<compile_context>
chip_gen: v7x
topology: tpu7x:2x2x1
jax: 0.10.0
libtpu: 0.0.40
codegen_flags: <defaults>
</compile_context>

<pallas_src>
import functools

import jax
import jax.numpy as jnp
from jax.experimental import pallas as pl
from jax.experimental.pallas import tpu as pltpu


def basic_block_kernel(xp_ref, w1_ref, s1_ref, b1_ref, w2_ref, s2_ref, b2_ref,
                       o_ref, xpf_ref, mid_ref, *, T, H, W, C):
    # xp_ref : (T+2, H+2, W+2, C) bf16  zero-padded input (pad=1 on T, H, W)
    # w*_ref : (3, 9*C, C)        bf16  conv weights (kh, kw folded into K)
    # s*_ref, b*_ref : (1, C)     f32   folded batchnorm scale / bias
    # o_ref  : (T*H, W*C)         f32   lane-dense block output
    # xpf_ref: (T+2, H+2, W+2, C) f32   scratch = upcast padded input
    # mid_ref: (T+2, H+2, W+2, C) f32   scratch = padded relu(bn1(conv1(x)))
    M = T * H * W
    K9 = 9 * C

    # Upcast the bf16 input block once; all slicing below is on f32 refs
    # (aligned / well-supported), while HBM->VMEM DMA stayed bf16.
    xpf_ref[...] = xp_ref[...].astype(jnp.float32)

    def conv3(src_ref, w_ref):
        """3x3x3 conv: 3 matmuls of (M, 9C) @ (9C, C); bf16 MXU, f32 accum."""
        acc = jnp.zeros((M, C), jnp.float32)
        for kd in range(3):
            # Slice in f32, flatten to (M, C), cast to bf16, then a single
            # 9-way lane concat -> (M, 9C) im2col patch for this kd.
            patch = jnp.concatenate(
                [src_ref[kd:kd + T, kh:kh + H, kw:kw + W, :]
                     .reshape(M, C).astype(jnp.bfloat16)
                 for kh in range(3) for kw in range(3)],
                axis=-1)                                       # (M, 9C) bf16
            acc += jnp.dot(patch, w_ref[kd],                   # (9C, C) bf16
                           preferred_element_type=jnp.float32)
        return acc                                             # (M, C) f32

    # ---- zero only the halo ring of mid (interior is overwritten below) ----
    zslab = jnp.zeros((1, H + 2, W + 2, C), jnp.float32)
    mid_ref[0:1] = zslab
    mid_ref[T + 1:T + 2] = zslab
    zrow = jnp.zeros((T, 1, W + 2, C), jnp.float32)
    mid_ref[1:T + 1, 0:1] = zrow
    mid_ref[1:T + 1, H + 1:H + 2] = zrow
    zcol = jnp.zeros((T, H, 1, C), jnp.float32)
    mid_ref[1:T + 1, 1:H + 1, 0:1] = zcol
    mid_ref[1:T + 1, 1:H + 1, W + 1:W + 2] = zcol

    # ---- conv1 + bn1 + relu -> interior of mid ----
    y1 = conv3(xpf_ref, w1_ref)
    y1 = jnp.maximum(y1 * s1_ref[...] + b1_ref[...], 0.0)      # (M, C)
    mid_ref[1:T + 1, 1:H + 1, 1:W + 1, :] = y1.reshape(T, H, W, C)

    # ---- conv2 + bn2 + residual add + relu -> lane-dense output ----
    y2 = conv3(mid_ref, w2_ref)
    y2 = y2 * s2_ref[...] + b2_ref[...]
    resid = xpf_ref[1:1 + T, 1:1 + H, 1:1 + W, :].reshape(M, C)
    y = jnp.maximum(y2 + resid, 0.0).reshape(T * H, W, C)
    # Fold W into the lane dim: (T*H, W*C) slab -> unmasked dense stores.
    o_ref[...] = jnp.concatenate([y[:, w, :] for w in range(W)], axis=-1)


def basic_block_forward(x_ncdhw, params, eps=1e-5):
    """x_ncdhw: (N, C, T, H, W) float32.  Returns (N, C, T, H, W) float32."""
    N, C, T, H, W = x_ncdhw.shape

    # Boundary glue only: in a real model keep activations channels-last (and
    # padded) between blocks.  TODO(synk): fold pad/transpose into the kernel
    # for production to avoid the extra HBM round trips.
    x = jnp.transpose(x_ncdhw, (0, 2, 3, 4, 1)).astype(jnp.bfloat16)  # (N,T,H,W,C)
    xp = jnp.pad(x, ((0, 0), (1, 1), (1, 1), (1, 1), (0, 0)))          # bf16, padded

    # torch Conv3d weight (Cout, Cin, kd, kh, kw) -> (kd, 9*Cin, Cout), bf16.
    # The (kh, kw, Cin) merge order matches the in-kernel im2col concat order.
    def prep_w(w):
        w = jnp.transpose(w, (2, 3, 4, 1, 0))            # (kd, kh, kw, Cin, Cout)
        return w.reshape(3, 9 * C, C).astype(jnp.bfloat16)

    w1 = prep_w(params["w1"])
    w2 = prep_w(params["w2"])

    def fold_bn(g, b, m, v):
        scale = g / jnp.sqrt(v + eps)
        bias = b - m * scale
        return (scale.reshape(1, C).astype(jnp.float32),
                bias.reshape(1, C).astype(jnp.float32))

    s1, b1 = fold_bn(params["g1"], params["b1"], params["m1"], params["v1"])
    s2, b2 = fold_bn(params["g2"], params["b2"], params["m2"], params["v2"])

    kernel = functools.partial(basic_block_kernel, T=T, H=H, W=W, C=C)

    out_flat = pl.pallas_call(
        kernel,
        out_shape=jax.ShapeDtypeStruct((N, T * H, W * C), jnp.float32),
        grid_spec=pltpu.PrefetchScalarGridSpec(
            num_scalar_prefetch=0,
            grid=(N,),
            in_specs=[
                pl.BlockSpec((None, T + 2, H + 2, W + 2, C),
                             lambda n: (n, 0, 0, 0, 0)),       # padded input (bf16)
                pl.BlockSpec((3, 9 * C, C), lambda n: (0, 0, 0)),  # w1
                pl.BlockSpec((1, C), lambda n: (0, 0)),            # bn1 scale
                pl.BlockSpec((1, C), lambda n: (0, 0)),            # bn1 bias
                pl.BlockSpec((3, 9 * C, C), lambda n: (0, 0, 0)),  # w2
                pl.BlockSpec((1, C), lambda n: (0, 0)),            # bn2 scale
                pl.BlockSpec((1, C), lambda n: (0, 0)),            # bn2 bias
            ],
            out_specs=pl.BlockSpec((None, T * H, W * C), lambda n: (n, 0, 0)),
            scratch_shapes=[
                pltpu.VMEM((T + 2, H + 2, W + 2, C), jnp.float32),  # xpf
                pltpu.VMEM((T + 2, H + 2, W + 2, C), jnp.float32),  # mid
            ],
        ),
        compiler_params=pltpu.CompilerParams(
            dimension_semantics=("parallel",),
            vmem_limit_bytes=48 * 1024 * 1024,
        ),
    )(xp, w1, s1, b1, w2, s2, b2)

    # (N, T*H, W*C) -> (N, T, H, W, C): free reshape of a contiguous array.
    out_ndhwc = out_flat.reshape(N, T, H, W, C)
    return jnp.transpose(out_ndhwc, (0, 4, 1, 2, 3))    # back to NCDHW


def basic_block_reference(x, params, eps=1e-5):
    """Pure-JAX reference in NCDHW, mirroring the PyTorch module (eval BN)."""
    def conv(y, w):
        return jax.lax.conv_general_dilated(
            y, w, window_strides=(1, 1, 1),
            padding=((1, 1), (1, 1), (1, 1)),
            dimension_numbers=("NCDHW", "OIDHW", "NCDHW"))

    def bn(y, g, b, m, v):
        sh = (1, -1, 1, 1, 1)
        return (y - m.reshape(sh)) / jnp.sqrt(v.reshape(sh) + eps) * g.reshape(sh) + b.reshape(sh)

    out = conv(x, params["w1"])
    out = jnp.maximum(bn(out, params["g1"], params["b1"], params["m1"], params["v1"]), 0.0)
    out = conv(out, params["w2"])
    out = bn(out, params["g2"], params["b2"], params["m2"], params["v2"])
    out = out + x
    return jnp.maximum(out, 0.0)


if __name__ == "__main__":
    N, C, T, H, W = 2, 32, 4, 8, 8   # inplanes == planes == 32, stride=1, padding=1

    key = jax.random.PRNGKey(0)
    ks = jax.random.split(key, 11)
    x = jax.random.normal(ks[0], (N, C, T, H, W), jnp.float32)

    params = {
        "w1": jax.random.normal(ks[1], (C, C, 3, 3, 3), jnp.float32) * 0.05,
        "g1": jax.random.uniform(ks[2], (C,), jnp.float32, 0.5, 1.5),
        "b1": jax.random.normal(ks[3], (C,), jnp.float32) * 0.1,
        "m1": jax.random.normal(ks[4], (C,), jnp.float32) * 0.1,
        "v1": jax.random.uniform(ks[5], (C,), jnp.float32, 0.5, 1.5),
        "w2": jax.random.normal(ks[6], (C, C, 3, 3, 3), jnp.float32) * 0.05,
        "g2": jax.random.uniform(ks[7], (C,), jnp.float32, 0.5, 1.5),
        "b2": jax.random.normal(ks[8], (C,), jnp.float32) * 0.1,
        "m2": jax.random.normal(ks[9], (C,), jnp.float32) * 0.1,
        "v2": jax.random.uniform(ks[10], (C,), jnp.float32, 0.5, 1.5),
    }

    fwd = jax.jit(basic_block_forward)
    out = jax.block_until_ready(fwd(x, params))

    ref = jax.block_until_ready(basic_block_reference(x, params))

    max_err = float(jnp.max(jnp.abs(out - ref)))
    scale = float(jnp.max(jnp.abs(ref))) + 1e-6
    # bf16 activations / MXU operands -> allow ~2% normalized max error.
    assert max_err / scale < 2e-2, f"mismatch: max_err={max_err}, scale={scale}"

    print("KERNEL_OK")
</pallas_src>

<mosaic_0001>
module attributes {stable_mosaic.version = 11 : i64} {
  func.func @basic_block_kernel(%arg0: i32, %arg1: memref<1x6x10x10x32xbf16, #tpu.memory_space<vmem>>, %arg2: memref<3x288x32xbf16, #tpu.memory_space<vmem>>, %arg3: memref<1x32xf32, #tpu.memory_space<vmem>>, %arg4: memref<1x32xf32, #tpu.memory_space<vmem>>, %arg5: memref<3x288x32xbf16, #tpu.memory_space<vmem>>, %arg6: memref<1x32xf32, #tpu.memory_space<vmem>>, %arg7: memref<1x32xf32, #tpu.memory_space<vmem>>, %arg8: memref<1x32x256xf32, #tpu.memory_space<vmem>>, %arg9: memref<6x10x10x32xf32, #tpu.memory_space<vmem>>, %arg10: memref<6x10x10x32xf32, #tpu.memory_space<vmem>>) attributes {dimension_semantics = [#tpu.dimension_semantics<parallel>], iteration_bounds = array<i64: 2>, scalar_prefetch = 0 : i64, scratch_operands = 2 : i64, tpu.core_type = #tpu.core_type<tc>, window_params = [{transform_indices = @transform_0, window_bounds = array<i64: 1, 6, 10, 10, 32>}, {pipeline_mode = #tpu.pipeline_mode<synchronous>, transform_indices = @transform_1, window_bounds = array<i64: 3, 288, 32>}, {pipeline_mode = #tpu.pipeline_mode<synchronous>, transform_indices = @transform_2, window_bounds = array<i64: 1, 32>}, {pipeline_mode = #tpu.pipeline_mode<synchronous>, transform_indices = @transform_3, window_bounds = array<i64: 1, 32>}, {pipeline_mode = #tpu.pipeline_mode<synchronous>, transform_indices = @transform_4, window_bounds = array<i64: 3, 288, 32>}, {pipeline_mode = #tpu.pipeline_mode<synchronous>, transform_indices = @transform_5, window_bounds = array<i64: 1, 32>}, {pipeline_mode = #tpu.pipeline_mode<synchronous>, transform_indices = @transform_6, window_bounds = array<i64: 1, 32>}, {transform_indices = @transform_7, window_bounds = array<i64: 1, 32, 256>}]} {
    %c0 = arith.constant 0 : index
    %c0_0 = arith.constant 0 : index
    %c0_1 = arith.constant 0 : index
    %c0_2 = arith.constant 0 : index
    %c0_3 = arith.constant 0 : index
    %0 = vector.load %arg1[%c0, %c0_0, %c0_1, %c0_2, %c0_3] : memref<1x6x10x10x32xbf16, #tpu.memory_space<vmem>>, vector<1x6x10x10x32xbf16>
    %1 = vector.shape_cast %0 : vector<1x6x10x10x32xbf16> to vector<6x10x10x32xbf16>
    %2 = arith.extf %1 : vector<6x10x10x32xbf16> to vector<6x10x10x32xf32>
    %c0_4 = arith.constant 0 : index
    %c0_5 = arith.constant 0 : index
    %c0_6 = arith.constant 0 : index
    %c0_7 = arith.constant 0 : index
    %3 = vector.load %arg9[%c0_4, %c0_5, %c0_6, %c0_7] : memref<6x10x10x32xf32, #tpu.memory_space<vmem>>, vector<6x10x10x32xf32>
    tpu.vector_store %arg9[%c0_4, %c0_5, %c0_6, %c0_7], %2 {strides = array<i32>} : memref<6x10x10x32xf32, #tpu.memory_space<vmem>>, vector<6x10x10x32xf32>,
    %cst = arith.constant 0.000000e+00 : f32
    %4 = vector.broadcast %cst : f32 to vector<1x10x10x32xf32>
    %c0_8 = arith.constant 0 : index
    %c0_9 = arith.constant 0 : index
    %c0_10 = arith.constant 0 : index
    %c0_11 = arith.constant 0 : index
    %5 = vector.load %arg10[%c0_8, %c0_9, %c0_10, %c0_11] : memref<6x10x10x32xf32, #tpu.memory_space<vmem>>, vector<1x10x10x32xf32>
    tpu.vector_store %arg10[%c0_8, %c0_9, %c0_10, %c0_11], %4 {strides = array<i32>} : memref<6x10x10x32xf32, #tpu.memory_space<vmem>>, vector<1x10x10x32xf32>,
    %c5 = arith.constant 5 : index
    %c0_12 = arith.constant 0 : index
    %c0_13 = arith.constant 0 : index
    %c0_14 = arith.constant 0 : index
    %6 = vector.load %arg10[%c5, %c0_12, %c0_13, %c0_14] : memref<6x10x10x32xf32, #tpu.memory_space<vmem>>, vector<1x10x10x32xf32>
    tpu.vector_store %arg10[%c5, %c0_12, %c0_13, %c0_14], %4 {strides = array<i32>} : memref<6x10x10x32xf32, #tpu.memory_space<vmem>>, vector<1x10x10x32xf32>,
    %cst_15 = arith.constant 0.000000e+00 : f32
    %7 = vector.broadcast %cst_15 : f32 to vector<4x1x10x32xf32>
    %c1 = arith.constant 1 : index
    %c0_16 = arith.constant 0 : index
    %c0_17 = arith.constant 0 : index
    %c0_18 = arith.constant 0 : index
    %8 = vector.load %arg10[%c1, %c0_16, %c0_17, %c0_18] : memref<6x10x10x32xf32, #tpu.memory_space<vmem>>, vector<4x1x10x32xf32>
    tpu.vector_store %arg10[%c1, %c0_16, %c0_17, %c0_18], %7 {strides = array<i32>} : memref<6x10x10x32xf32, #tpu.memory_space<vmem>>, vector<4x1x10x32xf32>,
    %c1_19 = arith.constant 1 : index
    %c9 = arith.constant 9 : index
    %c0_20 = arith.constant 0 : index
    %c0_21 = arith.constant 0 : index
    %9 = vector.load %arg10[%c1_19, %c9, %c0_20, %c0_21] : memref<6x10x10x32xf32, #tpu.memory_space<vmem>>, vector<4x1x10x32xf32>
    tpu.vector_store %arg10[%c1_19, %c9, %c0_20, %c0_21], %7 {strides = array<i32>} : memref<6x10x10x32xf32, #tpu.memory_space<vmem>>, vector<4x1x10x32xf32>,
    %cst_22 = arith.constant 0.000000e+00 : f32
    %10 = vector.broadcast %cst_22 : f32 to vector<4x8x1x32xf32>
    %c1_23 = arith.constant 1 : index
    %c1_24 = arith.constant 1 : index
    %c0_25 = arith.constant 0 : index
    %c0_26 = arith.constant 0 : index
    %11 = vector.load %arg10[%c1_23, %c1_24, %c0_25, %c0_26] : memref<6x10x10x32xf32, #tpu.memory_space<vmem>>, vector<4x8x1x32xf32>
    tpu.vector_store %arg10[%c1_23, %c1_24, %c0_25, %c0_26], %10 {strides = array<i32>} : memref<6x10x10x32xf32, #tpu.memory_space<vmem>>, vector<4x8x1x32xf32>,
    %c1_27 = arith.constant 1 : index
    %c1_28 = arith.constant 1 : index
    %c9_29 = arith.constant 9 : index
    %c0_30 = arith.constant 0 : index
    %12 = vector.load %arg10[%c1_27, %c1_28, %c9_29, %c0_30] : memref<6x10x10x32xf32, #tpu.memory_space<vmem>>, vector<4x8x1x32xf32>
    tpu.vector_store %arg10[%c1_27, %c1_28, %c9_29, %c0_30], %10 {strides = array<i32>} : memref<6x10x10x32xf32, #tpu.memory_space<vmem>>, vector<4x8x1x32xf32>,
    %cst_31 = arith.constant 0.000000e+00 : f32
    %13 = vector.broadcast %cst_31 : f32 to vector<256x32xf32>
    %c0_32 = arith.constant 0 : index
    %c0_33 = arith.constant 0 : index
    %c0_34 = arith.constant 0 : index
    %c0_35 = arith.constant 0 : index
    %14 = vector.load %arg9[%c0_32, %c0_33, %c0_34, %c0_35] : memref<6x10x10x32xf32, #tpu.memory_space<vmem>>, vector<4x8x8x32xf32>
    %15 = vector.shape_cast %14 : vector<4x8x8x32xf32> to vector<256x32xf32>
    %16 = arith.truncf %15 : vector<256x32xf32> to vector<256x32xbf16>
    %c0_36 = arith.constant 0 : index
    %c0_37 = arith.constant 0 : index
    %c1_38 = arith.constant 1 : index
    %c0_39 = arith.constant 0 : index
    %17 = vector.load %arg9[%c0_36, %c0_37, %c1_38, %c0_39] : memref<6x10x10x32xf32, #tpu.memory_space<vmem>>, vector<4x8x8x32xf32>
    %18 = vector.shape_cast %17 : vector<4x8x8x32xf32> to vector<256x32xf32>
    %19 = arith.truncf %18 : vector<256x32xf32> to vector<256x32xbf16>
    %c0_40 = arith.constant 0 : index
    %c0_41 = arith.constant 0 : index
    %c2 = arith.constant 2 : index
    %c0_42 = arith.constant 0 : index
    %20 = vector.load %arg9[%c0_40, %c0_41, %c2, %c0_42] : memref<6x10x10x32xf32, #tpu.memory_space<vmem>>, vector<4x8x8x32xf32>
    %21 = vector.shape_cast %20 : vector<4x8x8x32xf32> to vector<256x32xf32>
    %22 = arith.truncf %21 : vector<256x32xf32> to vector<256x32xbf16>
    %c0_43 = arith.constant 0 : index
    %c1_44 = arith.constant 1 : index
    %c0_45 = arith.constant 0 : index
    %c0_46 = arith.constant 0 : index
    %23 = vector.load %arg9[%c0_43, %c1_44, %c0_45, %c0_46] : memref<6x10x10x32xf32, #tpu.memory_space<vmem>>, vector<4x8x8x32xf32>
    %24 = vector.shape_cast %23 : vector<4x8x8x32xf32> to vector<256x32xf32>
    %25 = arith.truncf %24 : vector<256x32xf32> to vector<256x32xbf16>
    %c0_47 = arith.constant 0 : index
    %c1_48 = arith.constant 1 : index
    %c1_49 = arith.constant 1 : index
    %c0_50 = arith.constant 0 : index
    %26 = vector.load %arg9[%c0_47, %c1_48, %c1_49, %c0_50] : memref<6x10x10x32xf32, #tpu.memory_space<vmem>>, vector<4x8x8x32xf32>
    %27 = vector.shape_cast %26 : vector<4x8x8x32xf32> to vector<256x32xf32>
    %28 = arith.truncf %27 : vector<256x32xf32> to vector<256x32xbf16>
    %c0_51 = arith.constant 0 : index
    %c1_52 = arith.constant 1 : index
    %c2_53 = arith.constant 2 : index
    %c0_54 = arith.constant 0 : index
    %29 = vector.load %arg9[%c0_51, %c1_52, %c2_53, %c0_54] : memref<6x10x10x32xf32, #tpu.memory_space<vmem>>, vector<4x8x8x32xf32>
    %30 = vector.shape_cast %29 : vector<4x8x8x32xf32> to vector<256x32xf32>
    %31 = arith.truncf %30 : vector<256x32xf32> to vector<256x32xbf16>
    %c0_55 = arith.constant 0 : index
    %c2_56 = arith.constant 2 : index
    %c0_57 = arith.constant 0 : index
    %c0_58 = arith.constant 0 : index
    %32 = vector.load %arg9[%c0_55, %c2_56, %c0_57, %c0_58] : memref<6x10x10x32xf32, #tpu.memory_space<vmem>>, vector<4x8x8x32xf32>
    %33 = vector.shape_cast %32 : vector<4x8x8x32xf32> to vector<256x32xf32>
    %34 = arith.truncf %33 : vector<256x32xf32> to vector<256x32xbf16>
    %c0_59 = arith.constant 0 : index
    %c2_60 = arith.constant 2 : index
    %c1_61 = arith.constant 1 : index
    %c0_62 = arith.constant 0 : index
    %35 = vector.load %arg9[%c0_59, %c2_60, %c1_61, %c0_62] : memref<6x10x10x32xf32, #tpu.memory_space<vmem>>, vector<4x8x8x32xf32>
    %36 = vector.shape_cast %35 : vector<4x8x8x32xf32> to vector<256x32xf32>
    %37 = arith.truncf %36 : vector<256x32xf32> to vector<256x32xbf16>
    %c0_63 = arith.constant 0 : index
    %c2_64 = arith.constant 2 : index
    %c2_65 = arith.constant 2 : index
    %c0_66 = arith.constant 0 : index
    %38 = vector.load %arg9[%c0_63, %c2_64, %c2_65, %c0_66] : memref<6x10x10x32xf32, #tpu.memory_space<vmem>>, vector<4x8x8x32xf32>
    %39 = vector.shape_cast %38 : vector<4x8x8x32xf32> to vector<256x32xf32>
    %40 = arith.truncf %39 : vector<256x32xf32> to vector<256x32xbf16>
    %41 = tpu.concatenate %16, %19, %22, %25, %28, %31, %34, %37, %40 in 1 : vector<256x32xbf16>, vector<256x32xbf16>, vector<256x32xbf16>, vector<256x32xbf16>, vector<256x32xbf16>, vector<256x32xbf16>, vector<256x32xbf16>, vector<256x32xbf16>, vector<256x32xbf16> -> vector<256x288xbf16>
    %c0_67 = arith.constant 0 : index
    %c0_68 = arith.constant 0 : index
    %c0_69 = arith.constant 0 : index
    %42 = vector.load %arg2[%c0_67, %c0_68, %c0_69] : memref<3x288x32xbf16, #tpu.memory_space<vmem>>, vector<1x288x32xbf16>
    %43 = vector.shape_cast %42 : vector<1x288x32xbf16> to vector<288x32xbf16>
    %cst_70 = arith.constant dense<0.000000e+00> : vector<256x32xf32>
    %44 = tpu.matmul %41, %43, %cst_70 {dimension_numbers = #tpu.dot_dimension_numbers<[1], [0], [0], [1], [0, 0, 1, 1], [], []>} : vector<256x288xbf16>, vector<288x32xbf16>, vector<256x32xf32> -> vector<256x32xf32>
    %45 = arith.addf %13, %44 : vector<256x32xf32>
    %c1_71 = arith.constant 1 : index
    %c0_72 = arith.constant 0 : index
    %c0_73 = arith.constant 0 : index
    %c0_74 = arith.constant 0 : index
    %46 = vector.load %arg9[%c1_71, %c0_72, %c0_73, %c0_74] : memref<6x10x10x32xf32, #tpu.memory_space<vmem>>, vector<4x8x8x32xf32>
    %47 = vector.shape_cast %46 : vector<4x8x8x32xf32> to vector<256x32xf32>
    %48 = arith.truncf %47 : vector<256x32xf32> to vector<256x32xbf16>
    %c1_75 = arith.constant 1 : index
    %c0_76 = arith.constant 0 : index
    %c1_77 = arith.constant 1 : index
    %c0_78 = arith.constant 0 : index
    %49 = vector.load %arg9[%c1_75, %c0_76, %c1_77, %c0_78] : memref<6x10x10x32xf32, #tpu.memory_space<vmem>>, vector<4x8x8x32xf32>
    %50 = vector.shape_cast %49 : vector<4x8x8x32xf32> to vector<256x32xf32>
    %51 = arith.truncf %50 : vector<256x32xf32> to vector<256x32xbf16>
    %c1_79 = arith.constant 1 : index
    %c0_80 = arith.constant 0 : index
    %c2_81 = arith.constant 2 : index
    %c0_82 = arith.constant 0 : index
    %52 = vector.load %arg9[%c1_79, %c0_80, %c2_81, %c0_82] : memref<6x10x10x32xf32, #tpu.memory_space<vmem>>, vector<4x8x8x32xf32>
    %53 = vector.shape_cast %52 : vector<4x8x8x32xf32> to vector<256x32xf32>
    %54 = arith.truncf %53 : vector<256x32xf32> to vector<256x32xbf16>
    %c1_83 = arith.constant 1 : index
    %c1_84 = arith.constant 1 : index
    %c0_85 = arith.constant 0 : index
    %c0_86 = arith.constant 0 : index
    %55 = vector.load %arg9[%c1_83, %c1_84, %c0_85, %c0_86] : memref<6x10x10x32xf32, #tpu.memory_space<vmem>>, vector<4x8x8x32xf32>
    %56 = vector.shape_cast %55 : vector<4x8x8x32xf32> to vector<256x32xf32>
    %57 = arith.truncf %56 : vector<256x32xf32> to vector<256x32xbf16>
    %c1_87 = arith.constant 1 : index
    %c1_88 = arith.constant 1 : index
    %c1_89 = arith.constant 1 : index
    %c0_90 = arith.constant 0 : index
    %58 = vector.load %arg9[%c1_87, %c1_88, %c1_89, %c0_90] : memref<6x10x10x32xf32, #tpu.memory_space<vmem>>, vector<4x8x8x32xf32>
    %59 = vector.shape_cast %58 : vector<4x8x8x32xf32> to vector<256x32xf32>
    %60 = arith.truncf %59 : vector<256x32xf32> to vector<256x32xbf16>
    %c1_91 = arith.constant 1 : index
    %c1_92 = arith.constant 1 : index
    %c2_93 = arith.constant 2 : index
    %c0_94 = arith.constant 0 : index
    %61 = vector.load %arg9[%c1_91, %c1_92, %c2_93, %c0_94] : memref<6x10x10x32xf32, #tpu.memory_space<vmem>>, vector<4x8x8x32xf32>
    %62 = vector.shape_cast %61 : vector<4x8x8x32xf32> to vector<256x32xf32>
    %63 = arith.truncf %62 : vector<256x32xf32> to vector<256x32xbf16>
    %c1_95 = arith.constant 1 : index
    %c2_96 = arith.constant 2 : index
    %c0_97 = arith.constant 0 : index
    %c0_98 = arith.constant 0 : index
    %64 = vector.load %arg9[%c1_95, %c2_96, %c0_97, %c0_98] : memref<6x10x10x32xf32, #tpu.memory_space<vmem>>, vector<4x8x8x32xf32>
    %65 = vector.shape_cast %64 : vector<4x8x8x32xf32> to vector<256x32xf32>
    %66 = arith.truncf %65 : vector<256x32xf32> to vector<256x32xbf16>
    %c1_99 = arith.constant 1 : index
    %c2_100 = arith.constant 2 : index
    %c1_101 = arith.constant 1 : index
    %c0_102 = arith.constant 0 : index
    %67 = vector.load %arg9[%c1_99, %c2_100, %c1_101, %c0_102] : memref<6x10x10x32xf32, #tpu.memory_space<vmem>>, vector<4x8x8x32xf32>
    %68 = vector.shape_cast %67 : vector<4x8x8x32xf32> to vector<256x32xf32>
    %69 = arith.truncf %68 : vector<256x32xf32> to vector<256x32xbf16>
    %c1_103 = arith.constant 1 : index
    %c2_104 = arith.constant 2 : index
    %c2_105 = arith.constant 2 : index
    %c0_106 = arith.constant 0 : index
    %70 = vector.load %arg9[%c1_103, %c2_104, %c2_105, %c0_106] : memref<6x10x10x32xf32, #tpu.memory_space<vmem>>, vector<4x8x8x32xf32>
    %71 = vector.shape_cast %70 : vector<4x8x8x32xf32> to vector<256x32xf32>
    %72 = arith.truncf %71 : vector<256x32xf32> to vector<256x32xbf16>
    %73 = tpu.concatenate %48, %51, %54, %57, %60, %63, %66, %69, %72 in 1 : vector<256x32xbf16>, vector<256x32xbf16>, vector<256x32xbf16>, vector<256x32xbf16>, vector<256x32xbf16>, vector<256x32xbf16>, vector<256x32xbf16>, vector<256x32xbf16>, vector<256x32xbf16> -> vector<256x288xbf16>
    %c1_107 = arith.constant 1 : index
    %c0_108 = arith.constant 0 : index
    %c0_109 = arith.constant 0 : index
    %74 = vector.load %arg2[%c1_107, %c0_108, %c0_109] : memref<3x288x32xbf16, #tpu.memory_space<vmem>>, vector<1x288x32xbf16>
    %75 = vector.shape_cast %74 : vector<1x288x32xbf16> to vector<288x32xbf16>
    %cst_110 = arith.constant dense<0.000000e+00> : vector<256x32xf32>
    %76 = tpu.matmul %73, %75, %cst_110 {dimension_numbers = #tpu.dot_dimension_numbers<[1], [0], [0], [1], [0, 0, 1, 1], [], []>} : vector<256x288xbf16>, vector<288x32xbf16>, vector<256x32xf32> -> vector<256x32xf32>
    %77 = arith.addf %45, %76 : vector<256x32xf32>
    %c2_111 = arith.constant 2 : index
    %c0_112 = arith.constant 0 : index
    %c0_113 = arith.constant 0 : index
    %c0_114 = arith.constant 0 : index
    %78 = vector.load %arg9[%c2_111, %c0_112, %c0_113, %c0_114] : memref<6x10x10x32xf32, #tpu.memory_space<vmem>>, vector<4x8x8x32xf32>
    %79 = vector.shape_cast %78 : vector<4x8x8x32xf32> to vector<256x32xf32>
    %80 = arith.truncf %79 : vector<256x32xf32> to vector<256x32xbf16>
    %c2_115 = arith.constant 2 : index
    %c0_116 = arith.constant 0 : index
    %c1_117 = arith.constant 1 : index
    %c0_118 = arith.constant 0 : index
    %81 = vector.load %arg9[%c2_115, %c0_116, %c1_117, %c0_118] : memref<6x10x10x32xf32, #tpu.memory_space<vmem>>, vector<4x8x8x32xf32>
    %82 = vector.shape_cast %81 : vector<4x8x8x32xf32> to vector<256x32xf32>
    %83 = arith.truncf %82 : vector<256x32xf32> to vector<256x32xbf16>
    %c2_119 = arith.constant 2 : index
    %c0_120 = arith.constant 0 : index
    %c2_121 = arith.constant 2 : index
    %c0_122 = arith.constant 0 : index
    %84 = vector.load %arg9[%c2_119, %c0_120, %c2_121, %c0_122] : memref<6x10x10x32xf32, #tpu.memory_space<vmem>>, vector<4x8x8x32xf32>
    %85 = vector.shape_cast %84 : vector<4x8x8x32xf32> to vector<256x32xf32>
    %86 = arith.truncf %85 : vector<256x32xf32> to vector<256x32xbf16>
    %c2_123 = arith.constant 2 : index
    %c1_124 = arith.constant 1 : index
    %c0_125 = arith.constant 0 : index
    %c0_126 = arith.constant 0 : index
    %87 = vector.load %arg9[%c2_123, %c1_124, %c0_125, %c0_126] : memref<6x10x10x32xf32, #tpu.memory_space<vmem>>, vector<4x8x8x32xf32>
    %88 = vector.shape_cast %87 : vector<4x8x8x32xf32> to vector<256x32xf32>
    %89 = arith.truncf %88 : vector<256x32xf32> to vector<256x32xbf16>
    %c2_127 = arith.constant 2 : index
    %c1_128 = arith.constant 1 : index
    %c1_129 = arith.constant 1 : index
    %c0_130 = arith.constant 0 : index
    %90 = vector.load %arg9[%c2_127, %c1_128, %c1_129, %c0_130] : memref<6x10x10x32xf32, #tpu.memory_space<vmem>>, vector<4x8x8x32xf32>
    %91 = vector.shape_cast %90 : vector<4x8x8x32xf32> to vector<256x32xf32>
    %92 = arith.truncf %91 : vector<256x32xf32> to vector<256x32xbf16>
    %c2_131 = arith.constant 2 : index
    %c1_132 = arith.constant 1 : index
    %c2_133 = arith.constant 2 : index
    %c0_134 = arith.constant 0 : index
    %93 = vector.load %arg9[%c2_131, %c1_132, %c2_133, %c0_134] : memref<6x10x10x32xf32, #tpu.memory_space<vmem>>, vector<4x8x8x32xf32>
    %94 = vector.shape_cast %93 : vector<4x8x8x32xf32> to vector<256x32xf32>
    %95 = arith.truncf %94 : vector<256x32xf32> to vector<256x32xbf16>
    %c2_135 = arith.constant 2 : index
    %c2_136 = arith.constant 2 : index
    %c0_137 = arith.constant 0 : index
    %c0_138 = arith.constant 0 : index
    %96 = vector.load %arg9[%c2_135, %c2_136, %c0_137, %c0_138] : memref<6x10x10x32xf32, #tpu.memory_space<vmem>>, vector<4x8x8x32xf32>
    %97 = vector.shape_cast %96 : vector<4x8x8x32xf32> to vector<256x32xf32>
    %98 = arith.truncf %97 : vector<256x32xf32> to vector<256x32xbf16>
    %c2_139 = arith.constant 2 : index
    %c2_140 = arith.constant 2 : index
    %c1_141 = arith.constant 1 : index
    %c0_142 = arith.constant 0 : index
    %99 = vector.load %arg9[%c2_139, %c2_140, %c1_141, %c0_142] : memref<6x10x10x32xf32, #tpu.memory_space<vmem>>, vector<4x8x8x32xf32>
    %100 = vector.shape_cast %99 : vector<4x8x8x32xf32> to vector<256x32xf32>
    %101 = arith.truncf %100 : vector<256x32xf32> to vector<256x32xbf16>
    %c2_143 = arith.constant 2 : index
    %c2_144 = arith.constant 2 : index
    %c2_145 = arith.constant 2 : index
    %c0_146 = arith.constant 0 : index
    %102 = vector.load %arg9[%c2_143, %c2_144, %c2_145, %c0_146] : memref<6x10x10x32xf32, #tpu.memory_space<vmem>>, vector<4x8x8x32xf32>
    %103 = vector.shape_cast %102 : vector<4x8x8x32xf32> to vector<256x32xf32>
    %104 = arith.truncf %103 : vector<256x32xf32> to vector<256x32xbf16>
    %105 = tpu.concatenate %80, %83, %86, %89, %92, %95, %98, %101, %104 in 1 : vector<256x32xbf16>, vector<256x32xbf16>, vector<256x32xbf16>, vector<256x32xbf16>, vector<256x32xbf16>, vector<256x32xbf16>, vector<256x32xbf16>, vector<256x32xbf16>, vector<256x32xbf16> -> vector<256x288xbf16>
    %c2_147 = arith.constant 2 : index
    %c0_148 = arith.constant 0 : index
    %c0_149 = arith.constant 0 : index
    %106 = vector.load %arg2[%c2_147, %c0_148, %c0_149] : memref<3x288x32xbf16, #tpu.memory_space<vmem>>, vector<1x288x32xbf16>
    %107 = vector.shape_cast %106 : vector<1x288x32xbf16> to vector<288x32xbf16>
    %cst_150 = arith.constant dense<0.000000e+00> : vector<256x32xf32>
    %108 = tpu.matmul %105, %107, %cst_150 {dimension_numbers = #tpu.dot_dimension_numbers<[1], [0], [0], [1], [0, 0, 1, 1], [], []>} : vector<256x288xbf16>, vector<288x32xbf16>, vector<256x32xf32> -> vector<256x32xf32>
    %109 = arith.addf %77, %108 : vector<256x32xf32>
    %c0_151 = arith.constant 0 : index
    %c0_152 = arith.constant 0 : index
    %110 = vector.load %arg3[%c0_151, %c0_152] : memref<1x32xf32, #tpu.memory_space<vmem>>, vector<1x32xf32>
    %111 = vector.broadcast %110 : vector<1x32xf32> to vector<256x32xf32>
    %112 = arith.mulf %109, %111 : vector<256x32xf32>
    %c0_153 = arith.constant 0 : index
    %c0_154 = arith.constant 0 : index
    %113 = vector.load %arg4[%c0_153, %c0_154] : memref<1x32xf32, #tpu.memory_space<vmem>>, vector<1x32xf32>
    %114 = vector.broadcast %113 : vector<1x32xf32> to vector<256x32xf32>
    %115 = arith.addf %112, %114 : vector<256x32xf32>
    %cst_155 = arith.constant 0.000000e+00 : f32
    %116 = vector.broadcast %cst_155 : f32 to vector<256x32xf32>
    %117 = arith.maximumf %115, %116 : vector<256x32xf32>
    %118 = vector.shape_cast %117 : vector<256x32xf32> to vector<4x8x8x32xf32>
    %c1_156 = arith.constant 1 : index
    %c1_157 = arith.constant 1 : index
    %c1_158 = arith.constant 1 : index
    %c0_159 = arith.constant 0 : index
    %119 = vector.load %arg10[%c1_156, %c1_157, %c1_158, %c0_159] : memref<6x10x10x32xf32, #tpu.memory_space<vmem>>, vector<4x8x8x32xf32>
    tpu.vector_store %arg10[%c1_156, %c1_157, %c1_158, %c0_159], %118 {strides = array<i32>} : memref<6x10x10x32xf32, #tpu.memory_space<vmem>>, vector<4x8x8x32xf32>,
    %cst_160 = arith.constant 0.000000e+00 : f32
    %120 = vector.broadcast %cst_160 : f32 to vector<256x32xf32>
    %c0_161 = arith.constant 0 : index
    %c0_162 = arith.constant 0 : index
    %c0_163 = arith.constant 0 : index
    %c0_164 = arith.constant 0 : index
    %121 = vector.load %arg10[%c0_161, %c0_162, %c0_163, %c0_164] : memref<6x10x10x32xf32, #tpu.memory_space<vmem>>, vector<4x8x8x32xf32>
    %122 = vector.shape_cast %121 : vector<4x8x8x32xf32> to vector<256x32xf32>
    %123 = arith.truncf %122 : vector<256x32xf32> to vector<256x32xbf16>
    %c0_165 = arith.constant 0 : index
    %c0_166 = arith.constant 0 : index
    %c1_167 = arith.constant 1 : index
    %c0_168 = arith.constant 0 : index
    %124 = vector.load %arg10[%c0_165, %c0_166, %c1_167, %c0_168] : memref<6x10x10x32xf32, #tpu.memory_space<vmem>>, vector<4x8x8x32xf32>
    %125 = vector.shape_cast %124 : vector<4x8x8x32xf32> to vector<256x32xf32>
    %126 = arith.truncf %125 : vector<256x32xf32> to vector<256x32xbf16>
    %c0_169 = arith.constant 0 : index
    %c0_170 = arith.constant 0 : index
    %c2_171 = arith.constant 2 : index
    %c0_172 = arith.constant 0 : index
    %127 = vector.load %arg10[%c0_169, %c0_170, %c2_171, %c0_172] : memref<6x10x10x32xf32, #tpu.memory_space<vmem>>, vector<4x8x8x32xf32>
    %128 = vector.shape_cast %127 : vector<4x8x8x32xf32> to vector<256x32xf32>
    %129 = arith.truncf %128 : vector<256x32xf32> to vector<256x32xbf16>
    %c0_173 = arith.constant 0 : index
    %c1_174 = arith.constant 1 : index
    %c0_175 = arith.constant 0 : index
    %c0_176 = arith.constant 0 : index
    %130 = vector.load %arg10[%c0_173, %c1_174, %c0_175, %c0_176] : memref<6x10x10x32xf32, #tpu.memory_space<vmem>>, vector<4x8x8x32xf32>
    %131 = vector.shape_cast %130 : vector<4x8x8x32xf32> to vector<256x32xf32>
    %132 = arith.truncf %131 : vector<256x32xf32> to vector<256x32xbf16>
    %c0_177 = arith.constant 0 : index
    %c1_178 = arith.constant 1 : index
    %c1_179 = arith.constant 1 : index
    %c0_180 = arith.constant 0 : index
    %133 = vector.load %arg10[%c0_177, %c1_178, %c1_179, %c0_180] : memref<6x10x10x32xf32, #tpu.memory_space<vmem>>, vector<4x8x8x32xf32>
    %134 = vector.shape_cast %133 : vector<4x8x8x32xf32> to vector<256x32xf32>
    %135 = arith.truncf %134 : vector<256x32xf32> to vector<256x32xbf16>
    %c0_181 = arith.constant 0 : index
    %c1_182 = arith.constant 1 : index
    %c2_183 = arith.constant 2 : index
    %c0_184 = arith.constant 0 : index
    %136 = vector.load %arg10[%c0_181, %c1_182, %c2_183, %c0_184] : memref<6x10x10x32xf32, #tpu.memory_space<vmem>>, vector<4x8x8x32xf32>
    %137 = vector.shape_cast %136 : vector<4x8x8x32xf32> to vector<256x32xf32>
    %138 = arith.truncf %137 : vector<256x32xf32> to vector<256x32xbf16>
    %c0_185 = arith.constant 0 : index
    %c2_186 = arith.constant 2 : index
    %c0_187 = arith.constant 0 : index
    %c0_188 = arith.constant 0 : index
    %139 = vector.load %arg10[%c0_185, %c2_186, %c0_187, %c0_188] : memref<6x10x10x32xf32, #tpu.memory_space<vmem>>, vector<4x8x8x32xf32>
    %140 = vector.shape_cast %139 : vector<4x8x8x32xf32> to vector<256x32xf32>
    %141 = arith.truncf %140 : vector<256x32xf32> to vector<256x32xbf16>
    %c0_189 = arith.constant 0 : index
    %c2_190 = arith.constant 2 : index
    %c1_191 = arith.constant 1 : index
    %c0_192 = arith.constant 0 : index
    %142 = vector.load %arg10[%c0_189, %c2_190, %c1_191, %c0_192] : memref<6x10x10x32xf32, #tpu.memory_space<vmem>>, vector<4x8x8x32xf32>
    %143 = vector.shape_cast %142 : vector<4x8x8x32xf32> to vector<256x32xf32>
    %144 = arith.truncf %143 : vector<256x32xf32> to vector<256x32xbf16>
    %c0_193 = arith.constant 0 : index
    %c2_194 = arith.constant 2 : index
    %c2_195 = arith.constant 2 : index
    %c0_196 = arith.constant 0 : index
    %145 = vector.load %arg10[%c0_193, %c2_194, %c2_195, %c0_196] : memref<6x10x10x32xf32, #tpu.memory_space<vmem>>, vector<4x8x8x32xf32>
    %146 = vector.shape_cast %145 : vector<4x8x8x32xf32> to vector<256x32xf32>
    %147 = arith.truncf %146 : vector<256x32xf32> to vector<256x32xbf16>
    %148 = tpu.concatenate %123, %126, %129, %132, %135, %138, %141, %144, %147 in 1 : vector<256x32xbf16>, vector<256x32xbf16>, vector<256x32xbf16>, vector<256x32xbf16>, vector<256x32xbf16>, vector<256x32xbf16>, vector<256x32xbf16>, vector<256x32xbf16>, vector<256x32xbf16> -> vector<256x288xbf16>
    %c0_197 = arith.constant 0 : index
    %c0_198 = arith.constant 0 : index
    %c0_199 = arith.constant 0 : index
    %149 = vector.load %arg5[%c0_197, %c0_198, %c0_199] : memref<3x288x32xbf16, #tpu.memory_space<vmem>>, vector<1x288x32xbf16>
    %150 = vector.shape_cast %149 : vector<1x288x32xbf16> to vector<288x32xbf16>
    %cst_200 = arith.constant dense<0.000000e+00> : vector<256x32xf32>
    %151 = tpu.matmul %148, %150, %cst_200 {dimension_numbers = #tpu.dot_dimension_numbers<[1], [0], [0], [1], [0, 0, 1, 1], [], []>} : vector<256x288xbf16>, vector<288x32xbf16>, vector<256x32xf32> -> vector<256x32xf32>
    %152 = arith.addf %120, %151 : vector<256x32xf32>
    %c1_201 = arith.constant 1 : index
    %c0_202 = arith.constant 0 : index
    %c0_203 = arith.constant 0 : index
    %c0_204 = arith.constant 0 : index
    %153 = vector.load %arg10[%c1_201, %c0_202, %c0_203, %c0_204] : memref<6x10x10x32xf32, #tpu.memory_space<vmem>>, vector<4x8x8x32xf32>
    %154 = vector.shape_cast %153 : vector<4x8x8x32xf32> to vector<256x32xf32>
    %155 = arith.truncf %154 : vector<256x32xf32> to vector<256x32xbf16>
    %c1_205 = arith.constant 1 : index
    %c0_206 = arith.constant 0 : index
    %c1_207 = arith.constant 1 : index
    %c0_208 = arith.constant 0 : index
    %156 = vector.load %arg10[%c1_205, %c0_206, %c1_207, %c0_208] : memref<6x10x10x32xf32, #tpu.memory_space<vmem>>, vector<4x8x8x32xf32>
    %157 = vector.shape_cast %156 : vector<4x8x8x32xf32> to vector<256x32xf32>
    %158 = arith.truncf %157 : vector<256x32xf32> to vector<256x32xbf16>
    %c1_209 = arith.constant 1 : index
    %c0_210 = arith.constant 0 : index
    %c2_211 = arith.constant 2 : index
    %c0_212 = arith.constant 0 : index
    %159 = vector.load %arg10[%c1_209, %c0_210, %c2_211, %c0_212] : memref<6x10x10x32xf32, #tpu.memory_space<vmem>>, vector<4x8x8x32xf32>
    %160 = vector.shape_cast %159 : vector<4x8x8x32xf32> to vector<256x32xf32>
    %161 = arith.truncf %160 : vector<256x32xf32> to vector<256x32xbf16>
    %c1_213 = arith.constant 1 : index
    %c1_214 = arith.constant 1 : index
    %c0_215 = arith.constant 0 : index
    %c0_216 = arith.constant 0 : index
    %162 = vector.load %arg10[%c1_213, %c1_214, %c0_215, %c0_216] : memref<6x10x10x32xf32, #tpu.memory_space<vmem>>, vector<4x8x8x32xf32>
    %163 = vector.shape_cast %162 : vector<4x8x8x32xf32> to vector<256x32xf32>
    %164 = arith.truncf %163 : vector<256x32xf32> to vector<256x32xbf16>
    %c1_217 = arith.constant 1 : index
    %c1_218 = arith.constant 1 : index
    %c1_219 = arith.constant 1 : index
    %c0_220 = arith.constant 0 : index
    %165 = vector.load %arg10[%c1_217, %c1_218, %c1_219, %c0_220] : memref<6x10x10x32xf32, #tpu.memory_space<vmem>>, vector<4x8x8x32xf32>
    %166 = vector.shape_cast %165 : vector<4x8x8x32xf32> to vector<256x32xf32>
    %167 = arith.truncf %166 : vector<256x32xf32> to vector<256x32xbf16>
    %c1_221 = arith.constant 1 : index
    %c1_222 = arith.constant 1 : index
    %c2_223 = arith.constant 2 : index
    %c0_224 = arith.constant 0 : index
    %168 = vector.load %arg10[%c1_221, %c1_222, %c2_223, %c0_224] : memref<6x10x10x32xf32, #tpu.memory_space<vmem>>, vector<4x8x8x32xf32>
    %169 = vector.shape_cast %168 : vector<4x8x8x32xf32> to vector<256x32xf32>
    %170 = arith.truncf %169 : vector<256x32xf32> to vector<256x32xbf16>
    %c1_225 = arith.constant 1 : index
    %c2_226 = arith.constant 2 : index
    %c0_227 = arith.constant 0 : index
    %c0_228 = arith.constant 0 : index
    %171 = vector.load %arg10[%c1_225, %c2_226, %c0_227, %c0_228] : memref<6x10x10x32xf32, #tpu.memory_space<vmem>>, vector<4x8x8x32xf32>
    %172 = vector.shape_cast %171 : vector<4x8x8x32xf32> to vector<256x32xf32>
    %173 = arith.truncf %172 : vector<256x32xf32> to vector<256x32xbf16>
    %c1_229 = arith.constant 1 : index
    %c2_230 = arith.constant 2 : index
    %c1_231 = arith.constant 1 : index
    %c0_232 = arith.constant 0 : index
    %174 = vector.load %arg10[%c1_229, %c2_230, %c1_231, %c0_232] : memref<6x10x10x32xf32, #tpu.memory_space<vmem>>, vector<4x8x8x32xf32>
    %175 = vector.shape_cast %174 : vector<4x8x8x32xf32> to vector<256x32xf32>
    %176 = arith.truncf %175 : vector<256x32xf32> to vector<256x32xbf16>
    %c1_233 = arith.constant 1 : index
    %c2_234 = arith.constant 2 : index
    %c2_235 = arith.constant 2 : index
    %c0_236 = arith.constant 0 : index
    %177 = vector.load %arg10[%c1_233, %c2_234, %c2_235, %c0_236] : memref<6x10x10x32xf32, #tpu.memory_space<vmem>>, vector<4x8x8x32xf32>
    %178 = vector.shape_cast %177 : vector<4x8x8x32xf32> to vector<256x32xf32>
    %179 = arith.truncf %178 : vector<256x32xf32> to vector<256x32xbf16>
    %180 = tpu.concatenate %155, %158, %161, %164, %167, %170, %173, %176, %179 in 1 : vector<256x32xbf16>, vector<256x32xbf16>, vector<256x32xbf16>, vector<256x32xbf16>, vector<256x32xbf16>, vector<256x32xbf16>, vector<256x32xbf16>, vector<256x32xbf16>, vector<256x32xbf16> -> vector<256x288xbf16>
    %c1_237 = arith.constant 1 : index
    %c0_238 = arith.constant 0 : index
    %c0_239 = arith.constant 0 : index
    %181 = vector.load %arg5[%c1_237, %c0_238, %c0_239] : memref<3x288x32xbf16, #tpu.memory_space<vmem>>, vector<1x288x32xbf16>
    %182 = vector.shape_cast %181 : vector<1x288x32xbf16> to vector<288x32xbf16>
    %cst_240 = arith.constant dense<0.000000e+00> : vector<256x32xf32>
    %183 = tpu.matmul %180, %182, %cst_240 {dimension_numbers = #tpu.dot_dimension_numbers<[1], [0], [0], [1], [0, 0, 1, 1], [], []>} : vector<256x288xbf16>, vector<288x32xbf16>, vector<256x32xf32> -> vector<256x32xf32>
    %184 = arith.addf %152, %183 : vector<256x32xf32>
    %c2_241 = arith.constant 2 : index
    %c0_242 = arith.constant 0 : index
    %c0_243 = arith.constant 0 : index
    %c0_244 = arith.constant 0 : index
    %185 = vector.load %arg10[%c2_241, %c0_242, %c0_243, %c0_244] : memref<6x10x10x32xf32, #tpu.memory_space<vmem>>, vector<4x8x8x32xf32>
    %186 = vector.shape_cast %185 : vector<4x8x8x32xf32> to vector<256x32xf32>
    %187 = arith.truncf %186 : vector<256x32xf32> to vector<256x32xbf16>
    %c2_245 = arith.constant 2 : index
    %c0_246 = arith.constant 0 : index
    %c1_247 = arith.constant 1 : index
    %c0_248 = arith.constant 0 : index
    %188 = vector.load %arg10[%c2_245, %c0_246, %c1_247, %c0_248] : memref<6x10x10x32xf32, #tpu.memory_space<vmem>>, vector<4x8x8x32xf32>
    %189 = vector.shape_cast %188 : vector<4x8x8x32xf32> to vector<256x32xf32>
    %190 = arith.truncf %189 : vector<256x32xf32> to vector<256x32xbf16>
    %c2_249 = arith.constant 2 : index
    %c0_250 = arith.constant 0 : index
    %c2_251 = arith.constant 2 : index
    %c0_252 = arith.constant 0 : index
    %191 = vector.load %arg10[%c2_249, %c0_250, %c2_251, %c0_252] : memref<6x10x10x32xf32, #tpu.memory_space<vmem>>, vector<4x8x8x32xf32>
    %192 = vector.shape_cast %191 : vector<4x8x8x32xf32> to vector<256x32xf32>
    %193 = arith.truncf %192 : vector<256x32xf32> to vector<256x32xbf16>
    %c2_253 = arith.constant 2 : index
    %c1_254 = arith.constant 1 : index
    %c0_255 = arith.constant 0 : index
    %c0_256 = arith.constant 0 : index
    %194 = vector.load %arg10[%c2_253, %c1_254, %c0_255, %c0_256] : memref<6x10x10x32xf32, #tpu.memory_space<vmem>>, vector<4x8x8x32xf32>
    %195 = vector.shape_cast %194 : vector<4x8x8x32xf32> to vector<256x32xf32>
    %196 = arith.truncf %195 : vector<256x32xf32> to vector<256x32xbf16>
    %c2_257 = arith.constant 2 : index
    %c1_258 = arith.constant 1 : index
    %c1_259 = arith.constant 1 : index
    %c0_260 = arith.constant 0 : index
    %197 = vector.load %arg10[%c2_257, %c1_258, %c1_259, %c0_260] : memref<6x10x10x32xf32, #tpu.memory_space<vmem>>, vector<4x8x8x32xf32>
    %198 = vector.shape_cast %197 : vector<4x8x8x32xf32> to vector<256x32xf32>
    %199 = arith.truncf %198 : vector<256x32xf32> to vector<256x32xbf16>
    %c2_261 = arith.constant 2 : index
    %c1_262 = arith.constant 1 : index
    %c2_263 = arith.constant 2 : index
    %c0_264 = arith.constant 0 : index
    %200 = vector.load %arg10[%c2_261, %c1_262, %c2_263, %c0_264] : memref<6x10x10x32xf32, #tpu.memory_space<vmem>>, vector<4x8x8x32xf32>
    %201 = vector.shape_cast %200 : vector<4x8x8x32xf32> to vector<256x32xf32>
    %202 = arith.truncf %201 : vector<256x32xf32> to vector<256x32xbf16>
    %c2_265 = arith.constant 2 : index
    %c2_266 = arith.constant 2 : index
    %c0_267 = arith.constant 0 : index
    %c0_268 = arith.constant 0 : index
    %203 = vector.load %arg10[%c2_265, %c2_266, %c0_267, %c0_268] : memref<6x10x10x32xf32, #tpu.memory_space<vmem>>, vector<4x8x8x32xf32>
    %204 = vector.shape_cast %203 : vector<4x8x8x32xf32> to vector<256x32xf32>
    %205 = arith.truncf %204 : vector<256x32xf32> to vector<256x32xbf16>
    %c2_269 = arith.constant 2 : index
    %c2_270 = arith.constant 2 : index
    %c1_271 = arith.constant 1 : index
    %c0_272 = arith.constant 0 : index
    %206 = vector.load %arg10[%c2_269, %c2_270, %c1_271, %c0_272] : memref<6x10x10x32xf32, #tpu.memory_space<vmem>>, vector<4x8x8x32xf32>
    %207 = vector.shape_cast %206 : vector<4x8x8x32xf32> to vector<256x32xf32>
    %208 = arith.truncf %207 : vector<256x32xf32> to vector<256x32xbf16>
    %c2_273 = arith.constant 2 : index
    %c2_274 = arith.constant 2 : index
    %c2_275 = arith.constant 2 : index
    %c0_276 = arith.constant 0 : index
    %209 = vector.load %arg10[%c2_273, %c2_274, %c2_275, %c0_276] : memref<6x10x10x32xf32, #tpu.memory_space<vmem>>, vector<4x8x8x32xf32>
    %210 = vector.shape_cast %209 : vector<4x8x8x32xf32> to vector<256x32xf32>
    %211 = arith.truncf %210 : vector<256x32xf32> to vector<256x32xbf16>
    %212 = tpu.concatenate %187, %190, %193, %196, %199, %202, %205, %208, %211 in 1 : vector<256x32xbf16>, vector<256x32xbf16>, vector<256x32xbf16>, vector<256x32xbf16>, vector<256x32xbf16>, vector<256x32xbf16>, vector<256x32xbf16>, vector<256x32xbf16>, vector<256x32xbf16> -> vector<256x288xbf16>
    %c2_277 = arith.constant 2 : index
    %c0_278 = arith.constant 0 : index
    %c0_279 = arith.constant 0 : index
    %213 = vector.load %arg5[%c2_277, %c0_278, %c0_279] : memref<3x288x32xbf16, #tpu.memory_space<vmem>>, vector<1x288x32xbf16>
    %214 = vector.shape_cast %213 : vector<1x288x32xbf16> to vector<288x32xbf16>
    %cst_280 = arith.constant dense<0.000000e+00> : vector<256x32xf32>
    %215 = tpu.matmul %212, %214, %cst_280 {dimension_numbers = #tpu.dot_dimension_numbers<[1], [0], [0], [1], [0, 0, 1, 1], [], []>} : vector<256x288xbf16>, vector<288x32xbf16>, vector<256x32xf32> -> vector<256x32xf32>
    %216 = arith.addf %184, %215 : vector<256x32xf32>
    %c0_281 = arith.constant 0 : index
    %c0_282 = arith.constant 0 : index
    %217 = vector.load %arg6[%c0_281, %c0_282] : memref<1x32xf32, #tpu.memory_space<vmem>>, vector<1x32xf32>
    %218 = vector.broadcast %217 : vector<1x32xf32> to vector<256x32xf32>
    %219 = arith.mulf %216, %218 : vector<256x32xf32>
    %c0_283 = arith.constant 0 : index
    %c0_284 = arith.constant 0 : index
    %220 = vector.load %arg7[%c0_283, %c0_284] : memref<1x32xf32, #tpu.memory_space<vmem>>, vector<1x32xf32>
    %221 = vector.broadcast %220 : vector<1x32xf32> to vector<256x32xf32>
    %222 = arith.addf %219, %221 : vector<256x32xf32>
    %c1_285 = arith.constant 1 : index
    %c1_286 = arith.constant 1 : index
    %c1_287 = arith.constant 1 : index
    %c0_288 = arith.constant 0 : index
    %223 = vector.load %arg9[%c1_285, %c1_286, %c1_287, %c0_288] : memref<6x10x10x32xf32, #tpu.memory_space<vmem>>, vector<4x8x8x32xf32>
    %224 = vector.shape_cast %223 : vector<4x8x8x32xf32> to vector<256x32xf32>
    %225 = arith.addf %222, %224 : vector<256x32xf32>
    %cst_289 = arith.constant 0.000000e+00 : f32
    %226 = vector.broadcast %cst_289 : f32 to vector<256x32xf32>
    %227 = arith.maximumf %225, %226 : vector<256x32xf32>
    %228 = vector.shape_cast %227 : vector<256x32xf32> to vector<32x8x32xf32>
    %229 = vector.extract_strided_slice %228 {offsets = [0, 0, 0], sizes = [32, 1, 32], strides = [1, 1, 1]} : vector<32x8x32xf32> to vector<32x1x32xf32>
    %230 = vector.shape_cast %229 : vector<32x1x32xf32> to vector<32x32xf32>
    %231 = vector.extract_strided_slice %228 {offsets = [0, 1, 0], sizes = [32, 1, 32], strides = [1, 1, 1]} : vector<32x8x32xf32> to vector<32x1x32xf32>
    %232 = vector.shape_cast %231 : vector<32x1x32xf32> to vector<32x32xf32>
    %233 = vector.extract_strided_slice %228 {offsets = [0, 2, 0], sizes = [32, 1, 32], strides = [1, 1, 1]} : vector<32x8x32xf32> to vector<32x1x32xf32>
    %234 = vector.shape_cast %233 : vector<32x1x32xf32> to vector<32x32xf32>
    %235 = vector.extract_strided_slice %228 {offsets = [0, 3, 0], sizes = [32, 1, 32], strides = [1, 1, 1]} : vector<32x8x32xf32> to vector<32x1x32xf32>
    %236 = vector.shape_cast %235 : vector<32x1x32xf32> to vector<32x32xf32>
    %237 = vector.extract_strided_slice %228 {offsets = [0, 4, 0], sizes = [32, 1, 32], strides = [1, 1, 1]} : vector<32x8x32xf32> to vector<32x1x32xf32>
    %238 = vector.shape_cast %237 : vector<32x1x32xf32> to vector<32x32xf32>
    %239 = vector.extract_strided_slice %228 {offsets = [0, 5, 0], sizes = [32, 1, 32], strides = [1, 1, 1]} : vector<32x8x32xf32> to vector<32x1x32xf32>
    %240 = vector.shape_cast %239 : vector<32x1x32xf32> to vector<32x32xf32>
    %241 = vector.extract_strided_slice %228 {offsets = [0, 6, 0], sizes = [32, 1, 32], strides = [1, 1, 1]} : vector<32x8x32xf32> to vector<32x1x32xf32>
    %242 = vector.shape_cast %241 : vector<32x1x32xf32> to vector<32x32xf32>
    %243 = vector.extract_strided_slice %228 {offsets = [0, 7, 0], sizes = [32, 1, 32], strides = [1, 1, 1]} : vector<32x8x32xf32> to vector<32x1x32xf32>
    %244 = vector.shape_cast %243 : vector<32x1x32xf32> to vector<32x32xf32>
    %245 = tpu.concatenate %230, %232, %234, %236, %238, %240, %242, %244 in 1 : vector<32x32xf32>, vector<32x32xf32>, vector<32x32xf32>, vector<32x32xf32>, vector<32x32xf32>, vector<32x32xf32>, vector<32x32xf32>, vector<32x32xf32> -> vector<32x256xf32>
    %c0_290 = arith.constant 0 : index
    %c0_291 = arith.constant 0 : index
    %c0_292 = arith.constant 0 : index
    %246 = vector.load %arg8[%c0_290, %c0_291, %c0_292] : memref<1x32x256xf32, #tpu.memory_space<vmem>>, vector<1x32x256xf32>
    %247 = vector.shape_cast %246 : vector<1x32x256xf32> to vector<32x256xf32>
    %248 = vector.shape_cast %245 : vector<32x256xf32> to vector<1x32x256xf32>
    tpu.vector_store %arg8[%c0_290, %c0_291, %c0_292], %248 {strides = array<i32>} : memref<1x32x256xf32, #tpu.memory_space<vmem>>, vector<1x32x256xf32>,
    return
  }
  func.func @transform_0(%arg0: i32) -> (i32, i32, i32, i32, i32) {
    %c0_i32 = arith.constant 0 : i32
    %c0_i32_0 = arith.constant 0 : i32
    %c0_i32_1 = arith.constant 0 : i32
    %c0_i32_2 = arith.constant 0 : i32
    %c0_i32_3 = arith.constant 0 : i32
    return %arg0, %c0_i32, %c0_i32_0, %c0_i32_1, %c0_i32_2 : i32, i32, i32, i32, i32
  }
  func.func @transform_1(%arg0: i32) -> (i32, i32, i32) {
    %c0_i32 = arith.constant 0 : i32
    %c0_i32_0 = arith.constant 0 : i32
    %c0_i32_1 = arith.constant 0 : i32
    %c0_i32_2 = arith.constant 0 : i32
    return %c0_i32, %c0_i32_0, %c0_i32_1 : i32, i32, i32
  }
  func.func @transform_2(%arg0: i32) -> (i32, i32) {
    %c0_i32 = arith.constant 0 : i32
    %c0_i32_0 = arith.constant 0 : i32
    %c0_i32_1 = arith.constant 0 : i32
    return %c0_i32, %c0_i32_0 : i32, i32
  }
  func.func @transform_3(%arg0: i32) -> (i32, i32) {
    %c0_i32 = arith.constant 0 : i32
    %c0_i32_0 = arith.constant 0 : i32
    %c0_i32_1 = arith.constant 0 : i32
    return %c0_i32, %c0_i32_0 : i32, i32
  }
  func.func @transform_4(%arg0: i32) -> (i32, i32, i32) {
    %c0_i32 = arith.constant 0 : i32
    %c0_i32_0 = arith.constant 0 : i32
    %c0_i32_1 = arith.constant 0 : i32
    %c0_i32_2 = arith.constant 0 : i32
    return %c0_i32, %c0_i32_0, %c0_i32_1 : i32, i32, i32
  }
  func.func @transform_5(%arg0: i32) -> (i32, i32) {
    %c0_i32 = arith.constant 0 : i32
    %c0_i32_0 = arith.constant 0 : i32
    %c0_i32_1 = arith.constant 0 : i32
    return %c0_i32, %c0_i32_0 : i32, i32
  }
  func.func @transform_6(%arg0: i32) -> (i32, i32) {
    %c0_i32 = arith.constant 0 : i32
    %c0_i32_0 = arith.constant 0 : i32
    %c0_i32_1 = arith.constant 0 : i32
    return %c0_i32, %c0_i32_0 : i32, i32
  }
  func.func @transform_7(%arg0: i32) -> (i32, i32, i32) {
    %c0_i32 = arith.constant 0 : i32
    %c0_i32_0 = arith.constant 0 : i32
    %c0_i32_1 = arith.constant 0 : i32
    return %arg0, %c0_i32, %c0_i32_0 : i32, i32, i32
  }
}

</mosaic_0001>

<llo_original>
// kernel: basic_block_forward.1
$region0: #{basic_block_forward.1}
  #allocation0 [shape = 'u32[]', space=smem, size = 0x4, offset = 0x4, fixed_abs, tag = 'smem constant byte address 0x4 - core index']
  #allocation1 [shape = 'u32[144,128]{1,0:T(1,128)}', space=vmem, size = 0x12000, scoped, tag = 'internal scratch']
  #allocation2 [shape = 'f32[6,10,10,32]{3,2,1,0:T(8,128)}', space=vmem, size = 0x78000, scoped, tag = 'scratch operand']
  #allocation3 [shape = 'f32[6,10,10,32]{3,2,1,0:T(8,128)}', space=vmem, size = 0x78000, scoped, tag = 'scratch operand']
  %s0 = inlined_call_operand.vmem [shape: bf16[2,6,10,10,32], index: 0, kind: input, shape index: {}]
  %s1 = inlined_call_operand.vmem [shape: bf16[3,288,32], index: 1, kind: input, shape index: {}]
  %s2 = inlined_call_operand.vmem [shape: f32[1,32], index: 2, kind: input, shape index: {}]
  %s3 = inlined_call_operand.vmem [shape: f32[1,32], index: 3, kind: input, shape index: {}]
  %s4 = inlined_call_operand.vmem [shape: bf16[3,288,32], index: 4, kind: input, shape index: {}]
  %s5 = inlined_call_operand.vmem [shape: f32[1,32], index: 5, kind: input, shape index: {}]
  %s6 = inlined_call_operand.vmem [shape: f32[1,32], index: 6, kind: input, shape index: {}]
  %s7 = inlined_call_operand.vmem [shape: f32[2,32,256], index: 7, kind: output, shape index: {}]
  %s8 = sld [smem:[#allocation0]]
  $region61: #{basic_block_forward.1} parent=0
    _
  %s10 = ssub.s32 1, %s8
  %s11 = scalar_select 0, %s10, %s8
  loop: start=0, step=1, limit=4
  $region2: #{basic_block_forward.1} parent=0 // loop_pre_header
    _
  $region3: #{basic_block_forward.1} parent=0 // loop_header
    %s13 = sphi 0, %s17
    %p14 = scmp.ge.s32.totalorder %s13, 4
    %s23 = sphi 0, %s25
    %s26 = sphi 0, %s23
    %s27 = sphi 0, %s26
    %s43 = sphi 0, %s27
    %s47 = sphi 0, %s47
    %s49 = sphi 0, %s47
    %s50 = sphi 0, %s49
    %s64 = sphi 0, %s50
    %s68 = sphi 0, %s68
    %s70 = sphi 0, %s68
    %s71 = sphi 0, %s70
    %s85 = sphi 0, %s71
    %s89 = sphi 0, %s89
    %s91 = sphi 0, %s89
    %s92 = sphi 0, %s91
    %s106 = sphi 0, %s92
    %s110 = sphi 0, %s110
    %s112 = sphi 0, %s110
    %s113 = sphi 0, %s112
    %s127 = sphi 0, %s113
    %s131 = sphi 0, %s131
    %s133 = sphi 0, %s131
    %s134 = sphi 0, %s133
    %s148 = sphi 0, %s134
    %s152 = sphi 0, %s152
    %s154 = sphi 0, %s152
    %s155 = sphi 0, %s154
    %s169 = sphi 0, %s155
    %s175 = sphi 0, %s177
    %s178 = sphi 0, %s175
    %s179 = sphi 0, %s178
    %s195 = sphi 0, %s179
  $region4: #{basic_block_forward.1} parent=0 // loop_header_branch
    %16 = sbr.rel (%p14) target = $region8
  $region5: #{basic_block_forward.1} parent=0 // loop_body
    %s18 = ssub.s32 %s13, 1
    %s19 = ssub.s32 %s13, 2
    %s20 = sadd.s32 %s13, 1
    %s21 = ssub.s32 %s13, %s20
    %p22 = scmp.eq.s32.totalorder %s21, 0
    %s24 = sadd.s32 %s23, 1
    %s25 = scalar_select %p22, %s23, %s24
    %p28 = pneg %p22
    %p29 = scmp.eq.s32.totalorder %s13, 1
    %p30 = por %p28, %p29
    %p31 = scmp.ne.s32.totalorder %s23, %s26
    %p32 = scmp.eq.s32.totalorder %s13, 0
    %p33 = por %p31, %p32
    %p34 = scmp.ne.s32.totalorder %s23, %s26
    %p35 = scmp.eq.s32.totalorder %s18, 1
    %p36 = por %p34, %p35
    %p37 = scmp.ne.s32.totalorder %s26, %s27
    %p38 = scmp.eq.s32.totalorder %s18, 0
    %p39 = por %p37, %p38
    %p40 = scmp.ne.s32.totalorder %s26, %s27
    %p41 = scmp.eq.s32.totalorder %s19, 1
    %p42 = por %p40, %p41
    %p44 = scmp.ne.s32.totalorder %s27, %s43
    %p45 = scmp.eq.s32.totalorder %s19, 0
    %p46 = por %p44, %p45
    %s48 = sadd.s32 %s47, 1
    %p51 = scmp.eq.s32.totalorder %s13, 1
    %p52 = scmp.ne.s32.totalorder %s47, %s49
    %p53 = scmp.eq.s32.totalorder %s13, 0
    %p54 = por %p52, %p53
    %p55 = scmp.ne.s32.totalorder %s47, %s49
    %p56 = scmp.eq.s32.totalorder %s18, 1
    %p57 = por %p55, %p56
    %p58 = scmp.ne.s32.totalorder %s49, %s50
    %p59 = scmp.eq.s32.totalorder %s18, 0
    %p60 = por %p58, %p59
    %p61 = scmp.ne.s32.totalorder %s49, %s50
    %p62 = scmp.eq.s32.totalorder %s19, 1
    %p63 = por %p61, %p62
    %p65 = scmp.ne.s32.totalorder %s50, %s64
    %p66 = scmp.eq.s32.totalorder %s19, 0
    %p67 = por %p65, %p66
    %s69 = sadd.s32 %s68, 1
    %p72 = scmp.eq.s32.totalorder %s13, 1
    %p73 = scmp.ne.s32.totalorder %s68, %s70
    %p74 = scmp.eq.s32.totalorder %s13, 0
    %p75 = por %p73, %p74
    %p76 = scmp.ne.s32.totalorder %s68, %s70
    %p77 = scmp.eq.s32.totalorder %s18, 1
    %p78 = por %p76, %p77
    %p79 = scmp.ne.s32.totalorder %s70, %s71
    %p80 = scmp.eq.s32.totalorder %s18, 0
    %p81 = por %p79, %p80
    %p82 = scmp.ne.s32.totalorder %s70, %s71
    %p83 = scmp.eq.s32.totalorder %s19, 1
    %p84 = por %p82, %p83
    %p86 = scmp.ne.s32.totalorder %s71, %s85
    %p87 = scmp.eq.s32.totalorder %s19, 0
    %p88 = por %p86, %p87
    %s90 = sadd.s32 %s89, 1
    %p93 = scmp.eq.s32.totalorder %s13, 1
    %p94 = scmp.ne.s32.totalorder %s89, %s91
    %p95 = scmp.eq.s32.totalorder %s13, 0
    %p96 = por %p94, %p95
    %p97 = scmp.ne.s32.totalorder %s89, %s91
    %p98 = scmp.eq.s32.totalorder %s18, 1
    %p99 = por %p97, %p98
    %p100 = scmp.ne.s32.totalorder %s91, %s92
    %p101 = scmp.eq.s32.totalorder %s18, 0
    %p102 = por %p100, %p101
    %p103 = scmp.ne.s32.totalorder %s91, %s92
    %p104 = scmp.eq.s32.totalorder %s19, 1
    %p105 = por %p103, %p104
    %p107 = scmp.ne.s32.totalorder %s92, %s106
    %p108 = scmp.eq.s32.totalorder %s19, 0
    %p109 = por %p107, %p108
    %s111 = sadd.s32 %s110, 1
    %p114 = scmp.eq.s32.totalorder %s13, 1
    %p115 = scmp.ne.s32.totalorder %s110, %s112
    %p116 = scmp.eq.s32.totalorder %s13, 0
    %p117 = por %p115, %p116
    %p118 = scmp.ne.s32.totalorder %s110, %s112
    %p119 = scmp.eq.s32.totalorder %s18, 1
    %p120 = por %p118, %p119
    %p121 = scmp.ne.s32.totalorder %s112, %s113
    %p122 = scmp.eq.s32.totalorder %s18, 0
    %p123 = por %p121, %p122
    %p124 = scmp.ne.s32.totalorder %s112, %s113
    %p125 = scmp.eq.s32.totalorder %s19, 1
    %p126 = por %p124, %p125
    %p128 = scmp.ne.s32.totalorder %s113, %s127
    %p129 = scmp.eq.s32.totalorder %s19, 0
    %p130 = por %p128, %p129
    %s132 = sadd.s32 %s131, 1
    %p135 = scmp.eq.s32.totalorder %s13, 1
    %p136 = scmp.ne.s32.totalorder %s131, %s133
    %p137 = scmp.eq.s32.totalorder %s13, 0
    %p138 = por %p136, %p137
    %p139 = scmp.ne.s32.totalorder %s131, %s133
    %p140 = scmp.eq.s32.totalorder %s18, 1
    %p141 = por %p139, %p140
    %p142 = scmp.ne.s32.totalorder %s133, %s134
    %p143 = scmp.eq.s32.totalorder %s18, 0
    %p144 = por %p142, %p143
    %p145 = scmp.ne.s32.totalorder %s133, %s134
    %p146 = scmp.eq.s32.totalorder %s19, 1
    %p147 = por %p145, %p146
    %p149 = scmp.ne.s32.totalorder %s134, %s148
    %p150 = scmp.eq.s32.totalorder %s19, 0
    %p151 = por %p149, %p150
    %s153 = sadd.s32 %s152, 1
    %p156 = scmp.eq.s32.totalorder %s13, 1
    %p157 = scmp.ne.s32.totalorder %s152, %s154
    %p158 = scmp.eq.s32.totalorder %s13, 0
    %p159 = por %p157, %p158
    %p160 = scmp.ne.s32.totalorder %s152, %s154
    %p161 = scmp.eq.s32.totalorder %s18, 1
    %p162 = por %p160, %p161
    %p163 = scmp.ne.s32.totalorder %s154, %s155
    %p164 = scmp.eq.s32.totalorder %s18, 0
    %p165 = por %p163, %p164
    %p166 = scmp.ne.s32.totalorder %s154, %s155
    %p167 = scmp.eq.s32.totalorder %s19, 1
    %p168 = por %p166, %p167
    %p170 = scmp.ne.s32.totalorder %s155, %s169
    %p171 = scmp.eq.s32.totalorder %s19, 0
    %p172 = por %p170, %p171
    %s173 = ssub.s32 %s13, %s20
    %p174 = scmp.eq.s32.totalorder %s173, 0
    %s176 = sadd.s32 %s175, 1
    %s177 = scalar_select %p174, %s175, %s176
    %p180 = pneg %p174
    %p181 = scmp.eq.s32.totalorder %s13, 1
    %p182 = por %p180, %p181
    %p183 = scmp.ne.s32.totalorder %s175, %s178
    %p184 = scmp.eq.s32.totalorder %s13, 0
    %p185 = por %p183, %p184
    %p186 = scmp.ne.s32.totalorder %s175, %s178
    %p187 = scmp.eq.s32.totalorder %s18, 1
    %p188 = por %p186, %p187
    %p189 = scmp.ne.s32.totalorder %s178, %s179
    %p190 = scmp.eq.s32.totalorder %s18, 0
    %p191 = por %p189, %p190
    %p192 = scmp.ne.s32.totalorder %s178, %s179
    %p193 = scmp.eq.s32.totalorder %s19, 1
    %p194 = por %p192, %p193
    %p196 = scmp.ne.s32.totalorder %s179, %s195
    %p197 = scmp.eq.s32.totalorder %s19, 0
    %p198 = por %p196, %p197
    %p199 = scmp.le.s32.totalorder 1, %s13
    %p200 = scmp.lt.s32.totalorder %s13, 3
    %p201 = pnand %p199, %p200
    %p202 = pneg %p201
    // Predicated region
    $region9: #{basic_block_forward.1} parent=5 // pred_check
      _
    $region10: #{basic_block_forward.1} parent=5 // pred_check_branch
      %204 = sbr.rel (%p201) target = $region12
    $region11: #{basic_block_forward.1} parent=5 // pred_region
      %s205 = ssub.s32 %s13, 1
      // Predicated region
      $region13: #{basic_block_forward.1} parent=11 // pred_check
        %p206 = pneg %p60
      $region14: #{basic_block_forward.1} parent=11 // pred_check_branch
        %208 = sbr.rel (%p206) target = $region16
      $region15: #{basic_block_forward.1} parent=11 // pred_region
        _
      $region16: #{basic_block_forward.1} parent=11 // pred_fallthru
        _
      // Predicated region
      $region17: #{basic_block_forward.1} parent=11 // pred_check
        %p209 = pneg %p81
      $region18: #{basic_block_forward.1} parent=11 // pred_check_branch
        %211 = sbr.rel (%p209) target = $region20
      $region19: #{basic_block_forward.1} parent=11 // pred_region
        _
      $region20: #{basic_block_forward.1} parent=11 // pred_fallthru
        _
      // Predicated region
      $region21: #{basic_block_forward.1} parent=11 // pred_check
        %p212 = pneg %p102
      $region22: #{basic_block_forward.1} parent=11 // pred_check_branch
        %214 = sbr.rel (%p212) target = $region24
      $region23: #{basic_block_forward.1} parent=11 // pred_region
        _
      $region24: #{basic_block_forward.1} parent=11 // pred_fallthru
        _
      // Predicated region
      $region25: #{basic_block_forward.1} parent=11 // pred_check
        %p215 = pneg %p123
      $region26: #{basic_block_forward.1} parent=11 // pred_check_branch
        %217 = sbr.rel (%p215) target = $region28
      $region27: #{basic_block_forward.1} parent=11 // pred_region
        _
      $region28: #{basic_block_forward.1} parent=11 // pred_fallthru
        _
      // Predicated region
      $region29: #{basic_block_forward.1} parent=11 // pred_check
        %p218 = pneg %p144
      $region30: #{basic_block_forward.1} parent=11 // pred_check_branch
        %220 = sbr.rel (%p218) target = $region32
      $region31: #{basic_block_forward.1} parent=11 // pred_region
        _
      $region32: #{basic_block_forward.1} parent=11 // pred_fallthru
        _
      // Predicated region
      $region33: #{basic_block_forward.1} parent=11 // pred_check
        %p221 = pneg %p165
      $region34: #{basic_block_forward.1} parent=11 // pred_check_branch
        %223 = sbr.rel (%p221) target = $region36
      $region35: #{basic_block_forward.1} parent=11 // pred_region
        _
      $region36: #{basic_block_forward.1} parent=11 // pred_fallthru
        _
    $region12: #{basic_block_forward.1} parent=5 // pred_fallthru
      _
    %p224 = scmp.lt.s32.totalorder %s13, 2
    // Predicated region
    $region37: #{basic_block_forward.1} parent=5 // pred_check
      %p225 = pneg %p224
    $region38: #{basic_block_forward.1} parent=5 // pred_check_branch
      %227 = sbr.rel (%p225) target = $region40
    $region39: #{basic_block_forward.1} parent=5 // pred_region
      // Predicated region
      $region41: #{basic_block_forward.1} parent=39 // pred_check
        %p228 = pneg %p33
      $region42: #{basic_block_forward.1} parent=39 // pred_check_branch
        %230 = sbr.rel (%p228) target = $region44
      $region43: #{basic_block_forward.1} parent=39 // pred_region
        %p231 = scmp.lt.s32.totalorder %s13, 1
        %s232 = scalar_select %p231, %s13, 1
        %s233 = smul.addr %s232, 120
        %s234 = smul.addr %s233, 4
        %s235 = scalar_lea.vmem %s0, %s234
      $region44: #{basic_block_forward.1} parent=39 // pred_fallthru
        _
    $region40: #{basic_block_forward.1} parent=5 // pred_fallthru
      _
    %p236 = scmp.le.s32.totalorder 1, %s13
    %p237 = scmp.lt.s32.totalorder %s13, 3
    %p238 = pnand %p236, %p237
    %p239 = pneg %p238
    // Predicated region
    $region45: #{basic_block_forward.1} parent=5 // pred_check
      _
    $region46: #{basic_block_forward.1} parent=5 // pred_check_branch
      %241 = sbr.rel (%p238) target = $region48
    $region47: #{basic_block_forward.1} parent=5 // pred_region
      %s242 = ssub.s32 %s13, 1
      %p243 = scmp.lt.s32.totalorder %s18, 1
      %s244 = scalar_select %p243, %s18, 1
      %s245 = smul.addr %s244, 120
      %s246 = smul.addr %s245, 4
      %s247 = scalar_lea.vmem %s0, %s246
      %p248 = pneg %p39
      %p249 = pneg %p36
      %p250 = pneg %p60
      %p251 = pneg %p57
      %p252 = pneg %p81
      %p253 = pneg %p78
      %p254 = pneg %p102
      %p255 = pneg %p99
      %p256 = pneg %p123
      %p257 = pneg %p120
      %p258 = pneg %p144
      %p259 = pneg %p141
      %p260 = pneg %p165
      %p261 = pneg %p162
      %p262 = pneg %p191
      %p263 = pneg %p188
      %p264 = scmp.lt.s32.totalorder %s18, 1
      %s265 = scalar_select %p264, %s18, 1
      %s266 = smul.addr %s265, 8
      %s267 = smul.addr %s266, 8
      %s268 = scalar_lea.vmem %s7, %s267
      %p269 = scmp.lt.s32.totalorder %s18, 1
      %s270 = scalar_select %p269, %s18, 1
      %s271 = smul.addr %s270, 120
      %s272 = smul.addr %s271, 4
      %s273 = scalar_lea.vmem %s0, %s272
      %p274 = scmp.lt.s32.totalorder %s18, 1
      %s275 = scalar_select %p274, %s18, 1
      %s276 = smul.addr %s275, 8
      %s277 = smul.addr %s276, 8
      %s278 = scalar_lea.vmem %s7, %s277
      %v280 = vld [vmem:[%s273] sm:$0xf]
      %v281 = vld [vmem:[%s273 + $0x4] sm:$0x1]
      %v282 = vld [vmem:[%s273 + $0x8] sm:$0xf]
      %v283 = vld [vmem:[%s273 + $0xc] sm:$0x1]
      %v284 = vld [vmem:[%s273 + $0x10] sm:$0xf]
      %v285 = vld [vmem:[%s273 + $0x14] sm:$0x1]
      %v286 = vld [vmem:[%s273 + $0x18] sm:$0xf]
      %v287 = vld [vmem:[%s273 + $0x1c] sm:$0x1]
      %v288 = vld [vmem:[%s273 + $0x20] sm:$0xf]
      %v289 = vld [vmem:[%s273 + $0x24] sm:$0x1]
      %v290 = vld [vmem:[%s273 + $0x28] sm:$0xf]
      %v291 = vld [vmem:[%s273 + $0x2c] sm:$0x1]
      %v292 = vld [vmem:[%s273 + $0x30] sm:$0xf]
      %v293 = vld [vmem:[%s273 + $0x34] sm:$0x1]
      %v294 = vld [vmem:[%s273 + $0x38] sm:$0xf]
      %v295 = vld [vmem:[%s273 + $0x3c] sm:$0x1]
      %v296 = vld [vmem:[%s273 + $0x40] sm:$0xf]
      %v297 = vld [vmem:[%s273 + $0x44] sm:$0x1]
      %v298 = vld [vmem:[%s273 + $0x48] sm:$0xf]
      %v299 = vld [vmem:[%s273 + $0x4c] sm:$0x1]
      %v300 = vld [vmem:[%s273 + $0x50] sm:$0xf]
      %v301 = vld [vmem:[%s273 + $0x54] sm:$0x1]
      %v302 = vld [vmem:[%s273 + $0x58] sm:$0xf]
      %v303 = vld [vmem:[%s273 + $0x5c] sm:$0x1]
      %v304 = vld [vmem:[%s273 + $0x60] sm:$0xf]
      %v305 = vld [vmem:[%s273 + $0x64] sm:$0x1]
      %v306 = vld [vmem:[%s273 + $0x68] sm:$0xf]
      %v307 = vld [vmem:[%s273 + $0x6c] sm:$0x1]
      %v308 = vld [vmem:[%s273 + $0x70] sm:$0xf]
      %v309 = vld [vmem:[%s273 + $0x74] sm:$0x1]
      %v310 = vld [vmem:[%s273 + $0x78] sm:$0xf]
      %v311 = vld [vmem:[%s273 + $0x7c] sm:$0x1]
      %v312 = vld [vmem:[%s273 + $0x80] sm:$0xf]
      %v313 = vld [vmem:[%s273 + $0x84] sm:$0x1]
      %v314 = vld [vmem:[%s273 + $0x88] sm:$0xf]
      %v315 = vld [vmem:[%s273 + $0x8c] sm:$0x1]
      %v316 = vld [vmem:[%s273 + $0x90] sm:$0xf]
      %v317 = vld [vmem:[%s273 + $0x94] sm:$0x1]
      %v318 = vld [vmem:[%s273 + $0x98] sm:$0xf]
      %v319 = vld [vmem:[%s273 + $0x9c] sm:$0x1]
      %v320 = vld [vmem:[%s273 + $0xa0] sm:$0xf]
      %v321 = vld [vmem:[%s273 + $0xa4] sm:$0x1]
      %v322 = vld [vmem:[%s273 + $0xa8] sm:$0xf]
      %v323 = vld [vmem:[%s273 + $0xac] sm:$0x1]
      %v324 = vld [vmem:[%s273 + $0xb0] sm:$0xf]
      %v325 = vld [vmem:[%s273 + $0xb4] sm:$0x1]
      %v326 = vld [vmem:[%s273 + $0xb8] sm:$0xf]
      %v327 = vld [vmem:[%s273 + $0xbc] sm:$0x1]
      %v328 = vld [vmem:[%s273 + $0xc0] sm:$0xf]
      %v329 = vld [vmem:[%s273 + $0xc4] sm:$0x1]
      %v330 = vld [vmem:[%s273 + $0xc8] sm:$0xf]
      %v331 = vld [vmem:[%s273 + $0xcc] sm:$0x1]
      %v332 = vld [vmem:[%s273 + $0xd0] sm:$0xf]
      %v333 = vld [vmem:[%s273 + $0xd4] sm:$0x1]
      %v334 = vld [vmem:[%s273 + $0xd8] sm:$0xf]
      %v335 = vld [vmem:[%s273 + $0xdc] sm:$0x1]
      %v336 = vld [vmem:[%s273 + $0xe0] sm:$0xf]
      %v337 = vld [vmem:[%s273 + $0xe4] sm:$0x1]
      %v338 = vld [vmem:[%s273 + $0xe8] sm:$0xf]
      %v339 = vld [vmem:[%s273 + $0xec] sm:$0x1]
      %v340 = vld [vmem:[%s273 + $0xf0] sm:$0xf]
      %v341 = vld [vmem:[%s273 + $0xf4] sm:$0x1]
      %v342 = vld [vmem:[%s273 + $0xf8] sm:$0xf]
      %v343 = vld [vmem:[%s273 + $0xfc] sm:$0x1]
      %v344 = vld [vmem:[%s273 + $0x100] sm:$0xf]
      %v345 = vld [vmem:[%s273 + $0x104] sm:$0x1]
      %v346 = vld [vmem:[%s273 + $0x108] sm:$0xf]
      %v347 = vld [vmem:[%s273 + $0x10c] sm:$0x1]
      %v348 = vld [vmem:[%s273 + $0x110] sm:$0xf]
      %v349 = vld [vmem:[%s273 + $0x114] sm:$0x1]
      %v350 = vld [vmem:[%s273 + $0x118] sm:$0xf]
      %v351 = vld [vmem:[%s273 + $0x11c] sm:$0x1]
      %v352 = vld [vmem:[%s273 + $0x120] sm:$0xf]
      %v353 = vld [vmem:[%s273 + $0x124] sm:$0x1]
      %v354 = vld [vmem:[%s273 + $0x128] sm:$0xf]
      %v355 = vld [vmem:[%s273 + $0x12c] sm:$0x1]
      %v356 = vld [vmem:[%s273 + $0x130] sm:$0xf]
      %v357 = vld [vmem:[%s273 + $0x134] sm:$0x1]
      %v358 = vld [vmem:[%s273 + $0x138] sm:$0xf]
      %v359 = vld [vmem:[%s273 + $0x13c] sm:$0x1]
      %v360 = vld [vmem:[%s273 + $0x140] sm:$0xf]
      %v361 = vld [vmem:[%s273 + $0x144] sm:$0x1]
      %v362 = vld [vmem:[%s273 + $0x148] sm:$0xf]
      %v363 = vld [vmem:[%s273 + $0x14c] sm:$0x1]
      %v364 = vld [vmem:[%s273 + $0x150] sm:$0xf]
      %v365 = vld [vmem:[%s273 + $0x154] sm:$0x1]
      %v366 = vld [vmem:[%s273 + $0x158] sm:$0xf]
      %v367 = vld [vmem:[%s273 + $0x15c] sm:$0x1]
      %v368 = vld [vmem:[%s273 + $0x160] sm:$0xf]
      %v369 = vld [vmem:[%s273 + $0x164] sm:$0x1]
      %v370 = vld [vmem:[%s273 + $0x168] sm:$0xf]
      %v371 = vld [vmem:[%s273 + $0x16c] sm:$0x1]
      %v372 = vld [vmem:[%s273 + $0x170] sm:$0xf]
      %v373 = vld [vmem:[%s273 + $0x174] sm:$0x1]
      %v374 = vld [vmem:[%s273 + $0x178] sm:$0xf]
      %v375 = vld [vmem:[%s273 + $0x17c] sm:$0x1]
      %v376 = vld [vmem:[%s273 + $0x180] sm:$0xf]
      %v377 = vld [vmem:[%s273 + $0x184] sm:$0x1]
      %v378 = vld [vmem:[%s273 + $0x188] sm:$0xf]
      %v379 = vld [vmem:[%s273 + $0x18c] sm:$0x1]
      %v380 = vld [vmem:[%s273 + $0x190] sm:$0xf]
      %v381 = vld [vmem:[%s273 + $0x194] sm:$0x1]
      %v382 = vld [vmem:[%s273 + $0x198] sm:$0xf]
      %v383 = vld [vmem:[%s273 + $0x19c] sm:$0x1]
      %v384 = vld [vmem:[%s273 + $0x1a0] sm:$0xf]
      %v385 = vld [vmem:[%s273 + $0x1a4] sm:$0x1]
      %v386 = vld [vmem:[%s273 + $0x1a8] sm:$0xf]
      %v387 = vld [vmem:[%s273 + $0x1ac] sm:$0x1]
      %v388 = vld [vmem:[%s273 + $0x1b0] sm:$0xf]
      %v389 = vld [vmem:[%s273 + $0x1b4] sm:$0x1]
      %v390 = vld [vmem:[%s273 + $0x1b8] sm:$0xf]
      %v391 = vld [vmem:[%s273 + $0x1bc] sm:$0x1]
      %v392 = vld [vmem:[%s273 + $0x1c0] sm:$0xf]
      %v393 = vld [vmem:[%s273 + $0x1c4] sm:$0x1]
      %v394 = vld [vmem:[%s273 + $0x1c8] sm:$0xf]
      %v395 = vld [vmem:[%s273 + $0x1cc] sm:$0x1]
      %v396 = vld [vmem:[%s273 + $0x1d0] sm:$0xf]
      %v397 = vld [vmem:[%s273 + $0x1d4] sm:$0x1]
      %v398 = vld [vmem:[%s273 + $0x1d8] sm:$0xf]
      %v399 = vld [vmem:[%s273 + $0x1dc] sm:$0x1]
      %v400 = vunpack.c.l.bf16 %v280
      %v401 = vunpack.c.l.bf16 %v281
      %v402 = vunpack.c.l.bf16 %v282
      %v403 = vunpack.c.l.bf16 %v283
      %v404 = vunpack.c.l.bf16 %v284
      %v405 = vunpack.c.l.bf16 %v285
      %v406 = vunpack.c.l.bf16 %v286
      %v407 = vunpack.c.l.bf16 %v287
      %v408 = vunpack.c.l.bf16 %v288
      %v409 = vunpack.c.l.bf16 %v289
      %v410 = vunpack.c.l.bf16 %v290
      %v411 = vunpack.c.l.bf16 %v291
      %v412 = vunpack.c.l.bf16 %v292
      %v413 = vunpack.c.l.bf16 %v293
      %v414 = vunpack.c.l.bf16 %v294
      %v415 = vunpack.c.l.bf16 %v295
      %v416 = vunpack.c.l.bf16 %v296
      %v417 = vunpack.c.l.bf16 %v297
      %v418 = vunpack.c.l.bf16 %v298
      %v419 = vunpack.c.l.bf16 %v299
      %v420 = vunpack.c.l.bf16 %v300
      %v421 = vunpack.c.l.bf16 %v301
      %v422 = vunpack.c.l.bf16 %v302
      %v423 = vunpack.c.l.bf16 %v303
      %v424 = vunpack.c.l.bf16 %v304
      %v425 = vunpack.c.l.bf16 %v305
      %v426 = vunpack.c.l.bf16 %v306
      %v427 = vunpack.c.l.bf16 %v307
      %v428 = vunpack.c.l.bf16 %v308
      %v429 = vunpack.c.l.bf16 %v309
      %v430 = vunpack.c.l.bf16 %v310
      %v431 = vunpack.c.l.bf16 %v311
      %v432 = vunpack.c.l.bf16 %v312
      %v433 = vunpack.c.l.bf16 %v313
      %v434 = vunpack.c.l.bf16 %v314
      %v435 = vunpack.c.l.bf16 %v315
      %v436 = vunpack.c.l.bf16 %v316
      %v437 = vunpack.c.l.bf16 %v317
      %v438 = vunpack.c.l.bf16 %v318
      %v439 = vunpack.c.l.bf16 %v319
      %v440 = vunpack.c.l.bf16 %v320
      %v441 = vunpack.c.l.bf16 %v321
      %v442 = vunpack.c.l.bf16 %v322
      %v443 = vunpack.c.l.bf16 %v323
      %v444 = vunpack.c.l.bf16 %v324
      %v445 = vunpack.c.l.bf16 %v325
      %v446 = vunpack.c.l.bf16 %v326
      %v447 = vunpack.c.l.bf16 %v327
      %v448 = vunpack.c.l.bf16 %v328
      %v449 = vunpack.c.l.bf16 %v329
      %v450 = vunpack.c.l.bf16 %v330
      %v451 = vunpack.c.l.bf16 %v331
      %v452 = vunpack.c.l.bf16 %v332
      %v453 = vunpack.c.l.bf16 %v333
      %v454 = vunpack.c.l.bf16 %v334
      %v455 = vunpack.c.l.bf16 %v335
      %v456 = vunpack.c.l.bf16 %v336
      %v457 = vunpack.c.l.bf16 %v337
      %v458 = vunpack.c.l.bf16 %v338
      %v459 = vunpack.c.l.bf16 %v339
      %v460 = vunpack.c.l.bf16 %v340
      %v461 = vunpack.c.l.bf16 %v341
      %v462 = vunpack.c.l.bf16 %v342
      %v463 = vunpack.c.l.bf16 %v343
      %v464 = vunpack.c.l.bf16 %v344
      %v465 = vunpack.c.l.bf16 %v345
      %v466 = vunpack.c.l.bf16 %v346
      %v467 = vunpack.c.l.bf16 %v347
      %v468 = vunpack.c.l.bf16 %v348
      %v469 = vunpack.c.l.bf16 %v349
      %v470 = vunpack.c.l.bf16 %v350
      %v471 = vunpack.c.l.bf16 %v351
      %v472 = vunpack.c.l.bf16 %v352
      %v473 = vunpack.c.l.bf16 %v353
      %v474 = vunpack.c.l.bf16 %v354
      %v475 = vunpack.c.l.bf16 %v355
      %v476 = vunpack.c.l.bf16 %v356
      %v477 = vunpack.c.l.bf16 %v357
      %v478 = vunpack.c.l.bf16 %v358
      %v479 = vunpack.c.l.bf16 %v359
      %v480 = vunpack.c.l.bf16 %v360
      %v481 = vunpack.c.l.bf16 %v361
      %v482 = vunpack.c.l.bf16 %v362
      %v483 = vunpack.c.l.bf16 %v363
      %v484 = vunpack.c.l.bf16 %v364
      %v485 = vunpack.c.l.bf16 %v365
      %v486 = vunpack.c.l.bf16 %v366
      %v487 = vunpack.c.l.bf16 %v367
      %v488 = vunpack.c.l.bf16 %v368
      %v489 = vunpack.c.l.bf16 %v369
      %v490 = vunpack.c.l.bf16 %v370
      %v491 = vunpack.c.l.bf16 %v371
      %v492 = vunpack.c.l.bf16 %v372
      %v493 = vunpack.c.l.bf16 %v373
      %v494 = vunpack.c.l.bf16 %v374
      %v495 = vunpack.c.l.bf16 %v375
      %v496 = vunpack.c.l.bf16 %v376
      %v497 = vunpack.c.l.bf16 %v377
      %v498 = vunpack.c.l.bf16 %v378
      %v499 = vunpack.c.l.bf16 %v379
      %v500 = vunpack.c.l.bf16 %v380
      %v501 = vunpack.c.l.bf16 %v381
      %v502 = vunpack.c.l.bf16 %v382
      %v503 = vunpack.c.l.bf16 %v383
      %v504 = vunpack.c.l.bf16 %v384
      %v505 = vunpack.c.l.bf16 %v385
      %v506 = vunpack.c.l.bf16 %v386
      %v507 = vunpack.c.l.bf16 %v387
      %v508 = vunpack.c.l.bf16 %v388
      %v509 = vunpack.c.l.bf16 %v389
      %v510 = vunpack.c.l.bf16 %v390
      %v511 = vunpack.c.l.bf16 %v391
      %v512 = vunpack.c.l.bf16 %v392
      %v513 = vunpack.c.l.bf16 %v393
      %v514 = vunpack.c.l.bf16 %v394
      %v515 = vunpack.c.l.bf16 %v395
      %v516 = vunpack.c.l.bf16 %v396
      %v517 = vunpack.c.l.bf16 %v397
      %v518 = vunpack.c.l.bf16 %v398
      %v519 = vunpack.c.l.bf16 %v399
      %vm520 = vcmask 261120
      %521 = vst.msk [vmem:[#allocation2] sm:$0xff] %vm520, %v400
      %vm522 = vcmask 254976
      %523 = vst.msk [vmem:[#allocation2 + $0x8] sm:$0x3] %vm522, %v401
      %524 = vst.msk [vmem:[#allocation2 + $0x10] sm:$0xff] %vm520, %v402
      %525 = vst.msk [vmem:[#allocation2 + $0x18] sm:$0x3] %vm522, %v403
      %526 = vst.msk [vmem:[#allocation2 + $0x20] sm:$0xff] %vm520, %v404
      %527 = vst.msk [vmem:[#allocation2 + $0x28] sm:$0x3] %vm522, %v405
      %528 = vst.msk [vmem:[#allocation2 + $0x30] sm:$0xff] %vm520, %v406
      %529 = vst.msk [vmem:[#allocation2 + $0x38] sm:$0x3] %vm522, %v407
      %530 = vst.msk [vmem:[#allocation2 + $0x40] sm:$0xff] %vm520, %v408
      %531 = vst.msk [vmem:[#allocation2 + $0x48] sm:$0x3] %vm522, %v409
      %532 = vst.msk [vmem:[#allocation2 + $0x50] sm:$0xff] %vm520, %v410
      %533 = vst.msk [vmem:[#allocation2 + $0x58] sm:$0x3] %vm522, %v411
      %534 = vst.msk [vmem:[#allocation2 + $0x60] sm:$0xff] %vm520, %v412
      %535 = vst.msk [vmem:[#allocation2 + $0x68] sm:$0x3] %vm522, %v413
      %536 = vst.msk [vmem:[#allocation2 + $0x70] sm:$0xff] %vm520, %v414
      %537 = vst.msk [vmem:[#allocation2 + $0x78] sm:$0x3] %vm522, %v415
      %538 = vst.msk [vmem:[#allocation2 + $0x80] sm:$0xff] %vm520, %v416
      %539 = vst.msk [vmem:[#allocation2 + $0x88] sm:$0x3] %vm522, %v417
      %540 = vst.msk [vmem:[#allocation2 + $0x90] sm:$0xff] %vm520, %v418
      %541 = vst.msk [vmem:[#allocation2 + $0x98] sm:$0x3] %vm522, %v419
      %542 = vst.msk [vmem:[#allocation2 + $0xa0] sm:$0xff] %vm520, %v420
      %543 = vst.msk [vmem:[#allocation2 + $0xa8] sm:$0x3] %vm522, %v421
      %544 = vst.msk [vmem:[#allocation2 + $0xb0] sm:$0xff] %vm520, %v422
      %545 = vst.msk [vmem:[#allocation2 + $0xb8] sm:$0x3] %vm522, %v423
      %546 = vst.msk [vmem:[#allocation2 + $0xc0] sm:$0xff] %vm520, %v424
      %547 = vst.msk [vmem:[#allocation2 + $0xc8] sm:$0x3] %vm522, %v425
      %548 = vst.msk [vmem:[#allocation2 + $0xd0] sm:$0xff] %vm520, %v426
      %549 = vst.msk [vmem:[#allocation2 + $0xd8] sm:$0x3] %vm522, %v427
      %550 = vst.msk [vmem:[#allocation2 + $0xe0] sm:$0xff] %vm520, %v428
      %551 = vst.msk [vmem:[#allocation2 + $0xe8] sm:$0x3] %vm522, %v429
      %552 = vst.msk [vmem:[#allocation2 + $0xf0] sm:$0xff] %vm520, %v430
      %553 = vst.msk [vmem:[#allocation2 + $0xf8] sm:$0x3] %vm522, %v431
      %554 = vst.msk [vmem:[#allocation2 + $0x100] sm:$0xff] %vm520, %v432
      %555 = vst.msk [vmem:[#allocation2 + $0x108] sm:$0x3] %vm522, %v433
      %556 = vst.msk [vmem:[#allocation2 + $0x110] sm:$0xff] %vm520, %v434
      %557 = vst.msk [vmem:[#allocation2 + $0x118] sm:$0x3] %vm522, %v435
      %558 = vst.msk [vmem:[#allocation2 + $0x120] sm:$0xff] %vm520, %v436
      %559 = vst.msk [vmem:[#allocation2 + $0x128] sm:$0x3] %vm522, %v437
      %560 = vst.msk [vmem:[#allocation2 + $0x130] sm:$0xff] %vm520, %v438
      %561 = vst.msk [vmem:[#allocation2 + $0x138] sm:$0x3] %vm522, %v439
      %562 = vst.msk [vmem:[#allocation2 + $0x140] sm:$0xff] %vm520, %v440
      %563 = vst.msk [vmem:[#allocation2 + $0x148] sm:$0x3] %vm522, %v441
      %564 = vst.msk [vmem:[#allocation2 + $0x150] sm:$0xff] %vm520, %v442
      %565 = vst.msk [vmem:[#allocation2 + $0x158] sm:$0x3] %vm522, %v443
      %566 = vst.msk [vmem:[#allocation2 + $0x160] sm:$0xff] %vm520, %v444
      %567 = vst.msk [vmem:[#allocation2 + $0x168] sm:$0x3] %vm522, %v445
      %568 = vst.msk [vmem:[#allocation2 + $0x170] sm:$0xff] %vm520, %v446
      %569 = vst.msk [vmem:[#allocation2 + $0x178] sm:$0x3] %vm522, %v447
      %570 = vst.msk [vmem:[#allocation2 + $0x180] sm:$0xff] %vm520, %v448
      %571 = vst.msk [vmem:[#allocation2 + $0x188] sm:$0x3] %vm522, %v449
      %572 = vst.msk [vmem:[#allocation2 + $0x190] sm:$0xff] %vm520, %v450
      %573 = vst.msk [vmem:[#allocation2 + $0x198] sm:$0x3] %vm522, %v451
      %574 = vst.msk [vmem:[#allocation2 + $0x1a0] sm:$0xff] %vm520, %v452
      %575 = vst.msk [vmem:[#allocation2 + $0x1a8] sm:$0x3] %vm522, %v453
      %576 = vst.msk [vmem:[#allocation2 + $0x1b0] sm:$0xff] %vm520, %v454
      %577 = vst.msk [vmem:[#allocation2 + $0x1b8] sm:$0x3] %vm522, %v455
      %578 = vst.msk [vmem:[#allocation2 + $0x1c0] sm:$0xff] %vm520, %v456
      %579 = vst.msk [vmem:[#allocation2 + $0x1c8] sm:$0x3] %vm522, %v457
      %580 = vst.msk [vmem:[#allocation2 + $0x1d0] sm:$0xff] %vm520, %v458
      %581 = vst.msk [vmem:[#allocation2 + $0x1d8] sm:$0x3] %vm522, %v459
      %582 = vst.msk [vmem:[#allocation2 + $0x1e0] sm:$0xff] %vm520, %v460
      %583 = vst.msk [vmem:[#allocation2 + $0x1e8] sm:$0x3] %vm522, %v461
      %584 = vst.msk [vmem:[#allocation2 + $0x1f0] sm:$0xff] %vm520, %v462
      %585 = vst.msk [vmem:[#allocation2 + $0x1f8] sm:$0x3] %vm522, %v463
      %586 = vst.msk [vmem:[#allocation2 + $0x200] sm:$0xff] %vm520, %v464
      %587 = vst.msk [vmem:[#allocation2 + $0x208] sm:$0x3] %vm522, %v465
      %588 = vst.msk [vmem:[#allocation2 + $0x210] sm:$0xff] %vm520, %v466
      %589 = vst.msk [vmem:[#allocation2 + $0x218] sm:$0x3] %vm522, %v467
      %590 = vst.msk [vmem:[#allocation2 + $0x220] sm:$0xff] %vm520, %v468
      %591 = vst.msk [vmem:[#allocation2 + $0x228] sm:$0x3] %vm522, %v469
      %592 = vst.msk [vmem:[#allocation2 + $0x230] sm:$0xff] %vm520, %v470
      %593 = vst.msk [vmem:[#allocation2 + $0x238] sm:$0x3] %vm522, %v471
      %594 = vst.msk [vmem:[#allocation2 + $0x240] sm:$0xff] %vm520, %v472
      %595 = vst.msk [vmem:[#allocation2 + $0x248] sm:$0x3] %vm522, %v473
      %596 = vst.msk [vmem:[#allocation2 + $0x250] sm:$0xff] %vm520, %v474
      %597 = vst.msk [vmem:[#allocation2 + $0x258] sm:$0x3] %vm522, %v475
      %598 = vst.msk [vmem:[#allocation2 + $0x260] sm:$0xff] %vm520, %v476
      %599 = vst.msk [vmem:[#allocation2 + $0x268] sm:$0x3] %vm522, %v477
      %600 = vst.msk [vmem:[#allocation2 + $0x270] sm:$0xff] %vm520, %v478
      %601 = vst.msk [vmem:[#allocation2 + $0x278] sm:$0x3] %vm522, %v479
      %602 = vst.msk [vmem:[#allocation2 + $0x280] sm:$0xff] %vm520, %v480
      %603 = vst.msk [vmem:[#allocation2 + $0x288] sm:$0x3] %vm522, %v481
      %604 = vst.msk [vmem:[#allocation2 + $0x290] sm:$0xff] %vm520, %v482
      %605 = vst.msk [vmem:[#allocation2 + $0x298] sm:$0x3] %vm522, %v483
      %606 = vst.msk [vmem:[#allocation2 + $0x2a0] sm:$0xff] %vm520, %v484
      %607 = vst.msk [vmem:[#allocation2 + $0x2a8] sm:$0x3] %vm522, %v485
      %608 = vst.msk [vmem:[#allocation2 + $0x2b0] sm:$0xff] %vm520, %v486
      %609 = vst.msk [vmem:[#allocation2 + $0x2b8] sm:$0x3] %vm522, %v487
      %610 = vst.msk [vmem:[#allocation2 + $0x2c0] sm:$0xff] %vm520, %v488
      %611 = vst.msk [vmem:[#allocation2 + $0x2c8] sm:$0x3] %vm522, %v489
      %612 = vst.msk [vmem:[#allocation2 + $0x2d0] sm:$0xff] %vm520, %v490
      %613 = vst.msk [vmem:[#allocation2 + $0x2d8] sm:$0x3] %vm522, %v491
      %614 = vst.msk [vmem:[#allocation2 + $0x2e0] sm:$0xff] %vm520, %v492
      %615 = vst.msk [vmem:[#allocation2 + $0x2e8] sm:$0x3] %vm522, %v493
      %616 = vst.msk [vmem:[#allocation2 + $0x2f0] sm:$0xff] %vm520, %v494
      %617 = vst.msk [vmem:[#allocation2 + $0x2f8] sm:$0x3] %vm522, %v495
      %618 = vst.msk [vmem:[#allocation2 + $0x300] sm:$0xff] %vm520, %v496
      %619 = vst.msk [vmem:[#allocation2 + $0x308] sm:$0x3] %vm522, %v497
      %620 = vst.msk [vmem:[#allocation2 + $0x310] sm:$0xff] %vm520, %v498
      %621 = vst.msk [vmem:[#allocation2 + $0x318] sm:$0x3] %vm522, %v499
      %622 = vst.msk [vmem:[#allocation2 + $0x320] sm:$0xff] %vm520, %v500
      %623 = vst.msk [vmem:[#allocation2 + $0x328] sm:$0x3] %vm522, %v501
      %624 = vst.msk [vmem:[#allocation2 + $0x330] sm:$0xff] %vm520, %v502
      %625 = vst.msk [vmem:[#allocation2 + $0x338] sm:$0x3] %vm522, %v503
      %626 = vst.msk [vmem:[#allocation2 + $0x340] sm:$0xff] %vm520, %v504
      %627 = vst.msk [vmem:[#allocation2 + $0x348] sm:$0x3] %vm522, %v505
      %628 = vst.msk [vmem:[#allocation2 + $0x350] sm:$0xff] %vm520, %v506
      %629 = vst.msk [vmem:[#allocation2 + $0x358] sm:$0x3] %vm522, %v507
      %630 = vst.msk [vmem:[#allocation2 + $0x360] sm:$0xff] %vm520, %v508
      %631 = vst.msk [vmem:[#allocation2 + $0x368] sm:$0x3] %vm522, %v509
      %632 = vst.msk [vmem:[#allocation2 + $0x370] sm:$0xff] %vm520, %v510
      %633 = vst.msk [vmem:[#allocation2 + $0x378] sm:$0x3] %vm522, %v511
      %634 = vst.msk [vmem:[#allocation2 + $0x380] sm:$0xff] %vm520, %v512
      %635 = vst.msk [vmem:[#allocation2 + $0x388] sm:$0x3] %vm522, %v513
      %636 = vst.msk [vmem:[#allocation2 + $0x390] sm:$0xff] %vm520, %v514
      %637 = vst.msk [vmem:[#allocation2 + $0x398] sm:$0x3] %vm522, %v515
      %638 = vst.msk [vmem:[#allocation2 + $0x3a0] sm:$0xff] %vm520, %v516
      %639 = vst.msk [vmem:[#allocation2 + $0x3a8] sm:$0x3] %vm522, %v517
      %640 = vst.msk [vmem:[#allocation2 + $0x3b0] sm:$0xff] %vm520, %v518
      %641 = vst.msk [vmem:[#allocation2 + $0x3b8] sm:$0x3] %vm522, %v519
      %642 = vst.msk [vmem:[#allocation3] sm:$0xff] %vm520, 0.0
      %643 = vst.msk [vmem:[#allocation3 + $0x8] sm:$0x3] %vm522, 0.0
      %644 = vst.msk [vmem:[#allocation3 + $0x10] sm:$0xff] %vm520, 0.0
      %645 = vst.msk [vmem:[#allocation3 + $0x18] sm:$0x3] %vm522, 0.0
      %646 = vst.msk [vmem:[#allocation3 + $0x20] sm:$0xff] %vm520, 0.0
      %647 = vst.msk [vmem:[#allocation3 + $0x28] sm:$0x3] %vm522, 0.0
      %648 = vst.msk [vmem:[#allocation3 + $0x30] sm:$0xff] %vm520, 0.0
      %649 = vst.msk [vmem:[#allocation3 + $0x38] sm:$0x3] %vm522, 0.0
      %650 = vst.msk [vmem:[#allocation3 + $0x40] sm:$0xff] %vm520, 0.0
      %651 = vst.msk [vmem:[#allocation3 + $0x48] sm:$0x3] %vm522, 0.0
      %652 = vst.msk [vmem:[#allocation3 + $0x50] sm:$0xff] %vm520, 0.0
      %653 = vst.msk [vmem:[#allocation3 + $0x58] sm:$0x3] %vm522, 0.0
      %654 = vst.msk [vmem:[#allocation3 + $0x60] sm:$0xff] %vm520, 0.0
      %655 = vst.msk [vmem:[#allocation3 + $0x68] sm:$0x3] %vm522, 0.0
      %656 = vst.msk [vmem:[#allocation3 + $0x70] sm:$0xff] %vm520, 0.0
      %657 = vst.msk [vmem:[#allocation3 + $0x78] sm:$0x3] %vm522, 0.0
      %658 = vst.msk [vmem:[#allocation3 + $0x80] sm:$0xff] %vm520, 0.0
      %659 = vst.msk [vmem:[#allocation3 + $0x88] sm:$0x3] %vm522, 0.0
      %660 = vst.msk [vmem:[#allocation3 + $0x90] sm:$0xff] %vm520, 0.0
      %661 = vst.msk [vmem:[#allocation3 + $0x98] sm:$0x3] %vm522, 0.0
      %s662 = scalar_lea.vmem [#allocation3], 800
      %663 = vst.msk [vmem:[%s662] sm:$0xff] %vm520, 0.0
      %664 = vst.msk [vmem:[%s662 + $0x8] sm:$0x3] %vm522, 0.0
      %665 = vst.msk [vmem:[%s662 + $0x10] sm:$0xff] %vm520, 0.0
      %666 = vst.msk [vmem:[%s662 + $0x18] sm:$0x3] %vm522, 0.0
      %667 = vst.msk [vmem:[%s662 + $0x20] sm:$0xff] %vm520, 0.0
      %668 = vst.msk [vmem:[%s662 + $0x28] sm:$0x3] %vm522, 0.0
      %669 = vst.msk [vmem:[%s662 + $0x30] sm:$0xff] %vm520, 0.0
      %670 = vst.msk [vmem:[%s662 + $0x38] sm:$0x3] %vm522, 0.0
      %671 = vst.msk [vmem:[%s662 + $0x40] sm:$0xff] %vm520, 0.0
      %672 = vst.msk [vmem:[%s662 + $0x48] sm:$0x3] %vm522, 0.0
      %673 = vst.msk [vmem:[%s662 + $0x50] sm:$0xff] %vm520, 0.0
      %674 = vst.msk [vmem:[%s662 + $0x58] sm:$0x3] %vm522, 0.0
      %675 = vst.msk [vmem:[%s662 + $0x60] sm:$0xff] %vm520, 0.0
      %676 = vst.msk [vmem:[%s662 + $0x68] sm:$0x3] %vm522, 0.0
      %677 = vst.msk [vmem:[%s662 + $0x70] sm:$0xff] %vm520, 0.0
      %678 = vst.msk [vmem:[%s662 + $0x78] sm:$0x3] %vm522, 0.0
      %679 = vst.msk [vmem:[%s662 + $0x80] sm:$0xff] %vm520, 0.0
      %680 = vst.msk [vmem:[%s662 + $0x88] sm:$0x3] %vm522, 0.0
      %681 = vst.msk [vmem:[%s662 + $0x90] sm:$0xff] %vm520, 0.0
      %682 = vst.msk [vmem:[%s662 + $0x98] sm:$0x3] %vm522, 0.0
      %s683 = scalar_lea.vmem [#allocation3], 160
      %684 = vst.msk [vmem:[%s683] sm:$0xff] %vm520, 0.0
      %685 = vst.msk [vmem:[%s683 + $0x8] sm:$0x3] %vm522, 0.0
      %686 = vst.msk [vmem:[%s683 + $0xa0] sm:$0xff] %vm520, 0.0
      %687 = vst.msk [vmem:[%s683 + $0xa8] sm:$0x3] %vm522, 0.0
      %688 = vst.msk [vmem:[%s683 + $0x140] sm:$0xff] %vm520, 0.0
      %689 = vst.msk [vmem:[%s683 + $0x148] sm:$0x3] %vm522, 0.0
      %690 = vst.msk [vmem:[%s683 + $0x1e0] sm:$0xff] %vm520, 0.0
      %691 = vst.msk [vmem:[%s683 + $0x1e8] sm:$0x3] %vm522, 0.0
      %s692 = scalar_lea.vmem [#allocation3], 304
      %693 = vst.msk [vmem:[%s692] sm:$0xff] %vm520, 0.0
      %694 = vst.msk [vmem:[%s692 + $0x8] sm:$0x3] %vm522, 0.0
      %695 = vst.msk [vmem:[%s692 + $0xa0] sm:$0xff] %vm520, 0.0
      %696 = vst.msk [vmem:[%s692 + $0xa8] sm:$0x3] %vm522, 0.0
      %697 = vst.msk [vmem:[%s692 + $0x140] sm:$0xff] %vm520, 0.0
      %698 = vst.msk [vmem:[%s692 + $0x148] sm:$0x3] %vm522, 0.0
      %699 = vst.msk [vmem:[%s692 + $0x1e0] sm:$0xff] %vm520, 0.0
      %700 = vst.msk [vmem:[%s692 + $0x1e8] sm:$0x3] %vm522, 0.0
      %s701 = scalar_lea.vmem [#allocation3], 176
      %vm702 = vcmask 253952
      %703 = vst.msk [vmem:[%s701] sm:$0x1] %vm702, 0.0
      %704 = vst.msk [vmem:[%s701 + $0x10] sm:$0x1] %vm702, 0.0
      %705 = vst.msk [vmem:[%s701 + $0x20] sm:$0x1] %vm702, 0.0
      %706 = vst.msk [vmem:[%s701 + $0x30] sm:$0x1] %vm702, 0.0
      %707 = vst.msk [vmem:[%s701 + $0x40] sm:$0x1] %vm702, 0.0
      %708 = vst.msk [vmem:[%s701 + $0x50] sm:$0x1] %vm702, 0.0
      %709 = vst.msk [vmem:[%s701 + $0x60] sm:$0x1] %vm702, 0.0
      %710 = vst.msk [vmem:[%s701 + $0x70] sm:$0x1] %vm702, 0.0
      %711 = vst.msk [vmem:[%s701 + $0xa0] sm:$0x1] %vm702, 0.0
      %712 = vst.msk [vmem:[%s701 + $0xb0] sm:$0x1] %vm702, 0.0
      %713 = vst.msk [vmem:[%s701 + $0xc0] sm:$0x1] %vm702, 0.0
      %714 = vst.msk [vmem:[%s701 + $0xd0] sm:$0x1] %vm702, 0.0
      %715 = vst.msk [vmem:[%s701 + $0xe0] sm:$0x1] %vm702, 0.0
      %716 = vst.msk [vmem:[%s701 + $0xf0] sm:$0x1] %vm702, 0.0
      %717 = vst.msk [vmem:[%s701 + $0x100] sm:$0x1] %vm702, 0.0
      %718 = vst.msk [vmem:[%s701 + $0x110] sm:$0x1] %vm702, 0.0
      %719 = vst.msk [vmem:[%s701 + $0x140] sm:$0x1] %vm702, 0.0
      %720 = vst.msk [vmem:[%s701 + $0x150] sm:$0x1] %vm702, 0.0
      %721 = vst.msk [vmem:[%s701 + $0x160] sm:$0x1] %vm702, 0.0
      %722 = vst.msk [vmem:[%s701 + $0x170] sm:$0x1] %vm702, 0.0
      %723 = vst.msk [vmem:[%s701 + $0x180] sm:$0x1] %vm702, 0.0
      %724 = vst.msk [vmem:[%s701 + $0x190] sm:$0x1] %vm702, 0.0
      %725 = vst.msk [vmem:[%s701 + $0x1a0] sm:$0x1] %vm702, 0.0
      %726 = vst.msk [vmem:[%s701 + $0x1b0] sm:$0x1] %vm702, 0.0
      %727 = vst.msk [vmem:[%s701 + $0x1e0] sm:$0x1] %vm702, 0.0
      %728 = vst.msk [vmem:[%s701 + $0x1f0] sm:$0x1] %vm702, 0.0
      %729 = vst.msk [vmem:[%s701 + $0x200] sm:$0x1] %vm702, 0.0
      %730 = vst.msk [vmem:[%s701 + $0x210] sm:$0x1] %vm702, 0.0
      %731 = vst.msk [vmem:[%s701 + $0x220] sm:$0x1] %vm702, 0.0
      %732 = vst.msk [vmem:[%s701 + $0x230] sm:$0x1] %vm702, 0.0
      %733 = vst.msk [vmem:[%s701 + $0x240] sm:$0x1] %vm702, 0.0
      %734 = vst.msk [vmem:[%s701 + $0x250] sm:$0x1] %vm702, 0.0
      %735 = vst.msk [vmem:[%s701 + $0x9] sm:$0x1] %vm702, 0.0
      %736 = vst.msk [vmem:[%s701 + $0x19] sm:$0x1] %vm702, 0.0
      %737 = vst.msk [vmem:[%s701 + $0x29] sm:$0x1] %vm702, 0.0
      %738 = vst.msk [vmem:[%s701 + $0x39] sm:$0x1] %vm702, 0.0
      %739 = vst.msk [vmem:[%s701 + $0x49] sm:$0x1] %vm702, 0.0
      %740 = vst.msk [vmem:[%s701 + $0x59] sm:$0x1] %vm702, 0.0
      %741 = vst.msk [vmem:[%s701 + $0x69] sm:$0x1] %vm702, 0.0
      %742 = vst.msk [vmem:[%s701 + $0x79] sm:$0x1] %vm702, 0.0
      %743 = vst.msk [vmem:[%s701 + $0xa9] sm:$0x1] %vm702, 0.0
      %744 = vst.msk [vmem:[%s701 + $0xb9] sm:$0x1] %vm702, 0.0
      %745 = vst.msk [vmem:[%s701 + $0xc9] sm:$0x1] %vm702, 0.0
      %746 = vst.msk [vmem:[%s701 + $0xd9] sm:$0x1] %vm702, 0.0
      %747 = vst.msk [vmem:[%s701 + $0xe9] sm:$0x1] %vm702, 0.0
      %748 = vst.msk [vmem:[%s701 + $0xf9] sm:$0x1] %vm702, 0.0
      %749 = vst.msk [vmem:[%s701 + $0x109] sm:$0x1] %vm702, 0.0
      %750 = vst.msk [vmem:[%s701 + $0x119] sm:$0x1] %vm702, 0.0
      %751 = vst.msk [vmem:[%s701 + $0x149] sm:$0x1] %vm702, 0.0
      %752 = vst.msk [vmem:[%s701 + $0x159] sm:$0x1] %vm702, 0.0
      %753 = vst.msk [vmem:[%s701 + $0x169] sm:$0x1] %vm702, 0.0
      %754 = vst.msk [vmem:[%s701 + $0x179] sm:$0x1] %vm702, 0.0
      %755 = vst.msk [vmem:[%s701 + $0x189] sm:$0x1] %vm702, 0.0
      %756 = vst.msk [vmem:[%s701 + $0x199] sm:$0x1] %vm702, 0.0
      %757 = vst.msk [vmem:[%s701 + $0x1a9] sm:$0x1] %vm702, 0.0
      %758 = vst.msk [vmem:[%s701 + $0x1b9] sm:$0x1] %vm702, 0.0
      %759 = vst.msk [vmem:[%s701 + $0x1e9] sm:$0x1] %vm702, 0.0
      %760 = vst.msk [vmem:[%s701 + $0x1f9] sm:$0x1] %vm702, 0.0
      %761 = vst.msk [vmem:[%s701 + $0x209] sm:$0x1] %vm702, 0.0
      %762 = vst.msk [vmem:[%s701 + $0x219] sm:$0x1] %vm702, 0.0
      %763 = vst.msk [vmem:[%s701 + $0x229] sm:$0x1] %vm702, 0.0
      %764 = vst.msk [vmem:[%s701 + $0x239] sm:$0x1] %vm702, 0.0
      %765 = vst.msk [vmem:[%s701 + $0x249] sm:$0x1] %vm702, 0.0
      %766 = vst.msk [vmem:[%s701 + $0x259] sm:$0x1] %vm702, 0.0
      %v767 = vld [vmem:[#allocation2] sm:$0xff]
      %v768 = vld [vmem:[#allocation2 + $0x10] sm:$0xff]
      %v769 = vld [vmem:[#allocation2 + $0x20] sm:$0xff]
      %v770 = vld [vmem:[#allocation2 + $0x30] sm:$0xff]
      %v771 = vld [vmem:[#allocation2 + $0x40] sm:$0xff]
      %v772 = vld [vmem:[#allocation2 + $0x50] sm:$0xff]
      %v773 = vld [vmem:[#allocation2 + $0x60] sm:$0xff]
      %v774 = vld [vmem:[#allocation2 + $0x70] sm:$0xff]
      %v775 = vld [vmem:[#allocation2 + $0xa0] sm:$0xff]
      %v776 = vld [vmem:[#allocation2 + $0xb0] sm:$0xff]
      %v777 = vld [vmem:[#allocation2 + $0xc0] sm:$0xff]
      %v778 = vld [vmem:[#allocation2 + $0xd0] sm:$0xff]
      %v779 = vld [vmem:[#allocation2 + $0xe0] sm:$0xff]
      %v780 = vld [vmem:[#allocation2 + $0xf0] sm:$0xff]
      %v781 = vld [vmem:[#allocation2 + $0x100] sm:$0xff]
      %v782 = vld [vmem:[#allocation2 + $0x110] sm:$0xff]
      %v783 = vld [vmem:[#allocation2 + $0x140] sm:$0xff]
      %v784 = vld [vmem:[#allocation2 + $0x150] sm:$0xff]
      %v785 = vld [vmem:[#allocation2 + $0x160] sm:$0xff]
      %v786 = vld [vmem:[#allocation2 + $0x170] sm:$0xff]
      %v787 = vld [vmem:[#allocation2 + $0x180] sm:$0xff]
      %v788 = vld [vmem:[#allocation2 + $0x190] sm:$0xff]
      %v789 = vld [vmem:[#allocation2 + $0x1a0] sm:$0xff]
      %v790 = vld [vmem:[#allocation2 + $0x1b0] sm:$0xff]
      %v791 = vld [vmem:[#allocation2 + $0x1e0] sm:$0xff]
      %v792 = vld [vmem:[#allocation2 + $0x1f0] sm:$0xff]
      %v793 = vld [vmem:[#allocation2 + $0x200] sm:$0xff]
      %v794 = vld [vmem:[#allocation2 + $0x210] sm:$0xff]
      %v795 = vld [vmem:[#allocation2 + $0x220] sm:$0xff]
      %v796 = vld [vmem:[#allocation2 + $0x230] sm:$0xff]
      %v797 = vld [vmem:[#allocation2 + $0x240] sm:$0xff]
      %v798 = vld [vmem:[#allocation2 + $0x250] sm:$0xff]
      %v799 = vpack.c.bf16 %v768, %v767
      %v800 = vpack.c.bf16 %v770, %v769
      %v801 = vpack.c.bf16 %v772, %v771
      %v802 = vpack.c.bf16 %v774, %v773
      %v803 = vpack.c.bf16 %v776, %v775
      %v804 = vpack.c.bf16 %v778, %v777
      %v805 = vpack.c.bf16 %v780, %v779
      %v806 = vpack.c.bf16 %v782, %v781
      %v807 = vpack.c.bf16 %v784, %v783
      %v808 = vpack.c.bf16 %v786, %v785
      %v809 = vpack.c.bf16 %v788, %v787
      %v810 = vpack.c.bf16 %v790, %v789
      %v811 = vpack.c.bf16 %v792, %v791
      %v812 = vpack.c.bf16 %v794, %v793
      %v813 = vpack.c.bf16 %v796, %v795
      %v814 = vpack.c.bf16 %v798, %v797
      %v815 = vld [vmem:[#allocation2 + $0x1] sm:$0xff]
      %v816 = vld [vmem:[#allocation2 + $0x11] sm:$0xff]
      %v817 = vld [vmem:[#allocation2 + $0x21] sm:$0xff]
      %v818 = vld [vmem:[#allocation2 + $0x31] sm:$0xff]
      %v819 = vld [vmem:[#allocation2 + $0x41] sm:$0xff]
      %v820 = vld [vmem:[#allocation2 + $0x51] sm:$0xff]
      %v821 = vld [vmem:[#allocation2 + $0x61] sm:$0xff]
      %v822 = vld [vmem:[#allocation2 + $0x71] sm:$0xff]
      %v823 = vld [vmem:[#allocation2 + $0xa1] sm:$0xff]
      %v824 = vld [vmem:[#allocation2 + $0xb1] sm:$0xff]
      %v825 = vld [vmem:[#allocation2 + $0xc1] sm:$0xff]
      %v826 = vld [vmem:[#allocation2 + $0xd1] sm:$0xff]
      %v827 = vld [vmem:[#allocation2 + $0xe1] sm:$0xff]
      %v828 = vld [vmem:[#allocation2 + $0xf1] sm:$0xff]
      %v829 = vld [vmem:[#allocation2 + $0x101] sm:$0xff]
      %v830 = vld [vmem:[#allocation2 + $0x111] sm:$0xff]
      %v831 = vld [vmem:[#allocation2 + $0x141] sm:$0xff]
      %v832 = vld [vmem:[#allocation2 + $0x151] sm:$0xff]
      %v833 = vld [vmem:[#allocation2 + $0x161] sm:$0xff]
      %v834 = vld [vmem:[#allocation2 + $0x171] sm:$0xff]
      %v835 = vld [vmem:[#allocation2 + $0x181] sm:$0xff]
      %v836 = vld [vmem:[#allocation2 + $0x191] sm:$0xff]
      %v837 = vld [vmem:[#allocation2 + $0x1a1] sm:$0xff]
      %v838 = vld [vmem:[#allocation2 + $0x1b1] sm:$0xff]
      %v839 = vld [vmem:[#allocation2 + $0x1e1] sm:$0xff]
      %v840 = vld [vmem:[#allocation2 + $0x1f1] sm:$0xff]
      %v841 = vld [vmem:[#allocation2 + $0x201] sm:$0xff]
      %v842 = vld [vmem:[#allocation2 + $0x211] sm:$0xff]
      %v843 = vld [vmem:[#allocation2 + $0x221] sm:$0xff]
      %v844 = vld [vmem:[#allocation2 + $0x231] sm:$0xff]
      %v845 = vld [vmem:[#allocation2 + $0x241] sm:$0xff]
      %v846 = vld [vmem:[#allocation2 + $0x251] sm:$0xff]
      %v847 = vpack.c.bf16 %v816, %v815
      %v848 = vpack.c.bf16 %v818, %v817
      %v849 = vpack.c.bf16 %v820, %v819
      %v850 = vpack.c.bf16 %v822, %v821
      %v851 = vpack.c.bf16 %v824, %v823
      %v852 = vpack.c.bf16 %v826, %v825
      %v853 = vpack.c.bf16 %v828, %v827
      %v854 = vpack.c.bf16 %v830, %v829
      %v855 = vpack.c.bf16 %v832, %v831
      %v856 = vpack.c.bf16 %v834, %v833
      %v857 = vpack.c.bf16 %v836, %v835
      %v858 = vpack.c.bf16 %v838, %v837
      %v859 = vpack.c.bf16 %v840, %v839
      %v860 = vpack.c.bf16 %v842, %v841
      %v861 = vpack.c.bf16 %v844, %v843
      %v862 = vpack.c.bf16 %v846, %v845
      %v863 = vld [vmem:[#allocation2 + $0x2] sm:$0xff]
      %v864 = vld [vmem:[#allocation2 + $0x12] sm:$0xff]
      %v865 = vld [vmem:[#allocation2 + $0x22] sm:$0xff]
      %v866 = vld [vmem:[#allocation2 + $0x32] sm:$0xff]
      %v867 = vld [vmem:[#allocation2 + $0x42] sm:$0xff]
      %v868 = vld [vmem:[#allocation2 + $0x52] sm:$0xff]
      %v869 = vld [vmem:[#allocation2 + $0x62] sm:$0xff]
      %v870 = vld [vmem:[#allocation2 + $0x72] sm:$0xff]
      %v871 = vld [vmem:[#allocation2 + $0xa2] sm:$0xff]
      %v872 = vld [vmem:[#allocation2 + $0xb2] sm:$0xff]
      %v873 = vld [vmem:[#allocation2 + $0xc2] sm:$0xff]
      %v874 = vld [vmem:[#allocation2 + $0xd2] sm:$0xff]
      %v875 = vld [vmem:[#allocation2 + $0xe2] sm:$0xff]
      %v876 = vld [vmem:[#allocation2 + $0xf2] sm:$0xff]
      %v877 = vld [vmem:[#allocation2 + $0x102] sm:$0xff]
      %v878 = vld [vmem:[#allocation2 + $0x112] sm:$0xff]
      %v879 = vld [vmem:[#allocation2 + $0x142] sm:$0xff]
      %v880 = vld [vmem:[#allocation2 + $0x152] sm:$0xff]
      %v881 = vld [vmem:[#allocation2 + $0x162] sm:$0xff]
      %v882 = vld [vmem:[#allocation2 + $0x172] sm:$0xff]
      %v883 = vld [vmem:[#allocation2 + $0x182] sm:$0xff]
      %v884 = vld [vmem:[#allocation2 + $0x192] sm:$0xff]
      %v885 = vld [vmem:[#allocation2 + $0x1a2] sm:$0xff]
      %v886 = vld [vmem:[#allocation2 + $0x1b2] sm:$0xff]
      %v887 = vld [vmem:[#allocation2 + $0x1e2] sm:$0xff]
      %v888 = vld [vmem:[#allocation2 + $0x1f2] sm:$0xff]
      %v889 = vld [vmem:[#allocation2 + $0x202] sm:$0xff]
      %v890 = vld [vmem:[#allocation2 + $0x212] sm:$0xff]
      %v891 = vld [vmem:[#allocation2 + $0x222] sm:$0xff]
      %v892 = vld [vmem:[#allocation2 + $0x232] sm:$0xff]
      %v893 = vld [vmem:[#allocation2 + $0x242] sm:$0xff]
      %v894 = vld [vmem:[#allocation2 + $0x252] sm:$0xff]
      %v895 = vpack.c.bf16 %v864, %v863
      %v896 = vpack.c.bf16 %v866, %v865
      %v897 = vpack.c.bf16 %v868, %v867
      %v898 = vpack.c.bf16 %v870, %v869
      %v899 = vpack.c.bf16 %v872, %v871
      %v900 = vpack.c.bf16 %v874, %v873
      %v901 = vpack.c.bf16 %v876, %v875
      %v902 = vpack.c.bf16 %v878, %v877
      %v903 = vpack.c.bf16 %v880, %v879
      %v904 = vpack.c.bf16 %v882, %v881
      %v905 = vpack.c.bf16 %v884, %v883
      %v906 = vpack.c.bf16 %v886, %v885
      %v907 = vpack.c.bf16 %v888, %v887
      %v908 = vpack.c.bf16 %v890, %v889
      %v909 = vpack.c.bf16 %v892, %v891
      %v910 = vpack.c.bf16 %v894, %v893
      %s911 = scalar_lea.vmem [#allocation2], 16
      %v912 = vld [vmem:[%s911] sm:$0xff]
      %v913 = vld [vmem:[%s911 + $0x10] sm:$0xff]
      %v914 = vld [vmem:[%s911 + $0x20] sm:$0xff]
      %v915 = vld [vmem:[%s911 + $0x30] sm:$0xff]
      %v916 = vld [vmem:[%s911 + $0x40] sm:$0xff]
      %v917 = vld [vmem:[%s911 + $0x50] sm:$0xff]
      %v918 = vld [vmem:[%s911 + $0x60] sm:$0xff]
      %v919 = vld [vmem:[%s911 + $0x70] sm:$0xff]
      %v920 = vld [vmem:[%s911 + $0xa0] sm:$0xff]
      %v921 = vld [vmem:[%s911 + $0xb0] sm:$0xff]
      %v922 = vld [vmem:[%s911 + $0xc0] sm:$0xff]
      %v923 = vld [vmem:[%s911 + $0xd0] sm:$0xff]
      %v924 = vld [vmem:[%s911 + $0xe0] sm:$0xff]
      %v925 = vld [vmem:[%s911 + $0xf0] sm:$0xff]
      %v926 = vld [vmem:[%s911 + $0x100] sm:$0xff]
      %v927 = vld [vmem:[%s911 + $0x110] sm:$0xff]
      %v928 = vld [vmem:[%s911 + $0x140] sm:$0xff]
      %v929 = vld [vmem:[%s911 + $0x150] sm:$0xff]
      %v930 = vld [vmem:[%s911 + $0x160] sm:$0xff]
      %v931 = vld [vmem:[%s911 + $0x170] sm:$0xff]
      %v932 = vld [vmem:[%s911 + $0x180] sm:$0xff]
      %v933 = vld [vmem:[%s911 + $0x190] sm:$0xff]
      %v934 = vld [vmem:[%s911 + $0x1a0] sm:$0xff]
      %v935 = vld [vmem:[%s911 + $0x1b0] sm:$0xff]
      %v936 = vld [vmem:[%s911 + $0x1e0] sm:$0xff]
      %v937 = vld [vmem:[%s911 + $0x1f0] sm:$0xff]
      %v938 = vld [vmem:[%s911 + $0x200] sm:$0xff]
      %v939 = vld [vmem:[%s911 + $0x210] sm:$0xff]
      %v940 = vld [vmem:[%s911 + $0x220] sm:$0xff]
      %v941 = vld [vmem:[%s911 + $0x230] sm:$0xff]
      %v942 = vld [vmem:[%s911 + $0x240] sm:$0xff]
      %v943 = vld [vmem:[%s911 + $0x250] sm:$0xff]
      %v944 = vpack.c.bf16 %v913, %v912
      %v945 = vpack.c.bf16 %v915, %v914
      %v946 = vpack.c.bf16 %v917, %v916
      %v947 = vpack.c.bf16 %v919, %v918
      %v948 = vpack.c.bf16 %v921, %v920
      %v949 = vpack.c.bf16 %v923, %v922
      %v950 = vpack.c.bf16 %v925, %v924
      %v951 = vpack.c.bf16 %v927, %v926
      %v952 = vpack.c.bf16 %v929, %v928
      %v953 = vpack.c.bf16 %v931, %v930
      %v954 = vpack.c.bf16 %v933, %v932
      %v955 = vpack.c.bf16 %v935, %v934
      %v956 = vpack.c.bf16 %v937, %v936
      %v957 = vpack.c.bf16 %v939, %v938
      %v958 = vpack.c.bf16 %v941, %v940
      %v959 = vpack.c.bf16 %v943, %v942
      %v960 = vld [vmem:[%s911 + $0x1] sm:$0xff]
      %v961 = vld [vmem:[%s911 + $0x11] sm:$0xff]
      %v962 = vld [vmem:[%s911 + $0x21] sm:$0xff]
      %v963 = vld [vmem:[%s911 + $0x31] sm:$0xff]
      %v964 = vld [vmem:[%s911 + $0x41] sm:$0xff]
      %v965 = vld [vmem:[%s911 + $0x51] sm:$0xff]
      %v966 = vld [vmem:[%s911 + $0x61] sm:$0xff]
      %v967 = vld [vmem:[%s911 + $0x71] sm:$0xff]
      %v968 = vld [vmem:[%s911 + $0xa1] sm:$0xff]
      %v969 = vld [vmem:[%s911 + $0xb1] sm:$0xff]
      %v970 = vld [vmem:[%s911 + $0xc1] sm:$0xff]
      %v971 = vld [vmem:[%s911 + $0xd1] sm:$0xff]
      %v972 = vld [vmem:[%s911 + $0xe1] sm:$0xff]
      %v973 = vld [vmem:[%s911 + $0xf1] sm:$0xff]
      %v974 = vld [vmem:[%s911 + $0x101] sm:$0xff]
      %v975 = vld [vmem:[%s911 + $0x111] sm:$0xff]
      %v976 = vld [vmem:[%s911 + $0x141] sm:$0xff]
      %v977 = vld [vmem:[%s911 + $0x151] sm:$0xff]
      %v978 = vld [vmem:[%s911 + $0x161] sm:$0xff]
      %v979 = vld [vmem:[%s911 + $0x171] sm:$0xff]
      %v980 = vld [vmem:[%s911 + $0x181] sm:$0xff]
      %v981 = vld [vmem:[%s911 + $0x191] sm:$0xff]
      %v982 = vld [vmem:[%s911 + $0x1a1] sm:$0xff]
      %v983 = vld [vmem:[%s911 + $0x1b1] sm:$0xff]
      %v984 = vld [vmem:[%s911 + $0x1e1] sm:$0xff]
      %v985 = vld [vmem:[%s911 + $0x1f1] sm:$0xff]
      %v986 = vld [vmem:[%s911 + $0x201] sm:$0xff]
      %v987 = vld [vmem:[%s911 + $0x211] sm:$0xff]
      %v988 = vld [vmem:[%s911 + $0x221] sm:$0xff]
      %v989 = vld [vmem:[%s911 + $0x231] sm:$0xff]
      %v990 = vld [vmem:[%s911 + $0x241] sm:$0xff]
      %v991 = vld [vmem:[%s911 + $0x251] sm:$0xff]
      %v992 = vpack.c.bf16 %v961, %v960
      %v993 = vpack.c.bf16 %v963, %v962
      %v994 = vpack.c.bf16 %v965, %v964
      %v995 = vpack.c.bf16 %v967, %v966
      %v996 = vpack.c.bf16 %v969, %v968
      %v997 = vpack.c.bf16 %v971, %v970
      %v998 = vpack.c.bf16 %v973, %v972
      %v999 = vpack.c.bf16 %v975, %v974
      %v1000 = vpack.c.bf16 %v977, %v976
      %v1001 = vpack.c.bf16 %v979, %v978
      %v1002 = vpack.c.bf16 %v981, %v980
      %v1003 = vpack.c.bf16 %v983, %v982
      %v1004 = vpack.c.bf16 %v985, %v984
      %v1005 = vpack.c.bf16 %v987, %v986
      %v1006 = vpack.c.bf16 %v989, %v988
      %v1007 = vpack.c.bf16 %v991, %v990
      %v1008 = vld [vmem:[%s911 + $0x2] sm:$0xff]
      %v1009 = vld [vmem:[%s911 + $0x12] sm:$0xff]
      %v1010 = vld [vmem:[%s911 + $0x22] sm:$0xff]
      %v1011 = vld [vmem:[%s911 + $0x32] sm:$0xff]
      %v1012 = vld [vmem:[%s911 + $0x42] sm:$0xff]
      %v1013 = vld [vmem:[%s911 + $0x52] sm:$0xff]
      %v1014 = vld [vmem:[%s911 + $0x62] sm:$0xff]
      %v1015 = vld [vmem:[%s911 + $0x72] sm:$0xff]
      %v1016 = vld [vmem:[%s911 + $0xa2] sm:$0xff]
      %v1017 = vld [vmem:[%s911 + $0xb2] sm:$0xff]
      %v1018 = vld [vmem:[%s911 + $0xc2] sm:$0xff]
      %v1019 = vld [vmem:[%s911 + $0xd2] sm:$0xff]
      %v1020 = vld [vmem:[%s911 + $0xe2] sm:$0xff]
      %v1021 = vld [vmem:[%s911 + $0xf2] sm:$0xff]
      %v1022 = vld [vmem:[%s911 + $0x102] sm:$0xff]
      %v1023 = vld [vmem:[%s911 + $0x112] sm:$0xff]
      %v1024 = vld [vmem:[%s911 + $0x142] sm:$0xff]
      %v1025 = vld [vmem:[%s911 + $0x152] sm:$0xff]
      %v1026 = vld [vmem:[%s911 + $0x162] sm:$0xff]
      %v1027 = vld [vmem:[%s911 + $0x172] sm:$0xff]
      %v1028 = vld [vmem:[%s911 + $0x182] sm:$0xff]
      %v1029 = vld [vmem:[%s911 + $0x192] sm:$0xff]
      %v1030 = vld [vmem:[%s911 + $0x1a2] sm:$0xff]
      %v1031 = vld [vmem:[%s911 + $0x1b2] sm:$0xff]
      %v1032 = vld [vmem:[%s911 + $0x1e2] sm:$0xff]
      %v1033 = vld [vmem:[%s911 + $0x1f2] sm:$0xff]
      %v1034 = vld [vmem:[%s911 + $0x202] sm:$0xff]
      %v1035 = vld [vmem:[%s911 + $0x212] sm:$0xff]
      %v1036 = vld [vmem:[%s911 + $0x222] sm:$0xff]
      %v1037 = vld [vmem:[%s911 + $0x232] sm:$0xff]
      %v1038 = vld [vmem:[%s911 + $0x242] sm:$0xff]
      %v1039 = vld [vmem:[%s911 + $0x252] sm:$0xff]
      %v1040 = vpack.c.bf16 %v1009, %v1008
      %v1041 = vpack.c.bf16 %v1011, %v1010
      %v1042 = vpack.c.bf16 %v1013, %v1012
      %v1043 = vpack.c.bf16 %v1015, %v1014
      %v1044 = vpack.c.bf16 %v1017, %v1016
      %v1045 = vpack.c.bf16 %v1019, %v1018
      %v1046 = vpack.c.bf16 %v1021, %v1020
      %v1047 = vpack.c.bf16 %v1023, %v1022
      %v1048 = vpack.c.bf16 %v1025, %v1024
      %v1049 = vpack.c.bf16 %v1027, %v1026
      %v1050 = vpack.c.bf16 %v1029, %v1028
      %v1051 = vpack.c.bf16 %v1031, %v1030
      %v1052 = vpack.c.bf16 %v1033, %v1032
      %v1053 = vpack.c.bf16 %v1035, %v1034
      %v1054 = vpack.c.bf16 %v1037, %v1036
      %v1055 = vpack.c.bf16 %v1039, %v1038
      %s1056 = scalar_lea.vmem [#allocation2], 32
      %v1057 = vld [vmem:[%s1056] sm:$0xff]
      %v1058 = vld [vmem:[%s1056 + $0x10] sm:$0xff]
      %v1059 = vld [vmem:[%s1056 + $0x20] sm:$0xff]
      %v1060 = vld [vmem:[%s1056 + $0x30] sm:$0xff]
      %v1061 = vld [vmem:[%s1056 + $0x40] sm:$0xff]
      %v1062 = vld [vmem:[%s1056 + $0x50] sm:$0xff]
      %v1063 = vld [vmem:[%s1056 + $0x60] sm:$0xff]
      %v1064 = vld [vmem:[%s1056 + $0x70] sm:$0xff]
      %v1065 = vld [vmem:[%s1056 + $0xa0] sm:$0xff]
      %v1066 = vld [vmem:[%s1056 + $0xb0] sm:$0xff]
      %v1067 = vld [vmem:[%s1056 + $0xc0] sm:$0xff]
      %v1068 = vld [vmem:[%s1056 + $0xd0] sm:$0xff]
      %v1069 = vld [vmem:[%s1056 + $0xe0] sm:$0xff]
      %v1070 = vld [vmem:[%s1056 + $0xf0] sm:$0xff]
      %v1071 = vld [vmem:[%s1056 + $0x100] sm:$0xff]
      %v1072 = vld [vmem:[%s1056 + $0x110] sm:$0xff]
      %v1073 = vld [vmem:[%s1056 + $0x140] sm:$0xff]
      %v1074 = vld [vmem:[%s1056 + $0x150] sm:$0xff]
      %v1075 = vld [vmem:[%s1056 + $0x160] sm:$0xff]
      %v1076 = vld [vmem:[%s1056 + $0x170] sm:$0xff]
      %v1077 = vld [vmem:[%s1056 + $0x180] sm:$0xff]
      %v1078 = vld [vmem:[%s1056 + $0x190] sm:$0xff]
      %v1079 = vld [vmem:[%s1056 + $0x1a0] sm:$0xff]
      %v1080 = vld [vmem:[%s1056 + $0x1b0] sm:$0xff]
      %v1081 = vld [vmem:[%s1056 + $0x1e0] sm:$0xff]
      %v1082 = vld [vmem:[%s1056 + $0x1f0] sm:$0xff]
      %v1083 = vld [vmem:[%s1056 + $0x200] sm:$0xff]
      %v1084 = vld [vmem:[%s1056 + $0x210] sm:$0xff]
      %v1085 = vld [vmem:[%s1056 + $0x220] sm:$0xff]
      %v1086 = vld [vmem:[%s1056 + $0x230] sm:$0xff]
      %v1087 = vld [vmem:[%s1056 + $0x240] sm:$0xff]
      %v1088 = vld [vmem:[%s1056 + $0x250] sm:$0xff]
      %v1089 = vpack.c.bf16 %v1058, %v1057
      %v1090 = vpack.c.bf16 %v1060, %v1059
      %v1091 = vpack.c.bf16 %v1062, %v1061
      %v1092 = vpack.c.bf16 %v1064, %v1063
      %v1093 = vpack.c.bf16 %v1066, %v1065
      %v1094 = vpack.c.bf16 %v1068, %v1067
      %v1095 = vpack.c.bf16 %v1070, %v1069
      %v1096 = vpack.c.bf16 %v1072, %v1071
      %v1097 = vpack.c.bf16 %v1074, %v1073
      %v1098 = vpack.c.bf16 %v1076, %v1075
      %v1099 = vpack.c.bf16 %v1078, %v1077
      %v1100 = vpack.c.bf16 %v1080, %v1079
      %v1101 = vpack.c.bf16 %v1082, %v1081
      %v1102 = vpack.c.bf16 %v1084, %v1083
      %v1103 = vpack.c.bf16 %v1086, %v1085
      %v1104 = vpack.c.bf16 %v1088, %v1087
      %v1105 = vld [vmem:[%s1056 + $0x1] sm:$0xff]
      %v1106 = vld [vmem:[%s1056 + $0x11] sm:$0xff]
      %v1107 = vld [vmem:[%s1056 + $0x21] sm:$0xff]
      %v1108 = vld [vmem:[%s1056 + $0x31] sm:$0xff]
      %v1109 = vld [vmem:[%s1056 + $0x41] sm:$0xff]
      %v1110 = vld [vmem:[%s1056 + $0x51] sm:$0xff]
      %v1111 = vld [vmem:[%s1056 + $0x61] sm:$0xff]
      %v1112 = vld [vmem:[%s1056 + $0x71] sm:$0xff]
      %v1113 = vld [vmem:[%s1056 + $0xa1] sm:$0xff]
      %v1114 = vld [vmem:[%s1056 + $0xb1] sm:$0xff]
      %v1115 = vld [vmem:[%s1056 + $0xc1] sm:$0xff]
      %v1116 = vld [vmem:[%s1056 + $0xd1] sm:$0xff]
      %v1117 = vld [vmem:[%s1056 + $0xe1] sm:$0xff]
      %v1118 = vld [vmem:[%s1056 + $0xf1] sm:$0xff]
      %v1119 = vld [vmem:[%s1056 + $0x101] sm:$0xff]
      %v1120 = vld [vmem:[%s1056 + $0x111] sm:$0xff]
      %v1121 = vld [vmem:[%s1056 + $0x141] sm:$0xff]
      %v1122 = vld [vmem:[%s1056 + $0x151] sm:$0xff]
      %v1123 = vld [vmem:[%s1056 + $0x161] sm:$0xff]
      %v1124 = vld [vmem:[%s1056 + $0x171] sm:$0xff]
      %v1125 = vld [vmem:[%s1056 + $0x181] sm:$0xff]
      %v1126 = vld [vmem:[%s1056 + $0x191] sm:$0xff]
      %v1127 = vld [vmem:[%s1056 + $0x1a1] sm:$0xff]
      %v1128 = vld [vmem:[%s1056 + $0x1b1] sm:$0xff]
      %v1129 = vld [vmem:[%s1056 + $0x1e1] sm:$0xff]
      %v1130 = vld [vmem:[%s1056 + $0x1f1] sm:$0xff]
      %v1131 = vld [vmem:[%s1056 + $0x201] sm:$0xff]
      %v1132 = vld [vmem:[%s1056 + $0x211] sm:$0xff]
      %v1133 = vld [vmem:[%s1056 + $0x221] sm:$0xff]
      %v1134 = vld [vmem:[%s1056 + $0x231] sm:$0xff]
      %v1135 = vld [vmem:[%s1056 + $0x241] sm:$0xff]
      %v1136 = vld [vmem:[%s1056 + $0x251] sm:$0xff]
      %v1137 = vpack.c.bf16 %v1106, %v1105
      %v1138 = vpack.c.bf16 %v1108, %v1107
      %v1139 = vpack.c.bf16 %v1110, %v1109
      %v1140 = vpack.c.bf16 %v1112, %v1111
      %v1141 = vpack.c.bf16 %v1114, %v1113
      %v1142 = vpack.c.bf16 %v1116, %v1115
      %v1143 = vpack.c.bf16 %v1118, %v1117
      %v1144 = vpack.c.bf16 %v1120, %v1119
      %v1145 = vpack.c.bf16 %v1122, %v1121
      %v1146 = vpack.c.bf16 %v1124, %v1123
      %v1147 = vpack.c.bf16 %v1126, %v1125
      %v1148 = vpack.c.bf16 %v1128, %v1127
      %v1149 = vpack.c.bf16 %v1130, %v1129
      %v1150 = vpack.c.bf16 %v1132, %v1131
      %v1151 = vpack.c.bf16 %v1134, %v1133
      %v1152 = vpack.c.bf16 %v1136, %v1135
      %v1153 = vld [vmem:[%s1056 + $0x2] sm:$0xff]
      %v1154 = vld [vmem:[%s1056 + $0x12] sm:$0xff]
      %v1155 = vld [vmem:[%s1056 + $0x22] sm:$0xff]
      %v1156 = vld [vmem:[%s1056 + $0x32] sm:$0xff]
      %v1157 = vld [vmem:[%s1056 + $0x42] sm:$0xff]
      %v1158 = vld [vmem:[%s1056 + $0x52] sm:$0xff]
      %v1159 = vld [vmem:[%s1056 + $0x62] sm:$0xff]
      %v1160 = vld [vmem:[%s1056 + $0x72] sm:$0xff]
      %v1161 = vld [vmem:[%s1056 + $0xa2] sm:$0xff]
      %v1162 = vld [vmem:[%s1056 + $0xb2] sm:$0xff]
      %v1163 = vld [vmem:[%s1056 + $0xc2] sm:$0xff]
      %v1164 = vld [vmem:[%s1056 + $0xd2] sm:$0xff]
      %v1165 = vld [vmem:[%s1056 + $0xe2] sm:$0xff]
      %v1166 = vld [vmem:[%s1056 + $0xf2] sm:$0xff]
      %v1167 = vld [vmem:[%s1056 + $0x102] sm:$0xff]
      %v1168 = vld [vmem:[%s1056 + $0x112] sm:$0xff]
      %v1169 = vld [vmem:[%s1056 + $0x142] sm:$0xff]
      %v1170 = vld [vmem:[%s1056 + $0x152] sm:$0xff]
      %v1171 = vld [vmem:[%s1056 + $0x162] sm:$0xff]
      %v1172 = vld [vmem:[%s1056 + $0x172] sm:$0xff]
      %v1173 = vld [vmem:[%s1056 + $0x182] sm:$0xff]
      %v1174 = vld [vmem:[%s1056 + $0x192] sm:$0xff]
      %v1175 = vld [vmem:[%s1056 + $0x1a2] sm:$0xff]
      %v1176 = vld [vmem:[%s1056 + $0x1b2] sm:$0xff]
      %v1177 = vld [vmem:[%s1056 + $0x1e2] sm:$0xff]
      %v1178 = vld [vmem:[%s1056 + $0x1f2] sm:$0xff]
      %v1179 = vld [vmem:[%s1056 + $0x202] sm:$0xff]
      %v1180 = vld [vmem:[%s1056 + $0x212] sm:$0xff]
      %v1181 = vld [vmem:[%s1056 + $0x222] sm:$0xff]
      %v1182 = vld [vmem:[%s1056 + $0x232] sm:$0xff]
      %v1183 = vld [vmem:[%s1056 + $0x242] sm:$0xff]
      %v1184 = vld [vmem:[%s1056 + $0x252] sm:$0xff]
      %v1185 = vpack.c.bf16 %v1154, %v1153
      %v1186 = vpack.c.bf16 %v1156, %v1155
      %v1187 = vpack.c.bf16 %v1158, %v1157
      %v1188 = vpack.c.bf16 %v1160, %v1159
      %v1189 = vpack.c.bf16 %v1162, %v1161
      %v1190 = vpack.c.bf16 %v1164, %v1163
      %v1191 = vpack.c.bf16 %v1166, %v1165
      %v1192 = vpack.c.bf16 %v1168, %v1167
      %v1193 = vpack.c.bf16 %v1170, %v1169
      %v1194 = vpack.c.bf16 %v1172, %v1171
      %v1195 = vpack.c.bf16 %v1174, %v1173
      %v1196 = vpack.c.bf16 %v1176, %v1175
      %v1197 = vpack.c.bf16 %v1178, %v1177
      %v1198 = vpack.c.bf16 %v1180, %v1179
      %v1199 = vpack.c.bf16 %v1182, %v1181
      %v1200 = vpack.c.bf16 %v1184, %v1183
      %1217 = vrot.lane.b32.xlu0 %v847, 32
      %v1218 = vpop.permute.xlu0 %1217
      %1219 = vrot.lane.b32.xlu0 %v848, 32
      %v1220 = vpop.permute.xlu0 %1219
      %1221 = vrot.lane.b32.xlu0 %v849, 32
      %v1222 = vpop.permute.xlu0 %1221
      %1223 = vrot.lane.b32.xlu0 %v850, 32
      %v1224 = vpop.permute.xlu0 %1223
      %1225 = vrot.lane.b32.xlu0 %v851, 32
      %v1226 = vpop.permute.xlu0 %1225
      %1227 = vrot.lane.b32.xlu0 %v852, 32
      %v1228 = vpop.permute.xlu0 %1227
      %1229 = vrot.lane.b32.xlu0 %v853, 32
      %v1230 = vpop.permute.xlu0 %1229
      %1231 = vrot.lane.b32.xlu0 %v854, 32
      %v1232 = vpop.permute.xlu0 %1231
      %1233 = vrot.lane.b32.xlu0 %v855, 32
      %v1234 = vpop.permute.xlu0 %1233
      %1235 = vrot.lane.b32.xlu0 %v856, 32
      %v1236 = vpop.permute.xlu0 %1235
      %1237 = vrot.lane.b32.xlu0 %v857, 32
      %v1238 = vpop.permute.xlu0 %1237
      %1239 = vrot.lane.b32.xlu0 %v858, 32
      %v1240 = vpop.permute.xlu0 %1239
      %1241 = vrot.lane.b32.xlu0 %v859, 32
      %v1242 = vpop.permute.xlu0 %1241
      %1243 = vrot.lane.b32.xlu0 %v860, 32
      %v1244 = vpop.permute.xlu0 %1243
      %1245 = vrot.lane.b32.xlu0 %v861, 32
      %v1246 = vpop.permute.xlu0 %1245
      %1247 = vrot.lane.b32.xlu0 %v862, 32
      %v1248 = vpop.permute.xlu0 %1247
      %1265 = vrot.lane.b32.xlu0 %v895, 64
      %v1266 = vpop.permute.xlu0 %1265
      %1267 = vrot.lane.b32.xlu0 %v896, 64
      %v1268 = vpop.permute.xlu0 %1267
      %1269 = vrot.lane.b32.xlu0 %v897, 64
      %v1270 = vpop.permute.xlu0 %1269
      %1271 = vrot.lane.b32.xlu0 %v898, 64
      %v1272 = vpop.permute.xlu0 %1271
      %1273 = vrot.lane.b32.xlu0 %v899, 64
      %v1274 = vpop.permute.xlu0 %1273
      %1275 = vrot.lane.b32.xlu0 %v900, 64
      %v1276 = vpop.permute.xlu0 %1275
      %1277 = vrot.lane.b32.xlu0 %v901, 64
      %v1278 = vpop.permute.xlu0 %1277
      %1279 = vrot.lane.b32.xlu0 %v902, 64
      %v1280 = vpop.permute.xlu0 %1279
      %1281 = vrot.lane.b32.xlu0 %v903, 64
      %v1282 = vpop.permute.xlu0 %1281
      %1283 = vrot.lane.b32.xlu0 %v904, 64
      %v1284 = vpop.permute.xlu0 %1283
      %1285 = vrot.lane.b32.xlu0 %v905, 64
      %v1286 = vpop.permute.xlu0 %1285
      %1287 = vrot.lane.b32.xlu0 %v906, 64
      %v1288 = vpop.permute.xlu0 %1287
      %1289 = vrot.lane.b32.xlu0 %v907, 64
      %v1290 = vpop.permute.xlu0 %1289
      %1291 = vrot.lane.b32.xlu0 %v908, 64
      %v1292 = vpop.permute.xlu0 %1291
      %1293 = vrot.lane.b32.xlu0 %v909, 64
      %v1294 = vpop.permute.xlu0 %1293
      %1295 = vrot.lane.b32.xlu0 %v910, 64
      %v1296 = vpop.permute.xlu0 %1295
      %1313 = vrot.lane.b32.xlu0 %v944, 96
      %v1314 = vpop.permute.xlu0 %1313
      %1315 = vrot.lane.b32.xlu0 %v945, 96
      %v1316 = vpop.permute.xlu0 %1315
      %1317 = vrot.lane.b32.xlu0 %v946, 96
      %v1318 = vpop.permute.xlu0 %1317
      %1319 = vrot.lane.b32.xlu0 %v947, 96
      %v1320 = vpop.permute.xlu0 %1319
      %1321 = vrot.lane.b32.xlu0 %v948, 96
      %v1322 = vpop.permute.xlu0 %1321
      %1323 = vrot.lane.b32.xlu0 %v949, 96
      %v1324 = vpop.permute.xlu0 %1323
      %1325 = vrot.lane.b32.xlu0 %v950, 96
      %v1326 = vpop.permute.xlu0 %1325
      %1327 = vrot.lane.b32.xlu0 %v951, 96
      %v1328 = vpop.permute.xlu0 %1327
      %1329 = vrot.lane.b32.xlu0 %v952, 96
      %v1330 = vpop.permute.xlu0 %1329
      %1331 = vrot.lane.b32.xlu0 %v953, 96
      %v1332 = vpop.permute.xlu0 %1331
      %1333 = vrot.lane.b32.xlu0 %v954, 96
      %v1334 = vpop.permute.xlu0 %1333
      %1335 = vrot.lane.b32.xlu0 %v955, 96
      %v1336 = vpop.permute.xlu0 %1335
      %1337 = vrot.lane.b32.xlu0 %v956, 96
      %v1338 = vpop.permute.xlu0 %1337
      %1339 = vrot.lane.b32.xlu0 %v957, 96
      %v1340 = vpop.permute.xlu0 %1339
      %1341 = vrot.lane.b32.xlu0 %v958, 96
      %v1342 = vpop.permute.xlu0 %1341
      %1343 = vrot.lane.b32.xlu0 %v959, 96
      %v1344 = vpop.permute.xlu0 %1343
      %1361 = vrot.lane.b32.xlu0 %v1040, 32
      %v1362 = vpop.permute.xlu0 %1361
      %1363 = vrot.lane.b32.xlu0 %v1041, 32
      %v1364 = vpop.permute.xlu0 %1363
      %1365 = vrot.lane.b32.xlu0 %v1042, 32
      %v1366 = vpop.permute.xlu0 %1365
      %1367 = vrot.lane.b32.xlu0 %v1043, 32
      %v1368 = vpop.permute.xlu0 %1367
      %1369 = vrot.lane.b32.xlu0 %v1044, 32
      %v1370 = vpop.permute.xlu0 %1369
      %1371 = vrot.lane.b32.xlu0 %v1045, 32
      %v1372 = vpop.permute.xlu0 %1371
      %1373 = vrot.lane.b32.xlu0 %v1046, 32
      %v1374 = vpop.permute.xlu0 %1373
      %1375 = vrot.lane.b32.xlu0 %v1047, 32
      %v1376 = vpop.permute.xlu0 %1375
      %1377 = vrot.lane.b32.xlu0 %v1048, 32
      %v1378 = vpop.permute.xlu0 %1377
      %1379 = vrot.lane.b32.xlu0 %v1049, 32
      %v1380 = vpop.permute.xlu0 %1379
      %1381 = vrot.lane.b32.xlu0 %v1050, 32
      %v1382 = vpop.permute.xlu0 %1381
      %1383 = vrot.lane.b32.xlu0 %v1051, 32
      %v1384 = vpop.permute.xlu0 %1383
      %1385 = vrot.lane.b32.xlu0 %v1052, 32
      %v1386 = vpop.permute.xlu0 %1385
      %1387 = vrot.lane.b32.xlu0 %v1053, 32
      %v1388 = vpop.permute.xlu0 %1387
      %1389 = vrot.lane.b32.xlu0 %v1054, 32
      %v1390 = vpop.permute.xlu0 %1389
      %1391 = vrot.lane.b32.xlu0 %v1055, 32
      %v1392 = vpop.permute.xlu0 %1391
      %1409 = vrot.lane.b32.xlu0 %v1089, 64
      %v1410 = vpop.permute.xlu0 %1409
      %1411 = vrot.lane.b32.xlu0 %v1090, 64
      %v1412 = vpop.permute.xlu0 %1411
      %1413 = vrot.lane.b32.xlu0 %v1091, 64
      %v1414 = vpop.permute.xlu0 %1413
      %1415 = vrot.lane.b32.xlu0 %v1092, 64
      %v1416 = vpop.permute.xlu0 %1415
      %1417 = vrot.lane.b32.xlu0 %v1093, 64
      %v1418 = vpop.permute.xlu0 %1417
      %1419 = vrot.lane.b32.xlu0 %v1094, 64
      %v1420 = vpop.permute.xlu0 %1419
      %1421 = vrot.lane.b32.xlu0 %v1095, 64
      %v1422 = vpop.permute.xlu0 %1421
      %1423 = vrot.lane.b32.xlu0 %v1096, 64
      %v1424 = vpop.permute.xlu0 %1423
      %1425 = vrot.lane.b32.xlu0 %v1097, 64
      %v1426 = vpop.permute.xlu0 %1425
      %1427 = vrot.lane.b32.xlu0 %v1098, 64
      %v1428 = vpop.permute.xlu0 %1427
      %1429 = vrot.lane.b32.xlu0 %v1099, 64
      %v1430 = vpop.permute.xlu0 %1429
      %1431 = vrot.lane.b32.xlu0 %v1100, 64
      %v1432 = vpop.permute.xlu0 %1431
      %1433 = vrot.lane.b32.xlu0 %v1101, 64
      %v1434 = vpop.permute.xlu0 %1433
      %1435 = vrot.lane.b32.xlu0 %v1102, 64
      %v1436 = vpop.permute.xlu0 %1435
      %1437 = vrot.lane.b32.xlu0 %v1103, 64
      %v1438 = vpop.permute.xlu0 %1437
      %1439 = vrot.lane.b32.xlu0 %v1104, 64
      %v1440 = vpop.permute.xlu0 %1439
      %1457 = vrot.lane.b32.xlu0 %v1137, 96
      %v1458 = vpop.permute.xlu0 %1457
      %1459 = vrot.lane.b32.xlu0 %v1138, 96
      %v1460 = vpop.permute.xlu0 %1459
      %1461 = vrot.lane.b32.xlu0 %v1139, 96
      %v1462 = vpop.permute.xlu0 %1461
      %1463 = vrot.lane.b32.xlu0 %v1140, 96
      %v1464 = vpop.permute.xlu0 %1463
      %1465 = vrot.lane.b32.xlu0 %v1141, 96
      %v1466 = vpop.permute.xlu0 %1465
      %1467 = vrot.lane.b32.xlu0 %v1142, 96
      %v1468 = vpop.permute.xlu0 %1467
      %1469 = vrot.lane.b32.xlu0 %v1143, 96
      %v1470 = vpop.permute.xlu0 %1469
      %1471 = vrot.lane.b32.xlu0 %v1144, 96
      %v1472 = vpop.permute.xlu0 %1471
      %1473 = vrot.lane.b32.xlu0 %v1145, 96
      %v1474 = vpop.permute.xlu0 %1473
      %1475 = vrot.lane.b32.xlu0 %v1146, 96
      %v1476 = vpop.permute.xlu0 %1475
      %1477 = vrot.lane.b32.xlu0 %v1147, 96
      %v1478 = vpop.permute.xlu0 %1477
      %1479 = vrot.lane.b32.xlu0 %v1148, 96
      %v1480 = vpop.permute.xlu0 %1479
      %1481 = vrot.lane.b32.xlu0 %v1149, 96
      %v1482 = vpop.permute.xlu0 %1481
      %1483 = vrot.lane.b32.xlu0 %v1150, 96
      %v1484 = vpop.permute.xlu0 %1483
      %1485 = vrot.lane.b32.xlu0 %v1151, 96
      %v1486 = vpop.permute.xlu0 %1485
      %1487 = vrot.lane.b32.xlu0 %v1152, 96
      %v1488 = vpop.permute.xlu0 %1487
      %v1491 = vsel %vm520, %v799, %v1218
      %v1494 = vsel %vm520, %v800, %v1220
      %v1497 = vsel %vm520, %v801, %v1222
      %v1500 = vsel %vm520, %v802, %v1224
      %v1503 = vsel %vm520, %v803, %v1226
      %v1506 = vsel %vm520, %v804, %v1228
      %v1509 = vsel %vm520, %v805, %v1230
      %v1512 = vsel %vm520, %v806, %v1232
      %v1515 = vsel %vm520, %v807, %v1234
      %v1518 = vsel %vm520, %v808, %v1236
      %v1521 = vsel %vm520, %v809, %v1238
      %v1524 = vsel %vm520, %v810, %v1240
      %v1527 = vsel %vm520, %v811, %v1242
      %v1530 = vsel %vm520, %v812, %v1244
      %v1533 = vsel %vm520, %v813, %v1246
      %v1536 = vsel %vm520, %v814, %v1248
      %vm1537 = vcmask 523264
      %v1539 = vsel %vm1537, %v1491, %v1266
      %v1541 = vsel %vm1537, %v1494, %v1268
      %v1543 = vsel %vm1537, %v1497, %v1270
      %v1545 = vsel %vm1537, %v1500, %v1272
      %v1547 = vsel %vm1537, %v1503, %v1274
      %v1549 = vsel %vm1537, %v1506, %v1276
      %v1551 = vsel %vm1537, %v1509, %v1278
      %v1553 = vsel %vm1537, %v1512, %v1280
      %v1555 = vsel %vm1537, %v1515, %v1282
      %v1557 = vsel %vm1537, %v1518, %v1284
      %v1559 = vsel %vm1537, %v1521, %v1286
      %v1561 = vsel %vm1537, %v1524, %v1288
      %v1563 = vsel %vm1537, %v1527, %v1290
      %v1565 = vsel %vm1537, %v1530, %v1292
      %v1567 = vsel %vm1537, %v1533, %v1294
      %v1569 = vsel %vm1537, %v1536, %v1296
      %vm1570 = vcmask 785408
      %v1572 = vsel %vm1570, %v1539, %v1314
      %v1575 = vsel %vm1570, %v1541, %v1316
      %v1578 = vsel %vm1570, %v1543, %v1318
      %v1581 = vsel %vm1570, %v1545, %v1320
      %v1584 = vsel %vm1570, %v1547, %v1322
      %v1587 = vsel %vm1570, %v1549, %v1324
      %v1590 = vsel %vm1570, %v1551, %v1326
      %v1593 = vsel %vm1570, %v1553, %v1328
      %v1596 = vsel %vm1570, %v1555, %v1330
      %v1599 = vsel %vm1570, %v1557, %v1332
      %v1602 = vsel %vm1570, %v1559, %v1334
      %v1605 = vsel %vm1570, %v1561, %v1336
      %v1608 = vsel %vm1570, %v1563, %v1338
      %v1611 = vsel %vm1570, %v1565, %v1340
      %v1614 = vsel %vm1570, %v1567, %v1342
      %v1617 = vsel %vm1570, %v1569, %v1344
      %v1621 = vsel %vm520, %v992, %v1362
      %v1624 = vsel %vm520, %v993, %v1364
      %v1627 = vsel %vm520, %v994, %v1366
      %v1630 = vsel %vm520, %v995, %v1368
      %v1633 = vsel %vm520, %v996, %v1370
      %v1636 = vsel %vm520, %v997, %v1372
      %v1639 = vsel %vm520, %v998, %v1374
      %v1642 = vsel %vm520, %v999, %v1376
      %v1645 = vsel %vm520, %v1000, %v1378
      %v1648 = vsel %vm520, %v1001, %v1380
      %v1651 = vsel %vm520, %v1002, %v1382
      %v1654 = vsel %vm520, %v1003, %v1384
      %v1657 = vsel %vm520, %v1004, %v1386
      %v1660 = vsel %vm520, %v1005, %v1388
      %v1663 = vsel %vm520, %v1006, %v1390
      %v1666 = vsel %vm520, %v1007, %v1392
      %v1668 = vsel %vm1537, %v1621, %v1410
      %v1670 = vsel %vm1537, %v1624, %v1412
      %v1672 = vsel %vm1537, %v1627, %v1414
      %v1674 = vsel %vm1537, %v1630, %v1416
      %v1676 = vsel %vm1537, %v1633, %v1418
      %v1678 = vsel %vm1537, %v1636, %v1420
      %v1680 = vsel %vm1537, %v1639, %v1422
      %v1682 = vsel %vm1537, %v1642, %v1424
      %v1684 = vsel %vm1537, %v1645, %v1426
      %v1686 = vsel %vm1537, %v1648, %v1428
      %v1688 = vsel %vm1537, %v1651, %v1430
      %v1690 = vsel %vm1537, %v1654, %v1432
      %v1692 = vsel %vm1537, %v1657, %v1434
      %v1694 = vsel %vm1537, %v1660, %v1436
      %v1696 = vsel %vm1537, %v1663, %v1438
      %v1698 = vsel %vm1537, %v1666, %v1440
      %v1700 = vsel %vm1570, %v1668, %v1458
      %v1703 = vsel %vm1570, %v1670, %v1460
      %v1706 = vsel %vm1570, %v1672, %v1462
      %v1709 = vsel %vm1570, %v1674, %v1464
      %v1712 = vsel %vm1570, %v1676, %v1466
      %v1715 = vsel %vm1570, %v1678, %v1468
      %v1718 = vsel %vm1570, %v1680, %v1470
      %v1721 = vsel %vm1570, %v1682, %v1472
      %v1724 = vsel %vm1570, %v1684, %v1474
      %v1727 = vsel %vm1570, %v1686, %v1476
      %v1730 = vsel %vm1570, %v1688, %v1478
      %v1733 = vsel %vm1570, %v1690, %v1480
      %v1736 = vsel %vm1570, %v1692, %v1482
      %v1739 = vsel %vm1570, %v1694, %v1484
      %v1742 = vsel %vm1570, %v1696, %v1486
      %v1745 = vsel %vm1570, %v1698, %v1488
      %v1747 = vld [vmem:[%s1] sm:$0xf]
      %v1748 = vld [vmem:[%s1 + $0x4] sm:$0xf]
      %v1749 = vld [vmem:[%s1 + $0x8] sm:$0xf]
      %v1750 = vld [vmem:[%s1 + $0xc] sm:$0xf]
      %v1751 = vld [vmem:[%s1 + $0x10] sm:$0xf]
      %v1752 = vld [vmem:[%s1 + $0x14] sm:$0xf]
      %v1753 = vld [vmem:[%s1 + $0x18] sm:$0xf]
      %v1754 = vld [vmem:[%s1 + $0x1c] sm:$0xf]
      %v1755 = vld [vmem:[%s1 + $0x20] sm:$0xf]
      %v1756 = vld [vmem:[%s1 + $0x24] sm:$0xf]
      %v1757 = vld [vmem:[%s1 + $0x28] sm:$0xf]
      %v1758 = vld [vmem:[%s1 + $0x2c] sm:$0xf]
      %v1759 = vld [vmem:[%s1 + $0x30] sm:$0xf]
      %v1760 = vld [vmem:[%s1 + $0x34] sm:$0xf]
      %v1761 = vld [vmem:[%s1 + $0x38] sm:$0xf]
      %v1762 = vld [vmem:[%s1 + $0x3c] sm:$0xf]
      %v1763 = vld [vmem:[%s1 + $0x40] sm:$0xf]
      %v1764 = vld [vmem:[%s1 + $0x44] sm:$0xf]
      %v1765 = vld [vmem:[%s1 + $0x48] sm:$0xf]
      %v1766 = vld [vmem:[%s1 + $0x4c] sm:$0xf]
      %v1767 = vld [vmem:[%s1 + $0x50] sm:$0xf]
      %v1768 = vld [vmem:[%s1 + $0x54] sm:$0xf]
      %v1769 = vld [vmem:[%s1 + $0x58] sm:$0xf]
      %v1770 = vld [vmem:[%s1 + $0x5c] sm:$0xf]
      %v1771 = vld [vmem:[%s1 + $0x60] sm:$0xf]
      %v1772 = vld [vmem:[%s1 + $0x64] sm:$0xf]
      %v1773 = vld [vmem:[%s1 + $0x68] sm:$0xf]
      %v1774 = vld [vmem:[%s1 + $0x6c] sm:$0xf]
      %v1775 = vld [vmem:[%s1 + $0x70] sm:$0xf]
      %v1776 = vld [vmem:[%s1 + $0x74] sm:$0xf]
      %v1777 = vld [vmem:[%s1 + $0x78] sm:$0xf]
      %v1778 = vld [vmem:[%s1 + $0x7c] sm:$0xf]
      %v1779 = vld [vmem:[%s1 + $0x80] sm:$0xf]
      %v1780 = vld [vmem:[%s1 + $0x84] sm:$0xf]
      %v1781 = vld [vmem:[%s1 + $0x88] sm:$0xf]
      %v1782 = vld [vmem:[%s1 + $0x8c] sm:$0xf]
      %s1783 = scalar_lea.vmem [#allocation2], 160
      %v1784 = vld [vmem:[%s1783] sm:$0xff]
      %v1785 = vld [vmem:[%s1783 + $0x10] sm:$0xff]
      %v1786 = vld [vmem:[%s1783 + $0x20] sm:$0xff]
      %v1787 = vld [vmem:[%s1783 + $0x30] sm:$0xff]
      %v1788 = vld [vmem:[%s1783 + $0x40] sm:$0xff]
      %v1789 = vld [vmem:[%s1783 + $0x50] sm:$0xff]
      %v1790 = vld [vmem:[%s1783 + $0x60] sm:$0xff]
      %v1791 = vld [vmem:[%s1783 + $0x70] sm:$0xff]
      %v1792 = vld [vmem:[%s1783 + $0xa0] sm:$0xff]
      %v1793 = vld [vmem:[%s1783 + $0xb0] sm:$0xff]
      %v1794 = vld [vmem:[%s1783 + $0xc0] sm:$0xff]
      %v1795 = vld [vmem:[%s1783 + $0xd0] sm:$0xff]
      %v1796 = vld [vmem:[%s1783 + $0xe0] sm:$0xff]
      %v1797 = vld [vmem:[%s1783 + $0xf0] sm:$0xff]
      %v1798 = vld [vmem:[%s1783 + $0x100] sm:$0xff]
      %v1799 = vld [vmem:[%s1783 + $0x110] sm:$0xff]
      %v1800 = vld [vmem:[%s1783 + $0x140] sm:$0xff]
      %v1801 = vld [vmem:[%s1783 + $0x150] sm:$0xff]
      %v1802 = vld [vmem:[%s1783 + $0x160] sm:$0xff]
      %v1803 = vld [vmem:[%s1783 + $0x170] sm:$0xff]
      %v1804 = vld [vmem:[%s1783 + $0x180] sm:$0xff]
      %v1805 = vld [vmem:[%s1783 + $0x190] sm:$0xff]
      %v1806 = vld [vmem:[%s1783 + $0x1a0] sm:$0xff]
      %v1807 = vld [vmem:[%s1783 + $0x1b0] sm:$0xff]
      %v1808 = vld [vmem:[%s1783 + $0x1e0] sm:$0xff]
      %v1809 = vld [vmem:[%s1783 + $0x1f0] sm:$0xff]
      %v1810 = vld [vmem:[%s1783 + $0x200] sm:$0xff]
      %v1811 = vld [vmem:[%s1783 + $0x210] sm:$0xff]
      %v1812 = vld [vmem:[%s1783 + $0x220] sm:$0xff]
      %v1813 = vld [vmem:[%s1783 + $0x230] sm:$0xff]
      %v1814 = vld [vmem:[%s1783 + $0x240] sm:$0xff]
      %v1815 = vld [vmem:[%s1783 + $0x250] sm:$0xff]
      %v1816 = vpack.c.bf16 %v1785, %v1784
      %v1817 = vpack.c.bf16 %v1787, %v1786
      %v1818 = vpack.c.bf16 %v1789, %v1788
      %v1819 = vpack.c.bf16 %v1791, %v1790
      %v1820 = vpack.c.bf16 %v1793, %v1792
      %v1821 = vpack.c.bf16 %v1795, %v1794
      %v1822 = vpack.c.bf16 %v1797, %v1796
      %v1823 = vpack.c.bf16 %v1799, %v1798
      %v1824 = vpack.c.bf16 %v1801, %v1800
      %v1825 = vpack.c.bf16 %v1803, %v1802
      %v1826 = vpack.c.bf16 %v1805, %v1804
      %v1827 = vpack.c.bf16 %v1807, %v1806
      %v1828 = vpack.c.bf16 %v1809, %v1808
      %v1829 = vpack.c.bf16 %v1811, %v1810
      %v1830 = vpack.c.bf16 %v1813, %v1812
      %v1831 = vpack.c.bf16 %v1815, %v1814
      %v1832 = vld [vmem:[%s1783 + $0x1] sm:$0xff]
      %v1833 = vld [vmem:[%s1783 + $0x11] sm:$0xff]
      %v1834 = vld [vmem:[%s1783 + $0x21] sm:$0xff]
      %v1835 = vld [vmem:[%s1783 + $0x31] sm:$0xff]
      %v1836 = vld [vmem:[%s1783 + $0x41] sm:$0xff]
      %v1837 = vld [vmem:[%s1783 + $0x51] sm:$0xff]
      %v1838 = vld [vmem:[%s1783 + $0x61] sm:$0xff]
      %v1839 = vld [vmem:[%s1783 + $0x71] sm:$0xff]
      %v1840 = vld [vmem:[%s1783 + $0xa1] sm:$0xff]
      %v1841 = vld [vmem:[%s1783 + $0xb1] sm:$0xff]
      %v1842 = vld [vmem:[%s1783 + $0xc1] sm:$0xff]
      %v1843 = vld [vmem:[%s1783 + $0xd1] sm:$0xff]
      %v1844 = vld [vmem:[%s1783 + $0xe1] sm:$0xff]
      %v1845 = vld [vmem:[%s1783 + $0xf1] sm:$0xff]
      %v1846 = vld [vmem:[%s1783 + $0x101] sm:$0xff]
      %v1847 = vld [vmem:[%s1783 + $0x111] sm:$0xff]
      %v1848 = vld [vmem:[%s1783 + $0x141] sm:$0xff]
      %v1849 = vld [vmem:[%s1783 + $0x151] sm:$0xff]
      %v1850 = vld [vmem:[%s1783 + $0x161] sm:$0xff]
      %v1851 = vld [vmem:[%s1783 + $0x171] sm:$0xff]
      %v1852 = vld [vmem:[%s1783 + $0x181] sm:$0xff]
      %v1853 = vld [vmem:[%s1783 + $0x191] sm:$0xff]
      %v1854 = vld [vmem:[%s1783 + $0x1a1] sm:$0xff]
      %v1855 = vld [vmem:[%s1783 + $0x1b1] sm:$0xff]
      %v1856 = vld [vmem:[%s1783 + $0x1e1] sm:$0xff]
      %v1857 = vld [vmem:[%s1783 + $0x1f1] sm:$0xff]
      %v1858 = vld [vmem:[%s1783 + $0x201] sm:$0xff]
      %v1859 = vld [vmem:[%s1783 + $0x211] sm:$0xff]
      %v1860 = vld [vmem:[%s1783 + $0x221] sm:$0xff]
      %v1861 = vld [vmem:[%s1783 + $0x231] sm:$0xff]
      %v1862 = vld [vmem:[%s1783 + $0x241] sm:$0xff]
      %v1863 = vld [vmem:[%s1783 + $0x251] sm:$0xff]
      %v1864 = vpack.c.bf16 %v1833, %v1832
      %v1865 = vpack.c.bf16 %v1835, %v1834
      %v1866 = vpack.c.bf16 %v1837, %v1836
      %v1867 = vpack.c.bf16 %v1839, %v1838
      %v1868 = vpack.c.bf16 %v1841, %v1840
      %v1869 = vpack.c.bf16 %v1843, %v1842
      %v1870 = vpack.c.bf16 %v1845, %v1844
      %v1871 = vpack.c.bf16 %v1847, %v1846
      %v1872 = vpack.c.bf16 %v1849, %v1848
      %v1873 = vpack.c.bf16 %v1851, %v1850
      %v1874 = vpack.c.bf16 %v1853, %v1852
      %v1875 = vpack.c.bf16 %v1855, %v1854
      %v1876 = vpack.c.bf16 %v1857, %v1856
      %v1877 = vpack.c.bf16 %v1859, %v1858
      %v1878 = vpack.c.bf16 %v1861, %v1860
      %v1879 = vpack.c.bf16 %v1863, %v1862
      %v1880 = vld [vmem:[%s1783 + $0x2] sm:$0xff]
      %v1881 = vld [vmem:[%s1783 + $0x12] sm:$0xff]
      %v1882 = vld [vmem:[%s1783 + $0x22] sm:$0xff]
      %v1883 = vld [vmem:[%s1783 + $0x32] sm:$0xff]
      %v1884 = vld [vmem:[%s1783 + $0x42] sm:$0xff]
      %v1885 = vld [vmem:[%s1783 + $0x52] sm:$0xff]
      %v1886 = vld [vmem:[%s1783 + $0x62] sm:$0xff]
      %v1887 = vld [vmem:[%s1783 + $0x72] sm:$0xff]
      %v1888 = vld [vmem:[%s1783 + $0xa2] sm:$0xff]
      %v1889 = vld [vmem:[%s1783 + $0xb2] sm:$0xff]
      %v1890 = vld [vmem:[%s1783 + $0xc2] sm:$0xff]
      %v1891 = vld [vmem:[%s1783 + $0xd2] sm:$0xff]
      %v1892 = vld [vmem:[%s1783 + $0xe2] sm:$0xff]
      %v1893 = vld [vmem:[%s1783 + $0xf2] sm:$0xff]
      %v1894 = vld [vmem:[%s1783 + $0x102] sm:$0xff]
      %v1895 = vld [vmem:[%s1783 + $0x112] sm:$0xff]
      %v1896 = vld [vmem:[%s1783 + $0x142] sm:$0xff]
      %v1897 = vld [vmem:[%s1783 + $0x152] sm:$0xff]
      %v1898 = vld [vmem:[%s1783 + $0x162] sm:$0xff]
      %v1899 = vld [vmem:[%s1783 + $0x172] sm:$0xff]
      %v1900 = vld [vmem:[%s1783 + $0x182] sm:$0xff]
      %v1901 = vld [vmem:[%s1783 + $0x192] sm:$0xff]
      %v1902 = vld [vmem:[%s1783 + $0x1a2] sm:$0xff]
      %v1903 = vld [vmem:[%s1783 + $0x1b2] sm:$0xff]
      %v1904 = vld [vmem:[%s1783 + $0x1e2] sm:$0xff]
      %v1905 = vld [vmem:[%s1783 + $0x1f2] sm:$0xff]
      %v1906 = vld [vmem:[%s1783 + $0x202] sm:$0xff]
      %v1907 = vld [vmem:[%s1783 + $0x212] sm:$0xff]
      %v1908 = vld [vmem:[%s1783 + $0x222] sm:$0xff]
      %v1909 = vld [vmem:[%s1783 + $0x232] sm:$0xff]
      %v1910 = vld [vmem:[%s1783 + $0x242] sm:$0xff]
      %v1911 = vld [vmem:[%s1783 + $0x252] sm:$0xff]
      %v1912 = vpack.c.bf16 %v1881, %v1880
      %v1913 = vpack.c.bf16 %v1883, %v1882
      %v1914 = vpack.c.bf16 %v1885, %v1884
      %v1915 = vpack.c.bf16 %v1887, %v1886
      %v1916 = vpack.c.bf16 %v1889, %v1888
      %v1917 = vpack.c.bf16 %v1891, %v1890
      %v1918 = vpack.c.bf16 %v1893, %v1892
      %v1919 = vpack.c.bf16 %v1895, %v1894
      %v1920 = vpack.c.bf16 %v1897, %v1896
      %v1921 = vpack.c.bf16 %v1899, %v1898
      %v1922 = vpack.c.bf16 %v1901, %v1900
      %v1923 = vpack.c.bf16 %v1903, %v1902
      %v1924 = vpack.c.bf16 %v1905, %v1904
      %v1925 = vpack.c.bf16 %v1907, %v1906
      %v1926 = vpack.c.bf16 %v1909, %v1908
      %v1927 = vpack.c.bf16 %v1911, %v1910
      %s1928 = scalar_lea.vmem [#allocation2], 176
      %v1929 = vld [vmem:[%s1928] sm:$0xff]
      %v1930 = vld [vmem:[%s1928 + $0x10] sm:$0xff]
      %v1931 = vld [vmem:[%s1928 + $0x20] sm:$0xff]
      %v1932 = vld [vmem:[%s1928 + $0x30] sm:$0xff]
      %v1933 = vld [vmem:[%s1928 + $0x40] sm:$0xff]
      %v1934 = vld [vmem:[%s1928 + $0x50] sm:$0xff]
      %v1935 = vld [vmem:[%s1928 + $0x60] sm:$0xff]
      %v1936 = vld [vmem:[%s1928 + $0x70] sm:$0xff]
      %v1937 = vld [vmem:[%s1928 + $0xa0] sm:$0xff]
      %v1938 = vld [vmem:[%s1928 + $0xb0] sm:$0xff]
      %v1939 = vld [vmem:[%s1928 + $0xc0] sm:$0xff]
      %v1940 = vld [vmem:[%s1928 + $0xd0] sm:$0xff]
      %v1941 = vld [vmem:[%s1928 + $0xe0] sm:$0xff]
      %v1942 = vld [vmem:[%s1928 + $0xf0] sm:$0xff]
      %v1943 = vld [vmem:[%s1928 + $0x100] sm:$0xff]
      %v1944 = vld [vmem:[%s1928 + $0x110] sm:$0xff]
      %v1945 = vld [vmem:[%s1928 + $0x140] sm:$0xff]
      %v1946 = vld [vmem:[%s1928 + $0x150] sm:$0xff]
      %v1947 = vld [vmem:[%s1928 + $0x160] sm:$0xff]
      %v1948 = vld [vmem:[%s1928 + $0x170] sm:$0xff]
      %v1949 = vld [vmem:[%s1928 + $0x180] sm:$0xff]
      %v1950 = vld [vmem:[%s1928 + $0x190] sm:$0xff]
      %v1951 = vld [vmem:[%s1928 + $0x1a0] sm:$0xff]
      %v1952 = vld [vmem:[%s1928 + $0x1b0] sm:$0xff]
      %v1953 = vld [vmem:[%s1928 + $0x1e0] sm:$0xff]
      %v1954 = vld [vmem:[%s1928 + $0x1f0] sm:$0xff]
      %v1955 = vld [vmem:[%s1928 + $0x200] sm:$0xff]
      %v1956 = vld [vmem:[%s1928 + $0x210] sm:$0xff]
      %v1957 = vld [vmem:[%s1928 + $0x220] sm:$0xff]
      %v1958 = vld [vmem:[%s1928 + $0x230] sm:$0xff]
      %v1959 = vld [vmem:[%s1928 + $0x240] sm:$0xff]
      %v1960 = vld [vmem:[%s1928 + $0x250] sm:$0xff]
      %v1961 = vpack.c.bf16 %v1930, %v1929
      %v1962 = vpack.c.bf16 %v1932, %v1931
      %v1963 = vpack.c.bf16 %v1934, %v1933
      %v1964 = vpack.c.bf16 %v1936, %v1935
      %v1965 = vpack.c.bf16 %v1938, %v1937
      %v1966 = vpack.c.bf16 %v1940, %v1939
      %v1967 = vpack.c.bf16 %v1942, %v1941
      %v1968 = vpack.c.bf16 %v1944, %v1943
      %v1969 = vpack.c.bf16 %v1946, %v1945
      %v1970 = vpack.c.bf16 %v1948, %v1947
      %v1971 = vpack.c.bf16 %v1950, %v1949
      %v1972 = vpack.c.bf16 %v1952, %v1951
      %v1973 = vpack.c.bf16 %v1954, %v1953
      %v1974 = vpack.c.bf16 %v1956, %v1955
      %v1975 = vpack.c.bf16 %v1958, %v1957
      %v1976 = vpack.c.bf16 %v1960, %v1959
      %v1977 = vld [vmem:[%s1928 + $0x1] sm:$0xff]
      %v1978 = vld [vmem:[%s1928 + $0x11] sm:$0xff]
      %v1979 = vld [vmem:[%s1928 + $0x21] sm:$0xff]
      %v1980 = vld [vmem:[%s1928 + $0x31] sm:$0xff]
      %v1981 = vld [vmem:[%s1928 + $0x41] sm:$0xff]
      %v1982 = vld [vmem:[%s1928 + $0x51] sm:$0xff]
      %v1983 = vld [vmem:[%s1928 + $0x61] sm:$0xff]
      %v1984 = vld [vmem:[%s1928 + $0x71] sm:$0xff]
      %v1985 = vld [vmem:[%s1928 + $0xa1] sm:$0xff]
      %v1986 = vld [vmem:[%s1928 + $0xb1] sm:$0xff]
      %v1987 = vld [vmem:[%s1928 + $0xc1] sm:$0xff]
      %v1988 = vld [vmem:[%s1928 + $0xd1] sm:$0xff]
      %v1989 = vld [vmem:[%s1928 + $0xe1] sm:$0xff]
      %v1990 = vld [vmem:[%s1928 + $0xf1] sm:$0xff]
      %v1991 = vld [vmem:[%s1928 + $0x101] sm:$0xff]
      %v1992 = vld [vmem:[%s1928 + $0x111] sm:$0xff]
      %v1993 = vld [vmem:[%s1928 + $0x141] sm:$0xff]
      %v1994 = vld [vmem:[%s1928 + $0x151] sm:$0xff]
      %v1995 = vld [vmem:[%s1928 + $0x161] sm:$0xff]
      %v1996 = vld [vmem:[%s1928 + $0x171] sm:$0xff]
      %v1997 = vld [vmem:[%s1928 + $0x181] sm:$0xff]
      %v1998 = vld [vmem:[%s1928 + $0x191] sm:$0xff]
      %v1999 = vld [vmem:[%s1928 + $0x1a1] sm:$0xff]
      %v2000 = vld [vmem:[%s1928 + $0x1b1] sm:$0xff]
      %v2001 = vld [vmem:[%s1928 + $0x1e1] sm:$0xff]
      %v2002 = vld [vmem:[%s1928 + $0x1f1] sm:$0xff]
      %v2003 = vld [vmem:[%s1928 + $0x201] sm:$0xff]
      %v2004 = vld [vmem:[%s1928 + $0x211] sm:$0xff]
      %v2005 = vld [vmem:[%s1928 + $0x221] sm:$0xff]
      %v2006 = vld [vmem:[%s1928 + $0x231] sm:$0xff]
      %v2007 = vld [vmem:[%s1928 + $0x241] sm:$0xff]
      %v2008 = vld [vmem:[%s1928 + $0x251] sm:$0xff]
      %v2009 = vpack.c.bf16 %v1978, %v1977
      %v2010 = vpack.c.bf16 %v1980, %v1979
      %v2011 = vpack.c.bf16 %v1982, %v1981
      %v2012 = vpack.c.bf16 %v1984, %v1983
      %v2013 = vpack.c.bf16 %v1986, %v1985
      %v2014 = vpack.c.bf16 %v1988, %v1987
      %v2015 = vpack.c.bf16 %v1990, %v1989
      %v2016 = vpack.c.bf16 %v1992, %v1991
      %v2017 = vpack.c.bf16 %v1994, %v1993
      %v2018 = vpack.c.bf16 %v1996, %v1995
      %v2019 = vpack.c.bf16 %v1998, %v1997
      %v2020 = vpack.c.bf16 %v2000, %v1999
      %v2021 = vpack.c.bf16 %v2002, %v2001
      %v2022 = vpack.c.bf16 %v2004, %v2003
      %v2023 = vpack.c.bf16 %v2006, %v2005
      %v2024 = vpack.c.bf16 %v2008, %v2007
      %v2025 = vld [vmem:[%s1928 + $0x2] sm:$0xff]
      %v2026 = vld [vmem:[%s1928 + $0x12] sm:$0xff]
      %v2027 = vld [vmem:[%s1928 + $0x22] sm:$0xff]
      %v2028 = vld [vmem:[%s1928 + $0x32] sm:$0xff]
      %v2029 = vld [vmem:[%s1928 + $0x42] sm:$0xff]
      %v2030 = vld [vmem:[%s1928 + $0x52] sm:$0xff]
      %v2031 = vld [vmem:[%s1928 + $0x62] sm:$0xff]
      %v2032 = vld [vmem:[%s1928 + $0x72] sm:$0xff]
      %v2033 = vld [vmem:[%s1928 + $0xa2] sm:$0xff]
      %v2034 = vld [vmem:[%s1928 + $0xb2] sm:$0xff]
      %v2035 = vld [vmem:[%s1928 + $0xc2] sm:$0xff]
      %v2036 = vld [vmem:[%s1928 + $0xd2] sm:$0xff]
      %v2037 = vld [vmem:[%s1928 + $0xe2] sm:$0xff]
      %v2038 = vld [vmem:[%s1928 + $0xf2] sm:$0xff]
      %v2039 = vld [vmem:[%s1928 + $0x102] sm:$0xff]
      %v2040 = vld [vmem:[%s1928 + $0x112] sm:$0xff]
      %v2041 = vld [vmem:[%s1928 + $0x142] sm:$0xff]
      %v2042 = vld [vmem:[%s1928 + $0x152] sm:$0xff]
      %v2043 = vld [vmem:[%s1928 + $0x162] sm:$0xff]
      %v2044 = vld [vmem:[%s1928 + $0x172] sm:$0xff]
      %v2045 = vld [vmem:[%s1928 + $0x182] sm:$0xff]
      %v2046 = vld [vmem:[%s1928 + $0x192] sm:$0xff]
      %v2047 = vld [vmem:[%s1928 + $0x1a2] sm:$0xff]
      %v2048 = vld [vmem:[%s1928 + $0x1b2] sm:$0xff]
      %v2049 = vld [vmem:[%s1928 + $0x1e2] sm:$0xff]
      %v2050 = vld [vmem:[%s1928 + $0x1f2] sm:$0xff]
      %v2051 = vld [vmem:[%s1928 + $0x202] sm:$0xff]
      %v2052 = vld [vmem:[%s1928 + $0x212] sm:$0xff]
      %v2053 = vld [vmem:[%s1928 + $0x222] sm:$0xff]
      %v2054 = vld [vmem:[%s1928 + $0x232] sm:$0xff]
      %v2055 = vld [vmem:[%s1928 + $0x242] sm:$0xff]
      %v2056 = vld [vmem:[%s1928 + $0x252] sm:$0xff]
      %v2057 = vpack.c.bf16 %v2026, %v2025
      %v2058 = vpack.c.bf16 %v2028, %v2027
      %v2059 = vpack.c.bf16 %v2030, %v2029
      %v2060 = vpack.c.bf16 %v2032, %v2031
      %v2061 = vpack.c.bf16 %v2034, %v2033
      %v2062 = vpack.c.bf16 %v2036, %v2035
      %v2063 = vpack.c.bf16 %v2038, %v2037
      %v2064 = vpack.c.bf16 %v2040, %v2039
      %v2065 = vpack.c.bf16 %v2042, %v2041
      %v2066 = vpack.c.bf16 %v2044, %v2043
      %v2067 = vpack.c.bf16 %v2046, %v2045
      %v2068 = vpack.c.bf16 %v2048, %v2047
      %v2069 = vpack.c.bf16 %v2050, %v2049
      %v2070 = vpack.c.bf16 %v2052, %v2051
      %v2071 = vpack.c.bf16 %v2054, %v2053
      %v2072 = vpack.c.bf16 %v2056, %v2055
      %s2073 = scalar_lea.vmem [#allocation2], 192
      %v2074 = vld [vmem:[%s2073] sm:$0xff]
      %v2075 = vld [vmem:[%s2073 + $0x10] sm:$0xff]
      %v2076 = vld [vmem:[%s2073 + $0x20] sm:$0xff]
      %v2077 = vld [vmem:[%s2073 + $0x30] sm:$0xff]
      %v2078 = vld [vmem:[%s2073 + $0x40] sm:$0xff]
      %v2079 = vld [vmem:[%s2073 + $0x50] sm:$0xff]
      %v2080 = vld [vmem:[%s2073 + $0x60] sm:$0xff]
      %v2081 = vld [vmem:[%s2073 + $0x70] sm:$0xff]
      %v2082 = vld [vmem:[%s2073 + $0xa0] sm:$0xff]
      %v2083 = vld [vmem:[%s2073 + $0xb0] sm:$0xff]
      %v2084 = vld [vmem:[%s2073 + $0xc0] sm:$0xff]
      %v2085 = vld [vmem:[%s2073 + $0xd0] sm:$0xff]
      %v2086 = vld [vmem:[%s2073 + $0xe0] sm:$0xff]
      %v2087 = vld [vmem:[%s2073 + $0xf0] sm:$0xff]
      %v2088 = vld [vmem:[%s2073 + $0x100] sm:$0xff]
      %v2089 = vld [vmem:[%s2073 + $0x110] sm:$0xff]
      %v2090 = vld [vmem:[%s2073 + $0x140] sm:$0xff]
      %v2091 = vld [vmem:[%s2073 + $0x150] sm:$0xff]
      %v2092 = vld [vmem:[%s2073 + $0x160] sm:$0xff]
      %v2093 = vld [vmem:[%s2073 + $0x170] sm:$0xff]
      %v2094 = vld [vmem:[%s2073 + $0x180] sm:$0xff]
      %v2095 = vld [vmem:[%s2073 + $0x190] sm:$0xff]
      %v2096 = vld [vmem:[%s2073 + $0x1a0] sm:$0xff]
      %v2097 = vld [vmem:[%s2073 + $0x1b0] sm:$0xff]
      %v2098 = vld [vmem:[%s2073 + $0x1e0] sm:$0xff]
      %v2099 = vld [vmem:[%s2073 + $0x1f0] sm:$0xff]
      %v2100 = vld [vmem:[%s2073 + $0x200] sm:$0xff]
      %v2101 = vld [vmem:[%s2073 + $0x210] sm:$0xff]
      %v2102 = vld [vmem:[%s2073 + $0x220] sm:$0xff]
      %v2103 = vld [vmem:[%s2073 + $0x230] sm:$0xff]
      %v2104 = vld [vmem:[%s2073 + $0x240] sm:$0xff]
      %v2105 = vld [vmem:[%s2073 + $0x250] sm:$0xff]
      %v2106 = vpack.c.bf16 %v2075, %v2074
      %v2107 = vpack.c.bf16 %v2077, %v2076
      %v2108 = vpack.c.bf16 %v2079, %v2078
      %v2109 = vpack.c.bf16 %v2081, %v2080
      %v2110 = vpack.c.bf16 %v2083, %v2082
      %v2111 = vpack.c.bf16 %v2085, %v2084
      %v2112 = vpack.c.bf16 %v2087, %v2086
      %v2113 = vpack.c.bf16 %v2089, %v2088
      %v2114 = vpack.c.bf16 %v2091, %v2090
      %v2115 = vpack.c.bf16 %v2093, %v2092
      %v2116 = vpack.c.bf16 %v2095, %v2094
      %v2117 = vpack.c.bf16 %v2097, %v2096
      %v2118 = vpack.c.bf16 %v2099, %v2098
      %v2119 = vpack.c.bf16 %v2101, %v2100
      %v2120 = vpack.c.bf16 %v2103, %v2102
      %v2121 = vpack.c.bf16 %v2105, %v2104
      %v2122 = vld [vmem:[%s2073 + $0x1] sm:$0xff]
      %v2123 = vld [vmem:[%s2073 + $0x11] sm:$0xff]
      %v2124 = vld [vmem:[%s2073 + $0x21] sm:$0xff]
      %v2125 = vld [vmem:[%s2073 + $0x31] sm:$0xff]
      %v2126 = vld [vmem:[%s2073 + $0x41] sm:$0xff]
      %v2127 = vld [vmem:[%s2073 + $0x51] sm:$0xff]
      %v2128 = vld [vmem:[%s2073 + $0x61] sm:$0xff]
      %v2129 = vld [vmem:[%s2073 + $0x71] sm:$0xff]
      %v2130 = vld [vmem:[%s2073 + $0xa1] sm:$0xff]
      %v2131 = vld [vmem:[%s2073 + $0xb1] sm:$0xff]
      %v2132 = vld [vmem:[%s2073 + $0xc1] sm:$0xff]
      %v2133 = vld [vmem:[%s2073 + $0xd1] sm:$0xff]
      %v2134 = vld [vmem:[%s2073 + $0xe1] sm:$0xff]
      %v2135 = vld [vmem:[%s2073 + $0xf1] sm:$0xff]
      %v2136 = vld [vmem:[%s2073 + $0x101] sm:$0xff]
      %v2137 = vld [vmem:[%s2073 + $0x111] sm:$0xff]
      %v2138 = vld [vmem:[%s2073 + $0x141] sm:$0xff]
      %v2139 = vld [vmem:[%s2073 + $0x151] sm:$0xff]
      %v2140 = vld [vmem:[%s2073 + $0x161] sm:$0xff]
      %v2141 = vld [vmem:[%s2073 + $0x171] sm:$0xff]
      %v2142 = vld [vmem:[%s2073 + $0x181] sm:$0xff]
      %v2143 = vld [vmem:[%s2073 + $0x191] sm:$0xff]
      %v2144 = vld [vmem:[%s2073 + $0x1a1] sm:$0xff]
      %v2145 = vld [vmem:[%s2073 + $0x1b1] sm:$0xff]
      %v2146 = vld [vmem:[%s2073 + $0x1e1] sm:$0xff]
      %v2147 = vld [vmem:[%s2073 + $0x1f1] sm:$0xff]
      %v2148 = vld [vmem:[%s2073 + $0x201] sm:$0xff]
      %v2149 = vld [vmem:[%s2073 + $0x211] sm:$0xff]
      %v2150 = vld [vmem:[%s2073 + $0x221] sm:$0xff]
      %v2151 = vld [vmem:[%s2073 + $0x231] sm:$0xff]
      %v2152 = vld [vmem:[%s2073 + $0x241] sm:$0xff]
      %v2153 = vld [vmem:[%s2073 + $0x251] sm:$0xff]
      %v2154 = vpack.c.bf16 %v2123, %v2122
      %v2155 = vpack.c.bf16 %v2125, %v2124
      %v2156 = vpack.c.bf16 %v2127, %v2126
      %v2157 = vpack.c.bf16 %v2129, %v2128
      %v2158 = vpack.c.bf16 %v2131, %v2130
      %v2159 = vpack.c.bf16 %v2133, %v2132
      %v2160 = vpack.c.bf16 %v2135, %v2134
      %v2161 = vpack.c.bf16 %v2137, %v2136
      %v2162 = vpack.c.bf16 %v2139, %v2138
      %v2163 = vpack.c.bf16 %v2141, %v2140
      %v2164 = vpack.c.bf16 %v2143, %v2142
      %v2165 = vpack.c.bf16 %v2145, %v2144
      %v2166 = vpack.c.bf16 %v2147, %v2146
      %v2167 = vpack.c.bf16 %v2149, %v2148
      %v2168 = vpack.c.bf16 %v2151, %v2150
      %v2169 = vpack.c.bf16 %v2153, %v2152
      %v2170 = vld [vmem:[%s2073 + $0x2] sm:$0xff]
      %v2171 = vld [vmem:[%s2073 + $0x12] sm:$0xff]
      %v2172 = vld [vmem:[%s2073 + $0x22] sm:$0xff]
      %v2173 = vld [vmem:[%s2073 + $0x32] sm:$0xff]
      %v2174 = vld [vmem:[%s2073 + $0x42] sm:$0xff]
      %v2175 = vld [vmem:[%s2073 + $0x52] sm:$0xff]
      %v2176 = vld [vmem:[%s2073 + $0x62] sm:$0xff]
      %v2177 = vld [vmem:[%s2073 + $0x72] sm:$0xff]
      %v2178 = vld [vmem:[%s2073 + $0xa2] sm:$0xff]
      %v2179 = vld [vmem:[%s2073 + $0xb2] sm:$0xff]
      %v2180 = vld [vmem:[%s2073 + $0xc2] sm:$0xff]
      %v2181 = vld [vmem:[%s2073 + $0xd2] sm:$0xff]
      %v2182 = vld [vmem:[%s2073 + $0xe2] sm:$0xff]
      %v2183 = vld [vmem:[%s2073 + $0xf2] sm:$0xff]
      %v2184 = vld [vmem:[%s2073 + $0x102] sm:$0xff]
      %v2185 = vld [vmem:[%s2073 + $0x112] sm:$0xff]
      %v2186 = vld [vmem:[%s2073 + $0x142] sm:$0xff]
      %v2187 = vld [vmem:[%s2073 + $0x152] sm:$0xff]
      %v2188 = vld [vmem:[%s2073 + $0x162] sm:$0xff]
      %v2189 = vld [vmem:[%s2073 + $0x172] sm:$0xff]
      %v2190 = vld [vmem:[%s2073 + $0x182] sm:$0xff]
      %v2191 = vld [vmem:[%s2073 + $0x192] sm:$0xff]
      %v2192 = vld [vmem:[%s2073 + $0x1a2] sm:$0xff]
      %v2193 = vld [vmem:[%s2073 + $0x1b2] sm:$0xff]
      %v2194 = vld [vmem:[%s2073 + $0x1e2] sm:$0xff]
      %v2195 = vld [vmem:[%s2073 + $0x1f2] sm:$0xff]
      %v2196 = vld [vmem:[%s2073 + $0x202] sm:$0xff]
      %v2197 = vld [vmem:[%s2073 + $0x212] sm:$0xff]
      %v2198 = vld [vmem:[%s2073 + $0x222] sm:$0xff]
      %v2199 = vld [vmem:[%s2073 + $0x232] sm:$0xff]
      %v2200 = vld [vmem:[%s2073 + $0x242] sm:$0xff]
      %v2201 = vld [vmem:[%s2073 + $0x252] sm:$0xff]
      %v2202 = vpack.c.bf16 %v2171, %v2170
      %v2203 = vpack.c.bf16 %v2173, %v2172
      %v2204 = vpack.c.bf16 %v2175, %v2174
      %v2205 = vpack.c.bf16 %v2177, %v2176
      %v2206 = vpack.c.bf16 %v2179, %v2178
      %v2207 = vpack.c.bf16 %v2181, %v2180
      %v2208 = vpack.c.bf16 %v2183, %v2182
      %v2209 = vpack.c.bf16 %v2185, %v2184
      %v2210 = vpack.c.bf16 %v2187, %v2186
      %v2211 = vpack.c.bf16 %v2189, %v2188
      %v2212 = vpack.c.bf16 %v2191, %v2190
      %v2213 = vpack.c.bf16 %v2193, %v2192
      %v2214 = vpack.c.bf16 %v2195, %v2194
      %v2215 = vpack.c.bf16 %v2197, %v2196
      %v2216 = vpack.c.bf16 %v2199, %v2198
      %v2217 = vpack.c.bf16 %v2201, %v2200
      %2234 = vrot.lane.b32.xlu0 %v1864, 32
      %v2235 = vpop.permute.xlu0 %2234
      %2236 = vrot.lane.b32.xlu0 %v1865, 32
      %v2237 = vpop.permute.xlu0 %2236
      %2238 = vrot.lane.b32.xlu0 %v1866, 32
      %v2239 = vpop.permute.xlu0 %2238
      %2240 = vrot.lane.b32.xlu0 %v1867, 32
      %v2241 = vpop.permute.xlu0 %2240
      %2242 = vrot.lane.b32.xlu0 %v1868, 32
      %v2243 = vpop.permute.xlu0 %2242
      %2244 = vrot.lane.b32.xlu0 %v1869, 32
      %v2245 = vpop.permute.xlu0 %2244
      %2246 = vrot.lane.b32.xlu0 %v1870, 32
      %v2247 = vpop.permute.xlu0 %2246
      %2248 = vrot.lane.b32.xlu0 %v1871, 32
      %v2249 = vpop.permute.xlu0 %2248
      %2250 = vrot.lane.b32.xlu0 %v1872, 32
      %v2251 = vpop.permute.xlu0 %2250
      %2252 = vrot.lane.b32.xlu0 %v1873, 32
      %v2253 = vpop.permute.xlu0 %2252
      %2254 = vrot.lane.b32.xlu0 %v1874, 32
      %v2255 = vpop.permute.xlu0 %2254
      %2256 = vrot.lane.b32.xlu0 %v1875, 32
      %v2257 = vpop.permute.xlu0 %2256
      %2258 = vrot.lane.b32.xlu0 %v1876, 32
      %v2259 = vpop.permute.xlu0 %2258
      %2260 = vrot.lane.b32.xlu0 %v1877, 32
      %v2261 = vpop.permute.xlu0 %2260
      %2262 = vrot.lane.b32.xlu0 %v1878, 32
      %v2263 = vpop.permute.xlu0 %2262
      %2264 = vrot.lane.b32.xlu0 %v1879, 32
      %v2265 = vpop.permute.xlu0 %2264
      %2282 = vrot.lane.b32.xlu0 %v1912, 64
      %v2283 = vpop.permute.xlu0 %2282
      %2284 = vrot.lane.b32.xlu0 %v1913, 64
      %v2285 = vpop.permute.xlu0 %2284
      %2286 = vrot.lane.b32.xlu0 %v1914, 64
      %v2287 = vpop.permute.xlu0 %2286
      %2288 = vrot.lane.b32.xlu0 %v1915, 64
      %v2289 = vpop.permute.xlu0 %2288
      %2290 = vrot.lane.b32.xlu0 %v1916, 64
      %v2291 = vpop.permute.xlu0 %2290
      %2292 = vrot.lane.b32.xlu0 %v1917, 64
      %v2293 = vpop.permute.xlu0 %2292
      %2294 = vrot.lane.b32.xlu0 %v1918, 64
      %v2295 = vpop.permute.xlu0 %2294
      %2296 = vrot.lane.b32.xlu0 %v1919, 64
      %v2297 = vpop.permute.xlu0 %2296
      %2298 = vrot.lane.b32.xlu0 %v1920, 64
      %v2299 = vpop.permute.xlu0 %2298
      %2300 = vrot.lane.b32.xlu0 %v1921, 64
      %v2301 = vpop.permute.xlu0 %2300
      %2302 = vrot.lane.b32.xlu0 %v1922, 64
      %v2303 = vpop.permute.xlu0 %2302
      %2304 = vrot.lane.b32.xlu0 %v1923, 64
      %v2305 = vpop.permute.xlu0 %2304
      %2306 = vrot.lane.b32.xlu0 %v1924, 64
      %v2307 = vpop.permute.xlu0 %2306
      %2308 = vrot.lane.b32.xlu0 %v1925, 64
      %v2309 = vpop.permute.xlu0 %2308
      %2310 = vrot.lane.b32.xlu0 %v1926, 64
      %v2311 = vpop.permute.xlu0 %2310
      %2312 = vrot.lane.b32.xlu0 %v1927, 64
      %v2313 = vpop.permute.xlu0 %2312
      %2330 = vrot.lane.b32.xlu0 %v1961, 96
      %v2331 = vpop.permute.xlu0 %2330
      %2332 = vrot.lane.b32.xlu0 %v1962, 96
      %v2333 = vpop.permute.xlu0 %2332
      %2334 = vrot.lane.b32.xlu0 %v1963, 96
      %v2335 = vpop.permute.xlu0 %2334
      %2336 = vrot.lane.b32.xlu0 %v1964, 96
      %v2337 = vpop.permute.xlu0 %2336
      %2338 = vrot.lane.b32.xlu0 %v1965, 96
      %v2339 = vpop.permute.xlu0 %2338
      %2340 = vrot.lane.b32.xlu0 %v1966, 96
      %v2341 = vpop.permute.xlu0 %2340
      %2342 = vrot.lane.b32.xlu0 %v1967, 96
      %v2343 = vpop.permute.xlu0 %2342
      %2344 = vrot.lane.b32.xlu0 %v1968, 96
      %v2345 = vpop.permute.xlu0 %2344
      %2346 = vrot.lane.b32.xlu0 %v1969, 96
      %v2347 = vpop.permute.xlu0 %2346
      %2348 = vrot.lane.b32.xlu0 %v1970, 96
      %v2349 = vpop.permute.xlu0 %2348
      %2350 = vrot.lane.b32.xlu0 %v1971, 96
      %v2351 = vpop.permute.xlu0 %2350
      %2352 = vrot.lane.b32.xlu0 %v1972, 96
      %v2353 = vpop.permute.xlu0 %2352
      %2354 = vrot.lane.b32.xlu0 %v1973, 96
      %v2355 = vpop.permute.xlu0 %2354
      %2356 = vrot.lane.b32.xlu0 %v1974, 96
      %v2357 = vpop.permute.xlu0 %2356
      %2358 = vrot.lane.b32.xlu0 %v1975, 96
      %v2359 = vpop.permute.xlu0 %2358
      %2360 = vrot.lane.b32.xlu0 %v1976, 96
      %v2361 = vpop.permute.xlu0 %2360
      %2378 = vrot.lane.b32.xlu0 %v2057, 32
      %v2379 = vpop.permute.xlu0 %2378
      %2380 = vrot.lane.b32.xlu0 %v2058, 32
      %v2381 = vpop.permute.xlu0 %2380
      %2382 = vrot.lane.b32.xlu0 %v2059, 32
      %v2383 = vpop.permute.xlu0 %2382
      %2384 = vrot.lane.b32.xlu0 %v2060, 32
      %v2385 = vpop.permute.xlu0 %2384
      %2386 = vrot.lane.b32.xlu0 %v2061, 32
      %v2387 = vpop.permute.xlu0 %2386
      %2388 = vrot.lane.b32.xlu0 %v2062, 32
      %v2389 = vpop.permute.xlu0 %2388
      %2390 = vrot.lane.b32.xlu0 %v2063, 32
      %v2391 = vpop.permute.xlu0 %2390
      %2392 = vrot.lane.b32.xlu0 %v2064, 32
      %v2393 = vpop.permute.xlu0 %2392
      %2394 = vrot.lane.b32.xlu0 %v2065, 32
      %v2395 = vpop.permute.xlu0 %2394
      %2396 = vrot.lane.b32.xlu0 %v2066, 32
      %v2397 = vpop.permute.xlu0 %2396
      %2398 = vrot.lane.b32.xlu0 %v2067, 32
      %v2399 = vpop.permute.xlu0 %2398
      %2400 = vrot.lane.b32.xlu0 %v2068, 32
      %v2401 = vpop.permute.xlu0 %2400
      %2402 = vrot.lane.b32.xlu0 %v2069, 32
      %v2403 = vpop.permute.xlu0 %2402
      %2404 = vrot.lane.b32.xlu0 %v2070, 32
      %v2405 = vpop.permute.xlu0 %2404
      %2406 = vrot.lane.b32.xlu0 %v2071, 32
      %v2407 = vpop.permute.xlu0 %2406
      %2408 = vrot.lane.b32.xlu0 %v2072, 32
      %v2409 = vpop.permute.xlu0 %2408
      %2426 = vrot.lane.b32.xlu0 %v2106, 64
      %v2427 = vpop.permute.xlu0 %2426
      %2428 = vrot.lane.b32.xlu0 %v2107, 64
      %v2429 = vpop.permute.xlu0 %2428
      %2430 = vrot.lane.b32.xlu0 %v2108, 64
      %v2431 = vpop.permute.xlu0 %2430
      %2432 = vrot.lane.b32.xlu0 %v2109, 64
      %v2433 = vpop.permute.xlu0 %2432
      %2434 = vrot.lane.b32.xlu0 %v2110, 64
      %v2435 = vpop.permute.xlu0 %2434
      %2436 = vrot.lane.b32.xlu0 %v2111, 64
      %v2437 = vpop.permute.xlu0 %2436
      %2438 = vrot.lane.b32.xlu0 %v2112, 64
      %v2439 = vpop.permute.xlu0 %2438
      %2440 = vrot.lane.b32.xlu0 %v2113, 64
      %v2441 = vpop.permute.xlu0 %2440
      %2442 = vrot.lane.b32.xlu0 %v2114, 64
      %v2443 = vpop.permute.xlu0 %2442
      %2444 = vrot.lane.b32.xlu0 %v2115, 64
      %v2445 = vpop.permute.xlu0 %2444
      %2446 = vrot.lane.b32.xlu0 %v2116, 64
      %v2447 = vpop.permute.xlu0 %2446
      %2448 = vrot.lane.b32.xlu0 %v2117, 64
      %v2449 = vpop.permute.xlu0 %2448
      %2450 = vrot.lane.b32.xlu0 %v2118, 64
      %v2451 = vpop.permute.xlu0 %2450
      %2452 = vrot.lane.b32.xlu0 %v2119, 64
      %v2453 = vpop.permute.xlu0 %2452
      %2454 = vrot.lane.b32.xlu0 %v2120, 64
      %v2455 = vpop.permute.xlu0 %2454
      %2456 = vrot.lane.b32.xlu0 %v2121, 64
      %v2457 = vpop.permute.xlu0 %2456
      %2474 = vrot.lane.b32.xlu0 %v2154, 96
      %v2475 = vpop.permute.xlu0 %2474
      %2476 = vrot.lane.b32.xlu0 %v2155, 96
      %v2477 = vpop.permute.xlu0 %2476
      %2478 = vrot.lane.b32.xlu0 %v2156, 96
      %v2479 = vpop.permute.xlu0 %2478
      %2480 = vrot.lane.b32.xlu0 %v2157, 96
      %v2481 = vpop.permute.xlu0 %2480
      %2482 = vrot.lane.b32.xlu0 %v2158, 96
      %v2483 = vpop.permute.xlu0 %2482
      %2484 = vrot.lane.b32.xlu0 %v2159, 96
      %v2485 = vpop.permute.xlu0 %2484
      %2486 = vrot.lane.b32.xlu0 %v2160, 96
      %v2487 = vpop.permute.xlu0 %2486
      %2488 = vrot.lane.b32.xlu0 %v2161, 96
      %v2489 = vpop.permute.xlu0 %2488
      %2490 = vrot.lane.b32.xlu0 %v2162, 96
      %v2491 = vpop.permute.xlu0 %2490
      %2492 = vrot.lane.b32.xlu0 %v2163, 96
      %v2493 = vpop.permute.xlu0 %2492
      %2494 = vrot.lane.b32.xlu0 %v2164, 96
      %v2495 = vpop.permute.xlu0 %2494
      %2496 = vrot.lane.b32.xlu0 %v2165, 96
      %v2497 = vpop.permute.xlu0 %2496
      %2498 = vrot.lane.b32.xlu0 %v2166, 96
      %v2499 = vpop.permute.xlu0 %2498
      %2500 = vrot.lane.b32.xlu0 %v2167, 96
      %v2501 = vpop.permute.xlu0 %2500
      %2502 = vrot.lane.b32.xlu0 %v2168, 96
      %v2503 = vpop.permute.xlu0 %2502
      %2504 = vrot.lane.b32.xlu0 %v2169, 96
      %v2505 = vpop.permute.xlu0 %2504
      %v2508 = vsel %vm520, %v1816, %v2235
      %v2511 = vsel %vm520, %v1817, %v2237
      %v2514 = vsel %vm520, %v1818, %v2239
      %v2517 = vsel %vm520, %v1819, %v2241
      %v2520 = vsel %vm520, %v1820, %v2243
      %v2523 = vsel %vm520, %v1821, %v2245
      %v2526 = vsel %vm520, %v1822, %v2247
      %v2529 = vsel %vm520, %v1823, %v2249
      %v2532 = vsel %vm520, %v1824, %v2251
      %v2535 = vsel %vm520, %v1825, %v2253
      %v2538 = vsel %vm520, %v1826, %v2255
      %v2541 = vsel %vm520, %v1827, %v2257
      %v2544 = vsel %vm520, %v1828, %v2259
      %v2547 = vsel %vm520, %v1829, %v2261
      %v2550 = vsel %vm520, %v1830, %v2263
      %v2553 = vsel %vm520, %v1831, %v2265
      %v2555 = vsel %vm1537, %v2508, %v2283
      %v2557 = vsel %vm1537, %v2511, %v2285
      %v2559 = vsel %vm1537, %v2514, %v2287
      %v2561 = vsel %vm1537, %v2517, %v2289
      %v2563 = vsel %vm1537, %v2520, %v2291
      %v2565 = vsel %vm1537, %v2523, %v2293
      %v2567 = vsel %vm1537, %v2526, %v2295
      %v2569 = vsel %vm1537, %v2529, %v2297
      %v2571 = vsel %vm1537, %v2532, %v2299
      %v2573 = vsel %vm1537, %v2535, %v2301
      %v2575 = vsel %vm1537, %v2538, %v2303
      %v2577 = vsel %vm1537, %v2541, %v2305
      %v2579 = vsel %vm1537, %v2544, %v2307
      %v2581 = vsel %vm1537, %v2547, %v2309
      %v2583 = vsel %vm1537, %v2550, %v2311
      %v2585 = vsel %vm1537, %v2553, %v2313
      %v2587 = vsel %vm1570, %v2555, %v2331
      %v2590 = vsel %vm1570, %v2557, %v2333
      %v2593 = vsel %vm1570, %v2559, %v2335
      %v2596 = vsel %vm1570, %v2561, %v2337
      %v2599 = vsel %vm1570, %v2563, %v2339
      %v2602 = vsel %vm1570, %v2565, %v2341
      %v2605 = vsel %vm1570, %v2567, %v2343
      %v2608 = vsel %vm1570, %v2569, %v2345
      %v2611 = vsel %vm1570, %v2571, %v2347
      %v2614 = vsel %vm1570, %v2573, %v2349
      %v2617 = vsel %vm1570, %v2575, %v2351
      %v2620 = vsel %vm1570, %v2577, %v2353
      %v2623 = vsel %vm1570, %v2579, %v2355
      %v2626 = vsel %vm1570, %v2581, %v2357
      %v2629 = vsel %vm1570, %v2583, %v2359
      %v2632 = vsel %vm1570, %v2585, %v2361
      %v2636 = vsel %vm520, %v2009, %v2379
      %v2639 = vsel %vm520, %v2010, %v2381
      %v2642 = vsel %vm520, %v2011, %v2383
      %v2645 = vsel %vm520, %v2012, %v2385
      %v2648 = vsel %vm520, %v2013, %v2387
      %v2651 = vsel %vm520, %v2014, %v2389
      %v2654 = vsel %vm520, %v2015, %v2391
      %v2657 = vsel %vm520, %v2016, %v2393
      %v2660 = vsel %vm520, %v2017, %v2395
      %v2663 = vsel %vm520, %v2018, %v2397
      %v2666 = vsel %vm520, %v2019, %v2399
      %v2669 = vsel %vm520, %v2020, %v2401
      %v2672 = vsel %vm520, %v2021, %v2403
      %v2675 = vsel %vm520, %v2022, %v2405
      %v2678 = vsel %vm520, %v2023, %v2407
      %v2681 = vsel %vm520, %v2024, %v2409
      %v2683 = vsel %vm1537, %v2636, %v2427
      %v2685 = vsel %vm1537, %v2639, %v2429
      %v2687 = vsel %vm1537, %v2642, %v2431
      %v2689 = vsel %vm1537, %v2645, %v2433
      %v2691 = vsel %vm1537, %v2648, %v2435
      %v2693 = vsel %vm1537, %v2651, %v2437
      %v2695 = vsel %vm1537, %v2654, %v2439
      %v2697 = vsel %vm1537, %v2657, %v2441
      %v2699 = vsel %vm1537, %v2660, %v2443
      %v2701 = vsel %vm1537, %v2663, %v2445
      %v2703 = vsel %vm1537, %v2666, %v2447
      %v2705 = vsel %vm1537, %v2669, %v2449
      %v2707 = vsel %vm1537, %v2672, %v2451
      %v2709 = vsel %vm1537, %v2675, %v2453
      %v2711 = vsel %vm1537, %v2678, %v2455
      %v2713 = vsel %vm1537, %v2681, %v2457
      %v2715 = vsel %vm1570, %v2683, %v2475
      %v2718 = vsel %vm1570, %v2685, %v2477
      %v2721 = vsel %vm1570, %v2687, %v2479
      %v2724 = vsel %vm1570, %v2689, %v2481
      %v2727 = vsel %vm1570, %v2691, %v2483
      %v2730 = vsel %vm1570, %v2693, %v2485
      %v2733 = vsel %vm1570, %v2695, %v2487
      %v2736 = vsel %vm1570, %v2697, %v2489
      %v2739 = vsel %vm1570, %v2699, %v2491
      %v2742 = vsel %vm1570, %v2701, %v2493
      %v2745 = vsel %vm1570, %v2703, %v2495
      %v2748 = vsel %vm1570, %v2705, %v2497
      %v2751 = vsel %vm1570, %v2707, %v2499
      %v2754 = vsel %vm1570, %v2709, %v2501
      %v2757 = vsel %vm1570, %v2711, %v2503
      %v2760 = vsel %vm1570, %v2713, %v2505
      %s2762 = scalar_lea.vmem %s1, 144
      %v2763 = vld [vmem:[%s2762] sm:$0xf]
      %v2764 = vld [vmem:[%s2762 + $0x4] sm:$0xf]
      %v2765 = vld [vmem:[%s2762 + $0x8] sm:$0xf]
      %v2766 = vld [vmem:[%s2762 + $0xc] sm:$0xf]
      %v2767 = vld [vmem:[%s2762 + $0x10] sm:$0xf]
      %v2768 = vld [vmem:[%s2762 + $0x14] sm:$0xf]
      %v2769 = vld [vmem:[%s2762 + $0x18] sm:$0xf]
      %v2770 = vld [vmem:[%s2762 + $0x1c] sm:$0xf]
      %v2771 = vld [vmem:[%s2762 + $0x20] sm:$0xf]
      %v2772 = vld [vmem:[%s2762 + $0x24] sm:$0xf]
      %v2773 = vld [vmem:[%s2762 + $0x28] sm:$0xf]
      %v2774 = vld [vmem:[%s2762 + $0x2c] sm:$0xf]
      %v2775 = vld [vmem:[%s2762 + $0x30] sm:$0xf]
      %v2776 = vld [vmem:[%s2762 + $0x34] sm:$0xf]
      %v2777 = vld [vmem:[%s2762 + $0x38] sm:$0xf]
      %v2778 = vld [vmem:[%s2762 + $0x3c] sm:$0xf]
      %v2779 = vld [vmem:[%s2762 + $0x40] sm:$0xf]
      %v2780 = vld [vmem:[%s2762 + $0x44] sm:$0xf]
      %v2781 = vld [vmem:[%s2762 + $0x48] sm:$0xf]
      %v2782 = vld [vmem:[%s2762 + $0x4c] sm:$0xf]
      %v2783 = vld [vmem:[%s2762 + $0x50] sm:$0xf]
      %v2784 = vld [vmem:[%s2762 + $0x54] sm:$0xf]
      %v2785 = vld [vmem:[%s2762 + $0x58] sm:$0xf]
      %v2786 = vld [vmem:[%s2762 + $0x5c] sm:$0xf]
      %v2787 = vld [vmem:[%s2762 + $0x60] sm:$0xf]
      %v2788 = vld [vmem:[%s2762 + $0x64] sm:$0xf]
      %v2789 = vld [vmem:[%s2762 + $0x68] sm:$0xf]
      %v2790 = vld [vmem:[%s2762 + $0x6c] sm:$0xf]
      %v2791 = vld [vmem:[%s2762 + $0x70] sm:$0xf]
      %v2792 = vld [vmem:[%s2762 + $0x74] sm:$0xf]
      %v2793 = vld [vmem:[%s2762 + $0x78] sm:$0xf]
      %v2794 = vld [vmem:[%s2762 + $0x7c] sm:$0xf]
      %v2795 = vld [vmem:[%s2762 + $0x80] sm:$0xf]
      %v2796 = vld [vmem:[%s2762 + $0x84] sm:$0xf]
      %v2797 = vld [vmem:[%s2762 + $0x88] sm:$0xf]
      %v2798 = vld [vmem:[%s2762 + $0x8c] sm:$0xf]
      %v2835 = vunpack.c.l.b16 %v2763
      %v2836 = vunpack.c.l.b16 %v2764
      %v2837 = vunpack.c.l.b16 %v2765
      %v2838 = vunpack.c.l.b16 %v2766
      %v2839 = vunpack.c.l.b16 %v2767
      %v2840 = vunpack.c.l.b16 %v2768
      %v2841 = vunpack.c.l.b16 %v2769
      %v2842 = vunpack.c.l.b16 %v2770
      %v2843 = vunpack.c.l.b16 %v2771
      %v2844 = vunpack.c.l.b16 %v2772
      %v2845 = vunpack.c.l.b16 %v2773
      %v2846 = vunpack.c.l.b16 %v2774
      %v2847 = vunpack.c.l.b16 %v2775
      %v2848 = vunpack.c.l.b16 %v2776
      %v2849 = vunpack.c.l.b16 %v2777
      %v2850 = vunpack.c.l.b16 %v2778
      %v2851 = vunpack.c.l.b16 %v2779
      %v2852 = vunpack.c.l.b16 %v2780
      %v2853 = vunpack.c.l.b16 %v2781
      %v2854 = vunpack.c.l.b16 %v2782
      %v2855 = vunpack.c.l.b16 %v2783
      %v2856 = vunpack.c.l.b16 %v2784
      %v2857 = vunpack.c.l.b16 %v2785
      %v2858 = vunpack.c.l.b16 %v2786
      %v2859 = vunpack.c.l.b16 %v2787
      %v2860 = vunpack.c.l.b16 %v2788
      %v2861 = vunpack.c.l.b16 %v2789
      %v2862 = vunpack.c.l.b16 %v2790
      %v2863 = vunpack.c.l.b16 %v2791
      %v2864 = vunpack.c.l.b16 %v2792
      %v2865 = vunpack.c.l.b16 %v2793
      %v2866 = vunpack.c.l.b16 %v2794
      %v2867 = vunpack.c.l.b16 %v2795
      %v2868 = vunpack.c.l.b16 %v2796
      %v2869 = vunpack.c.l.b16 %v2797
      %v2870 = vunpack.c.l.b16 %v2798
      %v2871 = vpack.c.b16 %v2836, %v2835
      %v2872 = vpack.c.b16 %v2838, %v2837
      %v2873 = vpack.c.b16 %v2840, %v2839
      %v2874 = vpack.c.b16 %v2842, %v2841
      %v2875 = vpack.c.b16 %v2844, %v2843
      %v2876 = vpack.c.b16 %v2846, %v2845
      %v2877 = vpack.c.b16 %v2848, %v2847
      %v2878 = vpack.c.b16 %v2850, %v2849
      %v2879 = vpack.c.b16 %v2852, %v2851
      %v2880 = vpack.c.b16 %v2854, %v2853
      %v2881 = vpack.c.b16 %v2856, %v2855
      %v2882 = vpack.c.b16 %v2858, %v2857
      %v2883 = vpack.c.b16 %v2860, %v2859
      %v2884 = vpack.c.b16 %v2862, %v2861
      %v2885 = vpack.c.b16 %v2864, %v2863
      %v2886 = vpack.c.b16 %v2866, %v2865
      %v2887 = vpack.c.b16 %v2868, %v2867
      %v2888 = vpack.c.b16 %v2870, %v2869
      %v2908 = vsel %vm520, %v2202, 0
      %v2911 = vsel %vm520, %v2203, 0
      %v2914 = vsel %vm520, %v2204, 0
      %v2917 = vsel %vm520, %v2205, 0
      %v2920 = vsel %vm520, %v2206, 0
      %v2923 = vsel %vm520, %v2207, 0
      %v2926 = vsel %vm520, %v2208, 0
      %v2929 = vsel %vm520, %v2209, 0
      %v2932 = vsel %vm520, %v2210, 0
      %v2935 = vsel %vm520, %v2211, 0
      %v2938 = vsel %vm520, %v2212, 0
      %v2941 = vsel %vm520, %v2213, 0
      %v2944 = vsel %vm520, %v2214, 0
      %v2947 = vsel %vm520, %v2215, 0
      %v2950 = vsel %vm520, %v2216, 0
      %v2953 = vsel %vm520, %v2217, 0
      %2955 = vmatprep.subr.bf16.mxu0 0
      %2956 = vmatpush1.bf16.msra.mxu0 %v2871
      %2957 = vmatprep.subr.bf16.mxu0 0
      %2958 = vmatpush1.bf16.msra.mxu0 %v2872
      %2959 = vmatprep.subr.bf16.mxu0 0
      %2960 = vmatpush1.bf16.msra.mxu0 %v2873
      %2961 = vmatprep.subr.bf16.mxu0 0
      %2962 = vmatpush1.bf16.msra.mxu0 %v2874
      %2963 = vmatprep.subr.bf16.mxu0 0
      %2964 = vmatpush1.bf16.msra.mxu0 %v2875
      %2965 = vmatprep.subr.bf16.mxu0 0
      %2966 = vmatpush1.bf16.msra.mxu0 %v2876
      %2967 = vmatprep.subr.bf16.mxu0 0
      %2968 = vmatpush1.bf16.msra.mxu0 %v2877
      %2969 = vmatprep.subr.bf16.mxu0 0
      %2970 = vmatpush1.bf16.msra.mxu0 %v2878
      %2971 = vmatprep.subr.bf16.mxu0 0
      %2972 = vmatpush1.bf16.msra.mxu0 %v2879
      %2973 = vmatprep.subr.bf16.mxu0 0
      %2974 = vmatpush1.bf16.msra.mxu0 %v2880
      %2975 = vmatprep.subr.bf16.mxu0 0
      %2976 = vmatpush1.bf16.msra.mxu0 %v2881
      %2977 = vmatprep.subr.bf16.mxu0 0
      %2978 = vmatpush1.bf16.msra.mxu0 %v2882
      %2979 = vmatprep.subr.bf16.mxu0 0
      %2980 = vmatpush1.bf16.msra.mxu0 %v2883
      %2981 = vmatprep.subr.bf16.mxu0 0
      %2982 = vmatpush1.bf16.msra.mxu0 %v2884
      %2983 = vmatprep.subr.bf16.mxu0 0
      %2984 = vmatpush1.bf16.msra.mxu0 %v2885
      %2985 = vmatprep.subr.bf16.mxu0 0
      %2986 = vmatpush1.bf16.msra.mxu0 %v2886
      %2987 = vmatprep.mubr.bf16.mxu0 %v2715
      %2988 = vmatmul.mubr.bf16.gmra.mrb[0].mxu0 %v2587
      %v2989 = vpop.f32.mrb[0].mxu0
      %v2990 = vadd.f32 0.0, %v2989
      %v2991 = vpop.f32.mrb[0].mxu0
      %v2992 = vpop.f32.mrb[0].mxu0
      %v2993 = vadd.f32 0.0, %v2992
      %v2994 = vpop.f32.mrb[0].mxu0
      %2995 = vmatprep.mubr.bf16.mxu0 %v2718
      %2996 = vmatmul.mubr.bf16.gmra.mrb[0].mxu0 %v2590
      %v2997 = vpop.f32.mrb[0].mxu0
      %v2998 = vadd.f32 0.0, %v2997
      %v2999 = vpop.f32.mrb[0].mxu0
      %v3000 = vpop.f32.mrb[0].mxu0
      %v3001 = vadd.f32 0.0, %v3000
      %v3002 = vpop.f32.mrb[0].mxu0
      %3003 = vmatprep.mubr.bf16.mxu0 %v2721
      %3004 = vmatmul.mubr.bf16.gmra.mrb[0].mxu0 %v2593
      %v3005 = vpop.f32.mrb[0].mxu0
      %v3006 = vadd.f32 0.0, %v3005
      %v3007 = vpop.f32.mrb[0].mxu0
      %v3008 = vpop.f32.mrb[0].mxu0
      %v3009 = vadd.f32 0.0, %v3008
      %v3010 = vpop.f32.mrb[0].mxu0
      %3011 = vmatprep.mubr.bf16.mxu0 %v2724
      %3012 = vmatmul.mubr.bf16.gmra.mrb[0].mxu0 %v2596
      %v3013 = vpop.f32.mrb[0].mxu0
      %v3014 = vadd.f32 0.0, %v3013
      %v3015 = vpop.f32.mrb[0].mxu0
      %v3016 = vpop.f32.mrb[0].mxu0
      %v3017 = vadd.f32 0.0, %v3016
      %v3018 = vpop.f32.mrb[0].mxu0
      %3019 = vmatprep.mubr.bf16.mxu0 %v2727
      %3020 = vmatmul.mubr.bf16.gmra.mrb[0].mxu0 %v2599
      %v3021 = vpop.f32.mrb[0].mxu0
      %v3022 = vadd.f32 0.0, %v3021
      %v3023 = vpop.f32.mrb[0].mxu0
      %v3024 = vpop.f32.mrb[0].mxu0
      %v3025 = vadd.f32 0.0, %v3024
      %v3026 = vpop.f32.mrb[0].mxu0
      %3027 = vmatprep.mubr.bf16.mxu0 %v2730
      %3028 = vmatmul.mubr.bf16.gmra.mrb[0].mxu0 %v2602
      %v3029 = vpop.f32.mrb[0].mxu0
      %v3030 = vadd.f32 0.0, %v3029
      %v3031 = vpop.f32.mrb[0].mxu0
      %v3032 = vpop.f32.mrb[0].mxu0
      %v3033 = vadd.f32 0.0, %v3032
      %v3034 = vpop.f32.mrb[0].mxu0
      %3035 = vmatprep.mubr.bf16.mxu0 %v2733
      %3036 = vmatmul.mubr.bf16.gmra.mrb[0].mxu0 %v2605
      %v3037 = vpop.f32.mrb[0].mxu0
      %v3038 = vadd.f32 0.0, %v3037
      %v3039 = vpop.f32.mrb[0].mxu0
      %v3040 = vpop.f32.mrb[0].mxu0
      %v3041 = vadd.f32 0.0, %v3040
      %v3042 = vpop.f32.mrb[0].mxu0
      %3043 = vmatprep.mubr.bf16.mxu0 %v2736
      %3044 = vmatmul.mubr.bf16.gmra.mrb[0].mxu0 %v2608
      %v3045 = vpop.f32.mrb[0].mxu0
      %v3046 = vadd.f32 0.0, %v3045
      %v3047 = vpop.f32.mrb[0].mxu0
      %v3048 = vpop.f32.mrb[0].mxu0
      %v3049 = vadd.f32 0.0, %v3048
      %v3050 = vpop.f32.mrb[0].mxu0
      %3051 = vmatprep.mubr.bf16.mxu0 %v2739
      %3052 = vmatmul.mubr.bf16.gmra.mrb[0].mxu0 %v2611
      %v3053 = vpop.f32.mrb[0].mxu0
      %v3054 = vadd.f32 0.0, %v3053
      %v3055 = vpop.f32.mrb[0].mxu0
      %v3056 = vpop.f32.mrb[0].mxu0
      %v3057 = vadd.f32 0.0, %v3056
      %v3058 = vpop.f32.mrb[0].mxu0
      %3059 = vmatprep.mubr.bf16.mxu0 %v2742
      %3060 = vmatmul.mubr.bf16.gmra.mrb[0].mxu0 %v2614
      %v3061 = vpop.f32.mrb[0].mxu0
      %v3062 = vadd.f32 0.0, %v3061
      %v3063 = vpop.f32.mrb[0].mxu0
      %v3064 = vpop.f32.mrb[0].mxu0
      %v3065 = vadd.f32 0.0, %v3064
      %v3066 = vpop.f32.mrb[0].mxu0
      %3067 = vmatprep.mubr.bf16.mxu0 %v2745
      %3068 = vmatmul.mubr.bf16.gmra.mrb[0].mxu0 %v2617
      %v3069 = vpop.f32.mrb[0].mxu0
      %v3070 = vadd.f32 0.0, %v3069
      %v3071 = vpop.f32.mrb[0].mxu0
      %v3072 = vpop.f32.mrb[0].mxu0
      %v3073 = vadd.f32 0.0, %v3072
      %v3074 = vpop.f32.mrb[0].mxu0
      %3075 = vmatprep.mubr.bf16.mxu0 %v2748
      %3076 = vmatmul.mubr.bf16.gmra.mrb[0].mxu0 %v2620
      %v3077 = vpop.f32.mrb[0].mxu0
      %v3078 = vadd.f32 0.0, %v3077
      %v3079 = vpop.f32.mrb[0].mxu0
      %v3080 = vpop.f32.mrb[0].mxu0
      %v3081 = vadd.f32 0.0, %v3080
      %v3082 = vpop.f32.mrb[0].mxu0
      %3083 = vmatprep.mubr.bf16.mxu0 %v2751
      %3084 = vmatmul.mubr.bf16.gmra.mrb[0].mxu0 %v2623
      %v3085 = vpop.f32.mrb[0].mxu0
      %v3086 = vadd.f32 0.0, %v3085
      %v3087 = vpop.f32.mrb[0].mxu0
      %v3088 = vpop.f32.mrb[0].mxu0
      %v3089 = vadd.f32 0.0, %v3088
      %v3090 = vpop.f32.mrb[0].mxu0
      %3091 = vmatprep.mubr.bf16.mxu0 %v2754
      %3092 = vmatmul.mubr.bf16.gmra.mrb[0].mxu0 %v2626
      %v3093 = vpop.f32.mrb[0].mxu0
      %v3094 = vadd.f32 0.0, %v3093
      %v3095 = vpop.f32.mrb[0].mxu0
      %v3096 = vpop.f32.mrb[0].mxu0
      %v3097 = vadd.f32 0.0, %v3096
      %v3098 = vpop.f32.mrb[0].mxu0
      %3099 = vmatprep.mubr.bf16.mxu0 %v2757
      %3100 = vmatmul.mubr.bf16.gmra.mrb[0].mxu0 %v2629
      %v3101 = vpop.f32.mrb[0].mxu0
      %v3102 = vadd.f32 0.0, %v3101
      %v3103 = vpop.f32.mrb[0].mxu0
      %v3104 = vpop.f32.mrb[0].mxu0
      %v3105 = vadd.f32 0.0, %v3104
      %v3106 = vpop.f32.mrb[0].mxu0
      %3107 = vmatprep.mubr.bf16.mxu0 %v2760
      %3108 = vmatmul.mubr.bf16.gmra.mrb[0].mxu0 %v2632
      %v3109 = vpop.f32.mrb[0].mxu0
      %v3110 = vadd.f32 0.0, %v3109
      %v3111 = vpop.f32.mrb[0].mxu0
      %v3112 = vpop.f32.mrb[0].mxu0
      %v3113 = vadd.f32 0.0, %v3112
      %v3114 = vpop.f32.mrb[0].mxu0
      %3115 = vdwg.mxu0
      %3116 = vmatprep.subr.bf16.mxu0 0
      %3117 = vmatpush1.bf16.msra.mxu0 %v2887
      %3118 = vmatprep.subr.bf16.mxu0 0
      %3119 = vmatpush1.bf16.msra.mxu0 %v2888
      %3120 = vmatprep.subr.bf16.mxu0 0
      %3121 = vmatpush1.bf16.msra.mxu0 0
      %3122 = vmatprep.subr.bf16.mxu0 0
      %3123 = vmatpush1.bf16.msra.mxu0 0
      %3124 = vmatprep.subr.bf16.mxu0 0
      %3125 = vmatpush1.bf16.msra.mxu0 0
      %3126 = vmatprep.subr.bf16.mxu0 0
      %3127 = vmatpush1.bf16.msra.mxu0 0
      %3128 = vmatprep.subr.bf16.mxu0 0
      %3129 = vmatpush1.bf16.msra.mxu0 0
      %3130 = vmatprep.subr.bf16.mxu0 0
      %3131 = vmatpush1.bf16.msra.mxu0 0
      %3132 = vmatprep.subr.bf16.mxu0 0
      %3133 = vmatpush1.bf16.msra.mxu0 0
      %3134 = vmatprep.subr.bf16.mxu0 0
      %3135 = vmatpush1.bf16.msra.mxu0 0
      %3136 = vmatprep.subr.bf16.mxu0 0
      %3137 = vmatpush1.bf16.msra.mxu0 0
      %3138 = vmatprep.subr.bf16.mxu0 0
      %3139 = vmatpush1.bf16.msra.mxu0 0
      %3140 = vmatprep.subr.bf16.mxu0 0
      %3141 = vmatpush1.bf16.msra.mxu0 0
      %3142 = vmatprep.subr.bf16.mxu0 0
      %3143 = vmatpush1.bf16.msra.mxu0 0
      %3144 = vmatprep.subr.bf16.mxu0 0
      %3145 = vmatpush1.bf16.msra.mxu0 0
      %3146 = vmatprep.subr.bf16.mxu0 0
      %3147 = vmatpush1.bf16.msra.mxu0 0
      %3148 = vmatprep.mubr.bf16.mxu0 0
      %3149 = vmatmul.mubr.bf16.gmra.mrb[0].mxu0 %v2908
      %v3150 = vpop.f32.mrb[0].mxu0
      %v3151 = vadd.f32 %v2990, %v3150
      %v3152 = vpop.f32.mrb[0].mxu0
      %v3153 = vpop.f32.mrb[0].mxu0
      %v3154 = vadd.f32 %v2993, %v3153
      %v3155 = vpop.f32.mrb[0].mxu0
      %3156 = vmatprep.mubr.bf16.mxu0 0
      %3157 = vmatmul.mubr.bf16.gmra.mrb[0].mxu0 %v2911
      %v3158 = vpop.f32.mrb[0].mxu0
      %v3159 = vadd.f32 %v2998, %v3158
      %v3160 = vpop.f32.mrb[0].mxu0
      %v3161 = vpop.f32.mrb[0].mxu0
      %v3162 = vadd.f32 %v3001, %v3161
      %v3163 = vpop.f32.mrb[0].mxu0
      %3164 = vmatprep.mubr.bf16.mxu0 0
      %3165 = vmatmul.mubr.bf16.gmra.mrb[0].mxu0 %v2914
      %v3166 = vpop.f32.mrb[0].mxu0
      %v3167 = vadd.f32 %v3006, %v3166
      %v3168 = vpop.f32.mrb[0].mxu0
      %v3169 = vpop.f32.mrb[0].mxu0
      %v3170 = vadd.f32 %v3009, %v3169
      %v3171 = vpop.f32.mrb[0].mxu0
      %3172 = vmatprep.mubr.bf16.mxu0 0
      %3173 = vmatmul.mubr.bf16.gmra.mrb[0].mxu0 %v2917
      %v3174 = vpop.f32.mrb[0].mxu0
      %v3175 = vadd.f32 %v3014, %v3174
      %v3176 = vpop.f32.mrb[0].mxu0
      %v3177 = vpop.f32.mrb[0].mxu0
      %v3178 = vadd.f32 %v3017, %v3177
      %v3179 = vpop.f32.mrb[0].mxu0
      %3180 = vmatprep.mubr.bf16.mxu0 0
      %3181 = vmatmul.mubr.bf16.gmra.mrb[0].mxu0 %v2920
      %v3182 = vpop.f32.mrb[0].mxu0
      %v3183 = vadd.f32 %v3022, %v3182
      %v3184 = vpop.f32.mrb[0].mxu0
      %v3185 = vpop.f32.mrb[0].mxu0
      %v3186 = vadd.f32 %v3025, %v3185
      %v3187 = vpop.f32.mrb[0].mxu0
      %3188 = vmatprep.mubr.bf16.mxu0 0
      %3189 = vmatmul.mubr.bf16.gmra.mrb[0].mxu0 %v2923
      %v3190 = vpop.f32.mrb[0].mxu0
      %v3191 = vadd.f32 %v3030, %v3190
      %v3192 = vpop.f32.mrb[0].mxu0
      %v3193 = vpop.f32.mrb[0].mxu0
      %v3194 = vadd.f32 %v3033, %v3193
      %v3195 = vpop.f32.mrb[0].mxu0
      %3196 = vmatprep.mubr.bf16.mxu0 0
      %3197 = vmatmul.mubr.bf16.gmra.mrb[0].mxu0 %v2926
      %v3198 = vpop.f32.mrb[0].mxu0
      %v3199 = vadd.f32 %v3038, %v3198
      %v3200 = vpop.f32.mrb[0].mxu0
      %v3201 = vpop.f32.mrb[0].mxu0
      %v3202 = vadd.f32 %v3041, %v3201
      %v3203 = vpop.f32.mrb[0].mxu0
      %3204 = vmatprep.mubr.bf16.mxu0 0
      %3205 = vmatmul.mubr.bf16.gmra.mrb[0].mxu0 %v2929
      %v3206 = vpop.f32.mrb[0].mxu0
      %v3207 = vadd.f32 %v3046, %v3206
      %v3208 = vpop.f32.mrb[0].mxu0
      %v3209 = vpop.f32.mrb[0].mxu0
      %v3210 = vadd.f32 %v3049, %v3209
      %v3211 = vpop.f32.mrb[0].mxu0
      %3212 = vmatprep.mubr.bf16.mxu0 0
      %3213 = vmatmul.mubr.bf16.gmra.mrb[0].mxu0 %v2932
      %v3214 = vpop.f32.mrb[0].mxu0
      %v3215 = vadd.f32 %v3054, %v3214
      %v3216 = vpop.f32.mrb[0].mxu0
      %v3217 = vpop.f32.mrb[0].mxu0
      %v3218 = vadd.f32 %v3057, %v3217
      %v3219 = vpop.f32.mrb[0].mxu0
      %3220 = vmatprep.mubr.bf16.mxu0 0
      %3221 = vmatmul.mubr.bf16.gmra.mrb[0].mxu0 %v2935
      %v3222 = vpop.f32.mrb[0].mxu0
      %v3223 = vadd.f32 %v3062, %v3222
      %v3224 = vpop.f32.mrb[0].mxu0
      %v3225 = vpop.f32.mrb[0].mxu0
      %v3226 = vadd.f32 %v3065, %v3225
      %v3227 = vpop.f32.mrb[0].mxu0
      %3228 = vmatprep.mubr.bf16.mxu0 0
      %3229 = vmatmul.mubr.bf16.gmra.mrb[0].mxu0 %v2938
      %v3230 = vpop.f32.mrb[0].mxu0
      %v3231 = vadd.f32 %v3070, %v3230
      %v3232 = vpop.f32.mrb[0].mxu0
      %v3233 = vpop.f32.mrb[0].mxu0
      %v3234 = vadd.f32 %v3073, %v3233
      %v3235 = vpop.f32.mrb[0].mxu0
      %3236 = vmatprep.mubr.bf16.mxu0 0
      %3237 = vmatmul.mubr.bf16.gmra.mrb[0].mxu0 %v2941
      %v3238 = vpop.f32.mrb[0].mxu0
      %v3239 = vadd.f32 %v3078, %v3238
      %v3240 = vpop.f32.mrb[0].mxu0
      %v3241 = vpop.f32.mrb[0].mxu0
      %v3242 = vadd.f32 %v3081, %v3241
      %v3243 = vpop.f32.mrb[0].mxu0
      %3244 = vmatprep.mubr.bf16.mxu0 0
      %3245 = vmatmul.mubr.bf16.gmra.mrb[0].mxu0 %v2944
      %v3246 = vpop.f32.mrb[0].mxu0
      %v3247 = vadd.f32 %v3086, %v3246
      %v3248 = vpop.f32.mrb[0].mxu0
      %v3249 = vpop.f32.mrb[0].mxu0
      %v3250 = vadd.f32 %v3089, %v3249
      %v3251 = vpop.f32.mrb[0].mxu0
      %3252 = vmatprep.mubr.bf16.mxu0 0
      %3253 = vmatmul.mubr.bf16.gmra.mrb[0].mxu0 %v2947
      %v3254 = vpop.f32.mrb[0].mxu0
      %v3255 = vadd.f32 %v3094, %v3254
      %v3256 = vpop.f32.mrb[0].mxu0
      %v3257 = vpop.f32.mrb[0].mxu0
      %v3258 = vadd.f32 %v3097, %v3257
      %v3259 = vpop.f32.mrb[0].mxu0
      %3260 = vmatprep.mubr.bf16.mxu0 0
      %3261 = vmatmul.mubr.bf16.gmra.mrb[0].mxu0 %v2950
      %v3262 = vpop.f32.mrb[0].mxu0
      %v3263 = vadd.f32 %v3102, %v3262
      %v3264 = vpop.f32.mrb[0].mxu0
      %v3265 = vpop.f32.mrb[0].mxu0
      %v3266 = vadd.f32 %v3105, %v3265
      %v3267 = vpop.f32.mrb[0].mxu0
      %3268 = vmatprep.mubr.bf16.mxu0 0
      %3269 = vmatmul.mubr.bf16.gmra.mrb[0].mxu0 %v2953
      %v3270 = vpop.f32.mrb[0].mxu0
      %v3271 = vadd.f32 %v3110, %v3270
      %v3272 = vpop.f32.mrb[0].mxu0
      %v3273 = vpop.f32.mrb[0].mxu0
      %v3274 = vadd.f32 %v3113, %v3273
      %v3275 = vpop.f32.mrb[0].mxu0
      %3276 = vdwg.mxu0
      %v3313 = vunpack.c.l.b16 %v1747
      %v3314 = vunpack.c.l.b16 %v1748
      %v3315 = vunpack.c.l.b16 %v1749
      %v3316 = vunpack.c.l.b16 %v1750
      %v3317 = vunpack.c.l.b16 %v1751
      %v3318 = vunpack.c.l.b16 %v1752
      %v3319 = vunpack.c.l.b16 %v1753
      %v3320 = vunpack.c.l.b16 %v1754
      %v3321 = vunpack.c.l.b16 %v1755
      %v3322 = vunpack.c.l.b16 %v1756
      %v3323 = vunpack.c.l.b16 %v1757
      %v3324 = vunpack.c.l.b16 %v1758
      %v3325 = vunpack.c.l.b16 %v1759
      %v3326 = vunpack.c.l.b16 %v1760
      %v3327 = vunpack.c.l.b16 %v1761
      %v3328 = vunpack.c.l.b16 %v1762
      %v3329 = vunpack.c.l.b16 %v1763
      %v3330 = vunpack.c.l.b16 %v1764
      %v3331 = vunpack.c.l.b16 %v1765
      %v3332 = vunpack.c.l.b16 %v1766
      %v3333 = vunpack.c.l.b16 %v1767
      %v3334 = vunpack.c.l.b16 %v1768
      %v3335 = vunpack.c.l.b16 %v1769
      %v3336 = vunpack.c.l.b16 %v1770
      %v3337 = vunpack.c.l.b16 %v1771
      %v3338 = vunpack.c.l.b16 %v1772
      %v3339 = vunpack.c.l.b16 %v1773
      %v3340 = vunpack.c.l.b16 %v1774
      %v3341 = vunpack.c.l.b16 %v1775
      %v3342 = vunpack.c.l.b16 %v1776
      %v3343 = vunpack.c.l.b16 %v1777
      %v3344 = vunpack.c.l.b16 %v1778
      %v3345 = vunpack.c.l.b16 %v1779
      %v3346 = vunpack.c.l.b16 %v1780
      %v3347 = vunpack.c.l.b16 %v1781
      %v3348 = vunpack.c.l.b16 %v1782
      %v3349 = vpack.c.b16 %v3314, %v3313
      %v3350 = vpack.c.b16 %v3316, %v3315
      %v3351 = vpack.c.b16 %v3318, %v3317
      %v3352 = vpack.c.b16 %v3320, %v3319
      %v3353 = vpack.c.b16 %v3322, %v3321
      %v3354 = vpack.c.b16 %v3324, %v3323
      %v3355 = vpack.c.b16 %v3326, %v3325
      %v3356 = vpack.c.b16 %v3328, %v3327
      %v3357 = vpack.c.b16 %v3330, %v3329
      %v3358 = vpack.c.b16 %v3332, %v3331
      %v3359 = vpack.c.b16 %v3334, %v3333
      %v3360 = vpack.c.b16 %v3336, %v3335
      %v3361 = vpack.c.b16 %v3338, %v3337
      %v3362 = vpack.c.b16 %v3340, %v3339
      %v3363 = vpack.c.b16 %v3342, %v3341
      %v3364 = vpack.c.b16 %v3344, %v3343
      %v3365 = vpack.c.b16 %v3346, %v3345
      %v3366 = vpack.c.b16 %v3348, %v3347
      %v3386 = vsel %vm520, %v1185, 0
      %v3389 = vsel %vm520, %v1186, 0
      %v3392 = vsel %vm520, %v1187, 0
      %v3395 = vsel %vm520, %v1188, 0
      %v3398 = vsel %vm520, %v1189, 0
      %v3401 = vsel %vm520, %v1190, 0
      %v3404 = vsel %vm520, %v1191, 0
      %v3407 = vsel %vm520, %v1192, 0
      %v3410 = vsel %vm520, %v1193, 0
      %v3413 = vsel %vm520, %v1194, 0
      %v3416 = vsel %vm520, %v1195, 0
      %v3419 = vsel %vm520, %v1196, 0
      %v3422 = vsel %vm520, %v1197, 0
      %v3425 = vsel %vm520, %v1198, 0
      %v3428 = vsel %vm520, %v1199, 0
      %v3431 = vsel %vm520, %v1200, 0
      %3433 = vmatprep.subr.bf16.mxu0 0
      %3434 = vmatpush1.bf16.msra.mxu0 %v3349
      %3435 = vmatprep.subr.bf16.mxu0 0
      %3436 = vmatpush1.bf16.msra.mxu0 %v3350
      %3437 = vmatprep.subr.bf16.mxu0 0
      %3438 = vmatpush1.bf16.msra.mxu0 %v3351
      %3439 = vmatprep.subr.bf16.mxu0 0
      %3440 = vmatpush1.bf16.msra.mxu0 %v3352
      %3441 = vmatprep.subr.bf16.mxu0 0
      %3442 = vmatpush1.bf16.msra.mxu0 %v3353
      %3443 = vmatprep.subr.bf16.mxu0 0
      %3444 = vmatpush1.bf16.msra.mxu0 %v3354
      %3445 = vmatprep.subr.bf16.mxu0 0
      %3446 = vmatpush1.bf16.msra.mxu0 %v3355
      %3447 = vmatprep.subr.bf16.mxu0 0
      %3448 = vmatpush1.bf16.msra.mxu0 %v3356
      %3449 = vmatprep.subr.bf16.mxu0 0
      %3450 = vmatpush1.bf16.msra.mxu0 %v3357
      %3451 = vmatprep.subr.bf16.mxu0 0
      %3452 = vmatpush1.bf16.msra.mxu0 %v3358
      %3453 = vmatprep.subr.bf16.mxu0 0
      %3454 = vmatpush1.bf16.msra.mxu0 %v3359
      %3455 = vmatprep.subr.bf16.mxu0 0
      %3456 = vmatpush1.bf16.msra.mxu0 %v3360
      %3457 = vmatprep.subr.bf16.mxu0 0
      %3458 = vmatpush1.bf16.msra.mxu0 %v3361
      %3459 = vmatprep.subr.bf16.mxu0 0
      %3460 = vmatpush1.bf16.msra.mxu0 %v3362
      %3461 = vmatprep.subr.bf16.mxu0 0
      %3462 = vmatpush1.bf16.msra.mxu0 %v3363
      %3463 = vmatprep.subr.bf16.mxu0 0
      %3464 = vmatpush1.bf16.msra.mxu0 %v3364
      %3465 = vmatprep.mubr.bf16.mxu0 %v1700
      %3466 = vmatmul.mubr.bf16.gmra.mrb[0].mxu0 %v1572
      %v3467 = vpop.f32.mrb[0].mxu0
      %v3468 = vadd.f32 %v3151, %v3467
      %v3469 = vpop.f32.mrb[0].mxu0
      %v3470 = vpop.f32.mrb[0].mxu0
      %v3471 = vadd.f32 %v3154, %v3470
      %v3472 = vpop.f32.mrb[0].mxu0
      %3473 = vmatprep.mubr.bf16.mxu0 %v1703
      %3474 = vmatmul.mubr.bf16.gmra.mrb[0].mxu0 %v1575
      %v3475 = vpop.f32.mrb[0].mxu0
      %v3476 = vadd.f32 %v3159, %v3475
      %v3477 = vpop.f32.mrb[0].mxu0
      %v3478 = vpop.f32.mrb[0].mxu0
      %v3479 = vadd.f32 %v3162, %v3478
      %v3480 = vpop.f32.mrb[0].mxu0
      %3481 = vmatprep.mubr.bf16.mxu0 %v1706
      %3482 = vmatmul.mubr.bf16.gmra.mrb[0].mxu0 %v1578
      %v3483 = vpop.f32.mrb[0].mxu0
      %v3484 = vadd.f32 %v3167, %v3483
      %v3485 = vpop.f32.mrb[0].mxu0
      %v3486 = vpop.f32.mrb[0].mxu0
      %v3487 = vadd.f32 %v3170, %v3486
      %v3488 = vpop.f32.mrb[0].mxu0
      %3489 = vmatprep.mubr.bf16.mxu0 %v1709
      %3490 = vmatmul.mubr.bf16.gmra.mrb[0].mxu0 %v1581
      %v3491 = vpop.f32.mrb[0].mxu0
      %v3492 = vadd.f32 %v3175, %v3491
      %v3493 = vpop.f32.mrb[0].mxu0
      %v3494 = vpop.f32.mrb[0].mxu0
      %v3495 = vadd.f32 %v3178, %v3494
      %v3496 = vpop.f32.mrb[0].mxu0
      %3497 = vmatprep.mubr.bf16.mxu0 %v1712
      %3498 = vmatmul.mubr.bf16.gmra.mrb[0].mxu0 %v1584
      %v3499 = vpop.f32.mrb[0].mxu0
      %v3500 = vadd.f32 %v3183, %v3499
      %v3501 = vpop.f32.mrb[0].mxu0
      %v3502 = vpop.f32.mrb[0].mxu0
      %v3503 = vadd.f32 %v3186, %v3502
      %v3504 = vpop.f32.mrb[0].mxu0
      %3505 = vmatprep.mubr.bf16.mxu0 %v1715
      %3506 = vmatmul.mubr.bf16.gmra.mrb[0].mxu0 %v1587
      %v3507 = vpop.f32.mrb[0].mxu0
      %v3508 = vadd.f32 %v3191, %v3507
      %v3509 = vpop.f32.mrb[0].mxu0
      %v3510 = vpop.f32.mrb[0].mxu0
      %v3511 = vadd.f32 %v3194, %v3510
      %v3512 = vpop.f32.mrb[0].mxu0
      %3513 = vmatprep.mubr.bf16.mxu0 %v1718
      %3514 = vmatmul.mubr.bf16.gmra.mrb[0].mxu0 %v1590
      %v3515 = vpop.f32.mrb[0].mxu0
      %v3516 = vadd.f32 %v3199, %v3515
      %v3517 = vpop.f32.mrb[0].mxu0
      %v3518 = vpop.f32.mrb[0].mxu0
      %v3519 = vadd.f32 %v3202, %v3518
      %v3520 = vpop.f32.mrb[0].mxu0
      %3521 = vmatprep.mubr.bf16.mxu0 %v1721
      %3522 = vmatmul.mubr.bf16.gmra.mrb[0].mxu0 %v1593
      %v3523 = vpop.f32.mrb[0].mxu0
      %v3524 = vadd.f32 %v3207, %v3523
      %v3525 = vpop.f32.mrb[0].mxu0
      %v3526 = vpop.f32.mrb[0].mxu0
      %v3527 = vadd.f32 %v3210, %v3526
      %v3528 = vpop.f32.mrb[0].mxu0
      %3529 = vmatprep.mubr.bf16.mxu0 %v1724
      %3530 = vmatmul.mubr.bf16.gmra.mrb[0].mxu0 %v1596
      %v3531 = vpop.f32.mrb[0].mxu0
      %v3532 = vadd.f32 %v3215, %v3531
      %v3533 = vpop.f32.mrb[0].mxu0
      %v3534 = vpop.f32.mrb[0].mxu0
      %v3535 = vadd.f32 %v3218, %v3534
      %v3536 = vpop.f32.mrb[0].mxu0
      %3537 = vmatprep.mubr.bf16.mxu0 %v1727
      %3538 = vmatmul.mubr.bf16.gmra.mrb[0].mxu0 %v1599
      %v3539 = vpop.f32.mrb[0].mxu0
      %v3540 = vadd.f32 %v3223, %v3539
      %v3541 = vpop.f32.mrb[0].mxu0
      %v3542 = vpop.f32.mrb[0].mxu0
      %v3543 = vadd.f32 %v3226, %v3542
      %v3544 = vpop.f32.mrb[0].mxu0
      %3545 = vmatprep.mubr.bf16.mxu0 %v1730
      %3546 = vmatmul.mubr.bf16.gmra.mrb[0].mxu0 %v1602
      %v3547 = vpop.f32.mrb[0].mxu0
      %v3548 = vadd.f32 %v3231, %v3547
      %v3549 = vpop.f32.mrb[0].mxu0
      %v3550 = vpop.f32.mrb[0].mxu0
      %v3551 = vadd.f32 %v3234, %v3550
      %v3552 = vpop.f32.mrb[0].mxu0
      %3553 = vmatprep.mubr.bf16.mxu0 %v1733
      %3554 = vmatmul.mubr.bf16.gmra.mrb[0].mxu0 %v1605
      %v3555 = vpop.f32.mrb[0].mxu0
      %v3556 = vadd.f32 %v3239, %v3555
      %v3557 = vpop.f32.mrb[0].mxu0
      %v3558 = vpop.f32.mrb[0].mxu0
      %v3559 = vadd.f32 %v3242, %v3558
      %v3560 = vpop.f32.mrb[0].mxu0
      %3561 = vmatprep.mubr.bf16.mxu0 %v1736
      %3562 = vmatmul.mubr.bf16.gmra.mrb[0].mxu0 %v1608
      %v3563 = vpop.f32.mrb[0].mxu0
      %v3564 = vadd.f32 %v3247, %v3563
      %v3565 = vpop.f32.mrb[0].mxu0
      %v3566 = vpop.f32.mrb[0].mxu0
      %v3567 = vadd.f32 %v3250, %v3566
      %v3568 = vpop.f32.mrb[0].mxu0
      %3569 = vmatprep.mubr.bf16.mxu0 %v1739
      %3570 = vmatmul.mubr.bf16.gmra.mrb[0].mxu0 %v1611
      %v3571 = vpop.f32.mrb[0].mxu0
      %v3572 = vadd.f32 %v3255, %v3571
      %v3573 = vpop.f32.mrb[0].mxu0
      %v3574 = vpop.f32.mrb[0].mxu0
      %v3575 = vadd.f32 %v3258, %v3574
      %v3576 = vpop.f32.mrb[0].mxu0
      %3577 = vmatprep.mubr.bf16.mxu0 %v1742
      %3578 = vmatmul.mubr.bf16.gmra.mrb[0].mxu0 %v1614
      %v3579 = vpop.f32.mrb[0].mxu0
      %v3580 = vadd.f32 %v3263, %v3579
      %v3581 = vpop.f32.mrb[0].mxu0
      %v3582 = vpop.f32.mrb[0].mxu0
      %v3583 = vadd.f32 %v3266, %v3582
      %v3584 = vpop.f32.mrb[0].mxu0
      %3585 = vmatprep.mubr.bf16.mxu0 %v1745
      %3586 = vmatmul.mubr.bf16.gmra.mrb[0].mxu0 %v1617
      %v3587 = vpop.f32.mrb[0].mxu0
      %v3588 = vadd.f32 %v3271, %v3587
      %v3589 = vpop.f32.mrb[0].mxu0
      %v3590 = vpop.f32.mrb[0].mxu0
      %v3591 = vadd.f32 %v3274, %v3590
      %v3592 = vpop.f32.mrb[0].mxu0
      %3593 = vdwg.mxu0
      %3594 = vmatprep.subr.bf16.mxu0 0
      %3595 = vmatpush1.bf16.msra.mxu0 %v3365
      %3596 = vmatprep.subr.bf16.mxu0 0
      %3597 = vmatpush1.bf16.msra.mxu0 %v3366
      %3598 = vmatprep.subr.bf16.mxu0 0
      %3599 = vmatpush1.bf16.msra.mxu0 0
      %3600 = vmatprep.subr.bf16.mxu0 0
      %3601 = vmatpush1.bf16.msra.mxu0 0
      %3602 = vmatprep.subr.bf16.mxu0 0
      %3603 = vmatpush1.bf16.msra.mxu0 0
      %3604 = vmatprep.subr.bf16.mxu0 0
      %3605 = vmatpush1.bf16.msra.mxu0 0
      %3606 = vmatprep.subr.bf16.mxu0 0
      %3607 = vmatpush1.bf16.msra.mxu0 0
      %3608 = vmatprep.subr.bf16.mxu0 0
      %3609 = vmatpush1.bf16.msra.mxu0 0
      %3610 = vmatprep.subr.bf16.mxu0 0
      %3611 = vmatpush1.bf16.msra.mxu0 0
      %3612 = vmatprep.subr.bf16.mxu0 0
      %3613 = vmatpush1.bf16.msra.mxu0 0
      %3614 = vmatprep.subr.bf16.mxu0 0
      %3615 = vmatpush1.bf16.msra.mxu0 0
      %3616 = vmatprep.subr.bf16.mxu0 0
      %3617 = vmatpush1.bf16.msra.mxu0 0
      %3618 = vmatprep.subr.bf16.mxu0 0
      %3619 = vmatpush1.bf16.msra.mxu0 0
      %3620 = vmatprep.subr.bf16.mxu0 0
      %3621 = vmatpush1.bf16.msra.mxu0 0
      %3622 = vmatprep.subr.bf16.mxu0 0
      %3623 = vmatpush1.bf16.msra.mxu0 0
      %3624 = vmatprep.subr.bf16.mxu0 0
      %3625 = vmatpush1.bf16.msra.mxu0 0
      %3626 = vmatprep.mubr.bf16.mxu0 0
      %3627 = vmatmul.mubr.bf16.gmra.mrb[0].mxu0 %v3386
      %v3628 = vpop.f32.mrb[0].mxu0
      %v3629 = vadd.f32 %v3468, %v3628
      %v3630 = vpop.f32.mrb[0].mxu0
      %v3631 = vpop.f32.mrb[0].mxu0
      %v3632 = vadd.f32 %v3471, %v3631
      %v3633 = vpop.f32.mrb[0].mxu0
      %3634 = vmatprep.mubr.bf16.mxu0 0
      %3635 = vmatmul.mubr.bf16.gmra.mrb[0].mxu0 %v3389
      %v3636 = vpop.f32.mrb[0].mxu0
      %v3637 = vadd.f32 %v3476, %v3636
      %v3638 = vpop.f32.mrb[0].mxu0
      %v3639 = vpop.f32.mrb[0].mxu0
      %v3640 = vadd.f32 %v3479, %v3639
      %v3641 = vpop.f32.mrb[0].mxu0
      %3642 = vmatprep.mubr.bf16.mxu0 0
      %3643 = vmatmul.mubr.bf16.gmra.mrb[0].mxu0 %v3392
      %v3644 = vpop.f32.mrb[0].mxu0
      %v3645 = vadd.f32 %v3484, %v3644
      %v3646 = vpop.f32.mrb[0].mxu0
      %v3647 = vpop.f32.mrb[0].mxu0
      %v3648 = vadd.f32 %v3487, %v3647
      %v3649 = vpop.f32.mrb[0].mxu0
      %3650 = vmatprep.mubr.bf16.mxu0 0
      %3651 = vmatmul.mubr.bf16.gmra.mrb[0].mxu0 %v3395
      %v3652 = vpop.f32.mrb[0].mxu0
      %v3653 = vadd.f32 %v3492, %v3652
      %v3654 = vpop.f32.mrb[0].mxu0
      %v3655 = vpop.f32.mrb[0].mxu0
      %v3656 = vadd.f32 %v3495, %v3655
      %v3657 = vpop.f32.mrb[0].mxu0
      %3658 = vmatprep.mubr.bf16.mxu0 0
      %3659 = vmatmul.mubr.bf16.gmra.mrb[0].mxu0 %v3398
      %v3660 = vpop.f32.mrb[0].mxu0
      %v3661 = vadd.f32 %v3500, %v3660
      %v3662 = vpop.f32.mrb[0].mxu0
      %v3663 = vpop.f32.mrb[0].mxu0
      %v3664 = vadd.f32 %v3503, %v3663
      %v3665 = vpop.f32.mrb[0].mxu0
      %3666 = vmatprep.mubr.bf16.mxu0 0
      %3667 = vmatmul.mubr.bf16.gmra.mrb[0].mxu0 %v3401
      %v3668 = vpop.f32.mrb[0].mxu0
      %v3669 = vadd.f32 %v3508, %v3668
      %v3670 = vpop.f32.mrb[0].mxu0
      %v3671 = vpop.f32.mrb[0].mxu0
      %v3672 = vadd.f32 %v3511, %v3671
      %v3673 = vpop.f32.mrb[0].mxu0
      %3674 = vmatprep.mubr.bf16.mxu0 0
      %3675 = vmatmul.mubr.bf16.gmra.mrb[0].mxu0 %v3404
      %v3676 = vpop.f32.mrb[0].mxu0
      %v3677 = vadd.f32 %v3516, %v3676
      %v3678 = vpop.f32.mrb[0].mxu0
      %v3679 = vpop.f32.mrb[0].mxu0
      %v3680 = vadd.f32 %v3519, %v3679
      %v3681 = vpop.f32.mrb[0].mxu0
      %3682 = vmatprep.mubr.bf16.mxu0 0
      %3683 = vmatmul.mubr.bf16.gmra.mrb[0].mxu0 %v3407
      %v3684 = vpop.f32.mrb[0].mxu0
      %v3685 = vadd.f32 %v3524, %v3684
      %v3686 = vpop.f32.mrb[0].mxu0
      %v3687 = vpop.f32.mrb[0].mxu0
      %v3688 = vadd.f32 %v3527, %v3687
      %v3689 = vpop.f32.mrb[0].mxu0
      %3690 = vmatprep.mubr.bf16.mxu0 0
      %3691 = vmatmul.mubr.bf16.gmra.mrb[0].mxu0 %v3410
      %v3692 = vpop.f32.mrb[0].mxu0
      %v3693 = vadd.f32 %v3532, %v3692
      %v3694 = vpop.f32.mrb[0].mxu0
      %v3695 = vpop.f32.mrb[0].mxu0
      %v3696 = vadd.f32 %v3535, %v3695
      %v3697 = vpop.f32.mrb[0].mxu0
      %3698 = vmatprep.mubr.bf16.mxu0 0
      %3699 = vmatmul.mubr.bf16.gmra.mrb[0].mxu0 %v3413
      %v3700 = vpop.f32.mrb[0].mxu0
      %v3701 = vadd.f32 %v3540, %v3700
      %v3702 = vpop.f32.mrb[0].mxu0
      %v3703 = vpop.f32.mrb[0].mxu0
      %v3704 = vadd.f32 %v3543, %v3703
      %v3705 = vpop.f32.mrb[0].mxu0
      %3706 = vmatprep.mubr.bf16.mxu0 0
      %3707 = vmatmul.mubr.bf16.gmra.mrb[0].mxu0 %v3416
      %v3708 = vpop.f32.mrb[0].mxu0
      %v3709 = vadd.f32 %v3548, %v3708
      %v3710 = vpop.f32.mrb[0].mxu0
      %v3711 = vpop.f32.mrb[0].mxu0
      %v3712 = vadd.f32 %v3551, %v3711
      %v3713 = vpop.f32.mrb[0].mxu0
      %3714 = vmatprep.mubr.bf16.mxu0 0
      %3715 = vmatmul.mubr.bf16.gmra.mrb[0].mxu0 %v3419
      %v3716 = vpop.f32.mrb[0].mxu0
      %v3717 = vadd.f32 %v3556, %v3716
      %v3718 = vpop.f32.mrb[0].mxu0
      %v3719 = vpop.f32.mrb[0].mxu0
      %v3720 = vadd.f32 %v3559, %v3719
      %v3721 = vpop.f32.mrb[0].mxu0
      %3722 = vmatprep.mubr.bf16.mxu0 0
      %3723 = vmatmul.mubr.bf16.gmra.mrb[0].mxu0 %v3422
      %v3724 = vpop.f32.mrb[0].mxu0
      %v3725 = vadd.f32 %v3564, %v3724
      %v3726 = vpop.f32.mrb[0].mxu0
      %v3727 = vpop.f32.mrb[0].mxu0
      %v3728 = vadd.f32 %v3567, %v3727
      %v3729 = vpop.f32.mrb[0].mxu0
      %3730 = vmatprep.mubr.bf16.mxu0 0
      %3731 = vmatmul.mubr.bf16.gmra.mrb[0].mxu0 %v3425
      %v3732 = vpop.f32.mrb[0].mxu0
      %v3733 = vadd.f32 %v3572, %v3732
      %v3734 = vpop.f32.mrb[0].mxu0
      %v3735 = vpop.f32.mrb[0].mxu0
      %v3736 = vadd.f32 %v3575, %v3735
      %v3737 = vpop.f32.mrb[0].mxu0
      %3738 = vmatprep.mubr.bf16.mxu0 0
      %3739 = vmatmul.mubr.bf16.gmra.mrb[0].mxu0 %v3428
      %v3740 = vpop.f32.mrb[0].mxu0
      %v3741 = vadd.f32 %v3580, %v3740
      %v3742 = vpop.f32.mrb[0].mxu0
      %v3743 = vpop.f32.mrb[0].mxu0
      %v3744 = vadd.f32 %v3583, %v3743
      %v3745 = vpop.f32.mrb[0].mxu0
      %3746 = vmatprep.mubr.bf16.mxu0 0
      %3747 = vmatmul.mubr.bf16.gmra.mrb[0].mxu0 %v3431
      %v3748 = vpop.f32.mrb[0].mxu0
      %v3749 = vadd.f32 %v3588, %v3748
      %v3750 = vpop.f32.mrb[0].mxu0
      %v3751 = vpop.f32.mrb[0].mxu0
      %v3752 = vadd.f32 %v3591, %v3751
      %v3753 = vpop.f32.mrb[0].mxu0
      %3754 = vdwg.mxu0
      %s3755 = scalar_lea.vmem [#allocation2], 320
      %v3756 = vld [vmem:[%s3755] sm:$0xff]
      %v3757 = vld [vmem:[%s3755 + $0x10] sm:$0xff]
      %v3758 = vld [vmem:[%s3755 + $0x20] sm:$0xff]
      %v3759 = vld [vmem:[%s3755 + $0x30] sm:$0xff]
      %v3760 = vld [vmem:[%s3755 + $0x40] sm:$0xff]
      %v3761 = vld [vmem:[%s3755 + $0x50] sm:$0xff]
      %v3762 = vld [vmem:[%s3755 + $0x60] sm:$0xff]
      %v3763 = vld [vmem:[%s3755 + $0x70] sm:$0xff]
      %v3764 = vld [vmem:[%s3755 + $0xa0] sm:$0xff]
      %v3765 = vld [vmem:[%s3755 + $0xb0] sm:$0xff]
      %v3766 = vld [vmem:[%s3755 + $0xc0] sm:$0xff]
      %v3767 = vld [vmem:[%s3755 + $0xd0] sm:$0xff]
      %v3768 = vld [vmem:[%s3755 + $0xe0] sm:$0xff]
      %v3769 = vld [vmem:[%s3755 + $0xf0] sm:$0xff]
      %v3770 = vld [vmem:[%s3755 + $0x100] sm:$0xff]
      %v3771 = vld [vmem:[%s3755 + $0x110] sm:$0xff]
      %v3772 = vld [vmem:[%s3755 + $0x140] sm:$0xff]
      %v3773 = vld [vmem:[%s3755 + $0x150] sm:$0xff]
      %v3774 = vld [vmem:[%s3755 + $0x160] sm:$0xff]
      %v3775 = vld [vmem:[%s3755 + $0x170] sm:$0xff]
      %v3776 = vld [vmem:[%s3755 + $0x180] sm:$0xff]
      %v3777 = vld [vmem:[%s3755 + $0x190] sm:$0xff]
      %v3778 = vld [vmem:[%s3755 + $0x1a0] sm:$0xff]
      %v3779 = vld [vmem:[%s3755 + $0x1b0] sm:$0xff]
      %v3780 = vld [vmem:[%s3755 + $0x1e0] sm:$0xff]
      %v3781 = vld [vmem:[%s3755 + $0x1f0] sm:$0xff]
      %v3782 = vld [vmem:[%s3755 + $0x200] sm:$0xff]
      %v3783 = vld [vmem:[%s3755 + $0x210] sm:$0xff]
      %v3784 = vld [vmem:[%s3755 + $0x220] sm:$0xff]
      %v3785 = vld [vmem:[%s3755 + $0x230] sm:$0xff]
      %v3786 = vld [vmem:[%s3755 + $0x240] sm:$0xff]
      %v3787 = vld [vmem:[%s3755 + $0x250] sm:$0xff]
      %v3788 = vpack.c.bf16 %v3757, %v3756
      %v3789 = vpack.c.bf16 %v3759, %v3758
      %v3790 = vpack.c.bf16 %v3761, %v3760
      %v3791 = vpack.c.bf16 %v3763, %v3762
      %v3792 = vpack.c.bf16 %v3765, %v3764
      %v3793 = vpack.c.bf16 %v3767, %v3766
      %v3794 = vpack.c.bf16 %v3769, %v3768
      %v3795 = vpack.c.bf16 %v3771, %v3770
      %v3796 = vpack.c.bf16 %v3773, %v3772
      %v3797 = vpack.c.bf16 %v3775, %v3774
      %v3798 = vpack.c.bf16 %v3777, %v3776
      %v3799 = vpack.c.bf16 %v3779, %v3778
      %v3800 = vpack.c.bf16 %v3781, %v3780
      %v3801 = vpack.c.bf16 %v3783, %v3782
      %v3802 = vpack.c.bf16 %v3785, %v3784
      %v3803 = vpack.c.bf16 %v3787, %v3786
      %v3804 = vld [vmem:[%s3755 + $0x1] sm:$0xff]
      %v3805 = vld [vmem:[%s3755 + $0x11] sm:$0xff]
      %v3806 = vld [vmem:[%s3755 + $0x21] sm:$0xff]
      %v3807 = vld [vmem:[%s3755 + $0x31] sm:$0xff]
      %v3808 = vld [vmem:[%s3755 + $0x41] sm:$0xff]
      %v3809 = vld [vmem:[%s3755 + $0x51] sm:$0xff]
      %v3810 = vld [vmem:[%s3755 + $0x61] sm:$0xff]
      %v3811 = vld [vmem:[%s3755 + $0x71] sm:$0xff]
      %v3812 = vld [vmem:[%s3755 + $0xa1] sm:$0xff]
      %v3813 = vld [vmem:[%s3755 + $0xb1] sm:$0xff]
      %v3814 = vld [vmem:[%s3755 + $0xc1] sm:$0xff]
      %v3815 = vld [vmem:[%s3755 + $0xd1] sm:$0xff]
      %v3816 = vld [vmem:[%s3755 + $0xe1] sm:$0xff]
      %v3817 = vld [vmem:[%s3755 + $0xf1] sm:$0xff]
      %v3818 = vld [vmem:[%s3755 + $0x101] sm:$0xff]
      %v3819 = vld [vmem:[%s3755 + $0x111] sm:$0xff]
      %v3820 = vld [vmem:[%s3755 + $0x141] sm:$0xff]
      %v3821 = vld [vmem:[%s3755 + $0x151] sm:$0xff]
      %v3822 = vld [vmem:[%s3755 + $0x161] sm:$0xff]
      %v3823 = vld [vmem:[%s3755 + $0x171] sm:$0xff]
      %v3824 = vld [vmem:[%s3755 + $0x181] sm:$0xff]
      %v3825 = vld [vmem:[%s3755 + $0x191] sm:$0xff]
      %v3826 = vld [vmem:[%s3755 + $0x1a1] sm:$0xff]
      %v3827 = vld [vmem:[%s3755 + $0x1b1] sm:$0xff]
      %v3828 = vld [vmem:[%s3755 + $0x1e1] sm:$0xff]
      %v3829 = vld [vmem:[%s3755 + $0x1f1] sm:$0xff]
      %v3830 = vld [vmem:[%s3755 + $0x201] sm:$0xff]
      %v3831 = vld [vmem:[%s3755 + $0x211] sm:$0xff]
      %v3832 = vld [vmem:[%s3755 + $0x221] sm:$0xff]
      %v3833 = vld [vmem:[%s3755 + $0x231] sm:$0xff]
      %v3834 = vld [vmem:[%s3755 + $0x241] sm:$0xff]
      %v3835 = vld [vmem:[%s3755 + $0x251] sm:$0xff]
      %v3836 = vpack.c.bf16 %v3805, %v3804
      %v3837 = vpack.c.bf16 %v3807, %v3806
      %v3838 = vpack.c.bf16 %v3809, %v3808
      %v3839 = vpack.c.bf16 %v3811, %v3810
      %v3840 = vpack.c.bf16 %v3813, %v3812
      %v3841 = vpack.c.bf16 %v3815, %v3814
      %v3842 = vpack.c.bf16 %v3817, %v3816
      %v3843 = vpack.c.bf16 %v3819, %v3818
      %v3844 = vpack.c.bf16 %v3821, %v3820
      %v3845 = vpack.c.bf16 %v3823, %v3822
      %v3846 = vpack.c.bf16 %v3825, %v3824
      %v3847 = vpack.c.bf16 %v3827, %v3826
      %v3848 = vpack.c.bf16 %v3829, %v3828
      %v3849 = vpack.c.bf16 %v3831, %v3830
      %v3850 = vpack.c.bf16 %v3833, %v3832
      %v3851 = vpack.c.bf16 %v3835, %v3834
      %v3852 = vld [vmem:[%s3755 + $0x2] sm:$0xff]
      %v3853 = vld [vmem:[%s3755 + $0x12] sm:$0xff]
      %v3854 = vld [vmem:[%s3755 + $0x22] sm:$0xff]
      %v3855 = vld [vmem:[%s3755 + $0x32] sm:$0xff]
      %v3856 = vld [vmem:[%s3755 + $0x42] sm:$0xff]
      %v3857 = vld [vmem:[%s3755 + $0x52] sm:$0xff]
      %v3858 = vld [vmem:[%s3755 + $0x62] sm:$0xff]
      %v3859 = vld [vmem:[%s3755 + $0x72] sm:$0xff]
      %v3860 = vld [vmem:[%s3755 + $0xa2] sm:$0xff]
      %v3861 = vld [vmem:[%s3755 + $0xb2] sm:$0xff]
      %v3862 = vld [vmem:[%s3755 + $0xc2] sm:$0xff]
      %v3863 = vld [vmem:[%s3755 + $0xd2] sm:$0xff]
      %v3864 = vld [vmem:[%s3755 + $0xe2] sm:$0xff]
      %v3865 = vld [vmem:[%s3755 + $0xf2] sm:$0xff]
      %v3866 = vld [vmem:[%s3755 + $0x102] sm:$0xff]
      %v3867 = vld [vmem:[%s3755 + $0x112] sm:$0xff]
      %v3868 = vld [vmem:[%s3755 + $0x142] sm:$0xff]
      %v3869 = vld [vmem:[%s3755 + $0x152] sm:$0xff]
      %v3870 = vld [vmem:[%s3755 + $0x162] sm:$0xff]
      %v3871 = vld [vmem:[%s3755 + $0x172] sm:$0xff]
      %v3872 = vld [vmem:[%s3755 + $0x182] sm:$0xff]
      %v3873 = vld [vmem:[%s3755 + $0x192] sm:$0xff]
      %v3874 = vld [vmem:[%s3755 + $0x1a2] sm:$0xff]
      %v3875 = vld [vmem:[%s3755 + $0x1b2] sm:$0xff]
      %v3876 = vld [vmem:[%s3755 + $0x1e2] sm:$0xff]
      %v3877 = vld [vmem:[%s3755 + $0x1f2] sm:$0xff]
      %v3878 = vld [vmem:[%s3755 + $0x202] sm:$0xff]
      %v3879 = vld [vmem:[%s3755 + $0x212] sm:$0xff]
      %v3880 = vld [vmem:[%s3755 + $0x222] sm:$0xff]
      %v3881 = vld [vmem:[%s3755 + $0x232] sm:$0xff]
      %v3882 = vld [vmem:[%s3755 + $0x242] sm:$0xff]
      %v3883 = vld [vmem:[%s3755 + $0x252] sm:$0xff]
      %v3884 = vpack.c.bf16 %v3853, %v3852
      %v3885 = vpack.c.bf16 %v3855, %v3854
      %v3886 = vpack.c.bf16 %v3857, %v3856
      %v3887 = vpack.c.bf16 %v3859, %v3858
      %v3888 = vpack.c.bf16 %v3861, %v3860
      %v3889 = vpack.c.bf16 %v3863, %v3862
      %v3890 = vpack.c.bf16 %v3865, %v3864
      %v3891 = vpack.c.bf16 %v3867, %v3866
      %v3892 = vpack.c.bf16 %v3869, %v3868
      %v3893 = vpack.c.bf16 %v3871, %v3870
      %v3894 = vpack.c.bf16 %v3873, %v3872
      %v3895 = vpack.c.bf16 %v3875, %v3874
      %v3896 = vpack.c.bf16 %v3877, %v3876
      %v3897 = vpack.c.bf16 %v3879, %v3878
      %v3898 = vpack.c.bf16 %v3881, %v3880
      %v3899 = vpack.c.bf16 %v3883, %v3882
      %s3900 = scalar_lea.vmem [#allocation2], 336
      %v3901 = vld [vmem:[%s3900] sm:$0xff]
      %v3902 = vld [vmem:[%s3900 + $0x10] sm:$0xff]
      %v3903 = vld [vmem:[%s3900 + $0x20] sm:$0xff]
      %v3904 = vld [vmem:[%s3900 + $0x30] sm:$0xff]
      %v3905 = vld [vmem:[%s3900 + $0x40] sm:$0xff]
      %v3906 = vld [vmem:[%s3900 + $0x50] sm:$0xff]
      %v3907 = vld [vmem:[%s3900 + $0x60] sm:$0xff]
      %v3908 = vld [vmem:[%s3900 + $0x70] sm:$0xff]
      %v3909 = vld [vmem:[%s3900 + $0xa0] sm:$0xff]
      %v3910 = vld [vmem:[%s3900 + $0xb0] sm:$0xff]
      %v3911 = vld [vmem:[%s3900 + $0xc0] sm:$0xff]
      %v3912 = vld [vmem:[%s3900 + $0xd0] sm:$0xff]
      %v3913 = vld [vmem:[%s3900 + $0xe0] sm:$0xff]
      %v3914 = vld [vmem:[%s3900 + $0xf0] sm:$0xff]
      %v3915 = vld [vmem:[%s3900 + $0x100] sm:$0xff]
      %v3916 = vld [vmem:[%s3900 + $0x110] sm:$0xff]
      %v3917 = vld [vmem:[%s3900 + $0x140] sm:$0xff]
      %v3918 = vld [vmem:[%s3900 + $0x150] sm:$0xff]
      %v3919 = vld [vmem:[%s3900 + $0x160] sm:$0xff]
      %v3920 = vld [vmem:[%s3900 + $0x170] sm:$0xff]
      %v3921 = vld [vmem:[%s3900 + $0x180] sm:$0xff]
      %v3922 = vld [vmem:[%s3900 + $0x190] sm:$0xff]
      %v3923 = vld [vmem:[%s3900 + $0x1a0] sm:$0xff]
      %v3924 = vld [vmem:[%s3900 + $0x1b0] sm:$0xff]
      %v3925 = vld [vmem:[%s3900 + $0x1e0] sm:$0xff]
      %v3926 = vld [vmem:[%s3900 + $0x1f0] sm:$0xff]
      %v3927 = vld [vmem:[%s3900 + $0x200] sm:$0xff]
      %v3928 = vld [vmem:[%s3900 + $0x210] sm:$0xff]
      %v3929 = vld [vmem:[%s3900 + $0x220] sm:$0xff]
      %v3930 = vld [vmem:[%s3900 + $0x230] sm:$0xff]
      %v3931 = vld [vmem:[%s3900 + $0x240] sm:$0xff]
      %v3932 = vld [vmem:[%s3900 + $0x250] sm:$0xff]
      %v3933 = vpack.c.bf16 %v3902, %v3901
      %v3934 = vpack.c.bf16 %v3904, %v3903
      %v3935 = vpack.c.bf16 %v3906, %v3905
      %v3936 = vpack.c.bf16 %v3908, %v3907
      %v3937 = vpack.c.bf16 %v3910, %v3909
      %v3938 = vpack.c.bf16 %v3912, %v3911
      %v3939 = vpack.c.bf16 %v3914, %v3913
      %v3940 = vpack.c.bf16 %v3916, %v3915
      %v3941 = vpack.c.bf16 %v3918, %v3917
      %v3942 = vpack.c.bf16 %v3920, %v3919
      %v3943 = vpack.c.bf16 %v3922, %v3921
      %v3944 = vpack.c.bf16 %v3924, %v3923
      %v3945 = vpack.c.bf16 %v3926, %v3925
      %v3946 = vpack.c.bf16 %v3928, %v3927
      %v3947 = vpack.c.bf16 %v3930, %v3929
      %v3948 = vpack.c.bf16 %v3932, %v3931
      %v3949 = vld [vmem:[%s3900 + $0x1] sm:$0xff]
      %v3950 = vld [vmem:[%s3900 + $0x11] sm:$0xff]
      %v3951 = vld [vmem:[%s3900 + $0x21] sm:$0xff]
      %v3952 = vld [vmem:[%s3900 + $0x31] sm:$0xff]
      %v3953 = vld [vmem:[%s3900 + $0x41] sm:$0xff]
      %v3954 = vld [vmem:[%s3900 + $0x51] sm:$0xff]
      %v3955 = vld [vmem:[%s3900 + $0x61] sm:$0xff]
      %v3956 = vld [vmem:[%s3900 + $0x71] sm:$0xff]
      %v3957 = vld [vmem:[%s3900 + $0xa1] sm:$0xff]
      %v3958 = vld [vmem:[%s3900 + $0xb1] sm:$0xff]
      %v3959 = vld [vmem:[%s3900 + $0xc1] sm:$0xff]
      %v3960 = vld [vmem:[%s3900 + $0xd1] sm:$0xff]
      %v3961 = vld [vmem:[%s3900 + $0xe1] sm:$0xff]
      %v3962 = vld [vmem:[%s3900 + $0xf1] sm:$0xff]
      %v3963 = vld [vmem:[%s3900 + $0x101] sm:$0xff]
      %v3964 = vld [vmem:[%s3900 + $0x111] sm:$0xff]
      %v3965 = vld [vmem:[%s3900 + $0x141] sm:$0xff]
      %v3966 = vld [vmem:[%s3900 + $0x151] sm:$0xff]
      %v3967 = vld [vmem:[%s3900 + $0x161] sm:$0xff]
      %v3968 = vld [vmem:[%s3900 + $0x171] sm:$0xff]
      %v3969 = vld [vmem:[%s3900 + $0x181] sm:$0xff]
      %v3970 = vld [vmem:[%s3900 + $0x191] sm:$0xff]
      %v3971 = vld [vmem:[%s3900 + $0x1a1] sm:$0xff]
      %v3972 = vld [vmem:[%s3900 + $0x1b1] sm:$0xff]
      %v3973 = vld [vmem:[%s3900 + $0x1e1] sm:$0xff]
      %v3974 = vld [vmem:[%s3900 + $0x1f1] sm:$0xff]
      %v3975 = vld [vmem:[%s3900 + $0x201] sm:$0xff]
      %v3976 = vld [vmem:[%s3900 + $0x211] sm:$0xff]
      %v3977 = vld [vmem:[%s3900 + $0x221] sm:$0xff]
      %v3978 = vld [vmem:[%s3900 + $0x231] sm:$0xff]
      %v3979 = vld [vmem:[%s3900 + $0x241] sm:$0xff]
      %v3980 = vld [vmem:[%s3900 + $0x251] sm:$0xff]
      %v3981 = vpack.c.bf16 %v3950, %v3949
      %v3982 = vpack.c.bf16 %v3952, %v3951
      %v3983 = vpack.c.bf16 %v3954, %v3953
      %v3984 = vpack.c.bf16 %v3956, %v3955
      %v3985 = vpack.c.bf16 %v3958, %v3957
      %v3986 = vpack.c.bf16 %v3960, %v3959
      %v3987 = vpack.c.bf16 %v3962, %v3961
      %v3988 = vpack.c.bf16 %v3964, %v3963
      %v3989 = vpack.c.bf16 %v3966, %v3965
      %v3990 = vpack.c.bf16 %v3968, %v3967
      %v3991 = vpack.c.bf16 %v3970, %v3969
      %v3992 = vpack.c.bf16 %v3972, %v3971
      %v3993 = vpack.c.bf16 %v3974, %v3973
      %v3994 = vpack.c.bf16 %v3976, %v3975
      %v3995 = vpack.c.bf16 %v3978, %v3977
      %v3996 = vpack.c.bf16 %v3980, %v3979
      %v3997 = vld [vmem:[%s3900 + $0x2] sm:$0xff]
      %v3998 = vld [vmem:[%s3900 + $0x12] sm:$0xff]
      %v3999 = vld [vmem:[%s3900 + $0x22] sm:$0xff]
      %v4000 = vld [vmem:[%s3900 + $0x32] sm:$0xff]
      %v4001 = vld [vmem:[%s3900 + $0x42] sm:$0xff]
      %v4002 = vld [vmem:[%s3900 + $0x52] sm:$0xff]
      %v4003 = vld [vmem:[%s3900 + $0x62] sm:$0xff]
      %v4004 = vld [vmem:[%s3900 + $0x72] sm:$0xff]
      %v4005 = vld [vmem:[%s3900 + $0xa2] sm:$0xff]
      %v4006 = vld [vmem:[%s3900 + $0xb2] sm:$0xff]
      %v4007 = vld [vmem:[%s3900 + $0xc2] sm:$0xff]
      %v4008 = vld [vmem:[%s3900 + $0xd2] sm:$0xff]
      %v4009 = vld [vmem:[%s3900 + $0xe2] sm:$0xff]
      %v4010 = vld [vmem:[%s3900 + $0xf2] sm:$0xff]
      %v4011 = vld [vmem:[%s3900 + $0x102] sm:$0xff]
      %v4012 = vld [vmem:[%s3900 + $0x112] sm:$0xff]
      %v4013 = vld [vmem:[%s3900 + $0x142] sm:$0xff]
      %v4014 = vld [vmem:[%s3900 + $0x152] sm:$0xff]
      %v4015 = vld [vmem:[%s3900 + $0x162] sm:$0xff]
      %v4016 = vld [vmem:[%s3900 + $0x172] sm:$0xff]
      %v4017 = vld [vmem:[%s3900 + $0x182] sm:$0xff]
      %v4018 = vld [vmem:[%s3900 + $0x192] sm:$0xff]
      %v4019 = vld [vmem:[%s3900 + $0x1a2] sm:$0xff]
      %v4020 = vld [vmem:[%s3900 + $0x1b2] sm:$0xff]
      %v4021 = vld [vmem:[%s3900 + $0x1e2] sm:$0xff]
      %v4022 = vld [vmem:[%s3900 + $0x1f2] sm:$0xff]
      %v4023 = vld [vmem:[%s3900 + $0x202] sm:$0xff]
      %v4024 = vld [vmem:[%s3900 + $0x212] sm:$0xff]
      %v4025 = vld [vmem:[%s3900 + $0x222] sm:$0xff]
      %v4026 = vld [vmem:[%s3900 + $0x232] sm:$0xff]
      %v4027 = vld [vmem:[%s3900 + $0x242] sm:$0xff]
      %v4028 = vld [vmem:[%s3900 + $0x252] sm:$0xff]
      %v4029 = vpack.c.bf16 %v3998, %v3997
      %v4030 = vpack.c.bf16 %v4000, %v3999
      %v4031 = vpack.c.bf16 %v4002, %v4001
      %v4032 = vpack.c.bf16 %v4004, %v4003
      %v4033 = vpack.c.bf16 %v4006, %v4005
      %v4034 = vpack.c.bf16 %v4008, %v4007
      %v4035 = vpack.c.bf16 %v4010, %v4009
      %v4036 = vpack.c.bf16 %v4012, %v4011
      %v4037 = vpack.c.bf16 %v4014, %v4013
      %v4038 = vpack.c.bf16 %v4016, %v4015
      %v4039 = vpack.c.bf16 %v4018, %v4017
      %v4040 = vpack.c.bf16 %v4020, %v4019
      %v4041 = vpack.c.bf16 %v4022, %v4021
      %v4042 = vpack.c.bf16 %v4024, %v4023
      %v4043 = vpack.c.bf16 %v4026, %v4025
      %v4044 = vpack.c.bf16 %v4028, %v4027
      %s4045 = scalar_lea.vmem [#allocation2], 352
      %v4046 = vld [vmem:[%s4045] sm:$0xff]
      %v4047 = vld [vmem:[%s4045 + $0x10] sm:$0xff]
      %v4048 = vld [vmem:[%s4045 + $0x20] sm:$0xff]
      %v4049 = vld [vmem:[%s4045 + $0x30] sm:$0xff]
      %v4050 = vld [vmem:[%s4045 + $0x40] sm:$0xff]
      %v4051 = vld [vmem:[%s4045 + $0x50] sm:$0xff]
      %v4052 = vld [vmem:[%s4045 + $0x60] sm:$0xff]
      %v4053 = vld [vmem:[%s4045 + $0x70] sm:$0xff]
      %v4054 = vld [vmem:[%s4045 + $0xa0] sm:$0xff]
      %v4055 = vld [vmem:[%s4045 + $0xb0] sm:$0xff]
      %v4056 = vld [vmem:[%s4045 + $0xc0] sm:$0xff]
      %v4057 = vld [vmem:[%s4045 + $0xd0] sm:$0xff]
      %v4058 = vld [vmem:[%s4045 + $0xe0] sm:$0xff]
      %v4059 = vld [vmem:[%s4045 + $0xf0] sm:$0xff]
      %v4060 = vld [vmem:[%s4045 + $0x100] sm:$0xff]
      %v4061 = vld [vmem:[%s4045 + $0x110] sm:$0xff]
      %v4062 = vld [vmem:[%s4045 + $0x140] sm:$0xff]
      %v4063 = vld [vmem:[%s4045 + $0x150] sm:$0xff]
      %v4064 = vld [vmem:[%s4045 + $0x160] sm:$0xff]
      %v4065 = vld [vmem:[%s4045 + $0x170] sm:$0xff]
      %v4066 = vld [vmem:[%s4045 + $0x180] sm:$0xff]
      %v4067 = vld [vmem:[%s4045 + $0x190] sm:$0xff]
      %v4068 = vld [vmem:[%s4045 + $0x1a0] sm:$0xff]
      %v4069 = vld [vmem:[%s4045 + $0x1b0] sm:$0xff]
      %v4070 = vld [vmem:[%s4045 + $0x1e0] sm:$0xff]
      %v4071 = vld [vmem:[%s4045 + $0x1f0] sm:$0xff]
      %v4072 = vld [vmem:[%s4045 + $0x200] sm:$0xff]
      %v4073 = vld [vmem:[%s4045 + $0x210] sm:$0xff]
      %v4074 = vld [vmem:[%s4045 + $0x220] sm:$0xff]
      %v4075 = vld [vmem:[%s4045 + $0x230] sm:$0xff]
      %v4076 = vld [vmem:[%s4045 + $0x240] sm:$0xff]
      %v4077 = vld [vmem:[%s4045 + $0x250] sm:$0xff]
      %v4078 = vpack.c.bf16 %v4047, %v4046
      %v4079 = vpack.c.bf16 %v4049, %v4048
      %v4080 = vpack.c.bf16 %v4051, %v4050
      %v4081 = vpack.c.bf16 %v4053, %v4052
      %v4082 = vpack.c.bf16 %v4055, %v4054
      %v4083 = vpack.c.bf16 %v4057, %v4056
      %v4084 = vpack.c.bf16 %v4059, %v4058
      %v4085 = vpack.c.bf16 %v4061, %v4060
      %v4086 = vpack.c.bf16 %v4063, %v4062
      %v4087 = vpack.c.bf16 %v4065, %v4064
      %v4088 = vpack.c.bf16 %v4067, %v4066
      %v4089 = vpack.c.bf16 %v4069, %v4068
      %v4090 = vpack.c.bf16 %v4071, %v4070
      %v4091 = vpack.c.bf16 %v4073, %v4072
      %v4092 = vpack.c.bf16 %v4075, %v4074
      %v4093 = vpack.c.bf16 %v4077, %v4076
      %v4094 = vld [vmem:[%s4045 + $0x1] sm:$0xff]
      %v4095 = vld [vmem:[%s4045 + $0x11] sm:$0xff]
      %v4096 = vld [vmem:[%s4045 + $0x21] sm:$0xff]
      %v4097 = vld [vmem:[%s4045 + $0x31] sm:$0xff]
      %v4098 = vld [vmem:[%s4045 + $0x41] sm:$0xff]
      %v4099 = vld [vmem:[%s4045 + $0x51] sm:$0xff]
      %v4100 = vld [vmem:[%s4045 + $0x61] sm:$0xff]
      %v4101 = vld [vmem:[%s4045 + $0x71] sm:$0xff]
      %v4102 = vld [vmem:[%s4045 + $0xa1] sm:$0xff]
      %v4103 = vld [vmem:[%s4045 + $0xb1] sm:$0xff]
      %v4104 = vld [vmem:[%s4045 + $0xc1] sm:$0xff]
      %v4105 = vld [vmem:[%s4045 + $0xd1] sm:$0xff]
      %v4106 = vld [vmem:[%s4045 + $0xe1] sm:$0xff]
      %v4107 = vld [vmem:[%s4045 + $0xf1] sm:$0xff]
      %v4108 = vld [vmem:[%s4045 + $0x101] sm:$0xff]
      %v4109 = vld [vmem:[%s4045 + $0x111] sm:$0xff]
      %v4110 = vld [vmem:[%s4045 + $0x141] sm:$0xff]
      %v4111 = vld [vmem:[%s4045 + $0x151] sm:$0xff]
      %v4112 = vld [vmem:[%s4045 + $0x161] sm:$0xff]
      %v4113 = vld [vmem:[%s4045 + $0x171] sm:$0xff]
      %v4114 = vld [vmem:[%s4045 + $0x181] sm:$0xff]
      %v4115 = vld [vmem:[%s4045 + $0x191] sm:$0xff]
      %v4116 = vld [vmem:[%s4045 + $0x1a1] sm:$0xff]
      %v4117 = vld [vmem:[%s4045 + $0x1b1] sm:$0xff]
      %v4118 = vld [vmem:[%s4045 + $0x1e1] sm:$0xff]
      %v4119 = vld [vmem:[%s4045 + $0x1f1] sm:$0xff]
      %v4120 = vld [vmem:[%s4045 + $0x201] sm:$0xff]
      %v4121 = vld [vmem:[%s4045 + $0x211] sm:$0xff]
      %v4122 = vld [vmem:[%s4045 + $0x221] sm:$0xff]
      %v4123 = vld [vmem:[%s4045 + $0x231] sm:$0xff]
      %v4124 = vld [vmem:[%s4045 + $0x241] sm:$0xff]
      %v4125 = vld [vmem:[%s4045 + $0x251] sm:$0xff]
      %v4126 = vpack.c.bf16 %v4095, %v4094
      %v4127 = vpack.c.bf16 %v4097, %v4096
      %v4128 = vpack.c.bf16 %v4099, %v4098
      %v4129 = vpack.c.bf16 %v4101, %v4100
      %v4130 = vpack.c.bf16 %v4103, %v4102
      %v4131 = vpack.c.bf16 %v4105, %v4104
      %v4132 = vpack.c.bf16 %v4107, %v4106
      %v4133 = vpack.c.bf16 %v4109, %v4108
      %v4134 = vpack.c.bf16 %v4111, %v4110
      %v4135 = vpack.c.bf16 %v4113, %v4112
      %v4136 = vpack.c.bf16 %v4115, %v4114
      %v4137 = vpack.c.bf16 %v4117, %v4116
      %v4138 = vpack.c.bf16 %v4119, %v4118
      %v4139 = vpack.c.bf16 %v4121, %v4120
      %v4140 = vpack.c.bf16 %v4123, %v4122
      %v4141 = vpack.c.bf16 %v4125, %v4124
      %v4142 = vld [vmem:[%s4045 + $0x2] sm:$0xff]
      %v4143 = vld [vmem:[%s4045 + $0x12] sm:$0xff]
      %v4144 = vld [vmem:[%s4045 + $0x22] sm:$0xff]
      %v4145 = vld [vmem:[%s4045 + $0x32] sm:$0xff]
      %v4146 = vld [vmem:[%s4045 + $0x42] sm:$0xff]
      %v4147 = vld [vmem:[%s4045 + $0x52] sm:$0xff]
      %v4148 = vld [vmem:[%s4045 + $0x62] sm:$0xff]
      %v4149 = vld [vmem:[%s4045 + $0x72] sm:$0xff]
      %v4150 = vld [vmem:[%s4045 + $0xa2] sm:$0xff]
      %v4151 = vld [vmem:[%s4045 + $0xb2] sm:$0xff]
      %v4152 = vld [vmem:[%s4045 + $0xc2] sm:$0xff]
      %v4153 = vld [vmem:[%s4045 + $0xd2] sm:$0xff]
      %v4154 = vld [vmem:[%s4045 + $0xe2] sm:$0xff]
      %v4155 = vld [vmem:[%s4045 + $0xf2] sm:$0xff]
      %v4156 = vld [vmem:[%s4045 + $0x102] sm:$0xff]
      %v4157 = vld [vmem:[%s4045 + $0x112] sm:$0xff]
      %v4158 = vld [vmem:[%s4045 + $0x142] sm:$0xff]
      %v4159 = vld [vmem:[%s4045 + $0x152] sm:$0xff]
      %v4160 = vld [vmem:[%s4045 + $0x162] sm:$0xff]
      %v4161 = vld [vmem:[%s4045 + $0x172] sm:$0xff]
      %v4162 = vld [vmem:[%s4045 + $0x182] sm:$0xff]
      %v4163 = vld [vmem:[%s4045 + $0x192] sm:$0xff]
      %v4164 = vld [vmem:[%s4045 + $0x1a2] sm:$0xff]
      %v4165 = vld [vmem:[%s4045 + $0x1b2] sm:$0xff]
      %v4166 = vld [vmem:[%s4045 + $0x1e2] sm:$0xff]
      %v4167 = vld [vmem:[%s4045 + $0x1f2] sm:$0xff]
      %v4168 = vld [vmem:[%s4045 + $0x202] sm:$0xff]
      %v4169 = vld [vmem:[%s4045 + $0x212] sm:$0xff]
      %v4170 = vld [vmem:[%s4045 + $0x222] sm:$0xff]
      %v4171 = vld [vmem:[%s4045 + $0x232] sm:$0xff]
      %v4172 = vld [vmem:[%s4045 + $0x242] sm:$0xff]
      %v4173 = vld [vmem:[%s4045 + $0x252] sm:$0xff]
      %v4174 = vpack.c.bf16 %v4143, %v4142
      %v4175 = vpack.c.bf16 %v4145, %v4144
      %v4176 = vpack.c.bf16 %v4147, %v4146
      %v4177 = vpack.c.bf16 %v4149, %v4148
      %v4178 = vpack.c.bf16 %v4151, %v4150
      %v4179 = vpack.c.bf16 %v4153, %v4152
      %v4180 = vpack.c.bf16 %v4155, %v4154
      %v4181 = vpack.c.bf16 %v4157, %v4156
      %v4182 = vpack.c.bf16 %v4159, %v4158
      %v4183 = vpack.c.bf16 %v4161, %v4160
      %v4184 = vpack.c.bf16 %v4163, %v4162
      %v4185 = vpack.c.bf16 %v4165, %v4164
      %v4186 = vpack.c.bf16 %v4167, %v4166
      %v4187 = vpack.c.bf16 %v4169, %v4168
      %v4188 = vpack.c.bf16 %v4171, %v4170
      %v4189 = vpack.c.bf16 %v4173, %v4172
      %4206 = vrot.lane.b32.xlu0 %v3836, 32
      %v4207 = vpop.permute.xlu0 %4206
      %4208 = vrot.lane.b32.xlu0 %v3837, 32
      %v4209 = vpop.permute.xlu0 %4208
      %4210 = vrot.lane.b32.xlu0 %v3838, 32
      %v4211 = vpop.permute.xlu0 %4210
      %4212 = vrot.lane.b32.xlu0 %v3839, 32
      %v4213 = vpop.permute.xlu0 %4212
      %4214 = vrot.lane.b32.xlu0 %v3840, 32
      %v4215 = vpop.permute.xlu0 %4214
      %4216 = vrot.lane.b32.xlu0 %v3841, 32
      %v4217 = vpop.permute.xlu0 %4216
      %4218 = vrot.lane.b32.xlu0 %v3842, 32
      %v4219 = vpop.permute.xlu0 %4218
      %4220 = vrot.lane.b32.xlu0 %v3843, 32
      %v4221 = vpop.permute.xlu0 %4220
      %4222 = vrot.lane.b32.xlu0 %v3844, 32
      %v4223 = vpop.permute.xlu0 %4222
      %4224 = vrot.lane.b32.xlu0 %v3845, 32
      %v4225 = vpop.permute.xlu0 %4224
      %4226 = vrot.lane.b32.xlu0 %v3846, 32
      %v4227 = vpop.permute.xlu0 %4226
      %4228 = vrot.lane.b32.xlu0 %v3847, 32
      %v4229 = vpop.permute.xlu0 %4228
      %4230 = vrot.lane.b32.xlu0 %v3848, 32
      %v4231 = vpop.permute.xlu0 %4230
      %4232 = vrot.lane.b32.xlu0 %v3849, 32
      %v4233 = vpop.permute.xlu0 %4232
      %4234 = vrot.lane.b32.xlu0 %v3850, 32
      %v4235 = vpop.permute.xlu0 %4234
      %4236 = vrot.lane.b32.xlu0 %v3851, 32
      %v4237 = vpop.permute.xlu0 %4236
      %4254 = vrot.lane.b32.xlu0 %v3884, 64
      %v4255 = vpop.permute.xlu0 %4254
      %4256 = vrot.lane.b32.xlu0 %v3885, 64
      %v4257 = vpop.permute.xlu0 %4256
      %4258 = vrot.lane.b32.xlu0 %v3886, 64
      %v4259 = vpop.permute.xlu0 %4258
      %4260 = vrot.lane.b32.xlu0 %v3887, 64
      %v4261 = vpop.permute.xlu0 %4260
      %4262 = vrot.lane.b32.xlu0 %v3888, 64
      %v4263 = vpop.permute.xlu0 %4262
      %4264 = vrot.lane.b32.xlu0 %v3889, 64
      %v4265 = vpop.permute.xlu0 %4264
      %4266 = vrot.lane.b32.xlu0 %v3890, 64
      %v4267 = vpop.permute.xlu0 %4266
      %4268 = vrot.lane.b32.xlu0 %v3891, 64
      %v4269 = vpop.permute.xlu0 %4268
      %4270 = vrot.lane.b32.xlu0 %v3892, 64
      %v4271 = vpop.permute.xlu0 %4270
      %4272 = vrot.lane.b32.xlu0 %v3893, 64
      %v4273 = vpop.permute.xlu0 %4272
      %4274 = vrot.lane.b32.xlu0 %v3894, 64
      %v4275 = vpop.permute.xlu0 %4274
      %4276 = vrot.lane.b32.xlu0 %v3895, 64
      %v4277 = vpop.permute.xlu0 %4276
      %4278 = vrot.lane.b32.xlu0 %v3896, 64
      %v4279 = vpop.permute.xlu0 %4278
      %4280 = vrot.lane.b32.xlu0 %v3897, 64
      %v4281 = vpop.permute.xlu0 %4280
      %4282 = vrot.lane.b32.xlu0 %v3898, 64
      %v4283 = vpop.permute.xlu0 %4282
      %4284 = vrot.lane.b32.xlu0 %v3899, 64
      %v4285 = vpop.permute.xlu0 %4284
      %4302 = vrot.lane.b32.xlu0 %v3933, 96
      %v4303 = vpop.permute.xlu0 %4302
      %4304 = vrot.lane.b32.xlu0 %v3934, 96
      %v4305 = vpop.permute.xlu0 %4304
      %4306 = vrot.lane.b32.xlu0 %v3935, 96
      %v4307 = vpop.permute.xlu0 %4306
      %4308 = vrot.lane.b32.xlu0 %v3936, 96
      %v4309 = vpop.permute.xlu0 %4308
      %4310 = vrot.lane.b32.xlu0 %v3937, 96
      %v4311 = vpop.permute.xlu0 %4310
      %4312 = vrot.lane.b32.xlu0 %v3938, 96
      %v4313 = vpop.permute.xlu0 %4312
      %4314 = vrot.lane.b32.xlu0 %v3939, 96
      %v4315 = vpop.permute.xlu0 %4314
      %4316 = vrot.lane.b32.xlu0 %v3940, 96
      %v4317 = vpop.permute.xlu0 %4316
      %4318 = vrot.lane.b32.xlu0 %v3941, 96
      %v4319 = vpop.permute.xlu0 %4318
      %4320 = vrot.lane.b32.xlu0 %v3942, 96
      %v4321 = vpop.permute.xlu0 %4320
      %4322 = vrot.lane.b32.xlu0 %v3943, 96
      %v4323 = vpop.permute.xlu0 %4322
      %4324 = vrot.lane.b32.xlu0 %v3944, 96
      %v4325 = vpop.permute.xlu0 %4324
      %4326 = vrot.lane.b32.xlu0 %v3945, 96
      %v4327 = vpop.permute.xlu0 %4326
      %4328 = vrot.lane.b32.xlu0 %v3946, 96
      %v4329 = vpop.permute.xlu0 %4328
      %4330 = vrot.lane.b32.xlu0 %v3947, 96
      %v4331 = vpop.permute.xlu0 %4330
      %4332 = vrot.lane.b32.xlu0 %v3948, 96
      %v4333 = vpop.permute.xlu0 %4332
      %4350 = vrot.lane.b32.xlu0 %v4029, 32
      %v4351 = vpop.permute.xlu0 %4350
      %4352 = vrot.lane.b32.xlu0 %v4030, 32
      %v4353 = vpop.permute.xlu0 %4352
      %4354 = vrot.lane.b32.xlu0 %v4031, 32
      %v4355 = vpop.permute.xlu0 %4354
      %4356 = vrot.lane.b32.xlu0 %v4032, 32
      %v4357 = vpop.permute.xlu0 %4356
      %4358 = vrot.lane.b32.xlu0 %v4033, 32
      %v4359 = vpop.permute.xlu0 %4358
      %4360 = vrot.lane.b32.xlu0 %v4034, 32
      %v4361 = vpop.permute.xlu0 %4360
      %4362 = vrot.lane.b32.xlu0 %v4035, 32
      %v4363 = vpop.permute.xlu0 %4362
      %4364 = vrot.lane.b32.xlu0 %v4036, 32
      %v4365 = vpop.permute.xlu0 %4364
      %4366 = vrot.lane.b32.xlu0 %v4037, 32
      %v4367 = vpop.permute.xlu0 %4366
      %4368 = vrot.lane.b32.xlu0 %v4038, 32
      %v4369 = vpop.permute.xlu0 %4368
      %4370 = vrot.lane.b32.xlu0 %v4039, 32
      %v4371 = vpop.permute.xlu0 %4370
      %4372 = vrot.lane.b32.xlu0 %v4040, 32
      %v4373 = vpop.permute.xlu0 %4372
      %4374 = vrot.lane.b32.xlu0 %v4041, 32
      %v4375 = vpop.permute.xlu0 %4374
      %4376 = vrot.lane.b32.xlu0 %v4042, 32
      %v4377 = vpop.permute.xlu0 %4376
      %4378 = vrot.lane.b32.xlu0 %v4043, 32
      %v4379 = vpop.permute.xlu0 %4378
      %4380 = vrot.lane.b32.xlu0 %v4044, 32
      %v4381 = vpop.permute.xlu0 %4380
      %4398 = vrot.lane.b32.xlu0 %v4078, 64
      %v4399 = vpop.permute.xlu0 %4398
      %4400 = vrot.lane.b32.xlu0 %v4079, 64
      %v4401 = vpop.permute.xlu0 %4400
      %4402 = vrot.lane.b32.xlu0 %v4080, 64
      %v4403 = vpop.permute.xlu0 %4402
      %4404 = vrot.lane.b32.xlu0 %v4081, 64
      %v4405 = vpop.permute.xlu0 %4404
      %4406 = vrot.lane.b32.xlu0 %v4082, 64
      %v4407 = vpop.permute.xlu0 %4406
      %4408 = vrot.lane.b32.xlu0 %v4083, 64
      %v4409 = vpop.permute.xlu0 %4408
      %4410 = vrot.lane.b32.xlu0 %v4084, 64
      %v4411 = vpop.permute.xlu0 %4410
      %4412 = vrot.lane.b32.xlu0 %v4085, 64
      %v4413 = vpop.permute.xlu0 %4412
      %4414 = vrot.lane.b32.xlu0 %v4086, 64
      %v4415 = vpop.permute.xlu0 %4414
      %4416 = vrot.lane.b32.xlu0 %v4087, 64
      %v4417 = vpop.permute.xlu0 %4416
      %4418 = vrot.lane.b32.xlu0 %v4088, 64
      %v4419 = vpop.permute.xlu0 %4418
      %4420 = vrot.lane.b32.xlu0 %v4089, 64
      %v4421 = vpop.permute.xlu0 %4420
      %4422 = vrot.lane.b32.xlu0 %v4090, 64
      %v4423 = vpop.permute.xlu0 %4422
      %4424 = vrot.lane.b32.xlu0 %v4091, 64
      %v4425 = vpop.permute.xlu0 %4424
      %4426 = vrot.lane.b32.xlu0 %v4092, 64
      %v4427 = vpop.permute.xlu0 %4426
      %4428 = vrot.lane.b32.xlu0 %v4093, 64
      %v4429 = vpop.permute.xlu0 %4428
      %4446 = vrot.lane.b32.xlu0 %v4126, 96
      %v4447 = vpop.permute.xlu0 %4446
      %4448 = vrot.lane.b32.xlu0 %v4127, 96
      %v4449 = vpop.permute.xlu0 %4448
      %4450 = vrot.lane.b32.xlu0 %v4128, 96
      %v4451 = vpop.permute.xlu0 %4450
      %4452 = vrot.lane.b32.xlu0 %v4129, 96
      %v4453 = vpop.permute.xlu0 %4452
      %4454 = vrot.lane.b32.xlu0 %v4130, 96
      %v4455 = vpop.permute.xlu0 %4454
      %4456 = vrot.lane.b32.xlu0 %v4131, 96
      %v4457 = vpop.permute.xlu0 %4456
      %4458 = vrot.lane.b32.xlu0 %v4132, 96
      %v4459 = vpop.permute.xlu0 %4458
      %4460 = vrot.lane.b32.xlu0 %v4133, 96
      %v4461 = vpop.permute.xlu0 %4460
      %4462 = vrot.lane.b32.xlu0 %v4134, 96
      %v4463 = vpop.permute.xlu0 %4462
      %4464 = vrot.lane.b32.xlu0 %v4135, 96
      %v4465 = vpop.permute.xlu0 %4464
      %4466 = vrot.lane.b32.xlu0 %v4136, 96
      %v4467 = vpop.permute.xlu0 %4466
      %4468 = vrot.lane.b32.xlu0 %v4137, 96
      %v4469 = vpop.permute.xlu0 %4468
      %4470 = vrot.lane.b32.xlu0 %v4138, 96
      %v4471 = vpop.permute.xlu0 %4470
      %4472 = vrot.lane.b32.xlu0 %v4139, 96
      %v4473 = vpop.permute.xlu0 %4472
      %4474 = vrot.lane.b32.xlu0 %v4140, 96
      %v4475 = vpop.permute.xlu0 %4474
      %4476 = vrot.lane.b32.xlu0 %v4141, 96
      %v4477 = vpop.permute.xlu0 %4476
      %v4480 = vsel %vm520, %v3788, %v4207
      %v4483 = vsel %vm520, %v3789, %v4209
      %v4486 = vsel %vm520, %v3790, %v4211
      %v4489 = vsel %vm520, %v3791, %v4213
      %v4492 = vsel %vm520, %v3792, %v4215
      %v4495 = vsel %vm520, %v3793, %v4217
      %v4498 = vsel %vm520, %v3794, %v4219
      %v4501 = vsel %vm520, %v3795, %v4221
      %v4504 = vsel %vm520, %v3796, %v4223
      %v4507 = vsel %vm520, %v3797, %v4225
      %v4510 = vsel %vm520, %v3798, %v4227
      %v4513 = vsel %vm520, %v3799, %v4229
      %v4516 = vsel %vm520, %v3800, %v4231
      %v4519 = vsel %vm520, %v3801, %v4233
      %v4522 = vsel %vm520, %v3802, %v4235
      %v4525 = vsel %vm520, %v3803, %v4237
      %v4527 = vsel %vm1537, %v4480, %v4255
      %v4529 = vsel %vm1537, %v4483, %v4257
      %v4531 = vsel %vm1537, %v4486, %v4259
      %v4533 = vsel %vm1537, %v4489, %v4261
      %v4535 = vsel %vm1537, %v4492, %v4263
      %v4537 = vsel %vm1537, %v4495, %v4265
      %v4539 = vsel %vm1537, %v4498, %v4267
      %v4541 = vsel %vm1537, %v4501, %v4269
      %v4543 = vsel %vm1537, %v4504, %v4271
      %v4545 = vsel %vm1537, %v4507, %v4273
      %v4547 = vsel %vm1537, %v4510, %v4275
      %v4549 = vsel %vm1537, %v4513, %v4277
      %v4551 = vsel %vm1537, %v4516, %v4279
      %v4553 = vsel %vm1537, %v4519, %v4281
      %v4555 = vsel %vm1537, %v4522, %v4283
      %v4557 = vsel %vm1537, %v4525, %v4285
      %v4559 = vsel %vm1570, %v4527, %v4303
      %v4562 = vsel %vm1570, %v4529, %v4305
      %v4565 = vsel %vm1570, %v4531, %v4307
      %v4568 = vsel %vm1570, %v4533, %v4309
      %v4571 = vsel %vm1570, %v4535, %v4311
      %v4574 = vsel %vm1570, %v4537, %v4313
      %v4577 = vsel %vm1570, %v4539, %v4315
      %v4580 = vsel %vm1570, %v4541, %v4317
      %v4583 = vsel %vm1570, %v4543, %v4319
      %v4586 = vsel %vm1570, %v4545, %v4321
      %v4589 = vsel %vm1570, %v4547, %v4323
      %v4592 = vsel %vm1570, %v4549, %v4325
      %v4595 = vsel %vm1570, %v4551, %v4327
      %v4598 = vsel %vm1570, %v4553, %v4329
      %v4601 = vsel %vm1570, %v4555, %v4331
      %v4604 = vsel %vm1570, %v4557, %v4333
      %v4608 = vsel %vm520, %v3981, %v4351
      %v4611 = vsel %vm520, %v3982, %v4353
      %v4614 = vsel %vm520, %v3983, %v4355
      %v4617 = vsel %vm520, %v3984, %v4357
      %v4620 = vsel %vm520, %v3985, %v4359
      %v4623 = vsel %vm520, %v3986, %v4361
      %v4626 = vsel %vm520, %v3987, %v4363
      %v4629 = vsel %vm520, %v3988, %v4365
      %v4632 = vsel %vm520, %v3989, %v4367
      %v4635 = vsel %vm520, %v3990, %v4369
      %v4638 = vsel %vm520, %v3991, %v4371
      %v4641 = vsel %vm520, %v3992, %v4373
      %v4644 = vsel %vm520, %v3993, %v4375
      %v4647 = vsel %vm520, %v3994, %v4377
      %v4650 = vsel %vm520, %v3995, %v4379
      %v4653 = vsel %vm520, %v3996, %v4381
      %v4655 = vsel %vm1537, %v4608, %v4399
      %v4657 = vsel %vm1537, %v4611, %v4401
      %v4659 = vsel %vm1537, %v4614, %v4403
      %v4661 = vsel %vm1537, %v4617, %v4405
      %v4663 = vsel %vm1537, %v4620, %v4407
      %v4665 = vsel %vm1537, %v4623, %v4409
      %v4667 = vsel %vm1537, %v4626, %v4411
      %v4669 = vsel %vm1537, %v4629, %v4413
      %v4671 = vsel %vm1537, %v4632, %v4415
      %v4673 = vsel %vm1537, %v4635, %v4417
      %v4675 = vsel %vm1537, %v4638, %v4419
      %v4677 = vsel %vm1537, %v4641, %v4421
      %v4679 = vsel %vm1537, %v4644, %v4423
      %v4681 = vsel %vm1537, %v4647, %v4425
      %v4683 = vsel %vm1537, %v4650, %v4427
      %v4685 = vsel %vm1537, %v4653, %v4429
      %v4687 = vsel %vm1570, %v4655, %v4447
      %v4690 = vsel %vm1570, %v4657, %v4449
      %v4693 = vsel %vm1570, %v4659, %v4451
      %v4696 = vsel %vm1570, %v4661, %v4453
      %v4699 = vsel %vm1570, %v4663, %v4455
      %v4702 = vsel %vm1570, %v4665, %v4457
      %v4705 = vsel %vm1570, %v4667, %v4459
      %v4708 = vsel %vm1570, %v4669, %v4461
      %v4711 = vsel %vm1570, %v4671, %v4463
      %v4714 = vsel %vm1570, %v4673, %v4465
      %v4717 = vsel %vm1570, %v4675, %v4467
      %v4720 = vsel %vm1570, %v4677, %v4469
      %v4723 = vsel %vm1570, %v4679, %v4471
      %v4726 = vsel %vm1570, %v4681, %v4473
      %v4729 = vsel %vm1570, %v4683, %v4475
      %v4732 = vsel %vm1570, %v4685, %v4477
      %s4734 = scalar_lea.vmem %s1, 288
      %v4735 = vld [vmem:[%s4734] sm:$0xf]
      %v4736 = vld [vmem:[%s4734 + $0x4] sm:$0xf]
      %v4737 = vld [vmem:[%s4734 + $0x8] sm:$0xf]
      %v4738 = vld [vmem:[%s4734 + $0xc] sm:$0xf]
      %v4739 = vld [vmem:[%s4734 + $0x10] sm:$0xf]
      %v4740 = vld [vmem:[%s4734 + $0x14] sm:$0xf]
      %v4741 = vld [vmem:[%s4734 + $0x18] sm:$0xf]
      %v4742 = vld [vmem:[%s4734 + $0x1c] sm:$0xf]
      %v4743 = vld [vmem:[%s4734 + $0x20] sm:$0xf]
      %v4744 = vld [vmem:[%s4734 + $0x24] sm:$0xf]
      %v4745 = vld [vmem:[%s4734 + $0x28] sm:$0xf]
      %v4746 = vld [vmem:[%s4734 + $0x2c] sm:$0xf]
      %v4747 = vld [vmem:[%s4734 + $0x30] sm:$0xf]
      %v4748 = vld [vmem:[%s4734 + $0x34] sm:$0xf]
      %v4749 = vld [vmem:[%s4734 + $0x38] sm:$0xf]
      %v4750 = vld [vmem:[%s4734 + $0x3c] sm:$0xf]
      %v4751 = vld [vmem:[%s4734 + $0x40] sm:$0xf]
      %v4752 = vld [vmem:[%s4734 + $0x44] sm:$0xf]
      %v4753 = vld [vmem:[%s4734 + $0x48] sm:$0xf]
      %v4754 = vld [vmem:[%s4734 + $0x4c] sm:$0xf]
      %v4755 = vld [vmem:[%s4734 + $0x50] sm:$0xf]
      %v4756 = vld [vmem:[%s4734 + $0x54] sm:$0xf]
      %v4757 = vld [vmem:[%s4734 + $0x58] sm:$0xf]
      %v4758 = vld [vmem:[%s4734 + $0x5c] sm:$0xf]
      %v4759 = vld [vmem:[%s4734 + $0x60] sm:$0xf]
      %v4760 = vld [vmem:[%s4734 + $0x64] sm:$0xf]
      %v4761 = vld [vmem:[%s4734 + $0x68] sm:$0xf]
      %v4762 = vld [vmem:[%s4734 + $0x6c] sm:$0xf]
      %v4763 = vld [vmem:[%s4734 + $0x70] sm:$0xf]
      %v4764 = vld [vmem:[%s4734 + $0x74] sm:$0xf]
      %v4765 = vld [vmem:[%s4734 + $0x78] sm:$0xf]
      %v4766 = vld [vmem:[%s4734 + $0x7c] sm:$0xf]
      %v4767 = vld [vmem:[%s4734 + $0x80] sm:$0xf]
      %v4768 = vld [vmem:[%s4734 + $0x84] sm:$0xf]
      %v4769 = vld [vmem:[%s4734 + $0x88] sm:$0xf]
      %v4770 = vld [vmem:[%s4734 + $0x8c] sm:$0xf]
      %v4807 = vunpack.c.l.b16 %v4735
      %v4808 = vunpack.c.l.b16 %v4736
      %v4809 = vunpack.c.l.b16 %v4737
      %v4810 = vunpack.c.l.b16 %v4738
      %v4811 = vunpack.c.l.b16 %v4739
      %v4812 = vunpack.c.l.b16 %v4740
      %v4813 = vunpack.c.l.b16 %v4741
      %v4814 = vunpack.c.l.b16 %v4742
      %v4815 = vunpack.c.l.b16 %v4743
      %v4816 = vunpack.c.l.b16 %v4744
      %v4817 = vunpack.c.l.b16 %v4745
      %v4818 = vunpack.c.l.b16 %v4746
      %v4819 = vunpack.c.l.b16 %v4747
      %v4820 = vunpack.c.l.b16 %v4748
      %v4821 = vunpack.c.l.b16 %v4749
      %v4822 = vunpack.c.l.b16 %v4750
      %v4823 = vunpack.c.l.b16 %v4751
      %v4824 = vunpack.c.l.b16 %v4752
      %v4825 = vunpack.c.l.b16 %v4753
      %v4826 = vunpack.c.l.b16 %v4754
      %v4827 = vunpack.c.l.b16 %v4755
      %v4828 = vunpack.c.l.b16 %v4756
      %v4829 = vunpack.c.l.b16 %v4757
      %v4830 = vunpack.c.l.b16 %v4758
      %v4831 = vunpack.c.l.b16 %v4759
      %v4832 = vunpack.c.l.b16 %v4760
      %v4833 = vunpack.c.l.b16 %v4761
      %v4834 = vunpack.c.l.b16 %v4762
      %v4835 = vunpack.c.l.b16 %v4763
      %v4836 = vunpack.c.l.b16 %v4764
      %v4837 = vunpack.c.l.b16 %v4765
      %v4838 = vunpack.c.l.b16 %v4766
      %v4839 = vunpack.c.l.b16 %v4767
      %v4840 = vunpack.c.l.b16 %v4768
      %v4841 = vunpack.c.l.b16 %v4769
      %v4842 = vunpack.c.l.b16 %v4770
      %v4843 = vpack.c.b16 %v4808, %v4807
      %v4844 = vpack.c.b16 %v4810, %v4809
      %v4845 = vpack.c.b16 %v4812, %v4811
      %v4846 = vpack.c.b16 %v4814, %v4813
      %v4847 = vpack.c.b16 %v4816, %v4815
      %v4848 = vpack.c.b16 %v4818, %v4817
      %v4849 = vpack.c.b16 %v4820, %v4819
      %v4850 = vpack.c.b16 %v4822, %v4821
      %v4851 = vpack.c.b16 %v4824, %v4823
      %v4852 = vpack.c.b16 %v4826, %v4825
      %v4853 = vpack.c.b16 %v4828, %v4827
      %v4854 = vpack.c.b16 %v4830, %v4829
      %v4855 = vpack.c.b16 %v4832, %v4831
      %v4856 = vpack.c.b16 %v4834, %v4833
      %v4857 = vpack.c.b16 %v4836, %v4835
      %v4858 = vpack.c.b16 %v4838, %v4837
      %v4859 = vpack.c.b16 %v4840, %v4839
      %v4860 = vpack.c.b16 %v4842, %v4841
      %v4880 = vsel %vm520, %v4174, 0
      %v4883 = vsel %vm520, %v4175, 0
      %v4886 = vsel %vm520, %v4176, 0
      %v4889 = vsel %vm520, %v4177, 0
      %v4892 = vsel %vm520, %v4178, 0
      %v4895 = vsel %vm520, %v4179, 0
      %v4898 = vsel %vm520, %v4180, 0
      %v4901 = vsel %vm520, %v4181, 0
      %v4904 = vsel %vm520, %v4182, 0
      %v4907 = vsel %vm520, %v4183, 0
      %v4910 = vsel %vm520, %v4184, 0
      %v4913 = vsel %vm520, %v4185, 0
      %v4916 = vsel %vm520, %v4186, 0
      %v4919 = vsel %vm520, %v4187, 0
      %v4922 = vsel %vm520, %v4188, 0
      %v4925 = vsel %vm520, %v4189, 0
      %4927 = vmatprep.subr.bf16.mxu0 0
      %4928 = vmatpush1.bf16.msra.mxu0 %v4843
      %4929 = vmatprep.subr.bf16.mxu0 0
      %4930 = vmatpush1.bf16.msra.mxu0 %v4844
      %4931 = vmatprep.subr.bf16.mxu0 0
      %4932 = vmatpush1.bf16.msra.mxu0 %v4845
      %4933 = vmatprep.subr.bf16.mxu0 0
      %4934 = vmatpush1.bf16.msra.mxu0 %v4846
      %4935 = vmatprep.subr.bf16.mxu0 0
      %4936 = vmatpush1.bf16.msra.mxu0 %v4847
      %4937 = vmatprep.subr.bf16.mxu0 0
      %4938 = vmatpush1.bf16.msra.mxu0 %v4848
      %4939 = vmatprep.subr.bf16.mxu0 0
      %4940 = vmatpush1.bf16.msra.mxu0 %v4849
      %4941 = vmatprep.subr.bf16.mxu0 0
      %4942 = vmatpush1.bf16.msra.mxu0 %v4850
      %4943 = vmatprep.subr.bf16.mxu0 0
      %4944 = vmatpush1.bf16.msra.mxu0 %v4851
      %4945 = vmatprep.subr.bf16.mxu0 0
      %4946 = vmatpush1.bf16.msra.mxu0 %v4852
      %4947 = vmatprep.subr.bf16.mxu0 0
      %4948 = vmatpush1.bf16.msra.mxu0 %v4853
      %4949 = vmatprep.subr.bf16.mxu0 0
      %4950 = vmatpush1.bf16.msra.mxu0 %v4854
      %4951 = vmatprep.subr.bf16.mxu0 0
      %4952 = vmatpush1.bf16.msra.mxu0 %v4855
      %4953 = vmatprep.subr.bf16.mxu0 0
      %4954 = vmatpush1.bf16.msra.mxu0 %v4856
      %4955 = vmatprep.subr.bf16.mxu0 0
      %4956 = vmatpush1.bf16.msra.mxu0 %v4857
      %4957 = vmatprep.subr.bf16.mxu0 0
      %4958 = vmatpush1.bf16.msra.mxu0 %v4858
      %4959 = vmatprep.mubr.bf16.mxu0 %v4687
      %4960 = vmatmul.mubr.bf16.gmra.mrb[0].mxu0 %v4559
      %v4961 = vpop.f32.mrb[0].mxu0
      %v4962 = vadd.f32 0.0, %v4961
      %v4963 = vpop.f32.mrb[0].mxu0
      %v4964 = vpop.f32.mrb[0].mxu0
      %v4965 = vadd.f32 0.0, %v4964
      %v4966 = vpop.f32.mrb[0].mxu0
      %4967 = vmatprep.mubr.bf16.mxu0 %v4690
      %4968 = vmatmul.mubr.bf16.gmra.mrb[0].mxu0 %v4562
      %v4969 = vpop.f32.mrb[0].mxu0
      %v4970 = vadd.f32 0.0, %v4969
      %v4971 = vpop.f32.mrb[0].mxu0
      %v4972 = vpop.f32.mrb[0].mxu0
      %v4973 = vadd.f32 0.0, %v4972
      %v4974 = vpop.f32.mrb[0].mxu0
      %4975 = vmatprep.mubr.bf16.mxu0 %v4693
      %4976 = vmatmul.mubr.bf16.gmra.mrb[0].mxu0 %v4565
      %v4977 = vpop.f32.mrb[0].mxu0
      %v4978 = vadd.f32 0.0, %v4977
      %v4979 = vpop.f32.mrb[0].mxu0
      %v4980 = vpop.f32.mrb[0].mxu0
      %v4981 = vadd.f32 0.0, %v4980
      %v4982 = vpop.f32.mrb[0].mxu0
      %4983 = vmatprep.mubr.bf16.mxu0 %v4696
      %4984 = vmatmul.mubr.bf16.gmra.mrb[0].mxu0 %v4568
      %v4985 = vpop.f32.mrb[0].mxu0
      %v4986 = vadd.f32 0.0, %v4985
      %v4987 = vpop.f32.mrb[0].mxu0
      %v4988 = vpop.f32.mrb[0].mxu0
      %v4989 = vadd.f32 0.0, %v4988
      %v4990 = vpop.f32.mrb[0].mxu0
      %4991 = vmatprep.mubr.bf16.mxu0 %v4699
      %4992 = vmatmul.mubr.bf16.gmra.mrb[0].mxu0 %v4571
      %v4993 = vpop.f32.mrb[0].mxu0
      %v4994 = vadd.f32 0.0, %v4993
      %v4995 = vpop.f32.mrb[0].mxu0
      %v4996 = vpop.f32.mrb[0].mxu0
      %v4997 = vadd.f32 0.0, %v4996
      %v4998 = vpop.f32.mrb[0].mxu0
      %4999 = vmatprep.mubr.bf16.mxu0 %v4702
      %5000 = vmatmul.mubr.bf16.gmra.mrb[0].mxu0 %v4574
      %v5001 = vpop.f32.mrb[0].mxu0
      %v5002 = vadd.f32 0.0, %v5001
      %v5003 = vpop.f32.mrb[0].mxu0
      %v5004 = vpop.f32.mrb[0].mxu0
      %v5005 = vadd.f32 0.0, %v5004
      %v5006 = vpop.f32.mrb[0].mxu0
      %5007 = vmatprep.mubr.bf16.mxu0 %v4705
      %5008 = vmatmul.mubr.bf16.gmra.mrb[0].mxu0 %v4577
      %v5009 = vpop.f32.mrb[0].mxu0
      %v5010 = vadd.f32 0.0, %v5009
      %v5011 = vpop.f32.mrb[0].mxu0
      %v5012 = vpop.f32.mrb[0].mxu0
      %v5013 = vadd.f32 0.0, %v5012
      %v5014 = vpop.f32.mrb[0].mxu0
      %5015 = vmatprep.mubr.bf16.mxu0 %v4708
      %5016 = vmatmul.mubr.bf16.gmra.mrb[0].mxu0 %v4580
      %v5017 = vpop.f32.mrb[0].mxu0
      %v5018 = vadd.f32 0.0, %v5017
      %v5019 = vpop.f32.mrb[0].mxu0
      %v5020 = vpop.f32.mrb[0].mxu0
      %v5021 = vadd.f32 0.0, %v5020
      %v5022 = vpop.f32.mrb[0].mxu0
      %5023 = vmatprep.mubr.bf16.mxu0 %v4711
      %5024 = vmatmul.mubr.bf16.gmra.mrb[0].mxu0 %v4583
      %v5025 = vpop.f32.mrb[0].mxu0
      %v5026 = vadd.f32 0.0, %v5025
      %v5027 = vpop.f32.mrb[0].mxu0
      %v5028 = vpop.f32.mrb[0].mxu0
      %v5029 = vadd.f32 0.0, %v5028
      %v5030 = vpop.f32.mrb[0].mxu0
      %5031 = vmatprep.mubr.bf16.mxu0 %v4714
      %5032 = vmatmul.mubr.bf16.gmra.mrb[0].mxu0 %v4586
      %v5033 = vpop.f32.mrb[0].mxu0
      %v5034 = vadd.f32 0.0, %v5033
      %v5035 = vpop.f32.mrb[0].mxu0
      %v5036 = vpop.f32.mrb[0].mxu0
      %v5037 = vadd.f32 0.0, %v5036
      %v5038 = vpop.f32.mrb[0].mxu0
      %5039 = vmatprep.mubr.bf16.mxu0 %v4717
      %5040 = vmatmul.mubr.bf16.gmra.mrb[0].mxu0 %v4589
      %v5041 = vpop.f32.mrb[0].mxu0
      %v5042 = vadd.f32 0.0, %v5041
      %v5043 = vpop.f32.mrb[0].mxu0
      %v5044 = vpop.f32.mrb[0].mxu0
      %v5045 = vadd.f32 0.0, %v5044
      %v5046 = vpop.f32.mrb[0].mxu0
      %5047 = vmatprep.mubr.bf16.mxu0 %v4720
      %5048 = vmatmul.mubr.bf16.gmra.mrb[0].mxu0 %v4592
      %v5049 = vpop.f32.mrb[0].mxu0
      %v5050 = vadd.f32 0.0, %v5049
      %v5051 = vpop.f32.mrb[0].mxu0
      %v5052 = vpop.f32.mrb[0].mxu0
      %v5053 = vadd.f32 0.0, %v5052
      %v5054 = vpop.f32.mrb[0].mxu0
      %5055 = vmatprep.mubr.bf16.mxu0 %v4723
      %5056 = vmatmul.mubr.bf16.gmra.mrb[0].mxu0 %v4595
      %v5057 = vpop.f32.mrb[0].mxu0
      %v5058 = vadd.f32 0.0, %v5057
      %v5059 = vpop.f32.mrb[0].mxu0
      %v5060 = vpop.f32.mrb[0].mxu0
      %v5061 = vadd.f32 0.0, %v5060
      %v5062 = vpop.f32.mrb[0].mxu0
      %5063 = vmatprep.mubr.bf16.mxu0 %v4726
      %5064 = vmatmul.mubr.bf16.gmra.mrb[0].mxu0 %v4598
      %v5065 = vpop.f32.mrb[0].mxu0
      %v5066 = vadd.f32 0.0, %v5065
      %v5067 = vpop.f32.mrb[0].mxu0
      %v5068 = vpop.f32.mrb[0].mxu0
      %v5069 = vadd.f32 0.0, %v5068
      %v5070 = vpop.f32.mrb[0].mxu0
      %5071 = vmatprep.mubr.bf16.mxu0 %v4729
      %5072 = vmatmul.mubr.bf16.gmra.mrb[0].mxu0 %v4601
      %v5073 = vpop.f32.mrb[0].mxu0
      %v5074 = vadd.f32 0.0, %v5073
      %v5075 = vpop.f32.mrb[0].mxu0
      %v5076 = vpop.f32.mrb[0].mxu0
      %v5077 = vadd.f32 0.0, %v5076
      %v5078 = vpop.f32.mrb[0].mxu0
      %5079 = vmatprep.mubr.bf16.mxu0 %v4732
      %5080 = vmatmul.mubr.bf16.gmra.mrb[0].mxu0 %v4604
      %v5081 = vpop.f32.mrb[0].mxu0
      %v5082 = vadd.f32 0.0, %v5081
      %v5083 = vpop.f32.mrb[0].mxu0
      %v5084 = vpop.f32.mrb[0].mxu0
      %v5085 = vadd.f32 0.0, %v5084
      %v5086 = vpop.f32.mrb[0].mxu0
      %5087 = vdwg.mxu0
      %5088 = vmatprep.subr.bf16.mxu0 0
      %5089 = vmatpush1.bf16.msra.mxu0 %v4859
      %5090 = vmatprep.subr.bf16.mxu0 0
      %5091 = vmatpush1.bf16.msra.mxu0 %v4860
      %5092 = vmatprep.subr.bf16.mxu0 0
      %5093 = vmatpush1.bf16.msra.mxu0 0
      %5094 = vmatprep.subr.bf16.mxu0 0
      %5095 = vmatpush1.bf16.msra.mxu0 0
      %5096 = vmatprep.subr.bf16.mxu0 0
      %5097 = vmatpush1.bf16.msra.mxu0 0
      %5098 = vmatprep.subr.bf16.mxu0 0
      %5099 = vmatpush1.bf16.msra.mxu0 0
      %5100 = vmatprep.subr.bf16.mxu0 0
      %5101 = vmatpush1.bf16.msra.mxu0 0
      %5102 = vmatprep.subr.bf16.mxu0 0
      %5103 = vmatpush1.bf16.msra.mxu0 0
      %5104 = vmatprep.subr.bf16.mxu0 0
      %5105 = vmatpush1.bf16.msra.mxu0 0
      %5106 = vmatprep.subr.bf16.mxu0 0
      %5107 = vmatpush1.bf16.msra.mxu0 0
      %5108 = vmatprep.subr.bf16.mxu0 0
      %5109 = vmatpush1.bf16.msra.mxu0 0
      %5110 = vmatprep.subr.bf16.mxu0 0
      %5111 = vmatpush1.bf16.msra.mxu0 0
      %5112 = vmatprep.subr.bf16.mxu0 0
      %5113 = vmatpush1.bf16.msra.mxu0 0
      %5114 = vmatprep.subr.bf16.mxu0 0
      %5115 = vmatpush1.bf16.msra.mxu0 0
      %5116 = vmatprep.subr.bf16.mxu0 0
      %5117 = vmatpush1.bf16.msra.mxu0 0
      %5118 = vmatprep.subr.bf16.mxu0 0
      %5119 = vmatpush1.bf16.msra.mxu0 0
      %5120 = vmatprep.mubr.bf16.mxu0 0
      %5121 = vmatmul.mubr.bf16.gmra.mrb[0].mxu0 %v4880
      %v5122 = vpop.f32.mrb[0].mxu0
      %v5123 = vadd.f32 %v4962, %v5122
      %v5124 = vpop.f32.mrb[0].mxu0
      %v5125 = vpop.f32.mrb[0].mxu0
      %v5126 = vadd.f32 %v4965, %v5125
      %v5127 = vpop.f32.mrb[0].mxu0
      %5128 = vmatprep.mubr.bf16.mxu0 0
      %5129 = vmatmul.mubr.bf16.gmra.mrb[0].mxu0 %v4883
      %v5130 = vpop.f32.mrb[0].mxu0
      %v5131 = vadd.f32 %v4970, %v5130
      %v5132 = vpop.f32.mrb[0].mxu0
      %v5133 = vpop.f32.mrb[0].mxu0
      %v5134 = vadd.f32 %v4973, %v5133
      %v5135 = vpop.f32.mrb[0].mxu0
      %5136 = vmatprep.mubr.bf16.mxu0 0
      %5137 = vmatmul.mubr.bf16.gmra.mrb[0].mxu0 %v4886
      %v5138 = vpop.f32.mrb[0].mxu0
      %v5139 = vadd.f32 %v4978, %v5138
      %v5140 = vpop.f32.mrb[0].mxu0
      %v5141 = vpop.f32.mrb[0].mxu0
      %v5142 = vadd.f32 %v4981, %v5141
      %v5143 = vpop.f32.mrb[0].mxu0
      %5144 = vmatprep.mubr.bf16.mxu0 0
      %5145 = vmatmul.mubr.bf16.gmra.mrb[0].mxu0 %v4889
      %v5146 = vpop.f32.mrb[0].mxu0
      %v5147 = vadd.f32 %v4986, %v5146
      %v5148 = vpop.f32.mrb[0].mxu0
      %v5149 = vpop.f32.mrb[0].mxu0
      %v5150 = vadd.f32 %v4989, %v5149
      %v5151 = vpop.f32.mrb[0].mxu0
      %5152 = vmatprep.mubr.bf16.mxu0 0
      %5153 = vmatmul.mubr.bf16.gmra.mrb[0].mxu0 %v4892
      %v5154 = vpop.f32.mrb[0].mxu0
      %v5155 = vadd.f32 %v4994, %v5154
      %v5156 = vpop.f32.mrb[0].mxu0
      %v5157 = vpop.f32.mrb[0].mxu0
      %v5158 = vadd.f32 %v4997, %v5157
      %v5159 = vpop.f32.mrb[0].mxu0
      %5160 = vmatprep.mubr.bf16.mxu0 0
      %5161 = vmatmul.mubr.bf16.gmra.mrb[0].mxu0 %v4895
      %v5162 = vpop.f32.mrb[0].mxu0
      %v5163 = vadd.f32 %v5002, %v5162
      %v5164 = vpop.f32.mrb[0].mxu0
      %v5165 = vpop.f32.mrb[0].mxu0
      %v5166 = vadd.f32 %v5005, %v5165
      %v5167 = vpop.f32.mrb[0].mxu0
      %5168 = vmatprep.mubr.bf16.mxu0 0
      %5169 = vmatmul.mubr.bf16.gmra.mrb[0].mxu0 %v4898
      %v5170 = vpop.f32.mrb[0].mxu0
      %v5171 = vadd.f32 %v5010, %v5170
      %v5172 = vpop.f32.mrb[0].mxu0
      %v5173 = vpop.f32.mrb[0].mxu0
      %v5174 = vadd.f32 %v5013, %v5173
      %v5175 = vpop.f32.mrb[0].mxu0
      %5176 = vmatprep.mubr.bf16.mxu0 0
      %5177 = vmatmul.mubr.bf16.gmra.mrb[0].mxu0 %v4901
      %v5178 = vpop.f32.mrb[0].mxu0
      %v5179 = vadd.f32 %v5018, %v5178
      %v5180 = vpop.f32.mrb[0].mxu0
      %v5181 = vpop.f32.mrb[0].mxu0
      %v5182 = vadd.f32 %v5021, %v5181
      %v5183 = vpop.f32.mrb[0].mxu0
      %5184 = vmatprep.mubr.bf16.mxu0 0
      %5185 = vmatmul.mubr.bf16.gmra.mrb[0].mxu0 %v4904
      %v5186 = vpop.f32.mrb[0].mxu0
      %v5187 = vadd.f32 %v5026, %v5186
      %v5188 = vpop.f32.mrb[0].mxu0
      %v5189 = vpop.f32.mrb[0].mxu0
      %v5190 = vadd.f32 %v5029, %v5189
      %v5191 = vpop.f32.mrb[0].mxu0
      %5192 = vmatprep.mubr.bf16.mxu0 0
      %5193 = vmatmul.mubr.bf16.gmra.mrb[0].mxu0 %v4907
      %v5194 = vpop.f32.mrb[0].mxu0
      %v5195 = vadd.f32 %v5034, %v5194
      %v5196 = vpop.f32.mrb[0].mxu0
      %v5197 = vpop.f32.mrb[0].mxu0
      %v5198 = vadd.f32 %v5037, %v5197
      %v5199 = vpop.f32.mrb[0].mxu0
      %5200 = vmatprep.mubr.bf16.mxu0 0
      %5201 = vmatmul.mubr.bf16.gmra.mrb[0].mxu0 %v4910
      %v5202 = vpop.f32.mrb[0].mxu0
      %v5203 = vadd.f32 %v5042, %v5202
      %v5204 = vpop.f32.mrb[0].mxu0
      %v5205 = vpop.f32.mrb[0].mxu0
      %v5206 = vadd.f32 %v5045, %v5205
      %v5207 = vpop.f32.mrb[0].mxu0
      %5208 = vmatprep.mubr.bf16.mxu0 0
      %5209 = vmatmul.mubr.bf16.gmra.mrb[0].mxu0 %v4913
      %v5210 = vpop.f32.mrb[0].mxu0
      %v5211 = vadd.f32 %v5050, %v5210
      %v5212 = vpop.f32.mrb[0].mxu0
      %v5213 = vpop.f32.mrb[0].mxu0
      %v5214 = vadd.f32 %v5053, %v5213
      %v5215 = vpop.f32.mrb[0].mxu0
      %5216 = vmatprep.mubr.bf16.mxu0 0
      %5217 = vmatmul.mubr.bf16.gmra.mrb[0].mxu0 %v4916
      %v5218 = vpop.f32.mrb[0].mxu0
      %v5219 = vadd.f32 %v5058, %v5218
      %v5220 = vpop.f32.mrb[0].mxu0
      %v5221 = vpop.f32.mrb[0].mxu0
      %v5222 = vadd.f32 %v5061, %v5221
      %v5223 = vpop.f32.mrb[0].mxu0
      %5224 = vmatprep.mubr.bf16.mxu0 0
      %5225 = vmatmul.mubr.bf16.gmra.mrb[0].mxu0 %v4919
      %v5226 = vpop.f32.mrb[0].mxu0
      %v5227 = vadd.f32 %v5066, %v5226
      %v5228 = vpop.f32.mrb[0].mxu0
      %v5229 = vpop.f32.mrb[0].mxu0
      %v5230 = vadd.f32 %v5069, %v5229
      %v5231 = vpop.f32.mrb[0].mxu0
      %5232 = vmatprep.mubr.bf16.mxu0 0
      %5233 = vmatmul.mubr.bf16.gmra.mrb[0].mxu0 %v4922
      %v5234 = vpop.f32.mrb[0].mxu0
      %v5235 = vadd.f32 %v5074, %v5234
      %v5236 = vpop.f32.mrb[0].mxu0
      %v5237 = vpop.f32.mrb[0].mxu0
      %v5238 = vadd.f32 %v5077, %v5237
      %v5239 = vpop.f32.mrb[0].mxu0
      %5240 = vmatprep.mubr.bf16.mxu0 0
      %5241 = vmatmul.mubr.bf16.gmra.mrb[0].mxu0 %v4925
      %v5242 = vpop.f32.mrb[0].mxu0
      %v5243 = vadd.f32 %v5082, %v5242
      %v5244 = vpop.f32.mrb[0].mxu0
      %v5245 = vpop.f32.mrb[0].mxu0
      %v5246 = vadd.f32 %v5085, %v5245
      %v5247 = vpop.f32.mrb[0].mxu0
      %5248 = vdwg.mxu0
      %v5249 = vadd.f32 %v3629, %v5123
      %v5250 = vadd.f32 %v3632, %v5126
      %v5251 = vadd.f32 %v3637, %v5131
      %v5252 = vadd.f32 %v3640, %v5134
      %v5253 = vadd.f32 %v3645, %v5139
      %v5254 = vadd.f32 %v3648, %v5142
      %v5255 = vadd.f32 %v3653, %v5147
      %v5256 = vadd.f32 %v3656, %v5150
      %v5257 = vadd.f32 %v3661, %v5155
      %v5258 = vadd.f32 %v3664, %v5158
      %v5259 = vadd.f32 %v3669, %v5163
      %v5260 = vadd.f32 %v3672, %v5166
      %v5261 = vadd.f32 %v3677, %v5171
      %v5262 = vadd.f32 %v3680, %v5174
      %v5263 = vadd.f32 %v3685, %v5179
      %v5264 = vadd.f32 %v3688, %v5182
      %v5265 = vadd.f32 %v3693, %v5187
      %v5266 = vadd.f32 %v3696, %v5190
      %v5267 = vadd.f32 %v3701, %v5195
      %v5268 = vadd.f32 %v3704, %v5198
      %v5269 = vadd.f32 %v3709, %v5203
      %v5270 = vadd.f32 %v3712, %v5206
      %v5271 = vadd.f32 %v3717, %v5211
      %v5272 = vadd.f32 %v3720, %v5214
      %v5273 = vadd.f32 %v3725, %v5219
      %v5274 = vadd.f32 %v3728, %v5222
      %v5275 = vadd.f32 %v3733, %v5227
      %v5276 = vadd.f32 %v3736, %v5230
      %v5277 = vadd.f32 %v3741, %v5235
      %v5278 = vadd.f32 %v3744, %v5238
      %v5279 = vadd.f32 %v3749, %v5243
      %v5280 = vadd.f32 %v3752, %v5246
      %v5281 = vld [vmem:[%s2] sm:$0x1]
      %v5283 = vlaneseq
      %v5284 = vshrl.u32 %v5283, 7
      %v5285 = vsub.s32 0, %v5284
      %v5286 = vrot.slane %v5281, %v5285
      %v5288 = vmul.f32 %v5249, %v5286
      %v5289 = vmul.f32 %v5250, %v5286
      %v5290 = vmul.f32 %v5251, %v5286
      %v5291 = vmul.f32 %v5252, %v5286
      %v5292 = vmul.f32 %v5253, %v5286
      %v5293 = vmul.f32 %v5254, %v5286
      %v5294 = vmul.f32 %v5255, %v5286
      %v5295 = vmul.f32 %v5256, %v5286
      %v5296 = vmul.f32 %v5257, %v5286
      %v5297 = vmul.f32 %v5258, %v5286
      %v5298 = vmul.f32 %v5259, %v5286
      %v5299 = vmul.f32 %v5260, %v5286
      %v5300 = vmul.f32 %v5261, %v5286
      %v5301 = vmul.f32 %v5262, %v5286
      %v5302 = vmul.f32 %v5263, %v5286
      %v5303 = vmul.f32 %v5264, %v5286
      %v5304 = vmul.f32 %v5265, %v5286
      %v5305 = vmul.f32 %v5266, %v5286
      %v5306 = vmul.f32 %v5267, %v5286
      %v5307 = vmul.f32 %v5268, %v5286
      %v5308 = vmul.f32 %v5269, %v5286
      %v5309 = vmul.f32 %v5270, %v5286
      %v5310 = vmul.f32 %v5271, %v5286
      %v5311 = vmul.f32 %v5272, %v5286
      %v5312 = vmul.f32 %v5273, %v5286
      %v5313 = vmul.f32 %v5274, %v5286
      %v5314 = vmul.f32 %v5275, %v5286
      %v5315 = vmul.f32 %v5276, %v5286
      %v5316 = vmul.f32 %v5277, %v5286
      %v5317 = vmul.f32 %v5278, %v5286
      %v5318 = vmul.f32 %v5279, %v5286
      %v5319 = vmul.f32 %v5280, %v5286
      %v5320 = vld [vmem:[%s3] sm:$0x1]
      %v5322 = vlaneseq
      %v5323 = vshrl.u32 %v5322, 7
      %v5324 = vsub.s32 0, %v5323
      %v5325 = vrot.slane %v5320, %v5324
      %v5327 = vadd.f32 %v5288, %v5325
      %v5328 = vadd.f32 %v5289, %v5325
      %v5329 = vadd.f32 %v5290, %v5325
      %v5330 = vadd.f32 %v5291, %v5325
      %v5331 = vadd.f32 %v5292, %v5325
      %v5332 = vadd.f32 %v5293, %v5325
      %v5333 = vadd.f32 %v5294, %v5325
      %v5334 = vadd.f32 %v5295, %v5325
      %v5335 = vadd.f32 %v5296, %v5325
      %v5336 = vadd.f32 %v5297, %v5325
      %v5337 = vadd.f32 %v5298, %v5325
      %v5338 = vadd.f32 %v5299, %v5325
      %v5339 = vadd.f32 %v5300, %v5325
      %v5340 = vadd.f32 %v5301, %v5325
      %v5341 = vadd.f32 %v5302, %v5325
      %v5342 = vadd.f32 %v5303, %v5325
      %v5343 = vadd.f32 %v5304, %v5325
      %v5344 = vadd.f32 %v5305, %v5325
      %v5345 = vadd.f32 %v5306, %v5325
      %v5346 = vadd.f32 %v5307, %v5325
      %v5347 = vadd.f32 %v5308, %v5325
      %v5348 = vadd.f32 %v5309, %v5325
      %v5349 = vadd.f32 %v5310, %v5325
      %v5350 = vadd.f32 %v5311, %v5325
      %v5351 = vadd.f32 %v5312, %v5325
      %v5352 = vadd.f32 %v5313, %v5325
      %v5353 = vadd.f32 %v5314, %v5325
      %v5354 = vadd.f32 %v5315, %v5325
      %v5355 = vadd.f32 %v5316, %v5325
      %v5356 = vadd.f32 %v5317, %v5325
      %v5357 = vadd.f32 %v5318, %v5325
      %v5358 = vadd.f32 %v5319, %v5325
      %v5359 = vmax.f32 %v5327, 0.0
      %v5360 = vmax.f32 %v5328, 0.0
      %v5361 = vmax.f32 %v5329, 0.0
      %v5362 = vmax.f32 %v5330, 0.0
      %v5363 = vmax.f32 %v5331, 0.0
      %v5364 = vmax.f32 %v5332, 0.0
      %v5365 = vmax.f32 %v5333, 0.0
      %v5366 = vmax.f32 %v5334, 0.0
      %v5367 = vmax.f32 %v5335, 0.0
      %v5368 = vmax.f32 %v5336, 0.0
      %v5369 = vmax.f32 %v5337, 0.0
      %v5370 = vmax.f32 %v5338, 0.0
      %v5371 = vmax.f32 %v5339, 0.0
      %v5372 = vmax.f32 %v5340, 0.0
      %v5373 = vmax.f32 %v5341, 0.0
      %v5374 = vmax.f32 %v5342, 0.0
      %v5375 = vmax.f32 %v5343, 0.0
      %v5376 = vmax.f32 %v5344, 0.0
      %v5377 = vmax.f32 %v5345, 0.0
      %v5378 = vmax.f32 %v5346, 0.0
      %v5379 = vmax.f32 %v5347, 0.0
      %v5380 = vmax.f32 %v5348, 0.0
      %v5381 = vmax.f32 %v5349, 0.0
      %v5382 = vmax.f32 %v5350, 0.0
      %v5383 = vmax.f32 %v5351, 0.0
      %v5384 = vmax.f32 %v5352, 0.0
      %v5385 = vmax.f32 %v5353, 0.0
      %v5386 = vmax.f32 %v5354, 0.0
      %v5387 = vmax.f32 %v5355, 0.0
      %v5388 = vmax.f32 %v5356, 0.0
      %v5389 = vmax.f32 %v5357, 0.0
      %v5390 = vmax.f32 %v5358, 0.0
      %5391 = vst.msk [vmem:[%s701 + $0x1] sm:$0xff] %vm520, %v5359
      %5392 = vst.msk [vmem:[%s701 + $0x11] sm:$0xff] %vm520, %v5360
      %5393 = vst.msk [vmem:[%s701 + $0x21] sm:$0xff] %vm520, %v5361
      %5394 = vst.msk [vmem:[%s701 + $0x31] sm:$0xff] %vm520, %v5362
      %5395 = vst.msk [vmem:[%s701 + $0x41] sm:$0xff] %vm520, %v5363
      %5396 = vst.msk [vmem:[%s701 + $0x51] sm:$0xff] %vm520, %v5364
      %5397 = vst.msk [vmem:[%s701 + $0x61] sm:$0xff] %vm520, %v5365
      %5398 = vst.msk [vmem:[%s701 + $0x71] sm:$0xff] %vm520, %v5366
      %5399 = vst.msk [vmem:[%s701 + $0xa1] sm:$0xff] %vm520, %v5367
      %5400 = vst.msk [vmem:[%s701 + $0xb1] sm:$0xff] %vm520, %v5368
      %5401 = vst.msk [vmem:[%s701 + $0xc1] sm:$0xff] %vm520, %v5369
      %5402 = vst.msk [vmem:[%s701 + $0xd1] sm:$0xff] %vm520, %v5370
      %5403 = vst.msk [vmem:[%s701 + $0xe1] sm:$0xff] %vm520, %v5371
      %5404 = vst.msk [vmem:[%s701 + $0xf1] sm:$0xff] %vm520, %v5372
      %5405 = vst.msk [vmem:[%s701 + $0x101] sm:$0xff] %vm520, %v5373
      %5406 = vst.msk [vmem:[%s701 + $0x111] sm:$0xff] %vm520, %v5374
      %5407 = vst.msk [vmem:[%s701 + $0x141] sm:$0xff] %vm520, %v5375
      %5408 = vst.msk [vmem:[%s701 + $0x151] sm:$0xff] %vm520, %v5376
      %5409 = vst.msk [vmem:[%s701 + $0x161] sm:$0xff] %vm520, %v5377
      %5410 = vst.msk [vmem:[%s701 + $0x171] sm:$0xff] %vm520, %v5378
      %5411 = vst.msk [vmem:[%s701 + $0x181] sm:$0xff] %vm520, %v5379
      %5412 = vst.msk [vmem:[%s701 + $0x191] sm:$0xff] %vm520, %v5380
      %5413 = vst.msk [vmem:[%s701 + $0x1a1] sm:$0xff] %vm520, %v5381
      %5414 = vst.msk [vmem:[%s701 + $0x1b1] sm:$0xff] %vm520, %v5382
      %5415 = vst.msk [vmem:[%s701 + $0x1e1] sm:$0xff] %vm520, %v5383
      %5416 = vst.msk [vmem:[%s701 + $0x1f1] sm:$0xff] %vm520, %v5384
      %5417 = vst.msk [vmem:[%s701 + $0x201] sm:$0xff] %vm520, %v5385
      %5418 = vst.msk [vmem:[%s701 + $0x211] sm:$0xff] %vm520, %v5386
      %5419 = vst.msk [vmem:[%s701 + $0x221] sm:$0xff] %vm520, %v5387
      %5420 = vst.msk [vmem:[%s701 + $0x231] sm:$0xff] %vm520, %v5388
      %5421 = vst.msk [vmem:[%s701 + $0x241] sm:$0xff] %vm520, %v5389
      %5422 = vst.msk [vmem:[%s701 + $0x251] sm:$0xff] %vm520, %v5390
      %v5423 = vld [vmem:[#allocation3] sm:$0xff]
      %v5424 = vld [vmem:[#allocation3 + $0x10] sm:$0xff]
      %v5425 = vld [vmem:[#allocation3 + $0x20] sm:$0xff]
      %v5426 = vld [vmem:[#allocation3 + $0x30] sm:$0xff]
      %v5427 = vld [vmem:[#allocation3 + $0x40] sm:$0xff]
      %v5428 = vld [vmem:[#allocation3 + $0x50] sm:$0xff]
      %v5429 = vld [vmem:[#allocation3 + $0x60] sm:$0xff]
      %v5430 = vld [vmem:[#allocation3 + $0x70] sm:$0xff]
      %v5431 = vld [vmem:[#allocation3 + $0xa0] sm:$0xff]
      %v5432 = vld [vmem:[#allocation3 + $0xb0] sm:$0xff]
      %v5433 = vld [vmem:[#allocation3 + $0xc0] sm:$0xff]
      %v5434 = vld [vmem:[#allocation3 + $0xd0] sm:$0xff]
      %v5435 = vld [vmem:[#allocation3 + $0xe0] sm:$0xff]
      %v5436 = vld [vmem:[#allocation3 + $0xf0] sm:$0xff]
      %v5437 = vld [vmem:[#allocation3 + $0x100] sm:$0xff]
      %v5438 = vld [vmem:[#allocation3 + $0x110] sm:$0xff]
      %v5439 = vld [vmem:[#allocation3 + $0x140] sm:$0xff]
      %v5440 = vld [vmem:[#allocation3 + $0x150] sm:$0xff]
      %v5441 = vld [vmem:[#allocation3 + $0x160] sm:$0xff]
      %v5442 = vld [vmem:[#allocation3 + $0x170] sm:$0xff]
      %v5443 = vld [vmem:[#allocation3 + $0x180] sm:$0xff]
      %v5444 = vld [vmem:[#allocation3 + $0x190] sm:$0xff]
      %v5445 = vld [vmem:[#allocation3 + $0x1a0] sm:$0xff]
      %v5446 = vld [vmem:[#allocation3 + $0x1b0] sm:$0xff]
      %v5447 = vld [vmem:[#allocation3 + $0x1e0] sm:$0xff]
      %v5448 = vld [vmem:[#allocation3 + $0x1f0] sm:$0xff]
      %v5449 = vld [vmem:[#allocation3 + $0x200] sm:$0xff]
      %v5450 = vld [vmem:[#allocation3 + $0x210] sm:$0xff]
      %v5451 = vld [vmem:[#allocation3 + $0x220] sm:$0xff]
      %v5452 = vld [vmem:[#allocation3 + $0x230] sm:$0xff]
      %v5453 = vld [vmem:[#allocation3 + $0x240] sm:$0xff]
      %v5454 = vld [vmem:[#allocation3 + $0x250] sm:$0xff]
      %v5455 = vpack.c.bf16 %v5424, %v5423
      %v5456 = vpack.c.bf16 %v5426, %v5425
      %v5457 = vpack.c.bf16 %v5428, %v5427
      %v5458 = vpack.c.bf16 %v5430, %v5429
      %v5459 = vpack.c.bf16 %v5432, %v5431
      %v5460 = vpack.c.bf16 %v5434, %v5433
      %v5461 = vpack.c.bf16 %v5436, %v5435
      %v5462 = vpack.c.bf16 %v5438, %v5437
      %v5463 = vpack.c.bf16 %v5440, %v5439
      %v5464 = vpack.c.bf16 %v5442, %v5441
      %v5465 = vpack.c.bf16 %v5444, %v5443
      %v5466 = vpack.c.bf16 %v5446, %v5445
      %v5467 = vpack.c.bf16 %v5448, %v5447
      %v5468 = vpack.c.bf16 %v5450, %v5449
      %v5469 = vpack.c.bf16 %v5452, %v5451
      %v5470 = vpack.c.bf16 %v5454, %v5453
      %v5471 = vld [vmem:[#allocation3 + $0x1] sm:$0xff]
      %v5472 = vld [vmem:[#allocation3 + $0x11] sm:$0xff]
      %v5473 = vld [vmem:[#allocation3 + $0x21] sm:$0xff]
      %v5474 = vld [vmem:[#allocation3 + $0x31] sm:$0xff]
      %v5475 = vld [vmem:[#allocation3 + $0x41] sm:$0xff]
      %v5476 = vld [vmem:[#allocation3 + $0x51] sm:$0xff]
      %v5477 = vld [vmem:[#allocation3 + $0x61] sm:$0xff]
      %v5478 = vld [vmem:[#allocation3 + $0x71] sm:$0xff]
      %v5479 = vld [vmem:[#allocation3 + $0xa1] sm:$0xff]
      %v5480 = vld [vmem:[#allocation3 + $0xb1] sm:$0xff]
      %v5481 = vld [vmem:[#allocation3 + $0xc1] sm:$0xff]
      %v5482 = vld [vmem:[#allocation3 + $0xd1] sm:$0xff]
      %v5483 = vld [vmem:[#allocation3 + $0xe1] sm:$0xff]
      %v5484 = vld [vmem:[#allocation3 + $0xf1] sm:$0xff]
      %v5485 = vld [vmem:[#allocation3 + $0x101] sm:$0xff]
      %v5486 = vld [vmem:[#allocation3 + $0x111] sm:$0xff]
      %v5487 = vld [vmem:[#allocation3 + $0x141] sm:$0xff]
      %v5488 = vld [vmem:[#allocation3 + $0x151] sm:$0xff]
      %v5489 = vld [vmem:[#allocation3 + $0x161] sm:$0xff]
      %v5490 = vld [vmem:[#allocation3 + $0x171] sm:$0xff]
      %v5491 = vld [vmem:[#allocation3 + $0x181] sm:$0xff]
      %v5492 = vld [vmem:[#allocation3 + $0x191] sm:$0xff]
      %v5493 = vld [vmem:[#allocation3 + $0x1a1] sm:$0xff]
      %v5494 = vld [vmem:[#allocation3 + $0x1b1] sm:$0xff]
      %v5495 = vld [vmem:[#allocation3 + $0x1e1] sm:$0xff]
      %v5496 = vld [vmem:[#allocation3 + $0x1f1] sm:$0xff]
      %v5497 = vld [vmem:[#allocation3 + $0x201] sm:$0xff]
      %v5498 = vld [vmem:[#allocation3 + $0x211] sm:$0xff]
      %v5499 = vld [vmem:[#allocation3 + $0x221] sm:$0xff]
      %v5500 = vld [vmem:[#allocation3 + $0x231] sm:$0xff]
      %v5501 = vld [vmem:[#allocation3 + $0x241] sm:$0xff]
      %v5502 = vld [vmem:[#allocation3 + $0x251] sm:$0xff]
      %v5503 = vpack.c.bf16 %v5472, %v5471
      %v5504 = vpack.c.bf16 %v5474, %v5473
      %v5505 = vpack.c.bf16 %v5476, %v5475
      %v5506 = vpack.c.bf16 %v5478, %v5477
      %v5507 = vpack.c.bf16 %v5480, %v5479
      %v5508 = vpack.c.bf16 %v5482, %v5481
      %v5509 = vpack.c.bf16 %v5484, %v5483
      %v5510 = vpack.c.bf16 %v5486, %v5485
      %v5511 = vpack.c.bf16 %v5488, %v5487
      %v5512 = vpack.c.bf16 %v5490, %v5489
      %v5513 = vpack.c.bf16 %v5492, %v5491
      %v5514 = vpack.c.bf16 %v5494, %v5493
      %v5515 = vpack.c.bf16 %v5496, %v5495
      %v5516 = vpack.c.bf16 %v5498, %v5497
      %v5517 = vpack.c.bf16 %v5500, %v5499
      %v5518 = vpack.c.bf16 %v5502, %v5501
      %v5519 = vld [vmem:[#allocation3 + $0x2] sm:$0xff]
      %v5520 = vld [vmem:[#allocation3 + $0x12] sm:$0xff]
      %v5521 = vld [vmem:[#allocation3 + $0x22] sm:$0xff]
      %v5522 = vld [vmem:[#allocation3 + $0x32] sm:$0xff]
      %v5523 = vld [vmem:[#allocation3 + $0x42] sm:$0xff]
      %v5524 = vld [vmem:[#allocation3 + $0x52] sm:$0xff]
      %v5525 = vld [vmem:[#allocation3 + $0x62] sm:$0xff]
      %v5526 = vld [vmem:[#allocation3 + $0x72] sm:$0xff]
      %v5527 = vld [vmem:[#allocation3 + $0xa2] sm:$0xff]
      %v5528 = vld [vmem:[#allocation3 + $0xb2] sm:$0xff]
      %v5529 = vld [vmem:[#allocation3 + $0xc2] sm:$0xff]
      %v5530 = vld [vmem:[#allocation3 + $0xd2] sm:$0xff]
      %v5531 = vld [vmem:[#allocation3 + $0xe2] sm:$0xff]
      %v5532 = vld [vmem:[#allocation3 + $0xf2] sm:$0xff]
      %v5533 = vld [vmem:[#allocation3 + $0x102] sm:$0xff]
      %v5534 = vld [vmem:[#allocation3 + $0x112] sm:$0xff]
      %v5535 = vld [vmem:[#allocation3 + $0x142] sm:$0xff]
      %v5536 = vld [vmem:[#allocation3 + $0x152] sm:$0xff]
      %v5537 = vld [vmem:[#allocation3 + $0x162] sm:$0xff]
      %v5538 = vld [vmem:[#allocation3 + $0x172] sm:$0xff]
      %v5539 = vld [vmem:[#allocation3 + $0x182] sm:$0xff]
      %v5540 = vld [vmem:[#allocation3 + $0x192] sm:$0xff]
      %v5541 = vld [vmem:[#allocation3 + $0x1a2] sm:$0xff]
      %v5542 = vld [vmem:[#allocation3 + $0x1b2] sm:$0xff]
      %v5543 = vld [vmem:[#allocation3 + $0x1e2] sm:$0xff]
      %v5544 = vld [vmem:[#allocation3 + $0x1f2] sm:$0xff]
      %v5545 = vld [vmem:[#allocation3 + $0x202] sm:$0xff]
      %v5546 = vld [vmem:[#allocation3 + $0x212] sm:$0xff]
      %v5547 = vld [vmem:[#allocation3 + $0x222] sm:$0xff]
      %v5548 = vld [vmem:[#allocation3 + $0x232] sm:$0xff]
      %v5549 = vld [vmem:[#allocation3 + $0x242] sm:$0xff]
      %v5550 = vld [vmem:[#allocation3 + $0x252] sm:$0xff]
      %v5551 = vpack.c.bf16 %v5520, %v5519
      %v5552 = vpack.c.bf16 %v5522, %v5521
      %v5553 = vpack.c.bf16 %v5524, %v5523
      %v5554 = vpack.c.bf16 %v5526, %v5525
      %v5555 = vpack.c.bf16 %v5528, %v5527
      %v5556 = vpack.c.bf16 %v5530, %v5529
      %v5557 = vpack.c.bf16 %v5532, %v5531
      %v5558 = vpack.c.bf16 %v5534, %v5533
      %v5559 = vpack.c.bf16 %v5536, %v5535
      %v5560 = vpack.c.bf16 %v5538, %v5537
      %v5561 = vpack.c.bf16 %v5540, %v5539
      %v5562 = vpack.c.bf16 %v5542, %v5541
      %v5563 = vpack.c.bf16 %v5544, %v5543
      %v5564 = vpack.c.bf16 %v5546, %v5545
      %v5565 = vpack.c.bf16 %v5548, %v5547
      %v5566 = vpack.c.bf16 %v5550, %v5549
      %s5567 = scalar_lea.vmem [#allocation3], 16
      %v5568 = vld [vmem:[%s5567] sm:$0xff]
      %v5569 = vld [vmem:[%s5567 + $0x10] sm:$0xff]
      %v5570 = vld [vmem:[%s5567 + $0x20] sm:$0xff]
      %v5571 = vld [vmem:[%s5567 + $0x30] sm:$0xff]
      %v5572 = vld [vmem:[%s5567 + $0x40] sm:$0xff]
      %v5573 = vld [vmem:[%s5567 + $0x50] sm:$0xff]
      %v5574 = vld [vmem:[%s5567 + $0x60] sm:$0xff]
      %v5575 = vld [vmem:[%s5567 + $0x70] sm:$0xff]
      %v5576 = vld [vmem:[%s5567 + $0xa0] sm:$0xff]
      %v5577 = vld [vmem:[%s5567 + $0xb0] sm:$0xff]
      %v5578 = vld [vmem:[%s5567 + $0xc0] sm:$0xff]
      %v5579 = vld [vmem:[%s5567 + $0xd0] sm:$0xff]
      %v5580 = vld [vmem:[%s5567 + $0xe0] sm:$0xff]
      %v5581 = vld [vmem:[%s5567 + $0xf0] sm:$0xff]
      %v5582 = vld [vmem:[%s5567 + $0x100] sm:$0xff]
      %v5583 = vld [vmem:[%s5567 + $0x110] sm:$0xff]
      %v5584 = vld [vmem:[%s5567 + $0x140] sm:$0xff]
      %v5585 = vld [vmem:[%s5567 + $0x150] sm:$0xff]
      %v5586 = vld [vmem:[%s5567 + $0x160] sm:$0xff]
      %v5587 = vld [vmem:[%s5567 + $0x170] sm:$0xff]
      %v5588 = vld [vmem:[%s5567 + $0x180] sm:$0xff]
      %v5589 = vld [vmem:[%s5567 + $0x190] sm:$0xff]
      %v5590 = vld [vmem:[%s5567 + $0x1a0] sm:$0xff]
      %v5591 = vld [vmem:[%s5567 + $0x1b0] sm:$0xff]
      %v5592 = vld [vmem:[%s5567 + $0x1e0] sm:$0xff]
      %v5593 = vld [vmem:[%s5567 + $0x1f0] sm:$0xff]
      %v5594 = vld [vmem:[%s5567 + $0x200] sm:$0xff]
      %v5595 = vld [vmem:[%s5567 + $0x210] sm:$0xff]
      %v5596 = vld [vmem:[%s5567 + $0x220] sm:$0xff]
      %v5597 = vld [vmem:[%s5567 + $0x230] sm:$0xff]
      %v5598 = vld [vmem:[%s5567 + $0x240] sm:$0xff]
      %v5599 = vld [vmem:[%s5567 + $0x250] sm:$0xff]
      %v5600 = vpack.c.bf16 %v5569, %v5568
      %v5601 = vpack.c.bf16 %v5571, %v5570
      %v5602 = vpack.c.bf16 %v5573, %v5572
      %v5603 = vpack.c.bf16 %v5575, %v5574
      %v5604 = vpack.c.bf16 %v5577, %v5576
      %v5605 = vpack.c.bf16 %v5579, %v5578
      %v5606 = vpack.c.bf16 %v5581, %v5580
      %v5607 = vpack.c.bf16 %v5583, %v5582
      %v5608 = vpack.c.bf16 %v5585, %v5584
      %v5609 = vpack.c.bf16 %v5587, %v5586
      %v5610 = vpack.c.bf16 %v5589, %v5588
      %v5611 = vpack.c.bf16 %v5591, %v5590
      %v5612 = vpack.c.bf16 %v5593, %v5592
      %v5613 = vpack.c.bf16 %v5595, %v5594
      %v5614 = vpack.c.bf16 %v5597, %v5596
      %v5615 = vpack.c.bf16 %v5599, %v5598
      %v5616 = vld [vmem:[%s5567 + $0x1] sm:$0xff]
      %v5617 = vld [vmem:[%s5567 + $0x11] sm:$0xff]
      %v5618 = vld [vmem:[%s5567 + $0x21] sm:$0xff]
      %v5619 = vld [vmem:[%s5567 + $0x31] sm:$0xff]
      %v5620 = vld [vmem:[%s5567 + $0x41] sm:$0xff]
      %v5621 = vld [vmem:[%s5567 + $0x51] sm:$0xff]
      %v5622 = vld [vmem:[%s5567 + $0x61] sm:$0xff]
      %v5623 = vld [vmem:[%s5567 + $0x71] sm:$0xff]
      %v5624 = vld [vmem:[%s5567 + $0xa1] sm:$0xff]
      %v5625 = vld [vmem:[%s5567 + $0xb1] sm:$0xff]
      %v5626 = vld [vmem:[%s5567 + $0xc1] sm:$0xff]
      %v5627 = vld [vmem:[%s5567 + $0xd1] sm:$0xff]
      %v5628 = vld [vmem:[%s5567 + $0xe1] sm:$0xff]
      %v5629 = vld [vmem:[%s5567 + $0xf1] sm:$0xff]
      %v5630 = vld [vmem:[%s5567 + $0x101] sm:$0xff]
      %v5631 = vld [vmem:[%s5567 + $0x111] sm:$0xff]
      %v5632 = vld [vmem:[%s5567 + $0x141] sm:$0xff]
      %v5633 = vld [vmem:[%s5567 + $0x151] sm:$0xff]
      %v5634 = vld [vmem:[%s5567 + $0x161] sm:$0xff]
      %v5635 = vld [vmem:[%s5567 + $0x171] sm:$0xff]
      %v5636 = vld [vmem:[%s5567 + $0x181] sm:$0xff]
      %v5637 = vld [vmem:[%s5567 + $0x191] sm:$0xff]
      %v5638 = vld [vmem:[%s5567 + $0x1a1] sm:$0xff]
      %v5639 = vld [vmem:[%s5567 + $0x1b1] sm:$0xff]
      %v5640 = vld [vmem:[%s5567 + $0x1e1] sm:$0xff]
      %v5641 = vld [vmem:[%s5567 + $0x1f1] sm:$0xff]
      %v5642 = vld [vmem:[%s5567 + $0x201] sm:$0xff]
      %v5643 = vld [vmem:[%s5567 + $0x211] sm:$0xff]
      %v5644 = vld [vmem:[%s5567 + $0x221] sm:$0xff]
      %v5645 = vld [vmem:[%s5567 + $0x231] sm:$0xff]
      %v5646 = vld [vmem:[%s5567 + $0x241] sm:$0xff]
      %v5647 = vld [vmem:[%s5567 + $0x251] sm:$0xff]
      %v5648 = vpack.c.bf16 %v5617, %v5616
      %v5649 = vpack.c.bf16 %v5619, %v5618
      %v5650 = vpack.c.bf16 %v5621, %v5620
      %v5651 = vpack.c.bf16 %v5623, %v5622
      %v5652 = vpack.c.bf16 %v5625, %v5624
      %v5653 = vpack.c.bf16 %v5627, %v5626
      %v5654 = vpack.c.bf16 %v5629, %v5628
      %v5655 = vpack.c.bf16 %v5631, %v5630
      %v5656 = vpack.c.bf16 %v5633, %v5632
      %v5657 = vpack.c.bf16 %v5635, %v5634
      %v5658 = vpack.c.bf16 %v5637, %v5636
      %v5659 = vpack.c.bf16 %v5639, %v5638
      %v5660 = vpack.c.bf16 %v5641, %v5640
      %v5661 = vpack.c.bf16 %v5643, %v5642
      %v5662 = vpack.c.bf16 %v5645, %v5644
      %v5663 = vpack.c.bf16 %v5647, %v5646
      %v5664 = vld [vmem:[%s5567 + $0x2] sm:$0xff]
      %v5665 = vld [vmem:[%s5567 + $0x12] sm:$0xff]
      %v5666 = vld [vmem:[%s5567 + $0x22] sm:$0xff]
      %v5667 = vld [vmem:[%s5567 + $0x32] sm:$0xff]
      %v5668 = vld [vmem:[%s5567 + $0x42] sm:$0xff]
      %v5669 = vld [vmem:[%s5567 + $0x52] sm:$0xff]
      %v5670 = vld [vmem:[%s5567 + $0x62] sm:$0xff]
      %v5671 = vld [vmem:[%s5567 + $0x72] sm:$0xff]
      %v5672 = vld [vmem:[%s5567 + $0xa2] sm:$0xff]
      %v5673 = vld [vmem:[%s5567 + $0xb2] sm:$0xff]
      %v5674 = vld [vmem:[%s5567 + $0xc2] sm:$0xff]
      %v5675 = vld [vmem:[%s5567 + $0xd2] sm:$0xff]
      %v5676 = vld [vmem:[%s5567 + $0xe2] sm:$0xff]
      %v5677 = vld [vmem:[%s5567 + $0xf2] sm:$0xff]
      %v5678 = vld [vmem:[%s5567 + $0x102] sm:$0xff]
      %v5679 = vld [vmem:[%s5567 + $0x112] sm:$0xff]
      %v5680 = vld [vmem:[%s5567 + $0x142] sm:$0xff]
      %v5681 = vld [vmem:[%s5567 + $0x152] sm:$0xff]
      %v5682 = vld [vmem:[%s5567 + $0x162] sm:$0xff]
      %v5683 = vld [vmem:[%s5567 + $0x172] sm:$0xff]
      %v5684 = vld [vmem:[%s5567 + $0x182] sm:$0xff]
      %v5685 = vld [vmem:[%s5567 + $0x192] sm:$0xff]
      %v5686 = vld [vmem:[%s5567 + $0x1a2] sm:$0xff]
      %v5687 = vld [vmem:[%s5567 + $0x1b2] sm:$0xff]
      %v5688 = vld [vmem:[%s5567 + $0x1e2] sm:$0xff]
      %v5689 = vld [vmem:[%s5567 + $0x1f2] sm:$0xff]
      %v5690 = vld [vmem:[%s5567 + $0x202] sm:$0xff]
      %v5691 = vld [vmem:[%s5567 + $0x212] sm:$0xff]
      %v5692 = vld [vmem:[%s5567 + $0x222] sm:$0xff]
      %v5693 = vld [vmem:[%s5567 + $0x232] sm:$0xff]
      %v5694 = vld [vmem:[%s5567 + $0x242] sm:$0xff]
      %v5695 = vld [vmem:[%s5567 + $0x252] sm:$0xff]
      %v5696 = vpack.c.bf16 %v5665, %v5664
      %v5697 = vpack.c.bf16 %v5667, %v5666
      %v5698 = vpack.c.bf16 %v5669, %v5668
      %v5699 = vpack.c.bf16 %v5671, %v5670
      %v5700 = vpack.c.bf16 %v5673, %v5672
      %v5701 = vpack.c.bf16 %v5675, %v5674
      %v5702 = vpack.c.bf16 %v5677, %v5676
      %v5703 = vpack.c.bf16 %v5679, %v5678
      %v5704 = vpack.c.bf16 %v5681, %v5680
      %v5705 = vpack.c.bf16 %v5683, %v5682
      %v5706 = vpack.c.bf16 %v5685, %v5684
      %v5707 = vpack.c.bf16 %v5687, %v5686
      %v5708 = vpack.c.bf16 %v5689, %v5688
      %v5709 = vpack.c.bf16 %v5691, %v5690
      %v5710 = vpack.c.bf16 %v5693, %v5692
      %v5711 = vpack.c.bf16 %v5695, %v5694
      %s5712 = scalar_lea.vmem [#allocation3], 32
      %v5713 = vld [vmem:[%s5712] sm:$0xff]
      %v5714 = vld [vmem:[%s5712 + $0x10] sm:$0xff]
      %v5715 = vld [vmem:[%s5712 + $0x20] sm:$0xff]
      %v5716 = vld [vmem:[%s5712 + $0x30] sm:$0xff]
      %v5717 = vld [vmem:[%s5712 + $0x40] sm:$0xff]
      %v5718 = vld [vmem:[%s5712 + $0x50] sm:$0xff]
      %v5719 = vld [vmem:[%s5712 + $0x60] sm:$0xff]
      %v5720 = vld [vmem:[%s5712 + $0x70] sm:$0xff]
      %v5721 = vld [vmem:[%s5712 + $0xa0] sm:$0xff]
      %v5722 = vld [vmem:[%s5712 + $0xb0] sm:$0xff]
      %v5723 = vld [vmem:[%s5712 + $0xc0] sm:$0xff]
      %v5724 = vld [vmem:[%s5712 + $0xd0] sm:$0xff]
      %v5725 = vld [vmem:[%s5712 + $0xe0] sm:$0xff]
      %v5726 = vld [vmem:[%s5712 + $0xf0] sm:$0xff]
      %v5727 = vld [vmem:[%s5712 + $0x100] sm:$0xff]
      %v5728 = vld [vmem:[%s5712 + $0x110] sm:$0xff]
      %v5729 = vld [vmem:[%s5712 + $0x140] sm:$0xff]
      %v5730 = vld [vmem:[%s5712 + $0x150] sm:$0xff]
      %v5731 = vld [vmem:[%s5712 + $0x160] sm:$0xff]
      %v5732 = vld [vmem:[%s5712 + $0x170] sm:$0xff]
      %v5733 = vld [vmem:[%s5712 + $0x180] sm:$0xff]
      %v5734 = vld [vmem:[%s5712 + $0x190] sm:$0xff]
      %v5735 = vld [vmem:[%s5712 + $0x1a0] sm:$0xff]
      %v5736 = vld [vmem:[%s5712 + $0x1b0] sm:$0xff]
      %v5737 = vld [vmem:[%s5712 + $0x1e0] sm:$0xff]
      %v5738 = vld [vmem:[%s5712 + $0x1f0] sm:$0xff]
      %v5739 = vld [vmem:[%s5712 + $0x200] sm:$0xff]
      %v5740 = vld [vmem:[%s5712 + $0x210] sm:$0xff]
      %v5741 = vld [vmem:[%s5712 + $0x220] sm:$0xff]
      %v5742 = vld [vmem:[%s5712 + $0x230] sm:$0xff]
      %v5743 = vld [vmem:[%s5712 + $0x240] sm:$0xff]
      %v5744 = vld [vmem:[%s5712 + $0x250] sm:$0xff]
      %v5745 = vpack.c.bf16 %v5714, %v5713
      %v5746 = vpack.c.bf16 %v5716, %v5715
      %v5747 = vpack.c.bf16 %v5718, %v5717
      %v5748 = vpack.c.bf16 %v5720, %v5719
      %v5749 = vpack.c.bf16 %v5722, %v5721
      %v5750 = vpack.c.bf16 %v5724, %v5723
      %v5751 = vpack.c.bf16 %v5726, %v5725
      %v5752 = vpack.c.bf16 %v5728, %v5727
      %v5753 = vpack.c.bf16 %v5730, %v5729
      %v5754 = vpack.c.bf16 %v5732, %v5731
      %v5755 = vpack.c.bf16 %v5734, %v5733
      %v5756 = vpack.c.bf16 %v5736, %v5735
      %v5757 = vpack.c.bf16 %v5738, %v5737
      %v5758 = vpack.c.bf16 %v5740, %v5739
      %v5759 = vpack.c.bf16 %v5742, %v5741
      %v5760 = vpack.c.bf16 %v5744, %v5743
      %v5761 = vld [vmem:[%s5712 + $0x1] sm:$0xff]
      %v5762 = vld [vmem:[%s5712 + $0x11] sm:$0xff]
      %v5763 = vld [vmem:[%s5712 + $0x21] sm:$0xff]
      %v5764 = vld [vmem:[%s5712 + $0x31] sm:$0xff]
      %v5765 = vld [vmem:[%s5712 + $0x41] sm:$0xff]
      %v5766 = vld [vmem:[%s5712 + $0x51] sm:$0xff]
      %v5767 = vld [vmem:[%s5712 + $0x61] sm:$0xff]
      %v5768 = vld [vmem:[%s5712 + $0x71] sm:$0xff]
      %v5769 = vld [vmem:[%s5712 + $0xa1] sm:$0xff]
      %v5770 = vld [vmem:[%s5712 + $0xb1] sm:$0xff]
      %v5771 = vld [vmem:[%s5712 + $0xc1] sm:$0xff]
      %v5772 = vld [vmem:[%s5712 + $0xd1] sm:$0xff]
      %v5773 = vld [vmem:[%s5712 + $0xe1] sm:$0xff]
      %v5774 = vld [vmem:[%s5712 + $0xf1] sm:$0xff]
      %v5775 = vld [vmem:[%s5712 + $0x101] sm:$0xff]
      %v5776 = vld [vmem:[%s5712 + $0x111] sm:$0xff]
      %v5777 = vld [vmem:[%s5712 + $0x141] sm:$0xff]
      %v5778 = vld [vmem:[%s5712 + $0x151] sm:$0xff]
      %v5779 = vld [vmem:[%s5712 + $0x161] sm:$0xff]
      %v5780 = vld [vmem:[%s5712 + $0x171] sm:$0xff]
      %v5781 = vld [vmem:[%s5712 + $0x181] sm:$0xff]
      %v5782 = vld [vmem:[%s5712 + $0x191] sm:$0xff]
      %v5783 = vld [vmem:[%s5712 + $0x1a1] sm:$0xff]
      %v5784 = vld [vmem:[%s5712 + $0x1b1] sm:$0xff]
      %v5785 = vld [vmem:[%s5712 + $0x1e1] sm:$0xff]
      %v5786 = vld [vmem:[%s5712 + $0x1f1] sm:$0xff]
      %v5787 = vld [vmem:[%s5712 + $0x201] sm:$0xff]
      %v5788 = vld [vmem:[%s5712 + $0x211] sm:$0xff]
      %v5789 = vld [vmem:[%s5712 + $0x221] sm:$0xff]
      %v5790 = vld [vmem:[%s5712 + $0x231] sm:$0xff]
      %v5791 = vld [vmem:[%s5712 + $0x241] sm:$0xff]
      %v5792 = vld [vmem:[%s5712 + $0x251] sm:$0xff]
      %v5793 = vpack.c.bf16 %v5762, %v5761
      %v5794 = vpack.c.bf16 %v5764, %v5763
      %v5795 = vpack.c.bf16 %v5766, %v5765
      %v5796 = vpack.c.bf16 %v5768, %v5767
      %v5797 = vpack.c.bf16 %v5770, %v5769
      %v5798 = vpack.c.bf16 %v5772, %v5771
      %v5799 = vpack.c.bf16 %v5774, %v5773
      %v5800 = vpack.c.bf16 %v5776, %v5775
      %v5801 = vpack.c.bf16 %v5778, %v5777
      %v5802 = vpack.c.bf16 %v5780, %v5779
      %v5803 = vpack.c.bf16 %v5782, %v5781
      %v5804 = vpack.c.bf16 %v5784, %v5783
      %v5805 = vpack.c.bf16 %v5786, %v5785
      %v5806 = vpack.c.bf16 %v5788, %v5787
      %v5807 = vpack.c.bf16 %v5790, %v5789
      %v5808 = vpack.c.bf16 %v5792, %v5791
      %v5809 = vld [vmem:[%s5712 + $0x2] sm:$0xff]
      %v5810 = vld [vmem:[%s5712 + $0x12] sm:$0xff]
      %v5811 = vld [vmem:[%s5712 + $0x22] sm:$0xff]
      %v5812 = vld [vmem:[%s5712 + $0x32] sm:$0xff]
      %v5813 = vld [vmem:[%s5712 + $0x42] sm:$0xff]
      %v5814 = vld [vmem:[%s5712 + $0x52] sm:$0xff]
      %v5815 = vld [vmem:[%s5712 + $0x62] sm:$0xff]
      %v5816 = vld [vmem:[%s5712 + $0x72] sm:$0xff]
      %v5817 = vld [vmem:[%s5712 + $0xa2] sm:$0xff]
      %v5818 = vld [vmem:[%s5712 + $0xb2] sm:$0xff]
      %v5819 = vld [vmem:[%s5712 + $0xc2] sm:$0xff]
      %v5820 = vld [vmem:[%s5712 + $0xd2] sm:$0xff]
      %v5821 = vld [vmem:[%s5712 + $0xe2] sm:$0xff]
      %v5822 = vld [vmem:[%s5712 + $0xf2] sm:$0xff]
      %v5823 = vld [vmem:[%s5712 + $0x102] sm:$0xff]
      %v5824 = vld [vmem:[%s5712 + $0x112] sm:$0xff]
      %v5825 = vld [vmem:[%s5712 + $0x142] sm:$0xff]
      %v5826 = vld [vmem:[%s5712 + $0x152] sm:$0xff]
      %v5827 = vld [vmem:[%s5712 + $0x162] sm:$0xff]
      %v5828 = vld [vmem:[%s5712 + $0x172] sm:$0xff]
      %v5829 = vld [vmem:[%s5712 + $0x182] sm:$0xff]
      %v5830 = vld [vmem:[%s5712 + $0x192] sm:$0xff]
      %v5831 = vld [vmem:[%s5712 + $0x1a2] sm:$0xff]
      %v5832 = vld [vmem:[%s5712 + $0x1b2] sm:$0xff]
      %v5833 = vld [vmem:[%s5712 + $0x1e2] sm:$0xff]
      %v5834 = vld [vmem:[%s5712 + $0x1f2] sm:$0xff]
      %v5835 = vld [vmem:[%s5712 + $0x202] sm:$0xff]
      %v5836 = vld [vmem:[%s5712 + $0x212] sm:$0xff]
      %v5837 = vld [vmem:[%s5712 + $0x222] sm:$0xff]
      %v5838 = vld [vmem:[%s5712 + $0x232] sm:$0xff]
      %v5839 = vld [vmem:[%s5712 + $0x242] sm:$0xff]
      %v5840 = vld [vmem:[%s5712 + $0x252] sm:$0xff]
      %v5841 = vpack.c.bf16 %v5810, %v5809
      %v5842 = vpack.c.bf16 %v5812, %v5811
      %v5843 = vpack.c.bf16 %v5814, %v5813
      %v5844 = vpack.c.bf16 %v5816, %v5815
      %v5845 = vpack.c.bf16 %v5818, %v5817
      %v5846 = vpack.c.bf16 %v5820, %v5819
      %v5847 = vpack.c.bf16 %v5822, %v5821
      %v5848 = vpack.c.bf16 %v5824, %v5823
      %v5849 = vpack.c.bf16 %v5826, %v5825
      %v5850 = vpack.c.bf16 %v5828, %v5827
      %v5851 = vpack.c.bf16 %v5830, %v5829
      %v5852 = vpack.c.bf16 %v5832, %v5831
      %v5853 = vpack.c.bf16 %v5834, %v5833
      %v5854 = vpack.c.bf16 %v5836, %v5835
      %v5855 = vpack.c.bf16 %v5838, %v5837
      %v5856 = vpack.c.bf16 %v5840, %v5839
      %5873 = vrot.lane.b32.xlu0 %v5503, 32
      %v5874 = vpop.permute.xlu0 %5873
      %5875 = vrot.lane.b32.xlu0 %v5504, 32
      %v5876 = vpop.permute.xlu0 %5875
      %5877 = vrot.lane.b32.xlu0 %v5505, 32
      %v5878 = vpop.permute.xlu0 %5877
      %5879 = vrot.lane.b32.xlu0 %v5506, 32
      %v5880 = vpop.permute.xlu0 %5879
      %5881 = vrot.lane.b32.xlu0 %v5507, 32
      %v5882 = vpop.permute.xlu0 %5881
      %5883 = vrot.lane.b32.xlu0 %v5508, 32
      %v5884 = vpop.permute.xlu0 %5883
      %5885 = vrot.lane.b32.xlu0 %v5509, 32
      %v5886 = vpop.permute.xlu0 %5885
      %5887 = vrot.lane.b32.xlu0 %v5510, 32
      %v5888 = vpop.permute.xlu0 %5887
      %5889 = vrot.lane.b32.xlu0 %v5511, 32
      %v5890 = vpop.permute.xlu0 %5889
      %5891 = vrot.lane.b32.xlu0 %v5512, 32
      %v5892 = vpop.permute.xlu0 %5891
      %5893 = vrot.lane.b32.xlu0 %v5513, 32
      %v5894 = vpop.permute.xlu0 %5893
      %5895 = vrot.lane.b32.xlu0 %v5514, 32
      %v5896 = vpop.permute.xlu0 %5895
      %5897 = vrot.lane.b32.xlu0 %v5515, 32
      %v5898 = vpop.permute.xlu0 %5897
      %5899 = vrot.lane.b32.xlu0 %v5516, 32
      %v5900 = vpop.permute.xlu0 %5899
      %5901 = vrot.lane.b32.xlu0 %v5517, 32
      %v5902 = vpop.permute.xlu0 %5901
      %5903 = vrot.lane.b32.xlu0 %v5518, 32
      %v5904 = vpop.permute.xlu0 %5903
      %5921 = vrot.lane.b32.xlu0 %v5551, 64
      %v5922 = vpop.permute.xlu0 %5921
      %5923 = vrot.lane.b32.xlu0 %v5552, 64
      %v5924 = vpop.permute.xlu0 %5923
      %5925 = vrot.lane.b32.xlu0 %v5553, 64
      %v5926 = vpop.permute.xlu0 %5925
      %5927 = vrot.lane.b32.xlu0 %v5554, 64
      %v5928 = vpop.permute.xlu0 %5927
      %5929 = vrot.lane.b32.xlu0 %v5555, 64
      %v5930 = vpop.permute.xlu0 %5929
      %5931 = vrot.lane.b32.xlu0 %v5556, 64
      %v5932 = vpop.permute.xlu0 %5931
      %5933 = vrot.lane.b32.xlu0 %v5557, 64
      %v5934 = vpop.permute.xlu0 %5933
      %5935 = vrot.lane.b32.xlu0 %v5558, 64
      %v5936 = vpop.permute.xlu0 %5935
      %5937 = vrot.lane.b32.xlu0 %v5559, 64
      %v5938 = vpop.permute.xlu0 %5937
      %5939 = vrot.lane.b32.xlu0 %v5560, 64
      %v5940 = vpop.permute.xlu0 %5939
      %5941 = vrot.lane.b32.xlu0 %v5561, 64
      %v5942 = vpop.permute.xlu0 %5941
      %5943 = vrot.lane.b32.xlu0 %v5562, 64
      %v5944 = vpop.permute.xlu0 %5943
      %5945 = vrot.lane.b32.xlu0 %v5563, 64
      %v5946 = vpop.permute.xlu0 %5945
      %5947 = vrot.lane.b32.xlu0 %v5564, 64
      %v5948 = vpop.permute.xlu0 %5947
      %5949 = vrot.lane.b32.xlu0 %v5565, 64
      %v5950 = vpop.permute.xlu0 %5949
      %5951 = vrot.lane.b32.xlu0 %v5566, 64
      %v5952 = vpop.permute.xlu0 %5951
      %5969 = vrot.lane.b32.xlu0 %v5600, 96
      %v5970 = vpop.permute.xlu0 %5969
      %5971 = vrot.lane.b32.xlu0 %v5601, 96
      %v5972 = vpop.permute.xlu0 %5971
      %5973 = vrot.lane.b32.xlu0 %v5602, 96
      %v5974 = vpop.permute.xlu0 %5973
      %5975 = vrot.lane.b32.xlu0 %v5603, 96
      %v5976 = vpop.permute.xlu0 %5975
      %5977 = vrot.lane.b32.xlu0 %v5604, 96
      %v5978 = vpop.permute.xlu0 %5977
      %5979 = vrot.lane.b32.xlu0 %v5605, 96
      %v5980 = vpop.permute.xlu0 %5979
      %5981 = vrot.lane.b32.xlu0 %v5606, 96
      %v5982 = vpop.permute.xlu0 %5981
      %5983 = vrot.lane.b32.xlu0 %v5607, 96
      %v5984 = vpop.permute.xlu0 %5983
      %5985 = vrot.lane.b32.xlu0 %v5608, 96
      %v5986 = vpop.permute.xlu0 %5985
      %5987 = vrot.lane.b32.xlu0 %v5609, 96
      %v5988 = vpop.permute.xlu0 %5987
      %5989 = vrot.lane.b32.xlu0 %v5610, 96
      %v5990 = vpop.permute.xlu0 %5989
      %5991 = vrot.lane.b32.xlu0 %v5611, 96
      %v5992 = vpop.permute.xlu0 %5991
      %5993 = vrot.lane.b32.xlu0 %v5612, 96
      %v5994 = vpop.permute.xlu0 %5993
      %5995 = vrot.lane.b32.xlu0 %v5613, 96
      %v5996 = vpop.permute.xlu0 %5995
      %5997 = vrot.lane.b32.xlu0 %v5614, 96
      %v5998 = vpop.permute.xlu0 %5997
      %5999 = vrot.lane.b32.xlu0 %v5615, 96
      %v6000 = vpop.permute.xlu0 %5999
      %6017 = vrot.lane.b32.xlu0 %v5696, 32
      %v6018 = vpop.permute.xlu0 %6017
      %6019 = vrot.lane.b32.xlu0 %v5697, 32
      %v6020 = vpop.permute.xlu0 %6019
      %6021 = vrot.lane.b32.xlu0 %v5698, 32
      %v6022 = vpop.permute.xlu0 %6021
      %6023 = vrot.lane.b32.xlu0 %v5699, 32
      %v6024 = vpop.permute.xlu0 %6023
      %6025 = vrot.lane.b32.xlu0 %v5700, 32
      %v6026 = vpop.permute.xlu0 %6025
      %6027 = vrot.lane.b32.xlu0 %v5701, 32
      %v6028 = vpop.permute.xlu0 %6027
      %6029 = vrot.lane.b32.xlu0 %v5702, 32
      %v6030 = vpop.permute.xlu0 %6029
      %6031 = vrot.lane.b32.xlu0 %v5703, 32
      %v6032 = vpop.permute.xlu0 %6031
      %6033 = vrot.lane.b32.xlu0 %v5704, 32
      %v6034 = vpop.permute.xlu0 %6033
      %6035 = vrot.lane.b32.xlu0 %v5705, 32
      %v6036 = vpop.permute.xlu0 %6035
      %6037 = vrot.lane.b32.xlu0 %v5706, 32
      %v6038 = vpop.permute.xlu0 %6037
      %6039 = vrot.lane.b32.xlu0 %v5707, 32
      %v6040 = vpop.permute.xlu0 %6039
      %6041 = vrot.lane.b32.xlu0 %v5708, 32
      %v6042 = vpop.permute.xlu0 %6041
      %6043 = vrot.lane.b32.xlu0 %v5709, 32
      %v6044 = vpop.permute.xlu0 %6043
      %6045 = vrot.lane.b32.xlu0 %v5710, 32
      %v6046 = vpop.permute.xlu0 %6045
      %6047 = vrot.lane.b32.xlu0 %v5711, 32
      %v6048 = vpop.permute.xlu0 %6047
      %6065 = vrot.lane.b32.xlu0 %v5745, 64
      %v6066 = vpop.permute.xlu0 %6065
      %6067 = vrot.lane.b32.xlu0 %v5746, 64
      %v6068 = vpop.permute.xlu0 %6067
      %6069 = vrot.lane.b32.xlu0 %v5747, 64
      %v6070 = vpop.permute.xlu0 %6069
      %6071 = vrot.lane.b32.xlu0 %v5748, 64
      %v6072 = vpop.permute.xlu0 %6071
      %6073 = vrot.lane.b32.xlu0 %v5749, 64
      %v6074 = vpop.permute.xlu0 %6073
      %6075 = vrot.lane.b32.xlu0 %v5750, 64
      %v6076 = vpop.permute.xlu0 %6075
      %6077 = vrot.lane.b32.xlu0 %v5751, 64
      %v6078 = vpop.permute.xlu0 %6077
      %6079 = vrot.lane.b32.xlu0 %v5752, 64
      %v6080 = vpop.permute.xlu0 %6079
      %6081 = vrot.lane.b32.xlu0 %v5753, 64
      %v6082 = vpop.permute.xlu0 %6081
      %6083 = vrot.lane.b32.xlu0 %v5754, 64
      %v6084 = vpop.permute.xlu0 %6083
      %6085 = vrot.lane.b32.xlu0 %v5755, 64
      %v6086 = vpop.permute.xlu0 %6085
      %6087 = vrot.lane.b32.xlu0 %v5756, 64
      %v6088 = vpop.permute.xlu0 %6087
      %6089 = vrot.lane.b32.xlu0 %v5757, 64
      %v6090 = vpop.permute.xlu0 %6089
      %6091 = vrot.lane.b32.xlu0 %v5758, 64
      %v6092 = vpop.permute.xlu0 %6091
      %6093 = vrot.lane.b32.xlu0 %v5759, 64
      %v6094 = vpop.permute.xlu0 %6093
      %6095 = vrot.lane.b32.xlu0 %v5760, 64
      %v6096 = vpop.permute.xlu0 %6095
      %6113 = vrot.lane.b32.xlu0 %v5793, 96
      %v6114 = vpop.permute.xlu0 %6113
      %6115 = vrot.lane.b32.xlu0 %v5794, 96
      %v6116 = vpop.permute.xlu0 %6115
      %6117 = vrot.lane.b32.xlu0 %v5795, 96
      %v6118 = vpop.permute.xlu0 %6117
      %6119 = vrot.lane.b32.xlu0 %v5796, 96
      %v6120 = vpop.permute.xlu0 %6119
      %6121 = vrot.lane.b32.xlu0 %v5797, 96
      %v6122 = vpop.permute.xlu0 %6121
      %6123 = vrot.lane.b32.xlu0 %v5798, 96
      %v6124 = vpop.permute.xlu0 %6123
      %6125 = vrot.lane.b32.xlu0 %v5799, 96
      %v6126 = vpop.permute.xlu0 %6125
      %6127 = vrot.lane.b32.xlu0 %v5800, 96
      %v6128 = vpop.permute.xlu0 %6127
      %6129 = vrot.lane.b32.xlu0 %v5801, 96
      %v6130 = vpop.permute.xlu0 %6129
      %6131 = vrot.lane.b32.xlu0 %v5802, 96
      %v6132 = vpop.permute.xlu0 %6131
      %6133 = vrot.lane.b32.xlu0 %v5803, 96
      %v6134 = vpop.permute.xlu0 %6133
      %6135 = vrot.lane.b32.xlu0 %v5804, 96
      %v6136 = vpop.permute.xlu0 %6135
      %6137 = vrot.lane.b32.xlu0 %v5805, 96
      %v6138 = vpop.permute.xlu0 %6137
      %6139 = vrot.lane.b32.xlu0 %v5806, 96
      %v6140 = vpop.permute.xlu0 %6139
      %6141 = vrot.lane.b32.xlu0 %v5807, 96
      %v6142 = vpop.permute.xlu0 %6141
      %6143 = vrot.lane.b32.xlu0 %v5808, 96
      %v6144 = vpop.permute.xlu0 %6143
      %v6147 = vsel %vm520, %v5455, %v5874
      %v6150 = vsel %vm520, %v5456, %v5876
      %v6153 = vsel %vm520, %v5457, %v5878
      %v6156 = vsel %vm520, %v5458, %v5880
      %v6159 = vsel %vm520, %v5459, %v5882
      %v6162 = vsel %vm520, %v5460, %v5884
      %v6165 = vsel %vm520, %v5461, %v5886
      %v6168 = vsel %vm520, %v5462, %v5888
      %v6171 = vsel %vm520, %v5463, %v5890
      %v6174 = vsel %vm520, %v5464, %v5892
      %v6177 = vsel %vm520, %v5465, %v5894
      %v6180 = vsel %vm520, %v5466, %v5896
      %v6183 = vsel %vm520, %v5467, %v5898
      %v6186 = vsel %vm520, %v5468, %v5900
      %v6189 = vsel %vm520, %v5469, %v5902
      %v6192 = vsel %vm520, %v5470, %v5904
      %v6194 = vsel %vm1537, %v6147, %v5922
      %v6196 = vsel %vm1537, %v6150, %v5924
      %v6198 = vsel %vm1537, %v6153, %v5926
      %v6200 = vsel %vm1537, %v6156, %v5928
      %v6202 = vsel %vm1537, %v6159, %v5930
      %v6204 = vsel %vm1537, %v6162, %v5932
      %v6206 = vsel %vm1537, %v6165, %v5934
      %v6208 = vsel %vm1537, %v6168, %v5936
      %v6210 = vsel %vm1537, %v6171, %v5938
      %v6212 = vsel %vm1537, %v6174, %v5940
      %v6214 = vsel %vm1537, %v6177, %v5942
      %v6216 = vsel %vm1537, %v6180, %v5944
      %v6218 = vsel %vm1537, %v6183, %v5946
      %v6220 = vsel %vm1537, %v6186, %v5948
      %v6222 = vsel %vm1537, %v6189, %v5950
      %v6224 = vsel %vm1537, %v6192, %v5952
      %v6226 = vsel %vm1570, %v6194, %v5970
      %v6229 = vsel %vm1570, %v6196, %v5972
      %v6232 = vsel %vm1570, %v6198, %v5974
      %v6235 = vsel %vm1570, %v6200, %v5976
      %v6238 = vsel %vm1570, %v6202, %v5978
      %v6241 = vsel %vm1570, %v6204, %v5980
      %v6244 = vsel %vm1570, %v6206, %v5982
      %v6247 = vsel %vm1570, %v6208, %v5984
      %v6250 = vsel %vm1570, %v6210, %v5986
      %v6253 = vsel %vm1570, %v6212, %v5988
      %v6256 = vsel %vm1570, %v6214, %v5990
      %v6259 = vsel %vm1570, %v6216, %v5992
      %v6262 = vsel %vm1570, %v6218, %v5994
      %v6265 = vsel %vm1570, %v6220, %v5996
      %v6268 = vsel %vm1570, %v6222, %v5998
      %v6271 = vsel %vm1570, %v6224, %v6000
      %v6275 = vsel %vm520, %v5648, %v6018
      %v6278 = vsel %vm520, %v5649, %v6020
      %v6281 = vsel %vm520, %v5650, %v6022
      %v6284 = vsel %vm520, %v5651, %v6024
      %v6287 = vsel %vm520, %v5652, %v6026
      %v6290 = vsel %vm520, %v5653, %v6028
      %v6293 = vsel %vm520, %v5654, %v6030
      %v6296 = vsel %vm520, %v5655, %v6032
      %v6299 = vsel %vm520, %v5656, %v6034
      %v6302 = vsel %vm520, %v5657, %v6036
      %v6305 = vsel %vm520, %v5658, %v6038
      %v6308 = vsel %vm520, %v5659, %v6040
      %v6311 = vsel %vm520, %v5660, %v6042
      %v6314 = vsel %vm520, %v5661, %v6044
      %v6317 = vsel %vm520, %v5662, %v6046
      %v6320 = vsel %vm520, %v5663, %v6048
      %v6322 = vsel %vm1537, %v6275, %v6066
      %v6324 = vsel %vm1537, %v6278, %v6068
      %v6326 = vsel %vm1537, %v6281, %v6070
      %v6328 = vsel %vm1537, %v6284, %v6072
      %v6330 = vsel %vm1537, %v6287, %v6074
      %v6332 = vsel %vm1537, %v6290, %v6076
      %v6334 = vsel %vm1537, %v6293, %v6078
      %v6336 = vsel %vm1537, %v6296, %v6080
      %v6338 = vsel %vm1537, %v6299, %v6082
      %v6340 = vsel %vm1537, %v6302, %v6084
      %v6342 = vsel %vm1537, %v6305, %v6086
      %v6344 = vsel %vm1537, %v6308, %v6088
      %v6346 = vsel %vm1537, %v6311, %v6090
      %v6348 = vsel %vm1537, %v6314, %v6092
      %v6350 = vsel %vm1537, %v6317, %v6094
      %v6352 = vsel %vm1537, %v6320, %v6096
      %v6354 = vsel %vm1570, %v6322, %v6114
      %v6357 = vsel %vm1570, %v6324, %v6116
      %v6360 = vsel %vm1570, %v6326, %v6118
      %v6363 = vsel %vm1570, %v6328, %v6120
      %v6366 = vsel %vm1570, %v6330, %v6122
      %v6369 = vsel %vm1570, %v6332, %v6124
      %v6372 = vsel %vm1570, %v6334, %v6126
      %v6375 = vsel %vm1570, %v6336, %v6128
      %v6378 = vsel %vm1570, %v6338, %v6130
      %v6381 = vsel %vm1570, %v6340, %v6132
      %v6384 = vsel %vm1570, %v6342, %v6134
      %v6387 = vsel %vm1570, %v6344, %v6136
      %v6390 = vsel %vm1570, %v6346, %v6138
      %v6393 = vsel %vm1570, %v6348, %v6140
      %v6396 = vsel %vm1570, %v6350, %v6142
      %v6399 = vsel %vm1570, %v6352, %v6144
      %v6401 = vld [vmem:[%s4] sm:$0xf]
      %v6402 = vld [vmem:[%s4 + $0x4] sm:$0xf]
      %v6403 = vld [vmem:[%s4 + $0x8] sm:$0xf]
      %v6404 = vld [vmem:[%s4 + $0xc] sm:$0xf]
      %v6405 = vld [vmem:[%s4 + $0x10] sm:$0xf]
      %v6406 = vld [vmem:[%s4 + $0x14] sm:$0xf]
      %v6407 = vld [vmem:[%s4 + $0x18] sm:$0xf]
      %v6408 = vld [vmem:[%s4 + $0x1c] sm:$0xf]
      %v6409 = vld [vmem:[%s4 + $0x20] sm:$0xf]
      %v6410 = vld [vmem:[%s4 + $0x24] sm:$0xf]
      %v6411 = vld [vmem:[%s4 + $0x28] sm:$0xf]
      %v6412 = vld [vmem:[%s4 + $0x2c] sm:$0xf]
      %v6413 = vld [vmem:[%s4 + $0x30] sm:$0xf]
      %v6414 = vld [vmem:[%s4 + $0x34] sm:$0xf]
      %v6415 = vld [vmem:[%s4 + $0x38] sm:$0xf]
      %v6416 = vld [vmem:[%s4 + $0x3c] sm:$0xf]
      %v6417 = vld [vmem:[%s4 + $0x40] sm:$0xf]
      %v6418 = vld [vmem:[%s4 + $0x44] sm:$0xf]
      %v6419 = vld [vmem:[%s4 + $0x48] sm:$0xf]
      %v6420 = vld [vmem:[%s4 + $0x4c] sm:$0xf]
      %v6421 = vld [vmem:[%s4 + $0x50] sm:$0xf]
      %v6422 = vld [vmem:[%s4 + $0x54] sm:$0xf]
      %v6423 = vld [vmem:[%s4 + $0x58] sm:$0xf]
      %v6424 = vld [vmem:[%s4 + $0x5c] sm:$0xf]
      %v6425 = vld [vmem:[%s4 + $0x60] sm:$0xf]
      %v6426 = vld [vmem:[%s4 + $0x64] sm:$0xf]
      %v6427 = vld [vmem:[%s4 + $0x68] sm:$0xf]
      %v6428 = vld [vmem:[%s4 + $0x6c] sm:$0xf]
      %v6429 = vld [vmem:[%s4 + $0x70] sm:$0xf]
      %v6430 = vld [vmem:[%s4 + $0x74] sm:$0xf]
      %v6431 = vld [vmem:[%s4 + $0x78] sm:$0xf]
      %v6432 = vld [vmem:[%s4 + $0x7c] sm:$0xf]
      %v6433 = vld [vmem:[%s4 + $0x80] sm:$0xf]
      %v6434 = vld [vmem:[%s4 + $0x84] sm:$0xf]
      %v6435 = vld [vmem:[%s4 + $0x88] sm:$0xf]
      %v6436 = vld [vmem:[%s4 + $0x8c] sm:$0xf]
      %v6437 = vld [vmem:[%s683] sm:$0xff]
      %v6438 = vld [vmem:[%s683 + $0x10] sm:$0xff]
      %v6439 = vld [vmem:[%s683 + $0x20] sm:$0xff]
      %v6440 = vld [vmem:[%s683 + $0x30] sm:$0xff]
      %v6441 = vld [vmem:[%s683 + $0x40] sm:$0xff]
      %v6442 = vld [vmem:[%s683 + $0x50] sm:$0xff]
      %v6443 = vld [vmem:[%s683 + $0x60] sm:$0xff]
      %v6444 = vld [vmem:[%s683 + $0x70] sm:$0xff]
      %v6445 = vld [vmem:[%s683 + $0xa0] sm:$0xff]
      %v6446 = vld [vmem:[%s683 + $0xb0] sm:$0xff]
      %v6447 = vld [vmem:[%s683 + $0xc0] sm:$0xff]
      %v6448 = vld [vmem:[%s683 + $0xd0] sm:$0xff]
      %v6449 = vld [vmem:[%s683 + $0xe0] sm:$0xff]
      %v6450 = vld [vmem:[%s683 + $0xf0] sm:$0xff]
      %v6451 = vld [vmem:[%s683 + $0x100] sm:$0xff]
      %v6452 = vld [vmem:[%s683 + $0x110] sm:$0xff]
      %v6453 = vld [vmem:[%s683 + $0x140] sm:$0xff]
      %v6454 = vld [vmem:[%s683 + $0x150] sm:$0xff]
      %v6455 = vld [vmem:[%s683 + $0x160] sm:$0xff]
      %v6456 = vld [vmem:[%s683 + $0x170] sm:$0xff]
      %v6457 = vld [vmem:[%s683 + $0x180] sm:$0xff]
      %v6458 = vld [vmem:[%s683 + $0x190] sm:$0xff]
      %v6459 = vld [vmem:[%s683 + $0x1a0] sm:$0xff]
      %v6460 = vld [vmem:[%s683 + $0x1b0] sm:$0xff]
      %v6461 = vld [vmem:[%s683 + $0x1e0] sm:$0xff]
      %v6462 = vld [vmem:[%s683 + $0x1f0] sm:$0xff]
      %v6463 = vld [vmem:[%s683 + $0x200] sm:$0xff]
      %v6464 = vld [vmem:[%s683 + $0x210] sm:$0xff]
      %v6465 = vld [vmem:[%s683 + $0x220] sm:$0xff]
      %v6466 = vld [vmem:[%s683 + $0x230] sm:$0xff]
      %v6467 = vld [vmem:[%s683 + $0x240] sm:$0xff]
      %v6468 = vld [vmem:[%s683 + $0x250] sm:$0xff]
      %v6469 = vpack.c.bf16 %v6438, %v6437
      %v6470 = vpack.c.bf16 %v6440, %v6439
      %v6471 = vpack.c.bf16 %v6442, %v6441
      %v6472 = vpack.c.bf16 %v6444, %v6443
      %v6473 = vpack.c.bf16 %v6446, %v6445
      %v6474 = vpack.c.bf16 %v6448, %v6447
      %v6475 = vpack.c.bf16 %v6450, %v6449
      %v6476 = vpack.c.bf16 %v6452, %v6451
      %v6477 = vpack.c.bf16 %v6454, %v6453
      %v6478 = vpack.c.bf16 %v6456, %v6455
      %v6479 = vpack.c.bf16 %v6458, %v6457
      %v6480 = vpack.c.bf16 %v6460, %v6459
      %v6481 = vpack.c.bf16 %v6462, %v6461
      %v6482 = vpack.c.bf16 %v6464, %v6463
      %v6483 = vpack.c.bf16 %v6466, %v6465
      %v6484 = vpack.c.bf16 %v6468, %v6467
      %v6485 = vld [vmem:[%s683 + $0x1] sm:$0xff]
      %v6486 = vld [vmem:[%s683 + $0x11] sm:$0xff]
      %v6487 = vld [vmem:[%s683 + $0x21] sm:$0xff]
      %v6488 = vld [vmem:[%s683 + $0x31] sm:$0xff]
      %v6489 = vld [vmem:[%s683 + $0x41] sm:$0xff]
      %v6490 = vld [vmem:[%s683 + $0x51] sm:$0xff]
      %v6491 = vld [vmem:[%s683 + $0x61] sm:$0xff]
      %v6492 = vld [vmem:[%s683 + $0x71] sm:$0xff]
      %v6493 = vld [vmem:[%s683 + $0xa1] sm:$0xff]
      %v6494 = vld [vmem:[%s683 + $0xb1] sm:$0xff]
      %v6495 = vld [vmem:[%s683 + $0xc1] sm:$0xff]
      %v6496 = vld [vmem:[%s683 + $0xd1] sm:$0xff]
      %v6497 = vld [vmem:[%s683 + $0xe1] sm:$0xff]
      %v6498 = vld [vmem:[%s683 + $0xf1] sm:$0xff]
      %v6499 = vld [vmem:[%s683 + $0x101] sm:$0xff]
      %v6500 = vld [vmem:[%s683 + $0x111] sm:$0xff]
      %v6501 = vld [vmem:[%s683 + $0x141] sm:$0xff]
      %v6502 = vld [vmem:[%s683 + $0x151] sm:$0xff]
      %v6503 = vld [vmem:[%s683 + $0x161] sm:$0xff]
      %v6504 = vld [vmem:[%s683 + $0x171] sm:$0xff]
      %v6505 = vld [vmem:[%s683 + $0x181] sm:$0xff]
      %v6506 = vld [vmem:[%s683 + $0x191] sm:$0xff]
      %v6507 = vld [vmem:[%s683 + $0x1a1] sm:$0xff]
      %v6508 = vld [vmem:[%s683 + $0x1b1] sm:$0xff]
      %v6509 = vld [vmem:[%s683 + $0x1e1] sm:$0xff]
      %v6510 = vld [vmem:[%s683 + $0x1f1] sm:$0xff]
      %v6511 = vld [vmem:[%s683 + $0x201] sm:$0xff]
      %v6512 = vld [vmem:[%s683 + $0x211] sm:$0xff]
      %v6513 = vld [vmem:[%s683 + $0x221] sm:$0xff]
      %v6514 = vld [vmem:[%s683 + $0x231] sm:$0xff]
      %v6515 = vld [vmem:[%s683 + $0x241] sm:$0xff]
      %v6516 = vld [vmem:[%s683 + $0x251] sm:$0xff]
      %v6517 = vpack.c.bf16 %v6486, %v6485
      %v6518 = vpack.c.bf16 %v6488, %v6487
      %v6519 = vpack.c.bf16 %v6490, %v6489
      %v6520 = vpack.c.bf16 %v6492, %v6491
      %v6521 = vpack.c.bf16 %v6494, %v6493
      %v6522 = vpack.c.bf16 %v6496, %v6495
      %v6523 = vpack.c.bf16 %v6498, %v6497
      %v6524 = vpack.c.bf16 %v6500, %v6499
      %v6525 = vpack.c.bf16 %v6502, %v6501
      %v6526 = vpack.c.bf16 %v6504, %v6503
      %v6527 = vpack.c.bf16 %v6506, %v6505
      %v6528 = vpack.c.bf16 %v6508, %v6507
      %v6529 = vpack.c.bf16 %v6510, %v6509
      %v6530 = vpack.c.bf16 %v6512, %v6511
      %v6531 = vpack.c.bf16 %v6514, %v6513
      %v6532 = vpack.c.bf16 %v6516, %v6515
      %v6533 = vld [vmem:[%s683 + $0x2] sm:$0xff]
      %v6534 = vld [vmem:[%s683 + $0x12] sm:$0xff]
      %v6535 = vld [vmem:[%s683 + $0x22] sm:$0xff]
      %v6536 = vld [vmem:[%s683 + $0x32] sm:$0xff]
      %v6537 = vld [vmem:[%s683 + $0x42] sm:$0xff]
      %v6538 = vld [vmem:[%s683 + $0x52] sm:$0xff]
      %v6539 = vld [vmem:[%s683 + $0x62] sm:$0xff]
      %v6540 = vld [vmem:[%s683 + $0x72] sm:$0xff]
      %v6541 = vld [vmem:[%s683 + $0xa2] sm:$0xff]
      %v6542 = vld [vmem:[%s683 + $0xb2] sm:$0xff]
      %v6543 = vld [vmem:[%s683 + $0xc2] sm:$0xff]
      %v6544 = vld [vmem:[%s683 + $0xd2] sm:$0xff]
      %v6545 = vld [vmem:[%s683 + $0xe2] sm:$0xff]
      %v6546 = vld [vmem:[%s683 + $0xf2] sm:$0xff]
      %v6547 = vld [vmem:[%s683 + $0x102] sm:$0xff]
      %v6548 = vld [vmem:[%s683 + $0x112] sm:$0xff]
      %v6549 = vld [vmem:[%s683 + $0x142] sm:$0xff]
      %v6550 = vld [vmem:[%s683 + $0x152] sm:$0xff]
      %v6551 = vld [vmem:[%s683 + $0x162] sm:$0xff]
      %v6552 = vld [vmem:[%s683 + $0x172] sm:$0xff]
      %v6553 = vld [vmem:[%s683 + $0x182] sm:$0xff]
      %v6554 = vld [vmem:[%s683 + $0x192] sm:$0xff]
      %v6555 = vld [vmem:[%s683 + $0x1a2] sm:$0xff]
      %v6556 = vld [vmem:[%s683 + $0x1b2] sm:$0xff]
      %v6557 = vld [vmem:[%s683 + $0x1e2] sm:$0xff]
      %v6558 = vld [vmem:[%s683 + $0x1f2] sm:$0xff]
      %v6559 = vld [vmem:[%s683 + $0x202] sm:$0xff]
      %v6560 = vld [vmem:[%s683 + $0x212] sm:$0xff]
      %v6561 = vld [vmem:[%s683 + $0x222] sm:$0xff]
      %v6562 = vld [vmem:[%s683 + $0x232] sm:$0xff]
      %v6563 = vld [vmem:[%s683 + $0x242] sm:$0xff]
      %v6564 = vld [vmem:[%s683 + $0x252] sm:$0xff]
      %v6565 = vpack.c.bf16 %v6534, %v6533
      %v6566 = vpack.c.bf16 %v6536, %v6535
      %v6567 = vpack.c.bf16 %v6538, %v6537
      %v6568 = vpack.c.bf16 %v6540, %v6539
      %v6569 = vpack.c.bf16 %v6542, %v6541
      %v6570 = vpack.c.bf16 %v6544, %v6543
      %v6571 = vpack.c.bf16 %v6546, %v6545
      %v6572 = vpack.c.bf16 %v6548, %v6547
      %v6573 = vpack.c.bf16 %v6550, %v6549
      %v6574 = vpack.c.bf16 %v6552, %v6551
      %v6575 = vpack.c.bf16 %v6554, %v6553
      %v6576 = vpack.c.bf16 %v6556, %v6555
      %v6577 = vpack.c.bf16 %v6558, %v6557
      %v6578 = vpack.c.bf16 %v6560, %v6559
      %v6579 = vpack.c.bf16 %v6562, %v6561
      %v6580 = vpack.c.bf16 %v6564, %v6563
      %v6581 = vld [vmem:[%s701] sm:$0xff]
      %v6582 = vld [vmem:[%s701 + $0x10] sm:$0xff]
      %v6583 = vld [vmem:[%s701 + $0x20] sm:$0xff]
      %v6584 = vld [vmem:[%s701 + $0x30] sm:$0xff]
      %v6585 = vld [vmem:[%s701 + $0x40] sm:$0xff]
      %v6586 = vld [vmem:[%s701 + $0x50] sm:$0xff]
      %v6587 = vld [vmem:[%s701 + $0x60] sm:$0xff]
      %v6588 = vld [vmem:[%s701 + $0x70] sm:$0xff]
      %v6589 = vld [vmem:[%s701 + $0xa0] sm:$0xff]
      %v6590 = vld [vmem:[%s701 + $0xb0] sm:$0xff]
      %v6591 = vld [vmem:[%s701 + $0xc0] sm:$0xff]
      %v6592 = vld [vmem:[%s701 + $0xd0] sm:$0xff]
      %v6593 = vld [vmem:[%s701 + $0xe0] sm:$0xff]
      %v6594 = vld [vmem:[%s701 + $0xf0] sm:$0xff]
      %v6595 = vld [vmem:[%s701 + $0x100] sm:$0xff]
      %v6596 = vld [vmem:[%s701 + $0x110] sm:$0xff]
      %v6597 = vld [vmem:[%s701 + $0x140] sm:$0xff]
      %v6598 = vld [vmem:[%s701 + $0x150] sm:$0xff]
      %v6599 = vld [vmem:[%s701 + $0x160] sm:$0xff]
      %v6600 = vld [vmem:[%s701 + $0x170] sm:$0xff]
      %v6601 = vld [vmem:[%s701 + $0x180] sm:$0xff]
      %v6602 = vld [vmem:[%s701 + $0x190] sm:$0xff]
      %v6603 = vld [vmem:[%s701 + $0x1a0] sm:$0xff]
      %v6604 = vld [vmem:[%s701 + $0x1b0] sm:$0xff]
      %v6605 = vld [vmem:[%s701 + $0x1e0] sm:$0xff]
      %v6606 = vld [vmem:[%s701 + $0x1f0] sm:$0xff]
      %v6607 = vld [vmem:[%s701 + $0x200] sm:$0xff]
      %v6608 = vld [vmem:[%s701 + $0x210] sm:$0xff]
      %v6609 = vld [vmem:[%s701 + $0x220] sm:$0xff]
      %v6610 = vld [vmem:[%s701 + $0x230] sm:$0xff]
      %v6611 = vld [vmem:[%s701 + $0x240] sm:$0xff]
      %v6612 = vld [vmem:[%s701 + $0x250] sm:$0xff]
      %v6613 = vpack.c.bf16 %v6582, %v6581
      %v6614 = vpack.c.bf16 %v6584, %v6583
      %v6615 = vpack.c.bf16 %v6586, %v6585
      %v6616 = vpack.c.bf16 %v6588, %v6587
      %v6617 = vpack.c.bf16 %v6590, %v6589
      %v6618 = vpack.c.bf16 %v6592, %v6591
      %v6619 = vpack.c.bf16 %v6594, %v6593
      %v6620 = vpack.c.bf16 %v6596, %v6595
      %v6621 = vpack.c.bf16 %v6598, %v6597
      %v6622 = vpack.c.bf16 %v6600, %v6599
      %v6623 = vpack.c.bf16 %v6602, %v6601
      %v6624 = vpack.c.bf16 %v6604, %v6603
      %v6625 = vpack.c.bf16 %v6606, %v6605
      %v6626 = vpack.c.bf16 %v6608, %v6607
      %v6627 = vpack.c.bf16 %v6610, %v6609
      %v6628 = vpack.c.bf16 %v6612, %v6611
      %v6629 = vld [vmem:[%s701 + $0x1] sm:$0xff]
      %v6630 = vld [vmem:[%s701 + $0x11] sm:$0xff]
      %v6631 = vld [vmem:[%s701 + $0x21] sm:$0xff]
      %v6632 = vld [vmem:[%s701 + $0x31] sm:$0xff]
      %v6633 = vld [vmem:[%s701 + $0x41] sm:$0xff]
      %v6634 = vld [vmem:[%s701 + $0x51] sm:$0xff]
      %v6635 = vld [vmem:[%s701 + $0x61] sm:$0xff]
      %v6636 = vld [vmem:[%s701 + $0x71] sm:$0xff]
      %v6637 = vld [vmem:[%s701 + $0xa1] sm:$0xff]
      %v6638 = vld [vmem:[%s701 + $0xb1] sm:$0xff]
      %v6639 = vld [vmem:[%s701 + $0xc1] sm:$0xff]
      %v6640 = vld [vmem:[%s701 + $0xd1] sm:$0xff]
      %v6641 = vld [vmem:[%s701 + $0xe1] sm:$0xff]
      %v6642 = vld [vmem:[%s701 + $0xf1] sm:$0xff]
      %v6643 = vld [vmem:[%s701 + $0x101] sm:$0xff]
      %v6644 = vld [vmem:[%s701 + $0x111] sm:$0xff]
      %v6645 = vld [vmem:[%s701 + $0x141] sm:$0xff]
      %v6646 = vld [vmem:[%s701 + $0x151] sm:$0xff]
      %v6647 = vld [vmem:[%s701 + $0x161] sm:$0xff]
      %v6648 = vld [vmem:[%s701 + $0x171] sm:$0xff]
      %v6649 = vld [vmem:[%s701 + $0x181] sm:$0xff]
      %v6650 = vld [vmem:[%s701 + $0x191] sm:$0xff]
      %v6651 = vld [vmem:[%s701 + $0x1a1] sm:$0xff]
      %v6652 = vld [vmem:[%s701 + $0x1b1] sm:$0xff]
      %v6653 = vld [vmem:[%s701 + $0x1e1] sm:$0xff]
      %v6654 = vld [vmem:[%s701 + $0x1f1] sm:$0xff]
      %v6655 = vld [vmem:[%s701 + $0x201] sm:$0xff]
      %v6656 = vld [vmem:[%s701 + $0x211] sm:$0xff]
      %v6657 = vld [vmem:[%s701 + $0x221] sm:$0xff]
      %v6658 = vld [vmem:[%s701 + $0x231] sm:$0xff]
      %v6659 = vld [vmem:[%s701 + $0x241] sm:$0xff]
      %v6660 = vld [vmem:[%s701 + $0x251] sm:$0xff]
      %v6661 = vpack.c.bf16 %v6630, %v6629
      %v6662 = vpack.c.bf16 %v6632, %v6631
      %v6663 = vpack.c.bf16 %v6634, %v6633
      %v6664 = vpack.c.bf16 %v6636, %v6635
      %v6665 = vpack.c.bf16 %v6638, %v6637
      %v6666 = vpack.c.bf16 %v6640, %v6639
      %v6667 = vpack.c.bf16 %v6642, %v6641
      %v6668 = vpack.c.bf16 %v6644, %v6643
      %v6669 = vpack.c.bf16 %v6646, %v6645
      %v6670 = vpack.c.bf16 %v6648, %v6647
      %v6671 = vpack.c.bf16 %v6650, %v6649
      %v6672 = vpack.c.bf16 %v6652, %v6651
      %v6673 = vpack.c.bf16 %v6654, %v6653
      %v6674 = vpack.c.bf16 %v6656, %v6655
      %v6675 = vpack.c.bf16 %v6658, %v6657
      %v6676 = vpack.c.bf16 %v6660, %v6659
      %v6677 = vld [vmem:[%s701 + $0x2] sm:$0xff]
      %v6678 = vld [vmem:[%s701 + $0x12] sm:$0xff]
      %v6679 = vld [vmem:[%s701 + $0x22] sm:$0xff]
      %v6680 = vld [vmem:[%s701 + $0x32] sm:$0xff]
      %v6681 = vld [vmem:[%s701 + $0x42] sm:$0xff]
      %v6682 = vld [vmem:[%s701 + $0x52] sm:$0xff]
      %v6683 = vld [vmem:[%s701 + $0x62] sm:$0xff]
      %v6684 = vld [vmem:[%s701 + $0x72] sm:$0xff]
      %v6685 = vld [vmem:[%s701 + $0xa2] sm:$0xff]
      %v6686 = vld [vmem:[%s701 + $0xb2] sm:$0xff]
      %v6687 = vld [vmem:[%s701 + $0xc2] sm:$0xff]
      %v6688 = vld [vmem:[%s701 + $0xd2] sm:$0xff]
      %v6689 = vld [vmem:[%s701 + $0xe2] sm:$0xff]
      %v6690 = vld [vmem:[%s701 + $0xf2] sm:$0xff]
      %v6691 = vld [vmem:[%s701 + $0x102] sm:$0xff]
      %v6692 = vld [vmem:[%s701 + $0x112] sm:$0xff]
      %v6693 = vld [vmem:[%s701 + $0x142] sm:$0xff]
      %v6694 = vld [vmem:[%s701 + $0x152] sm:$0xff]
      %v6695 = vld [vmem:[%s701 + $0x162] sm:$0xff]
      %v6696 = vld [vmem:[%s701 + $0x172] sm:$0xff]
      %v6697 = vld [vmem:[%s701 + $0x182] sm:$0xff]
      %v6698 = vld [vmem:[%s701 + $0x192] sm:$0xff]
      %v6699 = vld [vmem:[%s701 + $0x1a2] sm:$0xff]
      %v6700 = vld [vmem:[%s701 + $0x1b2] sm:$0xff]
      %v6701 = vld [vmem:[%s701 + $0x1e2] sm:$0xff]
      %v6702 = vld [vmem:[%s701 + $0x1f2] sm:$0xff]
      %v6703 = vld [vmem:[%s701 + $0x202] sm:$0xff]
      %v6704 = vld [vmem:[%s701 + $0x212] sm:$0xff]
      %v6705 = vld [vmem:[%s701 + $0x222] sm:$0xff]
      %v6706 = vld [vmem:[%s701 + $0x232] sm:$0xff]
      %v6707 = vld [vmem:[%s701 + $0x242] sm:$0xff]
      %v6708 = vld [vmem:[%s701 + $0x252] sm:$0xff]
      %v6709 = vpack.c.bf16 %v6678, %v6677
      %v6710 = vpack.c.bf16 %v6680, %v6679
      %v6711 = vpack.c.bf16 %v6682, %v6681
      %v6712 = vpack.c.bf16 %v6684, %v6683
      %v6713 = vpack.c.bf16 %v6686, %v6685
      %v6714 = vpack.c.bf16 %v6688, %v6687
      %v6715 = vpack.c.bf16 %v6690, %v6689
      %v6716 = vpack.c.bf16 %v6692, %v6691
      %v6717 = vpack.c.bf16 %v6694, %v6693
      %v6718 = vpack.c.bf16 %v6696, %v6695
      %v6719 = vpack.c.bf16 %v6698, %v6697
      %v6720 = vpack.c.bf16 %v6700, %v6699
      %v6721 = vpack.c.bf16 %v6702, %v6701
      %v6722 = vpack.c.bf16 %v6704, %v6703
      %v6723 = vpack.c.bf16 %v6706, %v6705
      %v6724 = vpack.c.bf16 %v6708, %v6707
      %s6725 = scalar_lea.vmem [#allocation3], 192
      %v6726 = vld [vmem:[%s6725] sm:$0xff]
      %v6727 = vld [vmem:[%s6725 + $0x10] sm:$0xff]
      %v6728 = vld [vmem:[%s6725 + $0x20] sm:$0xff]
      %v6729 = vld [vmem:[%s6725 + $0x30] sm:$0xff]
      %v6730 = vld [vmem:[%s6725 + $0x40] sm:$0xff]
      %v6731 = vld [vmem:[%s6725 + $0x50] sm:$0xff]
      %v6732 = vld [vmem:[%s6725 + $0x60] sm:$0xff]
      %v6733 = vld [vmem:[%s6725 + $0x70] sm:$0xff]
      %v6734 = vld [vmem:[%s6725 + $0xa0] sm:$0xff]
      %v6735 = vld [vmem:[%s6725 + $0xb0] sm:$0xff]
      %v6736 = vld [vmem:[%s6725 + $0xc0] sm:$0xff]
      %v6737 = vld [vmem:[%s6725 + $0xd0] sm:$0xff]
      %v6738 = vld [vmem:[%s6725 + $0xe0] sm:$0xff]
      %v6739 = vld [vmem:[%s6725 + $0xf0] sm:$0xff]
      %v6740 = vld [vmem:[%s6725 + $0x100] sm:$0xff]
      %v6741 = vld [vmem:[%s6725 + $0x110] sm:$0xff]
      %v6742 = vld [vmem:[%s6725 + $0x140] sm:$0xff]
      %v6743 = vld [vmem:[%s6725 + $0x150] sm:$0xff]
      %v6744 = vld [vmem:[%s6725 + $0x160] sm:$0xff]
      %v6745 = vld [vmem:[%s6725 + $0x170] sm:$0xff]
      %v6746 = vld [vmem:[%s6725 + $0x180] sm:$0xff]
      %v6747 = vld [vmem:[%s6725 + $0x190] sm:$0xff]
      %v6748 = vld [vmem:[%s6725 + $0x1a0] sm:$0xff]
      %v6749 = vld [vmem:[%s6725 + $0x1b0] sm:$0xff]
      %v6750 = vld [vmem:[%s6725 + $0x1e0] sm:$0xff]
      %v6751 = vld [vmem:[%s6725 + $0x1f0] sm:$0xff]
      %v6752 = vld [vmem:[%s6725 + $0x200] sm:$0xff]
      %v6753 = vld [vmem:[%s6725 + $0x210] sm:$0xff]
      %v6754 = vld [vmem:[%s6725 + $0x220] sm:$0xff]
      %v6755 = vld [vmem:[%s6725 + $0x230] sm:$0xff]
      %v6756 = vld [vmem:[%s6725 + $0x240] sm:$0xff]
      %v6757 = vld [vmem:[%s6725 + $0x250] sm:$0xff]
      %v6758 = vpack.c.bf16 %v6727, %v6726
      %v6759 = vpack.c.bf16 %v6729, %v6728
      %v6760 = vpack.c.bf16 %v6731, %v6730
      %v6761 = vpack.c.bf16 %v6733, %v6732
      %v6762 = vpack.c.bf16 %v6735, %v6734
      %v6763 = vpack.c.bf16 %v6737, %v6736
      %v6764 = vpack.c.bf16 %v6739, %v6738
      %v6765 = vpack.c.bf16 %v6741, %v6740
      %v6766 = vpack.c.bf16 %v6743, %v6742
      %v6767 = vpack.c.bf16 %v6745, %v6744
      %v6768 = vpack.c.bf16 %v6747, %v6746
      %v6769 = vpack.c.bf16 %v6749, %v6748
      %v6770 = vpack.c.bf16 %v6751, %v6750
      %v6771 = vpack.c.bf16 %v6753, %v6752
      %v6772 = vpack.c.bf16 %v6755, %v6754
      %v6773 = vpack.c.bf16 %v6757, %v6756
      %v6774 = vld [vmem:[%s6725 + $0x1] sm:$0xff]
      %v6775 = vld [vmem:[%s6725 + $0x11] sm:$0xff]
      %v6776 = vld [vmem:[%s6725 + $0x21] sm:$0xff]
      %v6777 = vld [vmem:[%s6725 + $0x31] sm:$0xff]
      %v6778 = vld [vmem:[%s6725 + $0x41] sm:$0xff]
      %v6779 = vld [vmem:[%s6725 + $0x51] sm:$0xff]
      %v6780 = vld [vmem:[%s6725 + $0x61] sm:$0xff]
      %v6781 = vld [vmem:[%s6725 + $0x71] sm:$0xff]
      %v6782 = vld [vmem:[%s6725 + $0xa1] sm:$0xff]
      %v6783 = vld [vmem:[%s6725 + $0xb1] sm:$0xff]
      %v6784 = vld [vmem:[%s6725 + $0xc1] sm:$0xff]
      %v6785 = vld [vmem:[%s6725 + $0xd1] sm:$0xff]
      %v6786 = vld [vmem:[%s6725 + $0xe1] sm:$0xff]
      %v6787 = vld [vmem:[%s6725 + $0xf1] sm:$0xff]
      %v6788 = vld [vmem:[%s6725 + $0x101] sm:$0xff]
      %v6789 = vld [vmem:[%s6725 + $0x111] sm:$0xff]
      %v6790 = vld [vmem:[%s6725 + $0x141] sm:$0xff]
      %v6791 = vld [vmem:[%s6725 + $0x151] sm:$0xff]
      %v6792 = vld [vmem:[%s6725 + $0x161] sm:$0xff]
      %v6793 = vld [vmem:[%s6725 + $0x171] sm:$0xff]
      %v6794 = vld [vmem:[%s6725 + $0x181] sm:$0xff]
      %v6795 = vld [vmem:[%s6725 + $0x191] sm:$0xff]
      %v6796 = vld [vmem:[%s6725 + $0x1a1] sm:$0xff]
      %v6797 = vld [vmem:[%s6725 + $0x1b1] sm:$0xff]
      %v6798 = vld [vmem:[%s6725 + $0x1e1] sm:$0xff]
      %v6799 = vld [vmem:[%s6725 + $0x1f1] sm:$0xff]
      %v6800 = vld [vmem:[%s6725 + $0x201] sm:$0xff]
      %v6801 = vld [vmem:[%s6725 + $0x211] sm:$0xff]
      %v6802 = vld [vmem:[%s6725 + $0x221] sm:$0xff]
      %v6803 = vld [vmem:[%s6725 + $0x231] sm:$0xff]
      %v6804 = vld [vmem:[%s6725 + $0x241] sm:$0xff]
      %v6805 = vld [vmem:[%s6725 + $0x251] sm:$0xff]
      %v6806 = vpack.c.bf16 %v6775, %v6774
      %v6807 = vpack.c.bf16 %v6777, %v6776
      %v6808 = vpack.c.bf16 %v6779, %v6778
      %v6809 = vpack.c.bf16 %v6781, %v6780
      %v6810 = vpack.c.bf16 %v6783, %v6782
      %v6811 = vpack.c.bf16 %v6785, %v6784
      %v6812 = vpack.c.bf16 %v6787, %v6786
      %v6813 = vpack.c.bf16 %v6789, %v6788
      %v6814 = vpack.c.bf16 %v6791, %v6790
      %v6815 = vpack.c.bf16 %v6793, %v6792
      %v6816 = vpack.c.bf16 %v6795, %v6794
      %v6817 = vpack.c.bf16 %v6797, %v6796
      %v6818 = vpack.c.bf16 %v6799, %v6798
      %v6819 = vpack.c.bf16 %v6801, %v6800
      %v6820 = vpack.c.bf16 %v6803, %v6802
      %v6821 = vpack.c.bf16 %v6805, %v6804
      %v6822 = vld [vmem:[%s6725 + $0x2] sm:$0xff]
      %v6823 = vld [vmem:[%s6725 + $0x12] sm:$0xff]
      %v6824 = vld [vmem:[%s6725 + $0x22] sm:$0xff]
      %v6825 = vld [vmem:[%s6725 + $0x32] sm:$0xff]
      %v6826 = vld [vmem:[%s6725 + $0x42] sm:$0xff]
      %v6827 = vld [vmem:[%s6725 + $0x52] sm:$0xff]
      %v6828 = vld [vmem:[%s6725 + $0x62] sm:$0xff]
      %v6829 = vld [vmem:[%s6725 + $0x72] sm:$0xff]
      %v6830 = vld [vmem:[%s6725 + $0xa2] sm:$0xff]
      %v6831 = vld [vmem:[%s6725 + $0xb2] sm:$0xff]
      %v6832 = vld [vmem:[%s6725 + $0xc2] sm:$0xff]
      %v6833 = vld [vmem:[%s6725 + $0xd2] sm:$0xff]
      %v6834 = vld [vmem:[%s6725 + $0xe2] sm:$0xff]
      %v6835 = vld [vmem:[%s6725 + $0xf2] sm:$0xff]
      %v6836 = vld [vmem:[%s6725 + $0x102] sm:$0xff]
      %v6837 = vld [vmem:[%s6725 + $0x112] sm:$0xff]
      %v6838 = vld [vmem:[%s6725 + $0x142] sm:$0xff]
      %v6839 = vld [vmem:[%s6725 + $0x152] sm:$0xff]
      %v6840 = vld [vmem:[%s6725 + $0x162] sm:$0xff]
      %v6841 = vld [vmem:[%s6725 + $0x172] sm:$0xff]
      %v6842 = vld [vmem:[%s6725 + $0x182] sm:$0xff]
      %v6843 = vld [vmem:[%s6725 + $0x192] sm:$0xff]
      %v6844 = vld [vmem:[%s6725 + $0x1a2] sm:$0xff]
      %v6845 = vld [vmem:[%s6725 + $0x1b2] sm:$0xff]
      %v6846 = vld [vmem:[%s6725 + $0x1e2] sm:$0xff]
      %v6847 = vld [vmem:[%s6725 + $0x1f2] sm:$0xff]
      %v6848 = vld [vmem:[%s6725 + $0x202] sm:$0xff]
      %v6849 = vld [vmem:[%s6725 + $0x212] sm:$0xff]
      %v6850 = vld [vmem:[%s6725 + $0x222] sm:$0xff]
      %v6851 = vld [vmem:[%s6725 + $0x232] sm:$0xff]
      %v6852 = vld [vmem:[%s6725 + $0x242] sm:$0xff]
      %v6853 = vld [vmem:[%s6725 + $0x252] sm:$0xff]
      %v6854 = vpack.c.bf16 %v6823, %v6822
      %v6855 = vpack.c.bf16 %v6825, %v6824
      %v6856 = vpack.c.bf16 %v6827, %v6826
      %v6857 = vpack.c.bf16 %v6829, %v6828
      %v6858 = vpack.c.bf16 %v6831, %v6830
      %v6859 = vpack.c.bf16 %v6833, %v6832
      %v6860 = vpack.c.bf16 %v6835, %v6834
      %v6861 = vpack.c.bf16 %v6837, %v6836
      %v6862 = vpack.c.bf16 %v6839, %v6838
      %v6863 = vpack.c.bf16 %v6841, %v6840
      %v6864 = vpack.c.bf16 %v6843, %v6842
      %v6865 = vpack.c.bf16 %v6845, %v6844
      %v6866 = vpack.c.bf16 %v6847, %v6846
      %v6867 = vpack.c.bf16 %v6849, %v6848
      %v6868 = vpack.c.bf16 %v6851, %v6850
      %v6869 = vpack.c.bf16 %v6853, %v6852
      %6886 = vrot.lane.b32.xlu0 %v6517, 32
      %v6887 = vpop.permute.xlu0 %6886
      %6888 = vrot.lane.b32.xlu0 %v6518, 32
      %v6889 = vpop.permute.xlu0 %6888
      %6890 = vrot.lane.b32.xlu0 %v6519, 32
      %v6891 = vpop.permute.xlu0 %6890
      %6892 = vrot.lane.b32.xlu0 %v6520, 32
      %v6893 = vpop.permute.xlu0 %6892
      %6894 = vrot.lane.b32.xlu0 %v6521, 32
      %v6895 = vpop.permute.xlu0 %6894
      %6896 = vrot.lane.b32.xlu0 %v6522, 32
      %v6897 = vpop.permute.xlu0 %6896
      %6898 = vrot.lane.b32.xlu0 %v6523, 32
      %v6899 = vpop.permute.xlu0 %6898
      %6900 = vrot.lane.b32.xlu0 %v6524, 32
      %v6901 = vpop.permute.xlu0 %6900
      %6902 = vrot.lane.b32.xlu0 %v6525, 32
      %v6903 = vpop.permute.xlu0 %6902
      %6904 = vrot.lane.b32.xlu0 %v6526, 32
      %v6905 = vpop.permute.xlu0 %6904
      %6906 = vrot.lane.b32.xlu0 %v6527, 32
      %v6907 = vpop.permute.xlu0 %6906
      %6908 = vrot.lane.b32.xlu0 %v6528, 32
      %v6909 = vpop.permute.xlu0 %6908
      %6910 = vrot.lane.b32.xlu0 %v6529, 32
      %v6911 = vpop.permute.xlu0 %6910
      %6912 = vrot.lane.b32.xlu0 %v6530, 32
      %v6913 = vpop.permute.xlu0 %6912
      %6914 = vrot.lane.b32.xlu0 %v6531, 32
      %v6915 = vpop.permute.xlu0 %6914
      %6916 = vrot.lane.b32.xlu0 %v6532, 32
      %v6917 = vpop.permute.xlu0 %6916
      %6934 = vrot.lane.b32.xlu0 %v6565, 64
      %v6935 = vpop.permute.xlu0 %6934
      %6936 = vrot.lane.b32.xlu0 %v6566, 64
      %v6937 = vpop.permute.xlu0 %6936
      %6938 = vrot.lane.b32.xlu0 %v6567, 64
      %v6939 = vpop.permute.xlu0 %6938
      %6940 = vrot.lane.b32.xlu0 %v6568, 64
      %v6941 = vpop.permute.xlu0 %6940
      %6942 = vrot.lane.b32.xlu0 %v6569, 64
      %v6943 = vpop.permute.xlu0 %6942
      %6944 = vrot.lane.b32.xlu0 %v6570, 64
      %v6945 = vpop.permute.xlu0 %6944
      %6946 = vrot.lane.b32.xlu0 %v6571, 64
      %v6947 = vpop.permute.xlu0 %6946
      %6948 = vrot.lane.b32.xlu0 %v6572, 64
      %v6949 = vpop.permute.xlu0 %6948
      %6950 = vrot.lane.b32.xlu0 %v6573, 64
      %v6951 = vpop.permute.xlu0 %6950
      %6952 = vrot.lane.b32.xlu0 %v6574, 64
      %v6953 = vpop.permute.xlu0 %6952
      %6954 = vrot.lane.b32.xlu0 %v6575, 64
      %v6955 = vpop.permute.xlu0 %6954
      %6956 = vrot.lane.b32.xlu0 %v6576, 64
      %v6957 = vpop.permute.xlu0 %6956
      %6958 = vrot.lane.b32.xlu0 %v6577, 64
      %v6959 = vpop.permute.xlu0 %6958
      %6960 = vrot.lane.b32.xlu0 %v6578, 64
      %v6961 = vpop.permute.xlu0 %6960
      %6962 = vrot.lane.b32.xlu0 %v6579, 64
      %v6963 = vpop.permute.xlu0 %6962
      %6964 = vrot.lane.b32.xlu0 %v6580, 64
      %v6965 = vpop.permute.xlu0 %6964
      %6982 = vrot.lane.b32.xlu0 %v6613, 96
      %v6983 = vpop.permute.xlu0 %6982
      %6984 = vrot.lane.b32.xlu0 %v6614, 96
      %v6985 = vpop.permute.xlu0 %6984
      %6986 = vrot.lane.b32.xlu0 %v6615, 96
      %v6987 = vpop.permute.xlu0 %6986
      %6988 = vrot.lane.b32.xlu0 %v6616, 96
      %v6989 = vpop.permute.xlu0 %6988
      %6990 = vrot.lane.b32.xlu0 %v6617, 96
      %v6991 = vpop.permute.xlu0 %6990
      %6992 = vrot.lane.b32.xlu0 %v6618, 96
      %v6993 = vpop.permute.xlu0 %6992
      %6994 = vrot.lane.b32.xlu0 %v6619, 96
      %v6995 = vpop.permute.xlu0 %6994
      %6996 = vrot.lane.b32.xlu0 %v6620, 96
      %v6997 = vpop.permute.xlu0 %6996
      %6998 = vrot.lane.b32.xlu0 %v6621, 96
      %v6999 = vpop.permute.xlu0 %6998
      %7000 = vrot.lane.b32.xlu0 %v6622, 96
      %v7001 = vpop.permute.xlu0 %7000
      %7002 = vrot.lane.b32.xlu0 %v6623, 96
      %v7003 = vpop.permute.xlu0 %7002
      %7004 = vrot.lane.b32.xlu0 %v6624, 96
      %v7005 = vpop.permute.xlu0 %7004
      %7006 = vrot.lane.b32.xlu0 %v6625, 96
      %v7007 = vpop.permute.xlu0 %7006
      %7008 = vrot.lane.b32.xlu0 %v6626, 96
      %v7009 = vpop.permute.xlu0 %7008
      %7010 = vrot.lane.b32.xlu0 %v6627, 96
      %v7011 = vpop.permute.xlu0 %7010
      %7012 = vrot.lane.b32.xlu0 %v6628, 96
      %v7013 = vpop.permute.xlu0 %7012
      %7030 = vrot.lane.b32.xlu0 %v6709, 32
      %v7031 = vpop.permute.xlu0 %7030
      %7032 = vrot.lane.b32.xlu0 %v6710, 32
      %v7033 = vpop.permute.xlu0 %7032
      %7034 = vrot.lane.b32.xlu0 %v6711, 32
      %v7035 = vpop.permute.xlu0 %7034
      %7036 = vrot.lane.b32.xlu0 %v6712, 32
      %v7037 = vpop.permute.xlu0 %7036
      %7038 = vrot.lane.b32.xlu0 %v6713, 32
      %v7039 = vpop.permute.xlu0 %7038
      %7040 = vrot.lane.b32.xlu0 %v6714, 32
      %v7041 = vpop.permute.xlu0 %7040
      %7042 = vrot.lane.b32.xlu0 %v6715, 32
      %v7043 = vpop.permute.xlu0 %7042
      %7044 = vrot.lane.b32.xlu0 %v6716, 32
      %v7045 = vpop.permute.xlu0 %7044
      %7046 = vrot.lane.b32.xlu0 %v6717, 32
      %v7047 = vpop.permute.xlu0 %7046
      %7048 = vrot.lane.b32.xlu0 %v6718, 32
      %v7049 = vpop.permute.xlu0 %7048
      %7050 = vrot.lane.b32.xlu0 %v6719, 32
      %v7051 = vpop.permute.xlu0 %7050
      %7052 = vrot.lane.b32.xlu0 %v6720, 32
      %v7053 = vpop.permute.xlu0 %7052
      %7054 = vrot.lane.b32.xlu0 %v6721, 32
      %v7055 = vpop.permute.xlu0 %7054
      %7056 = vrot.lane.b32.xlu0 %v6722, 32
      %v7057 = vpop.permute.xlu0 %7056
      %7058 = vrot.lane.b32.xlu0 %v6723, 32
      %v7059 = vpop.permute.xlu0 %7058
      %7060 = vrot.lane.b32.xlu0 %v6724, 32
      %v7061 = vpop.permute.xlu0 %7060
      %7078 = vrot.lane.b32.xlu0 %v6758, 64
      %v7079 = vpop.permute.xlu0 %7078
      %7080 = vrot.lane.b32.xlu0 %v6759, 64
      %v7081 = vpop.permute.xlu0 %7080
      %7082 = vrot.lane.b32.xlu0 %v6760, 64
      %v7083 = vpop.permute.xlu0 %7082
      %7084 = vrot.lane.b32.xlu0 %v6761, 64
      %v7085 = vpop.permute.xlu0 %7084
      %7086 = vrot.lane.b32.xlu0 %v6762, 64
      %v7087 = vpop.permute.xlu0 %7086
      %7088 = vrot.lane.b32.xlu0 %v6763, 64
      %v7089 = vpop.permute.xlu0 %7088
      %7090 = vrot.lane.b32.xlu0 %v6764, 64
      %v7091 = vpop.permute.xlu0 %7090
      %7092 = vrot.lane.b32.xlu0 %v6765, 64
      %v7093 = vpop.permute.xlu0 %7092
      %7094 = vrot.lane.b32.xlu0 %v6766, 64
      %v7095 = vpop.permute.xlu0 %7094
      %7096 = vrot.lane.b32.xlu0 %v6767, 64
      %v7097 = vpop.permute.xlu0 %7096
      %7098 = vrot.lane.b32.xlu0 %v6768, 64
      %v7099 = vpop.permute.xlu0 %7098
      %7100 = vrot.lane.b32.xlu0 %v6769, 64
      %v7101 = vpop.permute.xlu0 %7100
      %7102 = vrot.lane.b32.xlu0 %v6770, 64
      %v7103 = vpop.permute.xlu0 %7102
      %7104 = vrot.lane.b32.xlu0 %v6771, 64
      %v7105 = vpop.permute.xlu0 %7104
      %7106 = vrot.lane.b32.xlu0 %v6772, 64
      %v7107 = vpop.permute.xlu0 %7106
      %7108 = vrot.lane.b32.xlu0 %v6773, 64
      %v7109 = vpop.permute.xlu0 %7108
      %7126 = vrot.lane.b32.xlu0 %v6806, 96
      %v7127 = vpop.permute.xlu0 %7126
      %7128 = vrot.lane.b32.xlu0 %v6807, 96
      %v7129 = vpop.permute.xlu0 %7128
      %7130 = vrot.lane.b32.xlu0 %v6808, 96
      %v7131 = vpop.permute.xlu0 %7130
      %7132 = vrot.lane.b32.xlu0 %v6809, 96
      %v7133 = vpop.permute.xlu0 %7132
      %7134 = vrot.lane.b32.xlu0 %v6810, 96
      %v7135 = vpop.permute.xlu0 %7134
      %7136 = vrot.lane.b32.xlu0 %v6811, 96
      %v7137 = vpop.permute.xlu0 %7136
      %7138 = vrot.lane.b32.xlu0 %v6812, 96
      %v7139 = vpop.permute.xlu0 %7138
      %7140 = vrot.lane.b32.xlu0 %v6813, 96
      %v7141 = vpop.permute.xlu0 %7140
      %7142 = vrot.lane.b32.xlu0 %v6814, 96
      %v7143 = vpop.permute.xlu0 %7142
      %7144 = vrot.lane.b32.xlu0 %v6815, 96
      %v7145 = vpop.permute.xlu0 %7144
      %7146 = vrot.lane.b32.xlu0 %v6816, 96
      %v7147 = vpop.permute.xlu0 %7146
      %7148 = vrot.lane.b32.xlu0 %v6817, 96
      %v7149 = vpop.permute.xlu0 %7148
      %7150 = vrot.lane.b32.xlu0 %v6818, 96
      %v7151 = vpop.permute.xlu0 %7150
      %7152 = vrot.lane.b32.xlu0 %v6819, 96
      %v7153 = vpop.permute.xlu0 %7152
      %7154 = vrot.lane.b32.xlu0 %v6820, 96
      %v7155 = vpop.permute.xlu0 %7154
      %7156 = vrot.lane.b32.xlu0 %v6821, 96
      %v7157 = vpop.permute.xlu0 %7156
      %v7160 = vsel %vm520, %v6469, %v6887
      %v7163 = vsel %vm520, %v6470, %v6889
      %v7166 = vsel %vm520, %v6471, %v6891
      %v7169 = vsel %vm520, %v6472, %v6893
      %v7172 = vsel %vm520, %v6473, %v6895
      %v7175 = vsel %vm520, %v6474, %v6897
      %v7178 = vsel %vm520, %v6475, %v6899
      %v7181 = vsel %vm520, %v6476, %v6901
      %v7184 = vsel %vm520, %v6477, %v6903
      %v7187 = vsel %vm520, %v6478, %v6905
      %v7190 = vsel %vm520, %v6479, %v6907
      %v7193 = vsel %vm520, %v6480, %v6909
      %v7196 = vsel %vm520, %v6481, %v6911
      %v7199 = vsel %vm520, %v6482, %v6913
      %v7202 = vsel %vm520, %v6483, %v6915
      %v7205 = vsel %vm520, %v6484, %v6917
      %v7207 = vsel %vm1537, %v7160, %v6935
      %v7209 = vsel %vm1537, %v7163, %v6937
      %v7211 = vsel %vm1537, %v7166, %v6939
      %v7213 = vsel %vm1537, %v7169, %v6941
      %v7215 = vsel %vm1537, %v7172, %v6943
      %v7217 = vsel %vm1537, %v7175, %v6945
      %v7219 = vsel %vm1537, %v7178, %v6947
      %v7221 = vsel %vm1537, %v7181, %v6949
      %v7223 = vsel %vm1537, %v7184, %v6951
      %v7225 = vsel %vm1537, %v7187, %v6953
      %v7227 = vsel %vm1537, %v7190, %v6955
      %v7229 = vsel %vm1537, %v7193, %v6957
      %v7231 = vsel %vm1537, %v7196, %v6959
      %v7233 = vsel %vm1537, %v7199, %v6961
      %v7235 = vsel %vm1537, %v7202, %v6963
      %v7237 = vsel %vm1537, %v7205, %v6965
      %v7239 = vsel %vm1570, %v7207, %v6983
      %v7242 = vsel %vm1570, %v7209, %v6985
      %v7245 = vsel %vm1570, %v7211, %v6987
      %v7248 = vsel %vm1570, %v7213, %v6989
      %v7251 = vsel %vm1570, %v7215, %v6991
      %v7254 = vsel %vm1570, %v7217, %v6993
      %v7257 = vsel %vm1570, %v7219, %v6995
      %v7260 = vsel %vm1570, %v7221, %v6997
      %v7263 = vsel %vm1570, %v7223, %v6999
      %v7266 = vsel %vm1570, %v7225, %v7001
      %v7269 = vsel %vm1570, %v7227, %v7003
      %v7272 = vsel %vm1570, %v7229, %v7005
      %v7275 = vsel %vm1570, %v7231, %v7007
      %v7278 = vsel %vm1570, %v7233, %v7009
      %v7281 = vsel %vm1570, %v7235, %v7011
      %v7284 = vsel %vm1570, %v7237, %v7013
      %v7288 = vsel %vm520, %v6661, %v7031
      %v7291 = vsel %vm520, %v6662, %v7033
      %v7294 = vsel %vm520, %v6663, %v7035
      %v7297 = vsel %vm520, %v6664, %v7037
      %v7300 = vsel %vm520, %v6665, %v7039
      %v7303 = vsel %vm520, %v6666, %v7041
      %v7306 = vsel %vm520, %v6667, %v7043
      %v7309 = vsel %vm520, %v6668, %v7045
      %v7312 = vsel %vm520, %v6669, %v7047
      %v7315 = vsel %vm520, %v6670, %v7049
      %v7318 = vsel %vm520, %v6671, %v7051
      %v7321 = vsel %vm520, %v6672, %v7053
      %v7324 = vsel %vm520, %v6673, %v7055
      %v7327 = vsel %vm520, %v6674, %v7057
      %v7330 = vsel %vm520, %v6675, %v7059
      %v7333 = vsel %vm520, %v6676, %v7061
      %v7335 = vsel %vm1537, %v7288, %v7079
      %v7337 = vsel %vm1537, %v7291, %v7081
      %v7339 = vsel %vm1537, %v7294, %v7083
      %v7341 = vsel %vm1537, %v7297, %v7085
      %v7343 = vsel %vm1537, %v7300, %v7087
      %v7345 = vsel %vm1537, %v7303, %v7089
      %v7347 = vsel %vm1537, %v7306, %v7091
      %v7349 = vsel %vm1537, %v7309, %v7093
      %v7351 = vsel %vm1537, %v7312, %v7095
      %v7353 = vsel %vm1537, %v7315, %v7097
      %v7355 = vsel %vm1537, %v7318, %v7099
      %v7357 = vsel %vm1537, %v7321, %v7101
      %v7359 = vsel %vm1537, %v7324, %v7103
      %v7361 = vsel %vm1537, %v7327, %v7105
      %v7363 = vsel %vm1537, %v7330, %v7107
      %v7365 = vsel %vm1537, %v7333, %v7109
      %v7367 = vsel %vm1570, %v7335, %v7127
      %v7370 = vsel %vm1570, %v7337, %v7129
      %v7373 = vsel %vm1570, %v7339, %v7131
      %v7376 = vsel %vm1570, %v7341, %v7133
      %v7379 = vsel %vm1570, %v7343, %v7135
      %v7382 = vsel %vm1570, %v7345, %v7137
      %v7385 = vsel %vm1570, %v7347, %v7139
      %v7388 = vsel %vm1570, %v7349, %v7141
      %v7391 = vsel %vm1570, %v7351, %v7143
      %v7394 = vsel %vm1570, %v7353, %v7145
      %v7397 = vsel %vm1570, %v7355, %v7147
      %v7400 = vsel %vm1570, %v7357, %v7149
      %v7403 = vsel %vm1570, %v7359, %v7151
      %v7406 = vsel %vm1570, %v7361, %v7153
      %v7409 = vsel %vm1570, %v7363, %v7155
      %v7412 = vsel %vm1570, %v7365, %v7157
      %s7414 = scalar_lea.vmem %s4, 144
      %v7415 = vld [vmem:[%s7414] sm:$0xf]
      %v7416 = vld [vmem:[%s7414 + $0x4] sm:$0xf]
      %v7417 = vld [vmem:[%s7414 + $0x8] sm:$0xf]
      %v7418 = vld [vmem:[%s7414 + $0xc] sm:$0xf]
      %v7419 = vld [vmem:[%s7414 + $0x10] sm:$0xf]
      %v7420 = vld [vmem:[%s7414 + $0x14] sm:$0xf]
      %v7421 = vld [vmem:[%s7414 + $0x18] sm:$0xf]
      %v7422 = vld [vmem:[%s7414 + $0x1c] sm:$0xf]
      %v7423 = vld [vmem:[%s7414 + $0x20] sm:$0xf]
      %v7424 = vld [vmem:[%s7414 + $0x24] sm:$0xf]
      %v7425 = vld [vmem:[%s7414 + $0x28] sm:$0xf]
      %v7426 = vld [vmem:[%s7414 + $0x2c] sm:$0xf]
      %v7427 = vld [vmem:[%s7414 + $0x30] sm:$0xf]
      %v7428 = vld [vmem:[%s7414 + $0x34] sm:$0xf]
      %v7429 = vld [vmem:[%s7414 + $0x38] sm:$0xf]
      %v7430 = vld [vmem:[%s7414 + $0x3c] sm:$0xf]
      %v7431 = vld [vmem:[%s7414 + $0x40] sm:$0xf]
      %v7432 = vld [vmem:[%s7414 + $0x44] sm:$0xf]
      %v7433 = vld [vmem:[%s7414 + $0x48] sm:$0xf]
      %v7434 = vld [vmem:[%s7414 + $0x4c] sm:$0xf]
      %v7435 = vld [vmem:[%s7414 + $0x50] sm:$0xf]
      %v7436 = vld [vmem:[%s7414 + $0x54] sm:$0xf]
      %v7437 = vld [vmem:[%s7414 + $0x58] sm:$0xf]
      %v7438 = vld [vmem:[%s7414 + $0x5c] sm:$0xf]
      %v7439 = vld [vmem:[%s7414 + $0x60] sm:$0xf]
      %v7440 = vld [vmem:[%s7414 + $0x64] sm:$0xf]
      %v7441 = vld [vmem:[%s7414 + $0x68] sm:$0xf]
      %v7442 = vld [vmem:[%s7414 + $0x6c] sm:$0xf]
      %v7443 = vld [vmem:[%s7414 + $0x70] sm:$0xf]
      %v7444 = vld [vmem:[%s7414 + $0x74] sm:$0xf]
      %v7445 = vld [vmem:[%s7414 + $0x78] sm:$0xf]
      %v7446 = vld [vmem:[%s7414 + $0x7c] sm:$0xf]
      %v7447 = vld [vmem:[%s7414 + $0x80] sm:$0xf]
      %v7448 = vld [vmem:[%s7414 + $0x84] sm:$0xf]
      %v7449 = vld [vmem:[%s7414 + $0x88] sm:$0xf]
      %v7450 = vld [vmem:[%s7414 + $0x8c] sm:$0xf]
      %v7487 = vunpack.c.l.b16 %v7415
      %v7488 = vunpack.c.l.b16 %v7416
      %v7489 = vunpack.c.l.b16 %v7417
      %v7490 = vunpack.c.l.b16 %v7418
      %v7491 = vunpack.c.l.b16 %v7419
      %v7492 = vunpack.c.l.b16 %v7420
      %v7493 = vunpack.c.l.b16 %v7421
      %v7494 = vunpack.c.l.b16 %v7422
      %v7495 = vunpack.c.l.b16 %v7423
      %v7496 = vunpack.c.l.b16 %v7424
      %v7497 = vunpack.c.l.b16 %v7425
      %v7498 = vunpack.c.l.b16 %v7426
      %v7499 = vunpack.c.l.b16 %v7427
      %v7500 = vunpack.c.l.b16 %v7428
      %v7501 = vunpack.c.l.b16 %v7429
      %v7502 = vunpack.c.l.b16 %v7430
      %v7503 = vunpack.c.l.b16 %v7431
      %v7504 = vunpack.c.l.b16 %v7432
      %v7505 = vunpack.c.l.b16 %v7433
      %v7506 = vunpack.c.l.b16 %v7434
      %v7507 = vunpack.c.l.b16 %v7435
      %v7508 = vunpack.c.l.b16 %v7436
      %v7509 = vunpack.c.l.b16 %v7437
      %v7510 = vunpack.c.l.b16 %v7438
      %v7511 = vunpack.c.l.b16 %v7439
      %v7512 = vunpack.c.l.b16 %v7440
      %v7513 = vunpack.c.l.b16 %v7441
      %v7514 = vunpack.c.l.b16 %v7442
      %v7515 = vunpack.c.l.b16 %v7443
      %v7516 = vunpack.c.l.b16 %v7444
      %v7517 = vunpack.c.l.b16 %v7445
      %v7518 = vunpack.c.l.b16 %v7446
      %v7519 = vunpack.c.l.b16 %v7447
      %v7520 = vunpack.c.l.b16 %v7448
      %v7521 = vunpack.c.l.b16 %v7449
      %v7522 = vunpack.c.l.b16 %v7450
      %v7523 = vpack.c.b16 %v7488, %v7487
      %v7524 = vpack.c.b16 %v7490, %v7489
      %v7525 = vpack.c.b16 %v7492, %v7491
      %v7526 = vpack.c.b16 %v7494, %v7493
      %v7527 = vpack.c.b16 %v7496, %v7495
      %v7528 = vpack.c.b16 %v7498, %v7497
      %v7529 = vpack.c.b16 %v7500, %v7499
      %v7530 = vpack.c.b16 %v7502, %v7501
      %v7531 = vpack.c.b16 %v7504, %v7503
      %v7532 = vpack.c.b16 %v7506, %v7505
      %v7533 = vpack.c.b16 %v7508, %v7507
      %v7534 = vpack.c.b16 %v7510, %v7509
      %v7535 = vpack.c.b16 %v7512, %v7511
      %v7536 = vpack.c.b16 %v7514, %v7513
      %v7537 = vpack.c.b16 %v7516, %v7515
      %v7538 = vpack.c.b16 %v7518, %v7517
      %v7539 = vpack.c.b16 %v7520, %v7519
      %v7540 = vpack.c.b16 %v7522, %v7521
      %v7560 = vsel %vm520, %v6854, 0
      %v7563 = vsel %vm520, %v6855, 0
      %v7566 = vsel %vm520, %v6856, 0
      %v7569 = vsel %vm520, %v6857, 0
      %v7572 = vsel %vm520, %v6858, 0
      %v7575 = vsel %vm520, %v6859, 0
      %v7578 = vsel %vm520, %v6860, 0
      %v7581 = vsel %vm520, %v6861, 0
      %v7584 = vsel %vm520, %v6862, 0
      %v7587 = vsel %vm520, %v6863, 0
      %v7590 = vsel %vm520, %v6864, 0
      %v7593 = vsel %vm520, %v6865, 0
      %v7596 = vsel %vm520, %v6866, 0
      %v7599 = vsel %vm520, %v6867, 0
      %v7602 = vsel %vm520, %v6868, 0
      %v7605 = vsel %vm520, %v6869, 0
      %7607 = vmatprep.subr.bf16.mxu0 0
      %7608 = vmatpush1.bf16.msra.mxu0 %v7523
      %7609 = vmatprep.subr.bf16.mxu0 0
      %7610 = vmatpush1.bf16.msra.mxu0 %v7524
      %7611 = vmatprep.subr.bf16.mxu0 0
      %7612 = vmatpush1.bf16.msra.mxu0 %v7525
      %7613 = vmatprep.subr.bf16.mxu0 0
      %7614 = vmatpush1.bf16.msra.mxu0 %v7526
      %7615 = vmatprep.subr.bf16.mxu0 0
      %7616 = vmatpush1.bf16.msra.mxu0 %v7527
      %7617 = vmatprep.subr.bf16.mxu0 0
      %7618 = vmatpush1.bf16.msra.mxu0 %v7528
      %7619 = vmatprep.subr.bf16.mxu0 0
      %7620 = vmatpush1.bf16.msra.mxu0 %v7529
      %7621 = vmatprep.subr.bf16.mxu0 0
      %7622 = vmatpush1.bf16.msra.mxu0 %v7530
      %7623 = vmatprep.subr.bf16.mxu0 0
      %7624 = vmatpush1.bf16.msra.mxu0 %v7531
      %7625 = vmatprep.subr.bf16.mxu0 0
      %7626 = vmatpush1.bf16.msra.mxu0 %v7532
      %7627 = vmatprep.subr.bf16.mxu0 0
      %7628 = vmatpush1.bf16.msra.mxu0 %v7533
      %7629 = vmatprep.subr.bf16.mxu0 0
      %7630 = vmatpush1.bf16.msra.mxu0 %v7534
      %7631 = vmatprep.subr.bf16.mxu0 0
      %7632 = vmatpush1.bf16.msra.mxu0 %v7535
      %7633 = vmatprep.subr.bf16.mxu0 0
      %7634 = vmatpush1.bf16.msra.mxu0 %v7536
      %7635 = vmatprep.subr.bf16.mxu0 0
      %7636 = vmatpush1.bf16.msra.mxu0 %v7537
      %7637 = vmatprep.subr.bf16.mxu0 0
      %7638 = vmatpush1.bf16.msra.mxu0 %v7538
      %7639 = vmatprep.mubr.bf16.mxu0 %v7367
      %7640 = vmatmul.mubr.bf16.gmra.mrb[0].mxu0 %v7239
      %v7641 = vpop.f32.mrb[0].mxu0
      %v7642 = vadd.f32 0.0, %v7641
      %v7643 = vpop.f32.mrb[0].mxu0
      %v7644 = vpop.f32.mrb[0].mxu0
      %v7645 = vadd.f32 0.0, %v7644
      %v7646 = vpop.f32.mrb[0].mxu0
      %7647 = vmatprep.mubr.bf16.mxu0 %v7370
      %7648 = vmatmul.mubr.bf16.gmra.mrb[0].mxu0 %v7242
      %v7649 = vpop.f32.mrb[0].mxu0
      %v7650 = vadd.f32 0.0, %v7649
      %v7651 = vpop.f32.mrb[0].mxu0
      %v7652 = vpop.f32.mrb[0].mxu0
      %v7653 = vadd.f32 0.0, %v7652
      %v7654 = vpop.f32.mrb[0].mxu0
      %7655 = vmatprep.mubr.bf16.mxu0 %v7373
      %7656 = vmatmul.mubr.bf16.gmra.mrb[0].mxu0 %v7245
      %v7657 = vpop.f32.mrb[0].mxu0
      %v7658 = vadd.f32 0.0, %v7657
      %v7659 = vpop.f32.mrb[0].mxu0
      %v7660 = vpop.f32.mrb[0].mxu0
      %v7661 = vadd.f32 0.0, %v7660
      %v7662 = vpop.f32.mrb[0].mxu0
      %7663 = vmatprep.mubr.bf16.mxu0 %v7376
      %7664 = vmatmul.mubr.bf16.gmra.mrb[0].mxu0 %v7248
      %v7665 = vpop.f32.mrb[0].mxu0
      %v7666 = vadd.f32 0.0, %v7665
      %v7667 = vpop.f32.mrb[0].mxu0
      %v7668 = vpop.f32.mrb[0].mxu0
      %v7669 = vadd.f32 0.0, %v7668
      %v7670 = vpop.f32.mrb[0].mxu0
      %7671 = vmatprep.mubr.bf16.mxu0 %v7379
      %7672 = vmatmul.mubr.bf16.gmra.mrb[0].mxu0 %v7251
      %v7673 = vpop.f32.mrb[0].mxu0
      %v7674 = vadd.f32 0.0, %v7673
      %v7675 = vpop.f32.mrb[0].mxu0
      %v7676 = vpop.f32.mrb[0].mxu0
      %v7677 = vadd.f32 0.0, %v7676
      %v7678 = vpop.f32.mrb[0].mxu0
      %7679 = vmatprep.mubr.bf16.mxu0 %v7382
      %7680 = vmatmul.mubr.bf16.gmra.mrb[0].mxu0 %v7254
      %v7681 = vpop.f32.mrb[0].mxu0
      %v7682 = vadd.f32 0.0, %v7681
      %v7683 = vpop.f32.mrb[0].mxu0
      %v7684 = vpop.f32.mrb[0].mxu0
      %v7685 = vadd.f32 0.0, %v7684
      %v7686 = vpop.f32.mrb[0].mxu0
      %7687 = vmatprep.mubr.bf16.mxu0 %v7385
      %7688 = vmatmul.mubr.bf16.gmra.mrb[0].mxu0 %v7257
      %v7689 = vpop.f32.mrb[0].mxu0
      %v7690 = vadd.f32 0.0, %v7689
      %v7691 = vpop.f32.mrb[0].mxu0
      %v7692 = vpop.f32.mrb[0].mxu0
      %v7693 = vadd.f32 0.0, %v7692
      %v7694 = vpop.f32.mrb[0].mxu0
      %7695 = vmatprep.mubr.bf16.mxu0 %v7388
      %7696 = vmatmul.mubr.bf16.gmra.mrb[0].mxu0 %v7260
      %v7697 = vpop.f32.mrb[0].mxu0
      %v7698 = vadd.f32 0.0, %v7697
      %v7699 = vpop.f32.mrb[0].mxu0
      %v7700 = vpop.f32.mrb[0].mxu0
      %v7701 = vadd.f32 0.0, %v7700
      %v7702 = vpop.f32.mrb[0].mxu0
      %7703 = vmatprep.mubr.bf16.mxu0 %v7391
      %7704 = vmatmul.mubr.bf16.gmra.mrb[0].mxu0 %v7263
      %v7705 = vpop.f32.mrb[0].mxu0
      %v7706 = vadd.f32 0.0, %v7705
      %v7707 = vpop.f32.mrb[0].mxu0
      %v7708 = vpop.f32.mrb[0].mxu0
      %v7709 = vadd.f32 0.0, %v7708
      %v7710 = vpop.f32.mrb[0].mxu0
      %7711 = vmatprep.mubr.bf16.mxu0 %v7394
      %7712 = vmatmul.mubr.bf16.gmra.mrb[0].mxu0 %v7266
      %v7713 = vpop.f32.mrb[0].mxu0
      %v7714 = vadd.f32 0.0, %v7713
      %v7715 = vpop.f32.mrb[0].mxu0
      %v7716 = vpop.f32.mrb[0].mxu0
      %v7717 = vadd.f32 0.0, %v7716
      %v7718 = vpop.f32.mrb[0].mxu0
      %7719 = vmatprep.mubr.bf16.mxu0 %v7397
      %7720 = vmatmul.mubr.bf16.gmra.mrb[0].mxu0 %v7269
      %v7721 = vpop.f32.mrb[0].mxu0
      %v7722 = vadd.f32 0.0, %v7721
      %v7723 = vpop.f32.mrb[0].mxu0
      %v7724 = vpop.f32.mrb[0].mxu0
      %v7725 = vadd.f32 0.0, %v7724
      %v7726 = vpop.f32.mrb[0].mxu0
      %7727 = vmatprep.mubr.bf16.mxu0 %v7400
      %7728 = vmatmul.mubr.bf16.gmra.mrb[0].mxu0 %v7272
      %v7729 = vpop.f32.mrb[0].mxu0
      %v7730 = vadd.f32 0.0, %v7729
      %v7731 = vpop.f32.mrb[0].mxu0
      %v7732 = vpop.f32.mrb[0].mxu0
      %v7733 = vadd.f32 0.0, %v7732
      %v7734 = vpop.f32.mrb[0].mxu0
      %7735 = vmatprep.mubr.bf16.mxu0 %v7403
      %7736 = vmatmul.mubr.bf16.gmra.mrb[0].mxu0 %v7275
      %v7737 = vpop.f32.mrb[0].mxu0
      %v7738 = vadd.f32 0.0, %v7737
      %v7739 = vpop.f32.mrb[0].mxu0
      %v7740 = vpop.f32.mrb[0].mxu0
      %v7741 = vadd.f32 0.0, %v7740
      %v7742 = vpop.f32.mrb[0].mxu0
      %7743 = vmatprep.mubr.bf16.mxu0 %v7406
      %7744 = vmatmul.mubr.bf16.gmra.mrb[0].mxu0 %v7278
      %v7745 = vpop.f32.mrb[0].mxu0
      %v7746 = vadd.f32 0.0, %v7745
      %v7747 = vpop.f32.mrb[0].mxu0
      %v7748 = vpop.f32.mrb[0].mxu0
      %v7749 = vadd.f32 0.0, %v7748
      %v7750 = vpop.f32.mrb[0].mxu0
      %7751 = vmatprep.mubr.bf16.mxu0 %v7409
      %7752 = vmatmul.mubr.bf16.gmra.mrb[0].mxu0 %v7281
      %v7753 = vpop.f32.mrb[0].mxu0
      %v7754 = vadd.f32 0.0, %v7753
      %v7755 = vpop.f32.mrb[0].mxu0
      %v7756 = vpop.f32.mrb[0].mxu0
      %v7757 = vadd.f32 0.0, %v7756
      %v7758 = vpop.f32.mrb[0].mxu0
      %7759 = vmatprep.mubr.bf16.mxu0 %v7412
      %7760 = vmatmul.mubr.bf16.gmra.mrb[0].mxu0 %v7284
      %v7761 = vpop.f32.mrb[0].mxu0
      %v7762 = vadd.f32 0.0, %v7761
      %v7763 = vpop.f32.mrb[0].mxu0
      %v7764 = vpop.f32.mrb[0].mxu0
      %v7765 = vadd.f32 0.0, %v7764
      %v7766 = vpop.f32.mrb[0].mxu0
      %7767 = vdwg.mxu0
      %7768 = vmatprep.subr.bf16.mxu0 0
      %7769 = vmatpush1.bf16.msra.mxu0 %v7539
      %7770 = vmatprep.subr.bf16.mxu0 0
      %7771 = vmatpush1.bf16.msra.mxu0 %v7540
      %7772 = vmatprep.subr.bf16.mxu0 0
      %7773 = vmatpush1.bf16.msra.mxu0 0
      %7774 = vmatprep.subr.bf16.mxu0 0
      %7775 = vmatpush1.bf16.msra.mxu0 0
      %7776 = vmatprep.subr.bf16.mxu0 0
      %7777 = vmatpush1.bf16.msra.mxu0 0
      %7778 = vmatprep.subr.bf16.mxu0 0
      %7779 = vmatpush1.bf16.msra.mxu0 0
      %7780 = vmatprep.subr.bf16.mxu0 0
      %7781 = vmatpush1.bf16.msra.mxu0 0
      %7782 = vmatprep.subr.bf16.mxu0 0
      %7783 = vmatpush1.bf16.msra.mxu0 0
      %7784 = vmatprep.subr.bf16.mxu0 0
      %7785 = vmatpush1.bf16.msra.mxu0 0
      %7786 = vmatprep.subr.bf16.mxu0 0
      %7787 = vmatpush1.bf16.msra.mxu0 0
      %7788 = vmatprep.subr.bf16.mxu0 0
      %7789 = vmatpush1.bf16.msra.mxu0 0
      %7790 = vmatprep.subr.bf16.mxu0 0
      %7791 = vmatpush1.bf16.msra.mxu0 0
      %7792 = vmatprep.subr.bf16.mxu0 0
      %7793 = vmatpush1.bf16.msra.mxu0 0
      %7794 = vmatprep.subr.bf16.mxu0 0
      %7795 = vmatpush1.bf16.msra.mxu0 0
      %7796 = vmatprep.subr.bf16.mxu0 0
      %7797 = vmatpush1.bf16.msra.mxu0 0
      %7798 = vmatprep.subr.bf16.mxu0 0
      %7799 = vmatpush1.bf16.msra.mxu0 0
      %7800 = vmatprep.mubr.bf16.mxu0 0
      %7801 = vmatmul.mubr.bf16.gmra.mrb[0].mxu0 %v7560
      %v7802 = vpop.f32.mrb[0].mxu0
      %v7803 = vadd.f32 %v7642, %v7802
      %v7804 = vpop.f32.mrb[0].mxu0
      %v7805 = vpop.f32.mrb[0].mxu0
      %v7806 = vadd.f32 %v7645, %v7805
      %v7807 = vpop.f32.mrb[0].mxu0
      %7808 = vmatprep.mubr.bf16.mxu0 0
      %7809 = vmatmul.mubr.bf16.gmra.mrb[0].mxu0 %v7563
      %v7810 = vpop.f32.mrb[0].mxu0
      %v7811 = vadd.f32 %v7650, %v7810
      %v7812 = vpop.f32.mrb[0].mxu0
      %v7813 = vpop.f32.mrb[0].mxu0
      %v7814 = vadd.f32 %v7653, %v7813
      %v7815 = vpop.f32.mrb[0].mxu0
      %7816 = vmatprep.mubr.bf16.mxu0 0
      %7817 = vmatmul.mubr.bf16.gmra.mrb[0].mxu0 %v7566
      %v7818 = vpop.f32.mrb[0].mxu0
      %v7819 = vadd.f32 %v7658, %v7818
      %v7820 = vpop.f32.mrb[0].mxu0
      %v7821 = vpop.f32.mrb[0].mxu0
      %v7822 = vadd.f32 %v7661, %v7821
      %v7823 = vpop.f32.mrb[0].mxu0
      %7824 = vmatprep.mubr.bf16.mxu0 0
      %7825 = vmatmul.mubr.bf16.gmra.mrb[0].mxu0 %v7569
      %v7826 = vpop.f32.mrb[0].mxu0
      %v7827 = vadd.f32 %v7666, %v7826
      %v7828 = vpop.f32.mrb[0].mxu0
      %v7829 = vpop.f32.mrb[0].mxu0
      %v7830 = vadd.f32 %v7669, %v7829
      %v7831 = vpop.f32.mrb[0].mxu0
      %7832 = vmatprep.mubr.bf16.mxu0 0
      %7833 = vmatmul.mubr.bf16.gmra.mrb[0].mxu0 %v7572
      %v7834 = vpop.f32.mrb[0].mxu0
      %v7835 = vadd.f32 %v7674, %v7834
      %v7836 = vpop.f32.mrb[0].mxu0
      %v7837 = vpop.f32.mrb[0].mxu0
      %v7838 = vadd.f32 %v7677, %v7837
      %v7839 = vpop.f32.mrb[0].mxu0
      %7840 = vmatprep.mubr.bf16.mxu0 0
      %7841 = vmatmul.mubr.bf16.gmra.mrb[0].mxu0 %v7575
      %v7842 = vpop.f32.mrb[0].mxu0
      %v7843 = vadd.f32 %v7682, %v7842
      %v7844 = vpop.f32.mrb[0].mxu0
      %v7845 = vpop.f32.mrb[0].mxu0
      %v7846 = vadd.f32 %v7685, %v7845
      %v7847 = vpop.f32.mrb[0].mxu0
      %7848 = vmatprep.mubr.bf16.mxu0 0
      %7849 = vmatmul.mubr.bf16.gmra.mrb[0].mxu0 %v7578
      %v7850 = vpop.f32.mrb[0].mxu0
      %v7851 = vadd.f32 %v7690, %v7850
      %v7852 = vpop.f32.mrb[0].mxu0
      %v7853 = vpop.f32.mrb[0].mxu0
      %v7854 = vadd.f32 %v7693, %v7853
      %v7855 = vpop.f32.mrb[0].mxu0
      %7856 = vmatprep.mubr.bf16.mxu0 0
      %7857 = vmatmul.mubr.bf16.gmra.mrb[0].mxu0 %v7581
      %v7858 = vpop.f32.mrb[0].mxu0
      %v7859 = vadd.f32 %v7698, %v7858
      %v7860 = vpop.f32.mrb[0].mxu0
      %v7861 = vpop.f32.mrb[0].mxu0
      %v7862 = vadd.f32 %v7701, %v7861
      %v7863 = vpop.f32.mrb[0].mxu0
      %7864 = vmatprep.mubr.bf16.mxu0 0
      %7865 = vmatmul.mubr.bf16.gmra.mrb[0].mxu0 %v7584
      %v7866 = vpop.f32.mrb[0].mxu0
      %v7867 = vadd.f32 %v7706, %v7866
      %v7868 = vpop.f32.mrb[0].mxu0
      %v7869 = vpop.f32.mrb[0].mxu0
      %v7870 = vadd.f32 %v7709, %v7869
      %v7871 = vpop.f32.mrb[0].mxu0
      %7872 = vmatprep.mubr.bf16.mxu0 0
      %7873 = vmatmul.mubr.bf16.gmra.mrb[0].mxu0 %v7587
      %v7874 = vpop.f32.mrb[0].mxu0
      %v7875 = vadd.f32 %v7714, %v7874
      %v7876 = vpop.f32.mrb[0].mxu0
      %v7877 = vpop.f32.mrb[0].mxu0
      %v7878 = vadd.f32 %v7717, %v7877
      %v7879 = vpop.f32.mrb[0].mxu0
      %7880 = vmatprep.mubr.bf16.mxu0 0
      %7881 = vmatmul.mubr.bf16.gmra.mrb[0].mxu0 %v7590
      %v7882 = vpop.f32.mrb[0].mxu0
      %v7883 = vadd.f32 %v7722, %v7882
      %v7884 = vpop.f32.mrb[0].mxu0
      %v7885 = vpop.f32.mrb[0].mxu0
      %v7886 = vadd.f32 %v7725, %v7885
      %v7887 = vpop.f32.mrb[0].mxu0
      %7888 = vmatprep.mubr.bf16.mxu0 0
      %7889 = vmatmul.mubr.bf16.gmra.mrb[0].mxu0 %v7593
      %v7890 = vpop.f32.mrb[0].mxu0
      %v7891 = vadd.f32 %v7730, %v7890
      %v7892 = vpop.f32.mrb[0].mxu0
      %v7893 = vpop.f32.mrb[0].mxu0
      %v7894 = vadd.f32 %v7733, %v7893
      %v7895 = vpop.f32.mrb[0].mxu0
      %7896 = vmatprep.mubr.bf16.mxu0 0
      %7897 = vmatmul.mubr.bf16.gmra.mrb[0].mxu0 %v7596
      %v7898 = vpop.f32.mrb[0].mxu0
      %v7899 = vadd.f32 %v7738, %v7898
      %v7900 = vpop.f32.mrb[0].mxu0
      %v7901 = vpop.f32.mrb[0].mxu0
      %v7902 = vadd.f32 %v7741, %v7901
      %v7903 = vpop.f32.mrb[0].mxu0
      %7904 = vmatprep.mubr.bf16.mxu0 0
      %7905 = vmatmul.mubr.bf16.gmra.mrb[0].mxu0 %v7599
      %v7906 = vpop.f32.mrb[0].mxu0
      %v7907 = vadd.f32 %v7746, %v7906
      %v7908 = vpop.f32.mrb[0].mxu0
      %v7909 = vpop.f32.mrb[0].mxu0
      %v7910 = vadd.f32 %v7749, %v7909
      %v7911 = vpop.f32.mrb[0].mxu0
      %7912 = vmatprep.mubr.bf16.mxu0 0
      %7913 = vmatmul.mubr.bf16.gmra.mrb[0].mxu0 %v7602
      %v7914 = vpop.f32.mrb[0].mxu0
      %v7915 = vadd.f32 %v7754, %v7914
      %v7916 = vpop.f32.mrb[0].mxu0
      %v7917 = vpop.f32.mrb[0].mxu0
      %v7918 = vadd.f32 %v7757, %v7917
      %v7919 = vpop.f32.mrb[0].mxu0
      %7920 = vmatprep.mubr.bf16.mxu0 0
      %7921 = vmatmul.mubr.bf16.gmra.mrb[0].mxu0 %v7605
      %v7922 = vpop.f32.mrb[0].mxu0
      %v7923 = vadd.f32 %v7762, %v7922
      %v7924 = vpop.f32.mrb[0].mxu0
      %v7925 = vpop.f32.mrb[0].mxu0
      %v7926 = vadd.f32 %v7765, %v7925
      %v7927 = vpop.f32.mrb[0].mxu0
      %7928 = vdwg.mxu0
      %v7965 = vunpack.c.l.b16 %v6401
      %v7966 = vunpack.c.l.b16 %v6402
      %v7967 = vunpack.c.l.b16 %v6403
      %v7968 = vunpack.c.l.b16 %v6404
      %v7969 = vunpack.c.l.b16 %v6405
      %v7970 = vunpack.c.l.b16 %v6406
      %v7971 = vunpack.c.l.b16 %v6407
      %v7972 = vunpack.c.l.b16 %v6408
      %v7973 = vunpack.c.l.b16 %v6409
      %v7974 = vunpack.c.l.b16 %v6410
      %v7975 = vunpack.c.l.b16 %v6411
      %v7976 = vunpack.c.l.b16 %v6412
      %v7977 = vunpack.c.l.b16 %v6413
      %v7978 = vunpack.c.l.b16 %v6414
      %v7979 = vunpack.c.l.b16 %v6415
      %v7980 = vunpack.c.l.b16 %v6416
      %v7981 = vunpack.c.l.b16 %v6417
      %v7982 = vunpack.c.l.b16 %v6418
      %v7983 = vunpack.c.l.b16 %v6419
      %v7984 = vunpack.c.l.b16 %v6420
      %v7985 = vunpack.c.l.b16 %v6421
      %v7986 = vunpack.c.l.b16 %v6422
      %v7987 = vunpack.c.l.b16 %v6423
      %v7988 = vunpack.c.l.b16 %v6424
      %v7989 = vunpack.c.l.b16 %v6425
      %v7990 = vunpack.c.l.b16 %v6426
      %v7991 = vunpack.c.l.b16 %v6427
      %v7992 = vunpack.c.l.b16 %v6428
      %v7993 = vunpack.c.l.b16 %v6429
      %v7994 = vunpack.c.l.b16 %v6430
      %v7995 = vunpack.c.l.b16 %v6431
      %v7996 = vunpack.c.l.b16 %v6432
      %v7997 = vunpack.c.l.b16 %v6433
      %v7998 = vunpack.c.l.b16 %v6434
      %v7999 = vunpack.c.l.b16 %v6435
      %v8000 = vunpack.c.l.b16 %v6436
      %v8001 = vpack.c.b16 %v7966, %v7965
      %v8002 = vpack.c.b16 %v7968, %v7967
      %v8003 = vpack.c.b16 %v7970, %v7969
      %v8004 = vpack.c.b16 %v7972, %v7971
      %v8005 = vpack.c.b16 %v7974, %v7973
      %v8006 = vpack.c.b16 %v7976, %v7975
      %v8007 = vpack.c.b16 %v7978, %v7977
      %v8008 = vpack.c.b16 %v7980, %v7979
      %v8009 = vpack.c.b16 %v7982, %v7981
      %v8010 = vpack.c.b16 %v7984, %v7983
      %v8011 = vpack.c.b16 %v7986, %v7985
      %v8012 = vpack.c.b16 %v7988, %v7987
      %v8013 = vpack.c.b16 %v7990, %v7989
      %v8014 = vpack.c.b16 %v7992, %v7991
      %v8015 = vpack.c.b16 %v7994, %v7993
      %v8016 = vpack.c.b16 %v7996, %v7995
      %v8017 = vpack.c.b16 %v7998, %v7997
      %v8018 = vpack.c.b16 %v8000, %v7999
      %v8038 = vsel %vm520, %v5841, 0
      %v8041 = vsel %vm520, %v5842, 0
      %v8044 = vsel %vm520, %v5843, 0
      %v8047 = vsel %vm520, %v5844, 0
      %v8050 = vsel %vm520, %v5845, 0
      %v8053 = vsel %vm520, %v5846, 0
      %v8056 = vsel %vm520, %v5847, 0
      %v8059 = vsel %vm520, %v5848, 0
      %v8062 = vsel %vm520, %v5849, 0
      %v8065 = vsel %vm520, %v5850, 0
      %v8068 = vsel %vm520, %v5851, 0
      %v8071 = vsel %vm520, %v5852, 0
      %v8074 = vsel %vm520, %v5853, 0
      %v8077 = vsel %vm520, %v5854, 0
      %v8080 = vsel %vm520, %v5855, 0
      %v8083 = vsel %vm520, %v5856, 0
      %8085 = vmatprep.subr.bf16.mxu0 0
      %8086 = vmatpush1.bf16.msra.mxu0 %v8001
      %8087 = vmatprep.subr.bf16.mxu0 0
      %8088 = vmatpush1.bf16.msra.mxu0 %v8002
      %8089 = vmatprep.subr.bf16.mxu0 0
      %8090 = vmatpush1.bf16.msra.mxu0 %v8003
      %8091 = vmatprep.subr.bf16.mxu0 0
      %8092 = vmatpush1.bf16.msra.mxu0 %v8004
      %8093 = vmatprep.subr.bf16.mxu0 0
      %8094 = vmatpush1.bf16.msra.mxu0 %v8005
      %8095 = vmatprep.subr.bf16.mxu0 0
      %8096 = vmatpush1.bf16.msra.mxu0 %v8006
      %8097 = vmatprep.subr.bf16.mxu0 0
      %8098 = vmatpush1.bf16.msra.mxu0 %v8007
      %8099 = vmatprep.subr.bf16.mxu0 0
      %8100 = vmatpush1.bf16.msra.mxu0 %v8008
      %8101 = vmatprep.subr.bf16.mxu0 0
      %8102 = vmatpush1.bf16.msra.mxu0 %v8009
      %8103 = vmatprep.subr.bf16.mxu0 0
      %8104 = vmatpush1.bf16.msra.mxu0 %v8010
      %8105 = vmatprep.subr.bf16.mxu0 0
      %8106 = vmatpush1.bf16.msra.mxu0 %v8011
      %8107 = vmatprep.subr.bf16.mxu0 0
      %8108 = vmatpush1.bf16.msra.mxu0 %v8012
      %8109 = vmatprep.subr.bf16.mxu0 0
      %8110 = vmatpush1.bf16.msra.mxu0 %v8013
      %8111 = vmatprep.subr.bf16.mxu0 0
      %8112 = vmatpush1.bf16.msra.mxu0 %v8014
      %8113 = vmatprep.subr.bf16.mxu0 0
      %8114 = vmatpush1.bf16.msra.mxu0 %v8015
      %8115 = vmatprep.subr.bf16.mxu0 0
      %8116 = vmatpush1.bf16.msra.mxu0 %v8016
      %8117 = vmatprep.mubr.bf16.mxu0 %v6354
      %8118 = vmatmul.mubr.bf16.gmra.mrb[0].mxu0 %v6226
      %v8119 = vpop.f32.mrb[0].mxu0
      %v8120 = vadd.f32 %v7803, %v8119
      %v8121 = vpop.f32.mrb[0].mxu0
      %v8122 = vpop.f32.mrb[0].mxu0
      %v8123 = vadd.f32 %v7806, %v8122
      %v8124 = vpop.f32.mrb[0].mxu0
      %8125 = vmatprep.mubr.bf16.mxu0 %v6357
      %8126 = vmatmul.mubr.bf16.gmra.mrb[0].mxu0 %v6229
      %v8127 = vpop.f32.mrb[0].mxu0
      %v8128 = vadd.f32 %v7811, %v8127
      %v8129 = vpop.f32.mrb[0].mxu0
      %v8130 = vpop.f32.mrb[0].mxu0
      %v8131 = vadd.f32 %v7814, %v8130
      %v8132 = vpop.f32.mrb[0].mxu0
      %8133 = vmatprep.mubr.bf16.mxu0 %v6360
      %8134 = vmatmul.mubr.bf16.gmra.mrb[0].mxu0 %v6232
      %v8135 = vpop.f32.mrb[0].mxu0
      %v8136 = vadd.f32 %v7819, %v8135
      %v8137 = vpop.f32.mrb[0].mxu0
      %v8138 = vpop.f32.mrb[0].mxu0
      %v8139 = vadd.f32 %v7822, %v8138
      %v8140 = vpop.f32.mrb[0].mxu0
      %8141 = vmatprep.mubr.bf16.mxu0 %v6363
      %8142 = vmatmul.mubr.bf16.gmra.mrb[0].mxu0 %v6235
      %v8143 = vpop.f32.mrb[0].mxu0
      %v8144 = vadd.f32 %v7827, %v8143
      %v8145 = vpop.f32.mrb[0].mxu0
      %v8146 = vpop.f32.mrb[0].mxu0
      %v8147 = vadd.f32 %v7830, %v8146
      %v8148 = vpop.f32.mrb[0].mxu0
      %8149 = vmatprep.mubr.bf16.mxu0 %v6366
      %8150 = vmatmul.mubr.bf16.gmra.mrb[0].mxu0 %v6238
      %v8151 = vpop.f32.mrb[0].mxu0
      %v8152 = vadd.f32 %v7835, %v8151
      %v8153 = vpop.f32.mrb[0].mxu0
      %v8154 = vpop.f32.mrb[0].mxu0
      %v8155 = vadd.f32 %v7838, %v8154
      %v8156 = vpop.f32.mrb[0].mxu0
      %8157 = vmatprep.mubr.bf16.mxu0 %v6369
      %8158 = vmatmul.mubr.bf16.gmra.mrb[0].mxu0 %v6241
      %v8159 = vpop.f32.mrb[0].mxu0
      %v8160 = vadd.f32 %v7843, %v8159
      %v8161 = vpop.f32.mrb[0].mxu0
      %v8162 = vpop.f32.mrb[0].mxu0
      %v8163 = vadd.f32 %v7846, %v8162
      %v8164 = vpop.f32.mrb[0].mxu0
      %8165 = vmatprep.mubr.bf16.mxu0 %v6372
      %8166 = vmatmul.mubr.bf16.gmra.mrb[0].mxu0 %v6244
      %v8167 = vpop.f32.mrb[0].mxu0
      %v8168 = vadd.f32 %v7851, %v8167
      %v8169 = vpop.f32.mrb[0].mxu0
      %v8170 = vpop.f32.mrb[0].mxu0
      %v8171 = vadd.f32 %v7854, %v8170
      %v8172 = vpop.f32.mrb[0].mxu0
      %8173 = vmatprep.mubr.bf16.mxu0 %v6375
      %8174 = vmatmul.mubr.bf16.gmra.mrb[0].mxu0 %v6247
      %v8175 = vpop.f32.mrb[0].mxu0
      %v8176 = vadd.f32 %v7859, %v8175
      %v8177 = vpop.f32.mrb[0].mxu0
      %v8178 = vpop.f32.mrb[0].mxu0
      %v8179 = vadd.f32 %v7862, %v8178
      %v8180 = vpop.f32.mrb[0].mxu0
      %8181 = vmatprep.mubr.bf16.mxu0 %v6378
      %8182 = vmatmul.mubr.bf16.gmra.mrb[0].mxu0 %v6250
      %v8183 = vpop.f32.mrb[0].mxu0
      %v8184 = vadd.f32 %v7867, %v8183
      %v8185 = vpop.f32.mrb[0].mxu0
      %v8186 = vpop.f32.mrb[0].mxu0
      %v8187 = vadd.f32 %v7870, %v8186
      %v8188 = vpop.f32.mrb[0].mxu0
      %8189 = vmatprep.mubr.bf16.mxu0 %v6381
      %8190 = vmatmul.mubr.bf16.gmra.mrb[0].mxu0 %v6253
      %v8191 = vpop.f32.mrb[0].mxu0
      %v8192 = vadd.f32 %v7875, %v8191
      %v8193 = vpop.f32.mrb[0].mxu0
      %v8194 = vpop.f32.mrb[0].mxu0
      %v8195 = vadd.f32 %v7878, %v8194
      %v8196 = vpop.f32.mrb[0].mxu0
      %8197 = vmatprep.mubr.bf16.mxu0 %v6384
      %8198 = vmatmul.mubr.bf16.gmra.mrb[0].mxu0 %v6256
      %v8199 = vpop.f32.mrb[0].mxu0
      %v8200 = vadd.f32 %v7883, %v8199
      %v8201 = vpop.f32.mrb[0].mxu0
      %v8202 = vpop.f32.mrb[0].mxu0
      %v8203 = vadd.f32 %v7886, %v8202
      %v8204 = vpop.f32.mrb[0].mxu0
      %8205 = vmatprep.mubr.bf16.mxu0 %v6387
      %8206 = vmatmul.mubr.bf16.gmra.mrb[0].mxu0 %v6259
      %v8207 = vpop.f32.mrb[0].mxu0
      %v8208 = vadd.f32 %v7891, %v8207
      %v8209 = vpop.f32.mrb[0].mxu0
      %v8210 = vpop.f32.mrb[0].mxu0
      %v8211 = vadd.f32 %v7894, %v8210
      %v8212 = vpop.f32.mrb[0].mxu0
      %8213 = vmatprep.mubr.bf16.mxu0 %v6390
      %8214 = vmatmul.mubr.bf16.gmra.mrb[0].mxu0 %v6262
      %v8215 = vpop.f32.mrb[0].mxu0
      %v8216 = vadd.f32 %v7899, %v8215
      %v8217 = vpop.f32.mrb[0].mxu0
      %v8218 = vpop.f32.mrb[0].mxu0
      %v8219 = vadd.f32 %v7902, %v8218
      %v8220 = vpop.f32.mrb[0].mxu0
      %8221 = vmatprep.mubr.bf16.mxu0 %v6393
      %8222 = vmatmul.mubr.bf16.gmra.mrb[0].mxu0 %v6265
      %v8223 = vpop.f32.mrb[0].mxu0
      %v8224 = vadd.f32 %v7907, %v8223
      %v8225 = vpop.f32.mrb[0].mxu0
      %v8226 = vpop.f32.mrb[0].mxu0
      %v8227 = vadd.f32 %v7910, %v8226
      %v8228 = vpop.f32.mrb[0].mxu0
      %8229 = vmatprep.mubr.bf16.mxu0 %v6396
      %8230 = vmatmul.mubr.bf16.gmra.mrb[0].mxu0 %v6268
      %v8231 = vpop.f32.mrb[0].mxu0
      %v8232 = vadd.f32 %v7915, %v8231
      %v8233 = vpop.f32.mrb[0].mxu0
      %v8234 = vpop.f32.mrb[0].mxu0
      %v8235 = vadd.f32 %v7918, %v8234
      %v8236 = vpop.f32.mrb[0].mxu0
      %8237 = vmatprep.mubr.bf16.mxu0 %v6399
      %8238 = vmatmul.mubr.bf16.gmra.mrb[0].mxu0 %v6271
      %v8239 = vpop.f32.mrb[0].mxu0
      %v8240 = vadd.f32 %v7923, %v8239
      %v8241 = vpop.f32.mrb[0].mxu0
      %v8242 = vpop.f32.mrb[0].mxu0
      %v8243 = vadd.f32 %v7926, %v8242
      %v8244 = vpop.f32.mrb[0].mxu0
      %8245 = vdwg.mxu0
      %8246 = vmatprep.subr.bf16.mxu0 0
      %8247 = vmatpush1.bf16.msra.mxu0 %v8017
      %8248 = vmatprep.subr.bf16.mxu0 0
      %8249 = vmatpush1.bf16.msra.mxu0 %v8018
      %8250 = vmatprep.subr.bf16.mxu0 0
      %8251 = vmatpush1.bf16.msra.mxu0 0
      %8252 = vmatprep.subr.bf16.mxu0 0
      %8253 = vmatpush1.bf16.msra.mxu0 0
      %8254 = vmatprep.subr.bf16.mxu0 0
      %8255 = vmatpush1.bf16.msra.mxu0 0
      %8256 = vmatprep.subr.bf16.mxu0 0
      %8257 = vmatpush1.bf16.msra.mxu0 0
      %8258 = vmatprep.subr.bf16.mxu0 0
      %8259 = vmatpush1.bf16.msra.mxu0 0
      %8260 = vmatprep.subr.bf16.mxu0 0
      %8261 = vmatpush1.bf16.msra.mxu0 0
      %8262 = vmatprep.subr.bf16.mxu0 0
      %8263 = vmatpush1.bf16.msra.mxu0 0
      %8264 = vmatprep.subr.bf16.mxu0 0
      %8265 = vmatpush1.bf16.msra.mxu0 0
      %8266 = vmatprep.subr.bf16.mxu0 0
      %8267 = vmatpush1.bf16.msra.mxu0 0
      %8268 = vmatprep.subr.bf16.mxu0 0
      %8269 = vmatpush1.bf16.msra.mxu0 0
      %8270 = vmatprep.subr.bf16.mxu0 0
      %8271 = vmatpush1.bf16.msra.mxu0 0
      %8272 = vmatprep.subr.bf16.mxu0 0
      %8273 = vmatpush1.bf16.msra.mxu0 0
      %8274 = vmatprep.subr.bf16.mxu0 0
      %8275 = vmatpush1.bf16.msra.mxu0 0
      %8276 = vmatprep.subr.bf16.mxu0 0
      %8277 = vmatpush1.bf16.msra.mxu0 0
      %8278 = vmatprep.mubr.bf16.mxu0 0
      %8279 = vmatmul.mubr.bf16.gmra.mrb[0].mxu0 %v8038
      %v8280 = vpop.f32.mrb[0].mxu0
      %v8281 = vadd.f32 %v8120, %v8280
      %v8282 = vpop.f32.mrb[0].mxu0
      %v8283 = vpop.f32.mrb[0].mxu0
      %v8284 = vadd.f32 %v8123, %v8283
      %v8285 = vpop.f32.mrb[0].mxu0
      %8286 = vmatprep.mubr.bf16.mxu0 0
      %8287 = vmatmul.mubr.bf16.gmra.mrb[0].mxu0 %v8041
      %v8288 = vpop.f32.mrb[0].mxu0
      %v8289 = vadd.f32 %v8128, %v8288
      %v8290 = vpop.f32.mrb[0].mxu0
      %v8291 = vpop.f32.mrb[0].mxu0
      %v8292 = vadd.f32 %v8131, %v8291
      %v8293 = vpop.f32.mrb[0].mxu0
      %8294 = vmatprep.mubr.bf16.mxu0 0
      %8295 = vmatmul.mubr.bf16.gmra.mrb[0].mxu0 %v8044
      %v8296 = vpop.f32.mrb[0].mxu0
      %v8297 = vadd.f32 %v8136, %v8296
      %v8298 = vpop.f32.mrb[0].mxu0
      %v8299 = vpop.f32.mrb[0].mxu0
      %v8300 = vadd.f32 %v8139, %v8299
      %v8301 = vpop.f32.mrb[0].mxu0
      %8302 = vmatprep.mubr.bf16.mxu0 0
      %8303 = vmatmul.mubr.bf16.gmra.mrb[0].mxu0 %v8047
      %v8304 = vpop.f32.mrb[0].mxu0
      %v8305 = vadd.f32 %v8144, %v8304
      %v8306 = vpop.f32.mrb[0].mxu0
      %v8307 = vpop.f32.mrb[0].mxu0
      %v8308 = vadd.f32 %v8147, %v8307
      %v8309 = vpop.f32.mrb[0].mxu0
      %8310 = vmatprep.mubr.bf16.mxu0 0
      %8311 = vmatmul.mubr.bf16.gmra.mrb[0].mxu0 %v8050
      %v8312 = vpop.f32.mrb[0].mxu0
      %v8313 = vadd.f32 %v8152, %v8312
      %v8314 = vpop.f32.mrb[0].mxu0
      %v8315 = vpop.f32.mrb[0].mxu0
      %v8316 = vadd.f32 %v8155, %v8315
      %v8317 = vpop.f32.mrb[0].mxu0
      %8318 = vmatprep.mubr.bf16.mxu0 0
      %8319 = vmatmul.mubr.bf16.gmra.mrb[0].mxu0 %v8053
      %v8320 = vpop.f32.mrb[0].mxu0
      %v8321 = vadd.f32 %v8160, %v8320
      %v8322 = vpop.f32.mrb[0].mxu0
      %v8323 = vpop.f32.mrb[0].mxu0
      %v8324 = vadd.f32 %v8163, %v8323
      %v8325 = vpop.f32.mrb[0].mxu0
      %8326 = vmatprep.mubr.bf16.mxu0 0
      %8327 = vmatmul.mubr.bf16.gmra.mrb[0].mxu0 %v8056
      %v8328 = vpop.f32.mrb[0].mxu0
      %v8329 = vadd.f32 %v8168, %v8328
      %v8330 = vpop.f32.mrb[0].mxu0
      %v8331 = vpop.f32.mrb[0].mxu0
      %v8332 = vadd.f32 %v8171, %v8331
      %v8333 = vpop.f32.mrb[0].mxu0
      %8334 = vmatprep.mubr.bf16.mxu0 0
      %8335 = vmatmul.mubr.bf16.gmra.mrb[0].mxu0 %v8059
      %v8336 = vpop.f32.mrb[0].mxu0
      %v8337 = vadd.f32 %v8176, %v8336
      %v8338 = vpop.f32.mrb[0].mxu0
      %v8339 = vpop.f32.mrb[0].mxu0
      %v8340 = vadd.f32 %v8179, %v8339
      %v8341 = vpop.f32.mrb[0].mxu0
      %8342 = vmatprep.mubr.bf16.mxu0 0
      %8343 = vmatmul.mubr.bf16.gmra.mrb[0].mxu0 %v8062
      %v8344 = vpop.f32.mrb[0].mxu0
      %v8345 = vadd.f32 %v8184, %v8344
      %v8346 = vpop.f32.mrb[0].mxu0
      %v8347 = vpop.f32.mrb[0].mxu0
      %v8348 = vadd.f32 %v8187, %v8347
      %v8349 = vpop.f32.mrb[0].mxu0
      %8350 = vmatprep.mubr.bf16.mxu0 0
      %8351 = vmatmul.mubr.bf16.gmra.mrb[0].mxu0 %v8065
      %v8352 = vpop.f32.mrb[0].mxu0
      %v8353 = vadd.f32 %v8192, %v8352
      %v8354 = vpop.f32.mrb[0].mxu0
      %v8355 = vpop.f32.mrb[0].mxu0
      %v8356 = vadd.f32 %v8195, %v8355
      %v8357 = vpop.f32.mrb[0].mxu0
      %8358 = vmatprep.mubr.bf16.mxu0 0
      %8359 = vmatmul.mubr.bf16.gmra.mrb[0].mxu0 %v8068
      %v8360 = vpop.f32.mrb[0].mxu0
      %v8361 = vadd.f32 %v8200, %v8360
      %v8362 = vpop.f32.mrb[0].mxu0
      %v8363 = vpop.f32.mrb[0].mxu0
      %v8364 = vadd.f32 %v8203, %v8363
      %v8365 = vpop.f32.mrb[0].mxu0
      %8366 = vmatprep.mubr.bf16.mxu0 0
      %8367 = vmatmul.mubr.bf16.gmra.mrb[0].mxu0 %v8071
      %v8368 = vpop.f32.mrb[0].mxu0
      %v8369 = vadd.f32 %v8208, %v8368
      %v8370 = vpop.f32.mrb[0].mxu0
      %v8371 = vpop.f32.mrb[0].mxu0
      %v8372 = vadd.f32 %v8211, %v8371
      %v8373 = vpop.f32.mrb[0].mxu0
      %8374 = vmatprep.mubr.bf16.mxu0 0
      %8375 = vmatmul.mubr.bf16.gmra.mrb[0].mxu0 %v8074
      %v8376 = vpop.f32.mrb[0].mxu0
      %v8377 = vadd.f32 %v8216, %v8376
      %v8378 = vpop.f32.mrb[0].mxu0
      %v8379 = vpop.f32.mrb[0].mxu0
      %v8380 = vadd.f32 %v8219, %v8379
      %v8381 = vpop.f32.mrb[0].mxu0
      %8382 = vmatprep.mubr.bf16.mxu0 0
      %8383 = vmatmul.mubr.bf16.gmra.mrb[0].mxu0 %v8077
      %v8384 = vpop.f32.mrb[0].mxu0
      %v8385 = vadd.f32 %v8224, %v8384
      %v8386 = vpop.f32.mrb[0].mxu0
      %v8387 = vpop.f32.mrb[0].mxu0
      %v8388 = vadd.f32 %v8227, %v8387
      %v8389 = vpop.f32.mrb[0].mxu0
      %8390 = vmatprep.mubr.bf16.mxu0 0
      %8391 = vmatmul.mubr.bf16.gmra.mrb[0].mxu0 %v8080
      %v8392 = vpop.f32.mrb[0].mxu0
      %v8393 = vadd.f32 %v8232, %v8392
      %v8394 = vpop.f32.mrb[0].mxu0
      %v8395 = vpop.f32.mrb[0].mxu0
      %v8396 = vadd.f32 %v8235, %v8395
      %v8397 = vpop.f32.mrb[0].mxu0
      %8398 = vmatprep.mubr.bf16.mxu0 0
      %8399 = vmatmul.mubr.bf16.gmra.mrb[0].mxu0 %v8083
      %v8400 = vpop.f32.mrb[0].mxu0
      %v8401 = vadd.f32 %v8240, %v8400
      %v8402 = vpop.f32.mrb[0].mxu0
      %v8403 = vpop.f32.mrb[0].mxu0
      %v8404 = vadd.f32 %v8243, %v8403
      %v8405 = vpop.f32.mrb[0].mxu0
      %8406 = vdwg.mxu0
      %s8407 = scalar_lea.vmem [#allocation3], 320
      %v8408 = vld [vmem:[%s8407] sm:$0xff]
      %v8409 = vld [vmem:[%s8407 + $0x10] sm:$0xff]
      %v8410 = vld [vmem:[%s8407 + $0x20] sm:$0xff]
      %v8411 = vld [vmem:[%s8407 + $0x30] sm:$0xff]
      %v8412 = vld [vmem:[%s8407 + $0x40] sm:$0xff]
      %v8413 = vld [vmem:[%s8407 + $0x50] sm:$0xff]
      %v8414 = vld [vmem:[%s8407 + $0x60] sm:$0xff]
      %v8415 = vld [vmem:[%s8407 + $0x70] sm:$0xff]
      %v8416 = vld [vmem:[%s8407 + $0xa0] sm:$0xff]
      %v8417 = vld [vmem:[%s8407 + $0xb0] sm:$0xff]
      %v8418 = vld [vmem:[%s8407 + $0xc0] sm:$0xff]
      %v8419 = vld [vmem:[%s8407 + $0xd0] sm:$0xff]
      %v8420 = vld [vmem:[%s8407 + $0xe0] sm:$0xff]
      %v8421 = vld [vmem:[%s8407 + $0xf0] sm:$0xff]
      %v8422 = vld [vmem:[%s8407 + $0x100] sm:$0xff]
      %v8423 = vld [vmem:[%s8407 + $0x110] sm:$0xff]
      %v8424 = vld [vmem:[%s8407 + $0x140] sm:$0xff]
      %v8425 = vld [vmem:[%s8407 + $0x150] sm:$0xff]
      %v8426 = vld [vmem:[%s8407 + $0x160] sm:$0xff]
      %v8427 = vld [vmem:[%s8407 + $0x170] sm:$0xff]
      %v8428 = vld [vmem:[%s8407 + $0x180] sm:$0xff]
      %v8429 = vld [vmem:[%s8407 + $0x190] sm:$0xff]
      %v8430 = vld [vmem:[%s8407 + $0x1a0] sm:$0xff]
      %v8431 = vld [vmem:[%s8407 + $0x1b0] sm:$0xff]
      %v8432 = vld [vmem:[%s8407 + $0x1e0] sm:$0xff]
      %v8433 = vld [vmem:[%s8407 + $0x1f0] sm:$0xff]
      %v8434 = vld [vmem:[%s8407 + $0x200] sm:$0xff]
      %v8435 = vld [vmem:[%s8407 + $0x210] sm:$0xff]
      %v8436 = vld [vmem:[%s8407 + $0x220] sm:$0xff]
      %v8437 = vld [vmem:[%s8407 + $0x230] sm:$0xff]
      %v8438 = vld [vmem:[%s8407 + $0x240] sm:$0xff]
      %v8439 = vld [vmem:[%s8407 + $0x250] sm:$0xff]
      %v8440 = vpack.c.bf16 %v8409, %v8408
      %v8441 = vpack.c.bf16 %v8411, %v8410
      %v8442 = vpack.c.bf16 %v8413, %v8412
      %v8443 = vpack.c.bf16 %v8415, %v8414
      %v8444 = vpack.c.bf16 %v8417, %v8416
      %v8445 = vpack.c.bf16 %v8419, %v8418
      %v8446 = vpack.c.bf16 %v8421, %v8420
      %v8447 = vpack.c.bf16 %v8423, %v8422
      %v8448 = vpack.c.bf16 %v8425, %v8424
      %v8449 = vpack.c.bf16 %v8427, %v8426
      %v8450 = vpack.c.bf16 %v8429, %v8428
      %v8451 = vpack.c.bf16 %v8431, %v8430
      %v8452 = vpack.c.bf16 %v8433, %v8432
      %v8453 = vpack.c.bf16 %v8435, %v8434
      %v8454 = vpack.c.bf16 %v8437, %v8436
      %v8455 = vpack.c.bf16 %v8439, %v8438
      %v8456 = vld [vmem:[%s8407 + $0x1] sm:$0xff]
      %v8457 = vld [vmem:[%s8407 + $0x11] sm:$0xff]
      %v8458 = vld [vmem:[%s8407 + $0x21] sm:$0xff]
      %v8459 = vld [vmem:[%s8407 + $0x31] sm:$0xff]
      %v8460 = vld [vmem:[%s8407 + $0x41] sm:$0xff]
      %v8461 = vld [vmem:[%s8407 + $0x51] sm:$0xff]
      %v8462 = vld [vmem:[%s8407 + $0x61] sm:$0xff]
      %v8463 = vld [vmem:[%s8407 + $0x71] sm:$0xff]
      %v8464 = vld [vmem:[%s8407 + $0xa1] sm:$0xff]
      %v8465 = vld [vmem:[%s8407 + $0xb1] sm:$0xff]
      %v8466 = vld [vmem:[%s8407 + $0xc1] sm:$0xff]
      %v8467 = vld [vmem:[%s8407 + $0xd1] sm:$0xff]
      %v8468 = vld [vmem:[%s8407 + $0xe1] sm:$0xff]
      %v8469 = vld [vmem:[%s8407 + $0xf1] sm:$0xff]
      %v8470 = vld [vmem:[%s8407 + $0x101] sm:$0xff]
      %v8471 = vld [vmem:[%s8407 + $0x111] sm:$0xff]
      %v8472 = vld [vmem:[%s8407 + $0x141] sm:$0xff]
      %v8473 = vld [vmem:[%s8407 + $0x151] sm:$0xff]
      %v8474 = vld [vmem:[%s8407 + $0x161] sm:$0xff]
      %v8475 = vld [vmem:[%s8407 + $0x171] sm:$0xff]
      %v8476 = vld [vmem:[%s8407 + $0x181] sm:$0xff]
      %v8477 = vld [vmem:[%s8407 + $0x191] sm:$0xff]
      %v8478 = vld [vmem:[%s8407 + $0x1a1] sm:$0xff]
      %v8479 = vld [vmem:[%s8407 + $0x1b1] sm:$0xff]
      %v8480 = vld [vmem:[%s8407 + $0x1e1] sm:$0xff]
      %v8481 = vld [vmem:[%s8407 + $0x1f1] sm:$0xff]
      %v8482 = vld [vmem:[%s8407 + $0x201] sm:$0xff]
      %v8483 = vld [vmem:[%s8407 + $0x211] sm:$0xff]
      %v8484 = vld [vmem:[%s8407 + $0x221] sm:$0xff]
      %v8485 = vld [vmem:[%s8407 + $0x231] sm:$0xff]
      %v8486 = vld [vmem:[%s8407 + $0x241] sm:$0xff]
      %v8487 = vld [vmem:[%s8407 + $0x251] sm:$0xff]
      %v8488 = vpack.c.bf16 %v8457, %v8456
      %v8489 = vpack.c.bf16 %v8459, %v8458
      %v8490 = vpack.c.bf16 %v8461, %v8460
      %v8491 = vpack.c.bf16 %v8463, %v8462
      %v8492 = vpack.c.bf16 %v8465, %v8464
      %v8493 = vpack.c.bf16 %v8467, %v8466
      %v8494 = vpack.c.bf16 %v8469, %v8468
      %v8495 = vpack.c.bf16 %v8471, %v8470
      %v8496 = vpack.c.bf16 %v8473, %v8472
      %v8497 = vpack.c.bf16 %v8475, %v8474
      %v8498 = vpack.c.bf16 %v8477, %v8476
      %v8499 = vpack.c.bf16 %v8479, %v8478
      %v8500 = vpack.c.bf16 %v8481, %v8480
      %v8501 = vpack.c.bf16 %v8483, %v8482
      %v8502 = vpack.c.bf16 %v8485, %v8484
      %v8503 = vpack.c.bf16 %v8487, %v8486
      %v8504 = vld [vmem:[%s8407 + $0x2] sm:$0xff]
      %v8505 = vld [vmem:[%s8407 + $0x12] sm:$0xff]
      %v8506 = vld [vmem:[%s8407 + $0x22] sm:$0xff]
      %v8507 = vld [vmem:[%s8407 + $0x32] sm:$0xff]
      %v8508 = vld [vmem:[%s8407 + $0x42] sm:$0xff]
      %v8509 = vld [vmem:[%s8407 + $0x52] sm:$0xff]
      %v8510 = vld [vmem:[%s8407 + $0x62] sm:$0xff]
      %v8511 = vld [vmem:[%s8407 + $0x72] sm:$0xff]
      %v8512 = vld [vmem:[%s8407 + $0xa2] sm:$0xff]
      %v8513 = vld [vmem:[%s8407 + $0xb2] sm:$0xff]
      %v8514 = vld [vmem:[%s8407 + $0xc2] sm:$0xff]
      %v8515 = vld [vmem:[%s8407 + $0xd2] sm:$0xff]
      %v8516 = vld [vmem:[%s8407 + $0xe2] sm:$0xff]
      %v8517 = vld [vmem:[%s8407 + $0xf2] sm:$0xff]
      %v8518 = vld [vmem:[%s8407 + $0x102] sm:$0xff]
      %v8519 = vld [vmem:[%s8407 + $0x112] sm:$0xff]
      %v8520 = vld [vmem:[%s8407 + $0x142] sm:$0xff]
      %v8521 = vld [vmem:[%s8407 + $0x152] sm:$0xff]
      %v8522 = vld [vmem:[%s8407 + $0x162] sm:$0xff]
      %v8523 = vld [vmem:[%s8407 + $0x172] sm:$0xff]
      %v8524 = vld [vmem:[%s8407 + $0x182] sm:$0xff]
      %v8525 = vld [vmem:[%s8407 + $0x192] sm:$0xff]
      %v8526 = vld [vmem:[%s8407 + $0x1a2] sm:$0xff]
      %v8527 = vld [vmem:[%s8407 + $0x1b2] sm:$0xff]
      %v8528 = vld [vmem:[%s8407 + $0x1e2] sm:$0xff]
      %v8529 = vld [vmem:[%s8407 + $0x1f2] sm:$0xff]
      %v8530 = vld [vmem:[%s8407 + $0x202] sm:$0xff]
      %v8531 = vld [vmem:[%s8407 + $0x212] sm:$0xff]
      %v8532 = vld [vmem:[%s8407 + $0x222] sm:$0xff]
      %v8533 = vld [vmem:[%s8407 + $0x232] sm:$0xff]
      %v8534 = vld [vmem:[%s8407 + $0x242] sm:$0xff]
      %v8535 = vld [vmem:[%s8407 + $0x252] sm:$0xff]
      %v8536 = vpack.c.bf16 %v8505, %v8504
      %v8537 = vpack.c.bf16 %v8507, %v8506
      %v8538 = vpack.c.bf16 %v8509, %v8508
      %v8539 = vpack.c.bf16 %v8511, %v8510
      %v8540 = vpack.c.bf16 %v8513, %v8512
      %v8541 = vpack.c.bf16 %v8515, %v8514
      %v8542 = vpack.c.bf16 %v8517, %v8516
      %v8543 = vpack.c.bf16 %v8519, %v8518
      %v8544 = vpack.c.bf16 %v8521, %v8520
      %v8545 = vpack.c.bf16 %v8523, %v8522
      %v8546 = vpack.c.bf16 %v8525, %v8524
      %v8547 = vpack.c.bf16 %v8527, %v8526
      %v8548 = vpack.c.bf16 %v8529, %v8528
      %v8549 = vpack.c.bf16 %v8531, %v8530
      %v8550 = vpack.c.bf16 %v8533, %v8532
      %v8551 = vpack.c.bf16 %v8535, %v8534
      %s8552 = scalar_lea.vmem [#allocation3], 336
      %v8553 = vld [vmem:[%s8552] sm:$0xff]
      %v8554 = vld [vmem:[%s8552 + $0x10] sm:$0xff]
      %v8555 = vld [vmem:[%s8552 + $0x20] sm:$0xff]
      %v8556 = vld [vmem:[%s8552 + $0x30] sm:$0xff]
      %v8557 = vld [vmem:[%s8552 + $0x40] sm:$0xff]
      %v8558 = vld [vmem:[%s8552 + $0x50] sm:$0xff]
      %v8559 = vld [vmem:[%s8552 + $0x60] sm:$0xff]
      %v8560 = vld [vmem:[%s8552 + $0x70] sm:$0xff]
      %v8561 = vld [vmem:[%s8552 + $0xa0] sm:$0xff]
      %v8562 = vld [vmem:[%s8552 + $0xb0] sm:$0xff]
      %v8563 = vld [vmem:[%s8552 + $0xc0] sm:$0xff]
      %v8564 = vld [vmem:[%s8552 + $0xd0] sm:$0xff]
      %v8565 = vld [vmem:[%s8552 + $0xe0] sm:$0xff]
      %v8566 = vld [vmem:[%s8552 + $0xf0] sm:$0xff]
      %v8567 = vld [vmem:[%s8552 + $0x100] sm:$0xff]
      %v8568 = vld [vmem:[%s8552 + $0x110] sm:$0xff]
      %v8569 = vld [vmem:[%s8552 + $0x140] sm:$0xff]
      %v8570 = vld [vmem:[%s8552 + $0x150] sm:$0xff]
      %v8571 = vld [vmem:[%s8552 + $0x160] sm:$0xff]
      %v8572 = vld [vmem:[%s8552 + $0x170] sm:$0xff]
      %v8573 = vld [vmem:[%s8552 + $0x180] sm:$0xff]
      %v8574 = vld [vmem:[%s8552 + $0x190] sm:$0xff]
      %v8575 = vld [vmem:[%s8552 + $0x1a0] sm:$0xff]
      %v8576 = vld [vmem:[%s8552 + $0x1b0] sm:$0xff]
      %v8577 = vld [vmem:[%s8552 + $0x1e0] sm:$0xff]
      %v8578 = vld [vmem:[%s8552 + $0x1f0] sm:$0xff]
      %v8579 = vld [vmem:[%s8552 + $0x200] sm:$0xff]
      %v8580 = vld [vmem:[%s8552 + $0x210] sm:$0xff]
      %v8581 = vld [vmem:[%s8552 + $0x220] sm:$0xff]
      %v8582 = vld [vmem:[%s8552 + $0x230] sm:$0xff]
      %v8583 = vld [vmem:[%s8552 + $0x240] sm:$0xff]
      %v8584 = vld [vmem:[%s8552 + $0x250] sm:$0xff]
      %v8585 = vpack.c.bf16 %v8554, %v8553
      %v8586 = vpack.c.bf16 %v8556, %v8555
      %v8587 = vpack.c.bf16 %v8558, %v8557
      %v8588 = vpack.c.bf16 %v8560, %v8559
      %v8589 = vpack.c.bf16 %v8562, %v8561
      %v8590 = vpack.c.bf16 %v8564, %v8563
      %v8591 = vpack.c.bf16 %v8566, %v8565
      %v8592 = vpack.c.bf16 %v8568, %v8567
      %v8593 = vpack.c.bf16 %v8570, %v8569
      %v8594 = vpack.c.bf16 %v8572, %v8571
      %v8595 = vpack.c.bf16 %v8574, %v8573
      %v8596 = vpack.c.bf16 %v8576, %v8575
      %v8597 = vpack.c.bf16 %v8578, %v8577
      %v8598 = vpack.c.bf16 %v8580, %v8579
      %v8599 = vpack.c.bf16 %v8582, %v8581
      %v8600 = vpack.c.bf16 %v8584, %v8583
      %v8601 = vld [vmem:[%s8552 + $0x1] sm:$0xff]
      %v8602 = vld [vmem:[%s8552 + $0x11] sm:$0xff]
      %v8603 = vld [vmem:[%s8552 + $0x21] sm:$0xff]
      %v8604 = vld [vmem:[%s8552 + $0x31] sm:$0xff]
      %v8605 = vld [vmem:[%s8552 + $0x41] sm:$0xff]
      %v8606 = vld [vmem:[%s8552 + $0x51] sm:$0xff]
      %v8607 = vld [vmem:[%s8552 + $0x61] sm:$0xff]
      %v8608 = vld [vmem:[%s8552 + $0x71] sm:$0xff]
      %v8609 = vld [vmem:[%s8552 + $0xa1] sm:$0xff]
      %v8610 = vld [vmem:[%s8552 + $0xb1] sm:$0xff]
      %v8611 = vld [vmem:[%s8552 + $0xc1] sm:$0xff]
      %v8612 = vld [vmem:[%s8552 + $0xd1] sm:$0xff]
      %v8613 = vld [vmem:[%s8552 + $0xe1] sm:$0xff]
      %v8614 = vld [vmem:[%s8552 + $0xf1] sm:$0xff]
      %v8615 = vld [vmem:[%s8552 + $0x101] sm:$0xff]
      %v8616 = vld [vmem:[%s8552 + $0x111] sm:$0xff]
      %v8617 = vld [vmem:[%s8552 + $0x141] sm:$0xff]
      %v8618 = vld [vmem:[%s8552 + $0x151] sm:$0xff]
      %v8619 = vld [vmem:[%s8552 + $0x161] sm:$0xff]
      %v8620 = vld [vmem:[%s8552 + $0x171] sm:$0xff]
      %v8621 = vld [vmem:[%s8552 + $0x181] sm:$0xff]
      %v8622 = vld [vmem:[%s8552 + $0x191] sm:$0xff]
      %v8623 = vld [vmem:[%s8552 + $0x1a1] sm:$0xff]
      %v8624 = vld [vmem:[%s8552 + $0x1b1] sm:$0xff]
      %v8625 = vld [vmem:[%s8552 + $0x1e1] sm:$0xff]
      %v8626 = vld [vmem:[%s8552 + $0x1f1] sm:$0xff]
      %v8627 = vld [vmem:[%s8552 + $0x201] sm:$0xff]
      %v8628 = vld [vmem:[%s8552 + $0x211] sm:$0xff]
      %v8629 = vld [vmem:[%s8552 + $0x221] sm:$0xff]
      %v8630 = vld [vmem:[%s8552 + $0x231] sm:$0xff]
      %v8631 = vld [vmem:[%s8552 + $0x241] sm:$0xff]
      %v8632 = vld [vmem:[%s8552 + $0x251] sm:$0xff]
      %v8633 = vpack.c.bf16 %v8602, %v8601
      %v8634 = vpack.c.bf16 %v8604, %v8603
      %v8635 = vpack.c.bf16 %v8606, %v8605
      %v8636 = vpack.c.bf16 %v8608, %v8607
      %v8637 = vpack.c.bf16 %v8610, %v8609
      %v8638 = vpack.c.bf16 %v8612, %v8611
      %v8639 = vpack.c.bf16 %v8614, %v8613
      %v8640 = vpack.c.bf16 %v8616, %v8615
      %v8641 = vpack.c.bf16 %v8618, %v8617
      %v8642 = vpack.c.bf16 %v8620, %v8619
      %v8643 = vpack.c.bf16 %v8622, %v8621
      %v8644 = vpack.c.bf16 %v8624, %v8623
      %v8645 = vpack.c.bf16 %v8626, %v8625
      %v8646 = vpack.c.bf16 %v8628, %v8627
      %v8647 = vpack.c.bf16 %v8630, %v8629
      %v8648 = vpack.c.bf16 %v8632, %v8631
      %v8649 = vld [vmem:[%s8552 + $0x2] sm:$0xff]
      %v8650 = vld [vmem:[%s8552 + $0x12] sm:$0xff]
      %v8651 = vld [vmem:[%s8552 + $0x22] sm:$0xff]
      %v8652 = vld [vmem:[%s8552 + $0x32] sm:$0xff]
      %v8653 = vld [vmem:[%s8552 + $0x42] sm:$0xff]
      %v8654 = vld [vmem:[%s8552 + $0x52] sm:$0xff]
      %v8655 = vld [vmem:[%s8552 + $0x62] sm:$0xff]
      %v8656 = vld [vmem:[%s8552 + $0x72] sm:$0xff]
      %v8657 = vld [vmem:[%s8552 + $0xa2] sm:$0xff]
      %v8658 = vld [vmem:[%s8552 + $0xb2] sm:$0xff]
      %v8659 = vld [vmem:[%s8552 + $0xc2] sm:$0xff]
      %v8660 = vld [vmem:[%s8552 + $0xd2] sm:$0xff]
      %v8661 = vld [vmem:[%s8552 + $0xe2] sm:$0xff]
      %v8662 = vld [vmem:[%s8552 + $0xf2] sm:$0xff]
      %v8663 = vld [vmem:[%s8552 + $0x102] sm:$0xff]
      %v8664 = vld [vmem:[%s8552 + $0x112] sm:$0xff]
      %v8665 = vld [vmem:[%s8552 + $0x142] sm:$0xff]
      %v8666 = vld [vmem:[%s8552 + $0x152] sm:$0xff]
      %v8667 = vld [vmem:[%s8552 + $0x162] sm:$0xff]
      %v8668 = vld [vmem:[%s8552 + $0x172] sm:$0xff]
      %v8669 = vld [vmem:[%s8552 + $0x182] sm:$0xff]
      %v8670 = vld [vmem:[%s8552 + $0x192] sm:$0xff]
      %v8671 = vld [vmem:[%s8552 + $0x1a2] sm:$0xff]
      %v8672 = vld [vmem:[%s8552 + $0x1b2] sm:$0xff]
      %v8673 = vld [vmem:[%s8552 + $0x1e2] sm:$0xff]
      %v8674 = vld [vmem:[%s8552 + $0x1f2] sm:$0xff]
      %v8675 = vld [vmem:[%s8552 + $0x202] sm:$0xff]
      %v8676 = vld [vmem:[%s8552 + $0x212] sm:$0xff]
      %v8677 = vld [vmem:[%s8552 + $0x222] sm:$0xff]
      %v8678 = vld [vmem:[%s8552 + $0x232] sm:$0xff]
      %v8679 = vld [vmem:[%s8552 + $0x242] sm:$0xff]
      %v8680 = vld [vmem:[%s8552 + $0x252] sm:$0xff]
      %v8681 = vpack.c.bf16 %v8650, %v8649
      %v8682 = vpack.c.bf16 %v8652, %v8651
      %v8683 = vpack.c.bf16 %v8654, %v8653
      %v8684 = vpack.c.bf16 %v8656, %v8655
      %v8685 = vpack.c.bf16 %v8658, %v8657
      %v8686 = vpack.c.bf16 %v8660, %v8659
      %v8687 = vpack.c.bf16 %v8662, %v8661
      %v8688 = vpack.c.bf16 %v8664, %v8663
      %v8689 = vpack.c.bf16 %v8666, %v8665
      %v8690 = vpack.c.bf16 %v8668, %v8667
      %v8691 = vpack.c.bf16 %v8670, %v8669
      %v8692 = vpack.c.bf16 %v8672, %v8671
      %v8693 = vpack.c.bf16 %v8674, %v8673
      %v8694 = vpack.c.bf16 %v8676, %v8675
      %v8695 = vpack.c.bf16 %v8678, %v8677
      %v8696 = vpack.c.bf16 %v8680, %v8679
      %s8697 = scalar_lea.vmem [#allocation3], 352
      %v8698 = vld [vmem:[%s8697] sm:$0xff]
      %v8699 = vld [vmem:[%s8697 + $0x10] sm:$0xff]
      %v8700 = vld [vmem:[%s8697 + $0x20] sm:$0xff]
      %v8701 = vld [vmem:[%s8697 + $0x30] sm:$0xff]
      %v8702 = vld [vmem:[%s8697 + $0x40] sm:$0xff]
      %v8703 = vld [vmem:[%s8697 + $0x50] sm:$0xff]
      %v8704 = vld [vmem:[%s8697 + $0x60] sm:$0xff]
      %v8705 = vld [vmem:[%s8697 + $0x70] sm:$0xff]
      %v8706 = vld [vmem:[%s8697 + $0xa0] sm:$0xff]
      %v8707 = vld [vmem:[%s8697 + $0xb0] sm:$0xff]
      %v8708 = vld [vmem:[%s8697 + $0xc0] sm:$0xff]
      %v8709 = vld [vmem:[%s8697 + $0xd0] sm:$0xff]
      %v8710 = vld [vmem:[%s8697 + $0xe0] sm:$0xff]
      %v8711 = vld [vmem:[%s8697 + $0xf0] sm:$0xff]
      %v8712 = vld [vmem:[%s8697 + $0x100] sm:$0xff]
      %v8713 = vld [vmem:[%s8697 + $0x110] sm:$0xff]
      %v8714 = vld [vmem:[%s8697 + $0x140] sm:$0xff]
      %v8715 = vld [vmem:[%s8697 + $0x150] sm:$0xff]
      %v8716 = vld [vmem:[%s8697 + $0x160] sm:$0xff]
      %v8717 = vld [vmem:[%s8697 + $0x170] sm:$0xff]
      %v8718 = vld [vmem:[%s8697 + $0x180] sm:$0xff]
      %v8719 = vld [vmem:[%s8697 + $0x190] sm:$0xff]
      %v8720 = vld [vmem:[%s8697 + $0x1a0] sm:$0xff]
      %v8721 = vld [vmem:[%s8697 + $0x1b0] sm:$0xff]
      %v8722 = vld [vmem:[%s8697 + $0x1e0] sm:$0xff]
      %v8723 = vld [vmem:[%s8697 + $0x1f0] sm:$0xff]
      %v8724 = vld [vmem:[%s8697 + $0x200] sm:$0xff]
      %v8725 = vld [vmem:[%s8697 + $0x210] sm:$0xff]
      %v8726 = vld [vmem:[%s8697 + $0x220] sm:$0xff]
      %v8727 = vld [vmem:[%s8697 + $0x230] sm:$0xff]
      %v8728 = vld [vmem:[%s8697 + $0x240] sm:$0xff]
      %v8729 = vld [vmem:[%s8697 + $0x250] sm:$0xff]
      %v8730 = vpack.c.bf16 %v8699, %v8698
      %v8731 = vpack.c.bf16 %v8701, %v8700
      %v8732 = vpack.c.bf16 %v8703, %v8702
      %v8733 = vpack.c.bf16 %v8705, %v8704
      %v8734 = vpack.c.bf16 %v8707, %v8706
      %v8735 = vpack.c.bf16 %v8709, %v8708
      %v8736 = vpack.c.bf16 %v8711, %v8710
      %v8737 = vpack.c.bf16 %v8713, %v8712
      %v8738 = vpack.c.bf16 %v8715, %v8714
      %v8739 = vpack.c.bf16 %v8717, %v8716
      %v8740 = vpack.c.bf16 %v8719, %v8718
      %v8741 = vpack.c.bf16 %v8721, %v8720
      %v8742 = vpack.c.bf16 %v8723, %v8722
      %v8743 = vpack.c.bf16 %v8725, %v8724
      %v8744 = vpack.c.bf16 %v8727, %v8726
      %v8745 = vpack.c.bf16 %v8729, %v8728
      %v8746 = vld [vmem:[%s8697 + $0x1] sm:$0xff]
      %v8747 = vld [vmem:[%s8697 + $0x11] sm:$0xff]
      %v8748 = vld [vmem:[%s8697 + $0x21] sm:$0xff]
      %v8749 = vld [vmem:[%s8697 + $0x31] sm:$0xff]
      %v8750 = vld [vmem:[%s8697 + $0x41] sm:$0xff]
      %v8751 = vld [vmem:[%s8697 + $0x51] sm:$0xff]
      %v8752 = vld [vmem:[%s8697 + $0x61] sm:$0xff]
      %v8753 = vld [vmem:[%s8697 + $0x71] sm:$0xff]
      %v8754 = vld [vmem:[%s8697 + $0xa1] sm:$0xff]
      %v8755 = vld [vmem:[%s8697 + $0xb1] sm:$0xff]
      %v8756 = vld [vmem:[%s8697 + $0xc1] sm:$0xff]
      %v8757 = vld [vmem:[%s8697 + $0xd1] sm:$0xff]
      %v8758 = vld [vmem:[%s8697 + $0xe1] sm:$0xff]
      %v8759 = vld [vmem:[%s8697 + $0xf1] sm:$0xff]
      %v8760 = vld [vmem:[%s8697 + $0x101] sm:$0xff]
      %v8761 = vld [vmem:[%s8697 + $0x111] sm:$0xff]
      %v8762 = vld [vmem:[%s8697 + $0x141] sm:$0xff]
      %v8763 = vld [vmem:[%s8697 + $0x151] sm:$0xff]
      %v8764 = vld [vmem:[%s8697 + $0x161] sm:$0xff]
      %v8765 = vld [vmem:[%s8697 + $0x171] sm:$0xff]
      %v8766 = vld [vmem:[%s8697 + $0x181] sm:$0xff]
      %v8767 = vld [vmem:[%s8697 + $0x191] sm:$0xff]
      %v8768 = vld [vmem:[%s8697 + $0x1a1] sm:$0xff]
      %v8769 = vld [vmem:[%s8697 + $0x1b1] sm:$0xff]
      %v8770 = vld [vmem:[%s8697 + $0x1e1] sm:$0xff]
      %v8771 = vld [vmem:[%s8697 + $0x1f1] sm:$0xff]
      %v8772 = vld [vmem:[%s8697 + $0x201] sm:$0xff]
      %v8773 = vld [vmem:[%s8697 + $0x211] sm:$0xff]
      %v8774 = vld [vmem:[%s8697 + $0x221] sm:$0xff]
      %v8775 = vld [vmem:[%s8697 + $0x231] sm:$0xff]
      %v8776 = vld [vmem:[%s8697 + $0x241] sm:$0xff]
      %v8777 = vld [vmem:[%s8697 + $0x251] sm:$0xff]
      %v8778 = vpack.c.bf16 %v8747, %v8746
      %v8779 = vpack.c.bf16 %v8749, %v8748
      %v8780 = vpack.c.bf16 %v8751, %v8750
      %v8781 = vpack.c.bf16 %v8753, %v8752
      %v8782 = vpack.c.bf16 %v8755, %v8754
      %v8783 = vpack.c.bf16 %v8757, %v8756
      %v8784 = vpack.c.bf16 %v8759, %v8758
      %v8785 = vpack.c.bf16 %v8761, %v8760
      %v8786 = vpack.c.bf16 %v8763, %v8762
      %v8787 = vpack.c.bf16 %v8765, %v8764
      %v8788 = vpack.c.bf16 %v8767, %v8766
      %v8789 = vpack.c.bf16 %v8769, %v8768
      %v8790 = vpack.c.bf16 %v8771, %v8770
      %v8791 = vpack.c.bf16 %v8773, %v8772
      %v8792 = vpack.c.bf16 %v8775, %v8774
      %v8793 = vpack.c.bf16 %v8777, %v8776
      %v8794 = vld [vmem:[%s8697 + $0x2] sm:$0xff]
      %v8795 = vld [vmem:[%s8697 + $0x12] sm:$0xff]
      %v8796 = vld [vmem:[%s8697 + $0x22] sm:$0xff]
      %v8797 = vld [vmem:[%s8697 + $0x32] sm:$0xff]
      %v8798 = vld [vmem:[%s8697 + $0x42] sm:$0xff]
      %v8799 = vld [vmem:[%s8697 + $0x52] sm:$0xff]
      %v8800 = vld [vmem:[%s8697 + $0x62] sm:$0xff]
      %v8801 = vld [vmem:[%s8697 + $0x72] sm:$0xff]
      %v8802 = vld [vmem:[%s8697 + $0xa2] sm:$0xff]
      %v8803 = vld [vmem:[%s8697 + $0xb2] sm:$0xff]
      %v8804 = vld [vmem:[%s8697 + $0xc2] sm:$0xff]
      %v8805 = vld [vmem:[%s8697 + $0xd2] sm:$0xff]
      %v8806 = vld [vmem:[%s8697 + $0xe2] sm:$0xff]
      %v8807 = vld [vmem:[%s8697 + $0xf2] sm:$0xff]
      %v8808 = vld [vmem:[%s8697 + $0x102] sm:$0xff]
      %v8809 = vld [vmem:[%s8697 + $0x112] sm:$0xff]
      %v8810 = vld [vmem:[%s8697 + $0x142] sm:$0xff]
      %v8811 = vld [vmem:[%s8697 + $0x152] sm:$0xff]
      %v8812 = vld [vmem:[%s8697 + $0x162] sm:$0xff]
      %v8813 = vld [vmem:[%s8697 + $0x172] sm:$0xff]
      %v8814 = vld [vmem:[%s8697 + $0x182] sm:$0xff]
      %v8815 = vld [vmem:[%s8697 + $0x192] sm:$0xff]
      %v8816 = vld [vmem:[%s8697 + $0x1a2] sm:$0xff]
      %v8817 = vld [vmem:[%s8697 + $0x1b2] sm:$0xff]
      %v8818 = vld [vmem:[%s8697 + $0x1e2] sm:$0xff]
      %v8819 = vld [vmem:[%s8697 + $0x1f2] sm:$0xff]
      %v8820 = vld [vmem:[%s8697 + $0x202] sm:$0xff]
      %v8821 = vld [vmem:[%s8697 + $0x212] sm:$0xff]
      %v8822 = vld [vmem:[%s8697 + $0x222] sm:$0xff]
      %v8823 = vld [vmem:[%s8697 + $0x232] sm:$0xff]
      %v8824 = vld [vmem:[%s8697 + $0x242] sm:$0xff]
      %v8825 = vld [vmem:[%s8697 + $0x252] sm:$0xff]
      %v8826 = vpack.c.bf16 %v8795, %v8794
      %v8827 = vpack.c.bf16 %v8797, %v8796
      %v8828 = vpack.c.bf16 %v8799, %v8798
      %v8829 = vpack.c.bf16 %v8801, %v8800
      %v8830 = vpack.c.bf16 %v8803, %v8802
      %v8831 = vpack.c.bf16 %v8805, %v8804
      %v8832 = vpack.c.bf16 %v8807, %v8806
      %v8833 = vpack.c.bf16 %v8809, %v8808
      %v8834 = vpack.c.bf16 %v8811, %v8810
      %v8835 = vpack.c.bf16 %v8813, %v8812
      %v8836 = vpack.c.bf16 %v8815, %v8814
      %v8837 = vpack.c.bf16 %v8817, %v8816
      %v8838 = vpack.c.bf16 %v8819, %v8818
      %v8839 = vpack.c.bf16 %v8821, %v8820
      %v8840 = vpack.c.bf16 %v8823, %v8822
      %v8841 = vpack.c.bf16 %v8825, %v8824
      %8858 = vrot.lane.b32.xlu0 %v8488, 32
      %v8859 = vpop.permute.xlu0 %8858
      %8860 = vrot.lane.b32.xlu0 %v8489, 32
      %v8861 = vpop.permute.xlu0 %8860
      %8862 = vrot.lane.b32.xlu0 %v8490, 32
      %v8863 = vpop.permute.xlu0 %8862
      %8864 = vrot.lane.b32.xlu0 %v8491, 32
      %v8865 = vpop.permute.xlu0 %8864
      %8866 = vrot.lane.b32.xlu0 %v8492, 32
      %v8867 = vpop.permute.xlu0 %8866
      %8868 = vrot.lane.b32.xlu0 %v8493, 32
      %v8869 = vpop.permute.xlu0 %8868
      %8870 = vrot.lane.b32.xlu0 %v8494, 32
      %v8871 = vpop.permute.xlu0 %8870
      %8872 = vrot.lane.b32.xlu0 %v8495, 32
      %v8873 = vpop.permute.xlu0 %8872
      %8874 = vrot.lane.b32.xlu0 %v8496, 32
      %v8875 = vpop.permute.xlu0 %8874
      %8876 = vrot.lane.b32.xlu0 %v8497, 32
      %v8877 = vpop.permute.xlu0 %8876
      %8878 = vrot.lane.b32.xlu0 %v8498, 32
      %v8879 = vpop.permute.xlu0 %8878
      %8880 = vrot.lane.b32.xlu0 %v8499, 32
      %v8881 = vpop.permute.xlu0 %8880
      %8882 = vrot.lane.b32.xlu0 %v8500, 32
      %v8883 = vpop.permute.xlu0 %8882
      %8884 = vrot.lane.b32.xlu0 %v8501, 32
      %v8885 = vpop.permute.xlu0 %8884
      %8886 = vrot.lane.b32.xlu0 %v8502, 32
      %v8887 = vpop.permute.xlu0 %8886
      %8888 = vrot.lane.b32.xlu0 %v8503, 32
      %v8889 = vpop.permute.xlu0 %8888
      %8906 = vrot.lane.b32.xlu0 %v8536, 64
      %v8907 = vpop.permute.xlu0 %8906
      %8908 = vrot.lane.b32.xlu0 %v8537, 64
      %v8909 = vpop.permute.xlu0 %8908
      %8910 = vrot.lane.b32.xlu0 %v8538, 64
      %v8911 = vpop.permute.xlu0 %8910
      %8912 = vrot.lane.b32.xlu0 %v8539, 64
      %v8913 = vpop.permute.xlu0 %8912
      %8914 = vrot.lane.b32.xlu0 %v8540, 64
      %v8915 = vpop.permute.xlu0 %8914
      %8916 = vrot.lane.b32.xlu0 %v8541, 64
      %v8917 = vpop.permute.xlu0 %8916
      %8918 = vrot.lane.b32.xlu0 %v8542, 64
      %v8919 = vpop.permute.xlu0 %8918
      %8920 = vrot.lane.b32.xlu0 %v8543, 64
      %v8921 = vpop.permute.xlu0 %8920
      %8922 = vrot.lane.b32.xlu0 %v8544, 64
      %v8923 = vpop.permute.xlu0 %8922
      %8924 = vrot.lane.b32.xlu0 %v8545, 64
      %v8925 = vpop.permute.xlu0 %8924
      %8926 = vrot.lane.b32.xlu0 %v8546, 64
      %v8927 = vpop.permute.xlu0 %8926
      %8928 = vrot.lane.b32.xlu0 %v8547, 64
      %v8929 = vpop.permute.xlu0 %8928
      %8930 = vrot.lane.b32.xlu0 %v8548, 64
      %v8931 = vpop.permute.xlu0 %8930
      %8932 = vrot.lane.b32.xlu0 %v8549, 64
      %v8933 = vpop.permute.xlu0 %8932
      %8934 = vrot.lane.b32.xlu0 %v8550, 64
      %v8935 = vpop.permute.xlu0 %8934
      %8936 = vrot.lane.b32.xlu0 %v8551, 64
      %v8937 = vpop.permute.xlu0 %8936
      %8954 = vrot.lane.b32.xlu0 %v8585, 96
      %v8955 = vpop.permute.xlu0 %8954
      %8956 = vrot.lane.b32.xlu0 %v8586, 96
      %v8957 = vpop.permute.xlu0 %8956
      %8958 = vrot.lane.b32.xlu0 %v8587, 96
      %v8959 = vpop.permute.xlu0 %8958
      %8960 = vrot.lane.b32.xlu0 %v8588, 96
      %v8961 = vpop.permute.xlu0 %8960
      %8962 = vrot.lane.b32.xlu0 %v8589, 96
      %v8963 = vpop.permute.xlu0 %8962
      %8964 = vrot.lane.b32.xlu0 %v8590, 96
      %v8965 = vpop.permute.xlu0 %8964
      %8966 = vrot.lane.b32.xlu0 %v8591, 96
      %v8967 = vpop.permute.xlu0 %8966
      %8968 = vrot.lane.b32.xlu0 %v8592, 96
      %v8969 = vpop.permute.xlu0 %8968
      %8970 = vrot.lane.b32.xlu0 %v8593, 96
      %v8971 = vpop.permute.xlu0 %8970
      %8972 = vrot.lane.b32.xlu0 %v8594, 96
      %v8973 = vpop.permute.xlu0 %8972
      %8974 = vrot.lane.b32.xlu0 %v8595, 96
      %v8975 = vpop.permute.xlu0 %8974
      %8976 = vrot.lane.b32.xlu0 %v8596, 96
      %v8977 = vpop.permute.xlu0 %8976
      %8978 = vrot.lane.b32.xlu0 %v8597, 96
      %v8979 = vpop.permute.xlu0 %8978
      %8980 = vrot.lane.b32.xlu0 %v8598, 96
      %v8981 = vpop.permute.xlu0 %8980
      %8982 = vrot.lane.b32.xlu0 %v8599, 96
      %v8983 = vpop.permute.xlu0 %8982
      %8984 = vrot.lane.b32.xlu0 %v8600, 96
      %v8985 = vpop.permute.xlu0 %8984
      %9002 = vrot.lane.b32.xlu0 %v8681, 32
      %v9003 = vpop.permute.xlu0 %9002
      %9004 = vrot.lane.b32.xlu0 %v8682, 32
      %v9005 = vpop.permute.xlu0 %9004
      %9006 = vrot.lane.b32.xlu0 %v8683, 32
      %v9007 = vpop.permute.xlu0 %9006
      %9008 = vrot.lane.b32.xlu0 %v8684, 32
      %v9009 = vpop.permute.xlu0 %9008
      %9010 = vrot.lane.b32.xlu0 %v8685, 32
      %v9011 = vpop.permute.xlu0 %9010
      %9012 = vrot.lane.b32.xlu0 %v8686, 32
      %v9013 = vpop.permute.xlu0 %9012
      %9014 = vrot.lane.b32.xlu0 %v8687, 32
      %v9015 = vpop.permute.xlu0 %9014
      %9016 = vrot.lane.b32.xlu0 %v8688, 32
      %v9017 = vpop.permute.xlu0 %9016
      %9018 = vrot.lane.b32.xlu0 %v8689, 32
      %v9019 = vpop.permute.xlu0 %9018
      %9020 = vrot.lane.b32.xlu0 %v8690, 32
      %v9021 = vpop.permute.xlu0 %9020
      %9022 = vrot.lane.b32.xlu0 %v8691, 32
      %v9023 = vpop.permute.xlu0 %9022
      %9024 = vrot.lane.b32.xlu0 %v8692, 32
      %v9025 = vpop.permute.xlu0 %9024
      %9026 = vrot.lane.b32.xlu0 %v8693, 32
      %v9027 = vpop.permute.xlu0 %9026
      %9028 = vrot.lane.b32.xlu0 %v8694, 32
      %v9029 = vpop.permute.xlu0 %9028
      %9030 = vrot.lane.b32.xlu0 %v8695, 32
      %v9031 = vpop.permute.xlu0 %9030
      %9032 = vrot.lane.b32.xlu0 %v8696, 32
      %v9033 = vpop.permute.xlu0 %9032
      %9050 = vrot.lane.b32.xlu0 %v8730, 64
      %v9051 = vpop.permute.xlu0 %9050
      %9052 = vrot.lane.b32.xlu0 %v8731, 64
      %v9053 = vpop.permute.xlu0 %9052
      %9054 = vrot.lane.b32.xlu0 %v8732, 64
      %v9055 = vpop.permute.xlu0 %9054
      %9056 = vrot.lane.b32.xlu0 %v8733, 64
      %v9057 = vpop.permute.xlu0 %9056
      %9058 = vrot.lane.b32.xlu0 %v8734, 64
      %v9059 = vpop.permute.xlu0 %9058
      %9060 = vrot.lane.b32.xlu0 %v8735, 64
      %v9061 = vpop.permute.xlu0 %9060
      %9062 = vrot.lane.b32.xlu0 %v8736, 64
      %v9063 = vpop.permute.xlu0 %9062
      %9064 = vrot.lane.b32.xlu0 %v8737, 64
      %v9065 = vpop.permute.xlu0 %9064
      %9066 = vrot.lane.b32.xlu0 %v8738, 64
      %v9067 = vpop.permute.xlu0 %9066
      %9068 = vrot.lane.b32.xlu0 %v8739, 64
      %v9069 = vpop.permute.xlu0 %9068
      %9070 = vrot.lane.b32.xlu0 %v8740, 64
      %v9071 = vpop.permute.xlu0 %9070
      %9072 = vrot.lane.b32.xlu0 %v8741, 64
      %v9073 = vpop.permute.xlu0 %9072
      %9074 = vrot.lane.b32.xlu0 %v8742, 64
      %v9075 = vpop.permute.xlu0 %9074
      %9076 = vrot.lane.b32.xlu0 %v8743, 64
      %v9077 = vpop.permute.xlu0 %9076
      %9078 = vrot.lane.b32.xlu0 %v8744, 64
      %v9079 = vpop.permute.xlu0 %9078
      %9080 = vrot.lane.b32.xlu0 %v8745, 64
      %v9081 = vpop.permute.xlu0 %9080
      %9098 = vrot.lane.b32.xlu0 %v8778, 96
      %v9099 = vpop.permute.xlu0 %9098
      %9100 = vrot.lane.b32.xlu0 %v8779, 96
      %v9101 = vpop.permute.xlu0 %9100
      %9102 = vrot.lane.b32.xlu0 %v8780, 96
      %v9103 = vpop.permute.xlu0 %9102
      %9104 = vrot.lane.b32.xlu0 %v8781, 96
      %v9105 = vpop.permute.xlu0 %9104
      %9106 = vrot.lane.b32.xlu0 %v8782, 96
      %v9107 = vpop.permute.xlu0 %9106
      %9108 = vrot.lane.b32.xlu0 %v8783, 96
      %v9109 = vpop.permute.xlu0 %9108
      %9110 = vrot.lane.b32.xlu0 %v8784, 96
      %v9111 = vpop.permute.xlu0 %9110
      %9112 = vrot.lane.b32.xlu0 %v8785, 96
      %v9113 = vpop.permute.xlu0 %9112
      %9114 = vrot.lane.b32.xlu0 %v8786, 96
      %v9115 = vpop.permute.xlu0 %9114
      %9116 = vrot.lane.b32.xlu0 %v8787, 96
      %v9117 = vpop.permute.xlu0 %9116
      %9118 = vrot.lane.b32.xlu0 %v8788, 96
      %v9119 = vpop.permute.xlu0 %9118
      %9120 = vrot.lane.b32.xlu0 %v8789, 96
      %v9121 = vpop.permute.xlu0 %9120
      %9122 = vrot.lane.b32.xlu0 %v8790, 96
      %v9123 = vpop.permute.xlu0 %9122
      %9124 = vrot.lane.b32.xlu0 %v8791, 96
      %v9125 = vpop.permute.xlu0 %9124
      %9126 = vrot.lane.b32.xlu0 %v8792, 96
      %v9127 = vpop.permute.xlu0 %9126
      %9128 = vrot.lane.b32.xlu0 %v8793, 96
      %v9129 = vpop.permute.xlu0 %9128
      %v9132 = vsel %vm520, %v8440, %v8859
      %v9135 = vsel %vm520, %v8441, %v8861
      %v9138 = vsel %vm520, %v8442, %v8863
      %v9141 = vsel %vm520, %v8443, %v8865
      %v9144 = vsel %vm520, %v8444, %v8867
      %v9147 = vsel %vm520, %v8445, %v8869
      %v9150 = vsel %vm520, %v8446, %v8871
      %v9153 = vsel %vm520, %v8447, %v8873
      %v9156 = vsel %vm520, %v8448, %v8875
      %v9159 = vsel %vm520, %v8449, %v8877
      %v9162 = vsel %vm520, %v8450, %v8879
      %v9165 = vsel %vm520, %v8451, %v8881
      %v9168 = vsel %vm520, %v8452, %v8883
      %v9171 = vsel %vm520, %v8453, %v8885
      %v9174 = vsel %vm520, %v8454, %v8887
      %v9177 = vsel %vm520, %v8455, %v8889
      %v9179 = vsel %vm1537, %v9132, %v8907
      %v9181 = vsel %vm1537, %v9135, %v8909
      %v9183 = vsel %vm1537, %v9138, %v8911
      %v9185 = vsel %vm1537, %v9141, %v8913
      %v9187 = vsel %vm1537, %v9144, %v8915
      %v9189 = vsel %vm1537, %v9147, %v8917
      %v9191 = vsel %vm1537, %v9150, %v8919
      %v9193 = vsel %vm1537, %v9153, %v8921
      %v9195 = vsel %vm1537, %v9156, %v8923
      %v9197 = vsel %vm1537, %v9159, %v8925
      %v9199 = vsel %vm1537, %v9162, %v8927
      %v9201 = vsel %vm1537, %v9165, %v8929
      %v9203 = vsel %vm1537, %v9168, %v8931
      %v9205 = vsel %vm1537, %v9171, %v8933
      %v9207 = vsel %vm1537, %v9174, %v8935
      %v9209 = vsel %vm1537, %v9177, %v8937
      %v9211 = vsel %vm1570, %v9179, %v8955
      %v9214 = vsel %vm1570, %v9181, %v8957
      %v9217 = vsel %vm1570, %v9183, %v8959
      %v9220 = vsel %vm1570, %v9185, %v8961
      %v9223 = vsel %vm1570, %v9187, %v8963
      %v9226 = vsel %vm1570, %v9189, %v8965
      %v9229 = vsel %vm1570, %v9191, %v8967
      %v9232 = vsel %vm1570, %v9193, %v8969
      %v9235 = vsel %vm1570, %v9195, %v8971
      %v9238 = vsel %vm1570, %v9197, %v8973
      %v9241 = vsel %vm1570, %v9199, %v8975
      %v9244 = vsel %vm1570, %v9201, %v8977
      %v9247 = vsel %vm1570, %v9203, %v8979
      %v9250 = vsel %vm1570, %v9205, %v8981
      %v9253 = vsel %vm1570, %v9207, %v8983
      %v9256 = vsel %vm1570, %v9209, %v8985
      %v9260 = vsel %vm520, %v8633, %v9003
      %v9263 = vsel %vm520, %v8634, %v9005
      %v9266 = vsel %vm520, %v8635, %v9007
      %v9269 = vsel %vm520, %v8636, %v9009
      %v9272 = vsel %vm520, %v8637, %v9011
      %v9275 = vsel %vm520, %v8638, %v9013
      %v9278 = vsel %vm520, %v8639, %v9015
      %v9281 = vsel %vm520, %v8640, %v9017
      %v9284 = vsel %vm520, %v8641, %v9019
      %v9287 = vsel %vm520, %v8642, %v9021
      %v9290 = vsel %vm520, %v8643, %v9023
      %v9293 = vsel %vm520, %v8644, %v9025
      %v9296 = vsel %vm520, %v8645, %v9027
      %v9299 = vsel %vm520, %v8646, %v9029
      %v9302 = vsel %vm520, %v8647, %v9031
      %v9305 = vsel %vm520, %v8648, %v9033
      %v9307 = vsel %vm1537, %v9260, %v9051
      %v9309 = vsel %vm1537, %v9263, %v9053
      %v9311 = vsel %vm1537, %v9266, %v9055
      %v9313 = vsel %vm1537, %v9269, %v9057
      %v9315 = vsel %vm1537, %v9272, %v9059
      %v9317 = vsel %vm1537, %v9275, %v9061
      %v9319 = vsel %vm1537, %v9278, %v9063
      %v9321 = vsel %vm1537, %v9281, %v9065
      %v9323 = vsel %vm1537, %v9284, %v9067
      %v9325 = vsel %vm1537, %v9287, %v9069
      %v9327 = vsel %vm1537, %v9290, %v9071
      %v9329 = vsel %vm1537, %v9293, %v9073
      %v9331 = vsel %vm1537, %v9296, %v9075
      %v9333 = vsel %vm1537, %v9299, %v9077
      %v9335 = vsel %vm1537, %v9302, %v9079
      %v9337 = vsel %vm1537, %v9305, %v9081
      %v9339 = vsel %vm1570, %v9307, %v9099
      %v9342 = vsel %vm1570, %v9309, %v9101
      %v9345 = vsel %vm1570, %v9311, %v9103
      %v9348 = vsel %vm1570, %v9313, %v9105
      %v9351 = vsel %vm1570, %v9315, %v9107
      %v9354 = vsel %vm1570, %v9317, %v9109
      %v9357 = vsel %vm1570, %v9319, %v9111
      %v9360 = vsel %vm1570, %v9321, %v9113
      %v9363 = vsel %vm1570, %v9323, %v9115
      %v9366 = vsel %vm1570, %v9325, %v9117
      %v9369 = vsel %vm1570, %v9327, %v9119
      %v9372 = vsel %vm1570, %v9329, %v9121
      %v9375 = vsel %vm1570, %v9331, %v9123
      %v9378 = vsel %vm1570, %v9333, %v9125
      %v9381 = vsel %vm1570, %v9335, %v9127
      %v9384 = vsel %vm1570, %v9337, %v9129
      %s9386 = scalar_lea.vmem %s4, 288
      %v9387 = vld [vmem:[%s9386] sm:$0xf]
      %v9388 = vld [vmem:[%s9386 + $0x4] sm:$0xf]
      %v9389 = vld [vmem:[%s9386 + $0x8] sm:$0xf]
      %v9390 = vld [vmem:[%s9386 + $0xc] sm:$0xf]
      %v9391 = vld [vmem:[%s9386 + $0x10] sm:$0xf]
      %v9392 = vld [vmem:[%s9386 + $0x14] sm:$0xf]
      %v9393 = vld [vmem:[%s9386 + $0x18] sm:$0xf]
      %v9394 = vld [vmem:[%s9386 + $0x1c] sm:$0xf]
      %v9395 = vld [vmem:[%s9386 + $0x20] sm:$0xf]
      %v9396 = vld [vmem:[%s9386 + $0x24] sm:$0xf]
      %v9397 = vld [vmem:[%s9386 + $0x28] sm:$0xf]
      %v9398 = vld [vmem:[%s9386 + $0x2c] sm:$0xf]
      %v9399 = vld [vmem:[%s9386 + $0x30] sm:$0xf]
      %v9400 = vld [vmem:[%s9386 + $0x34] sm:$0xf]
      %v9401 = vld [vmem:[%s9386 + $0x38] sm:$0xf]
      %v9402 = vld [vmem:[%s9386 + $0x3c] sm:$0xf]
      %v9403 = vld [vmem:[%s9386 + $0x40] sm:$0xf]
      %v9404 = vld [vmem:[%s9386 + $0x44] sm:$0xf]
      %v9405 = vld [vmem:[%s9386 + $0x48] sm:$0xf]
      %v9406 = vld [vmem:[%s9386 + $0x4c] sm:$0xf]
      %v9407 = vld [vmem:[%s9386 + $0x50] sm:$0xf]
      %v9408 = vld [vmem:[%s9386 + $0x54] sm:$0xf]
      %v9409 = vld [vmem:[%s9386 + $0x58] sm:$0xf]
      %v9410 = vld [vmem:[%s9386 + $0x5c] sm:$0xf]
      %v9411 = vld [vmem:[%s9386 + $0x60] sm:$0xf]
      %v9412 = vld [vmem:[%s9386 + $0x64] sm:$0xf]
      %v9413 = vld [vmem:[%s9386 + $0x68] sm:$0xf]
      %v9414 = vld [vmem:[%s9386 + $0x6c] sm:$0xf]
      %v9415 = vld [vmem:[%s9386 + $0x70] sm:$0xf]
      %v9416 = vld [vmem:[%s9386 + $0x74] sm:$0xf]
      %v9417 = vld [vmem:[%s9386 + $0x78] sm:$0xf]
      %v9418 = vld [vmem:[%s9386 + $0x7c] sm:$0xf]
      %v9419 = vld [vmem:[%s9386 + $0x80] sm:$0xf]
      %v9420 = vld [vmem:[%s9386 + $0x84] sm:$0xf]
      %v9421 = vld [vmem:[%s9386 + $0x88] sm:$0xf]
      %v9422 = vld [vmem:[%s9386 + $0x8c] sm:$0xf]
      %v9459 = vunpack.c.l.b16 %v9387
      %v9460 = vunpack.c.l.b16 %v9388
      %v9461 = vunpack.c.l.b16 %v9389
      %v9462 = vunpack.c.l.b16 %v9390
      %v9463 = vunpack.c.l.b16 %v9391
      %v9464 = vunpack.c.l.b16 %v9392
      %v9465 = vunpack.c.l.b16 %v9393
      %v9466 = vunpack.c.l.b16 %v9394
      %v9467 = vunpack.c.l.b16 %v9395
      %v9468 = vunpack.c.l.b16 %v9396
      %v9469 = vunpack.c.l.b16 %v9397
      %v9470 = vunpack.c.l.b16 %v9398
      %v9471 = vunpack.c.l.b16 %v9399
      %v9472 = vunpack.c.l.b16 %v9400
      %v9473 = vunpack.c.l.b16 %v9401
      %v9474 = vunpack.c.l.b16 %v9402
      %v9475 = vunpack.c.l.b16 %v9403
      %v9476 = vunpack.c.l.b16 %v9404
      %v9477 = vunpack.c.l.b16 %v9405
      %v9478 = vunpack.c.l.b16 %v9406
      %v9479 = vunpack.c.l.b16 %v9407
      %v9480 = vunpack.c.l.b16 %v9408
      %v9481 = vunpack.c.l.b16 %v9409
      %v9482 = vunpack.c.l.b16 %v9410
      %v9483 = vunpack.c.l.b16 %v9411
      %v9484 = vunpack.c.l.b16 %v9412
      %v9485 = vunpack.c.l.b16 %v9413
      %v9486 = vunpack.c.l.b16 %v9414
      %v9487 = vunpack.c.l.b16 %v9415
      %v9488 = vunpack.c.l.b16 %v9416
      %v9489 = vunpack.c.l.b16 %v9417
      %v9490 = vunpack.c.l.b16 %v9418
      %v9491 = vunpack.c.l.b16 %v9419
      %v9492 = vunpack.c.l.b16 %v9420
      %v9493 = vunpack.c.l.b16 %v9421
      %v9494 = vunpack.c.l.b16 %v9422
      %v9495 = vpack.c.b16 %v9460, %v9459
      %v9496 = vpack.c.b16 %v9462, %v9461
      %v9497 = vpack.c.b16 %v9464, %v9463
      %v9498 = vpack.c.b16 %v9466, %v9465
      %v9499 = vpack.c.b16 %v9468, %v9467
      %v9500 = vpack.c.b16 %v9470, %v9469
      %v9501 = vpack.c.b16 %v9472, %v9471
      %v9502 = vpack.c.b16 %v9474, %v9473
      %v9503 = vpack.c.b16 %v9476, %v9475
      %v9504 = vpack.c.b16 %v9478, %v9477
      %v9505 = vpack.c.b16 %v9480, %v9479
      %v9506 = vpack.c.b16 %v9482, %v9481
      %v9507 = vpack.c.b16 %v9484, %v9483
      %v9508 = vpack.c.b16 %v9486, %v9485
      %v9509 = vpack.c.b16 %v9488, %v9487
      %v9510 = vpack.c.b16 %v9490, %v9489
      %v9511 = vpack.c.b16 %v9492, %v9491
      %v9512 = vpack.c.b16 %v9494, %v9493
      %v9532 = vsel %vm520, %v8826, 0
      %v9535 = vsel %vm520, %v8827, 0
      %v9538 = vsel %vm520, %v8828, 0
      %v9541 = vsel %vm520, %v8829, 0
      %v9544 = vsel %vm520, %v8830, 0
      %v9547 = vsel %vm520, %v8831, 0
      %v9550 = vsel %vm520, %v8832, 0
      %v9553 = vsel %vm520, %v8833, 0
      %v9556 = vsel %vm520, %v8834, 0
      %v9559 = vsel %vm520, %v8835, 0
      %v9562 = vsel %vm520, %v8836, 0
      %v9565 = vsel %vm520, %v8837, 0
      %v9568 = vsel %vm520, %v8838, 0
      %v9571 = vsel %vm520, %v8839, 0
      %v9574 = vsel %vm520, %v8840, 0
      %v9577 = vsel %vm520, %v8841, 0
      %9579 = vmatprep.subr.bf16.mxu0 0
      %9580 = vmatpush1.bf16.msra.mxu0 %v9495
      %9581 = vmatprep.subr.bf16.mxu0 0
      %9582 = vmatpush1.bf16.msra.mxu0 %v9496
      %9583 = vmatprep.subr.bf16.mxu0 0
      %9584 = vmatpush1.bf16.msra.mxu0 %v9497
      %9585 = vmatprep.subr.bf16.mxu0 0
      %9586 = vmatpush1.bf16.msra.mxu0 %v9498
      %9587 = vmatprep.subr.bf16.mxu0 0
      %9588 = vmatpush1.bf16.msra.mxu0 %v9499
      %9589 = vmatprep.subr.bf16.mxu0 0
      %9590 = vmatpush1.bf16.msra.mxu0 %v9500
      %9591 = vmatprep.subr.bf16.mxu0 0
      %9592 = vmatpush1.bf16.msra.mxu0 %v9501
      %9593 = vmatprep.subr.bf16.mxu0 0
      %9594 = vmatpush1.bf16.msra.mxu0 %v9502
      %9595 = vmatprep.subr.bf16.mxu0 0
      %9596 = vmatpush1.bf16.msra.mxu0 %v9503
      %9597 = vmatprep.subr.bf16.mxu0 0
      %9598 = vmatpush1.bf16.msra.mxu0 %v9504
      %9599 = vmatprep.subr.bf16.mxu0 0
      %9600 = vmatpush1.bf16.msra.mxu0 %v9505
      %9601 = vmatprep.subr.bf16.mxu0 0
      %9602 = vmatpush1.bf16.msra.mxu0 %v9506
      %9603 = vmatprep.subr.bf16.mxu0 0
      %9604 = vmatpush1.bf16.msra.mxu0 %v9507
      %9605 = vmatprep.subr.bf16.mxu0 0
      %9606 = vmatpush1.bf16.msra.mxu0 %v9508
      %9607 = vmatprep.subr.bf16.mxu0 0
      %9608 = vmatpush1.bf16.msra.mxu0 %v9509
      %9609 = vmatprep.subr.bf16.mxu0 0
      %9610 = vmatpush1.bf16.msra.mxu0 %v9510
      %9611 = vmatprep.mubr.bf16.mxu0 %v9339
      %9612 = vmatmul.mubr.bf16.gmra.mrb[0].mxu0 %v9211
      %v9613 = vpop.f32.mrb[0].mxu0
      %v9614 = vadd.f32 0.0, %v9613
      %v9615 = vpop.f32.mrb[0].mxu0
      %v9616 = vpop.f32.mrb[0].mxu0
      %v9617 = vadd.f32 0.0, %v9616
      %v9618 = vpop.f32.mrb[0].mxu0
      %9619 = vmatprep.mubr.bf16.mxu0 %v9342
      %9620 = vmatmul.mubr.bf16.gmra.mrb[0].mxu0 %v9214
      %v9621 = vpop.f32.mrb[0].mxu0
      %v9622 = vadd.f32 0.0, %v9621
      %v9623 = vpop.f32.mrb[0].mxu0
      %v9624 = vpop.f32.mrb[0].mxu0
      %v9625 = vadd.f32 0.0, %v9624
      %v9626 = vpop.f32.mrb[0].mxu0
      %9627 = vmatprep.mubr.bf16.mxu0 %v9345
      %9628 = vmatmul.mubr.bf16.gmra.mrb[0].mxu0 %v9217
      %v9629 = vpop.f32.mrb[0].mxu0
      %v9630 = vadd.f32 0.0, %v9629
      %v9631 = vpop.f32.mrb[0].mxu0
      %v9632 = vpop.f32.mrb[0].mxu0
      %v9633 = vadd.f32 0.0, %v9632
      %v9634 = vpop.f32.mrb[0].mxu0
      %9635 = vmatprep.mubr.bf16.mxu0 %v9348
      %9636 = vmatmul.mubr.bf16.gmra.mrb[0].mxu0 %v9220
      %v9637 = vpop.f32.mrb[0].mxu0
      %v9638 = vadd.f32 0.0, %v9637
      %v9639 = vpop.f32.mrb[0].mxu0
      %v9640 = vpop.f32.mrb[0].mxu0
      %v9641 = vadd.f32 0.0, %v9640
      %v9642 = vpop.f32.mrb[0].mxu0
      %9643 = vmatprep.mubr.bf16.mxu0 %v9351
      %9644 = vmatmul.mubr.bf16.gmra.mrb[0].mxu0 %v9223
      %v9645 = vpop.f32.mrb[0].mxu0
      %v9646 = vadd.f32 0.0, %v9645
      %v9647 = vpop.f32.mrb[0].mxu0
      %v9648 = vpop.f32.mrb[0].mxu0
      %v9649 = vadd.f32 0.0, %v9648
      %v9650 = vpop.f32.mrb[0].mxu0
      %9651 = vmatprep.mubr.bf16.mxu0 %v9354
      %9652 = vmatmul.mubr.bf16.gmra.mrb[0].mxu0 %v9226
      %v9653 = vpop.f32.mrb[0].mxu0
      %v9654 = vadd.f32 0.0, %v9653
      %v9655 = vpop.f32.mrb[0].mxu0
      %v9656 = vpop.f32.mrb[0].mxu0
      %v9657 = vadd.f32 0.0, %v9656
      %v9658 = vpop.f32.mrb[0].mxu0
      %9659 = vmatprep.mubr.bf16.mxu0 %v9357
      %9660 = vmatmul.mubr.bf16.gmra.mrb[0].mxu0 %v9229
      %v9661 = vpop.f32.mrb[0].mxu0
      %v9662 = vadd.f32 0.0, %v9661
      %v9663 = vpop.f32.mrb[0].mxu0
      %v9664 = vpop.f32.mrb[0].mxu0
      %v9665 = vadd.f32 0.0, %v9664
      %v9666 = vpop.f32.mrb[0].mxu0
      %9667 = vmatprep.mubr.bf16.mxu0 %v9360
      %9668 = vmatmul.mubr.bf16.gmra.mrb[0].mxu0 %v9232
      %v9669 = vpop.f32.mrb[0].mxu0
      %v9670 = vadd.f32 0.0, %v9669
      %v9671 = vpop.f32.mrb[0].mxu0
      %v9672 = vpop.f32.mrb[0].mxu0
      %v9673 = vadd.f32 0.0, %v9672
      %v9674 = vpop.f32.mrb[0].mxu0
      %9675 = vmatprep.mubr.bf16.mxu0 %v9363
      %9676 = vmatmul.mubr.bf16.gmra.mrb[0].mxu0 %v9235
      %v9677 = vpop.f32.mrb[0].mxu0
      %v9678 = vadd.f32 0.0, %v9677
      %v9679 = vpop.f32.mrb[0].mxu0
      %v9680 = vpop.f32.mrb[0].mxu0
      %v9681 = vadd.f32 0.0, %v9680
      %v9682 = vpop.f32.mrb[0].mxu0
      %9683 = vmatprep.mubr.bf16.mxu0 %v9366
      %9684 = vmatmul.mubr.bf16.gmra.mrb[0].mxu0 %v9238
      %v9685 = vpop.f32.mrb[0].mxu0
      %v9686 = vadd.f32 0.0, %v9685
      %v9687 = vpop.f32.mrb[0].mxu0
      %v9688 = vpop.f32.mrb[0].mxu0
      %v9689 = vadd.f32 0.0, %v9688
      %v9690 = vpop.f32.mrb[0].mxu0
      %9691 = vmatprep.mubr.bf16.mxu0 %v9369
      %9692 = vmatmul.mubr.bf16.gmra.mrb[0].mxu0 %v9241
      %v9693 = vpop.f32.mrb[0].mxu0
      %v9694 = vadd.f32 0.0, %v9693
      %v9695 = vpop.f32.mrb[0].mxu0
      %v9696 = vpop.f32.mrb[0].mxu0
      %v9697 = vadd.f32 0.0, %v9696
      %v9698 = vpop.f32.mrb[0].mxu0
      %9699 = vmatprep.mubr.bf16.mxu0 %v9372
      %9700 = vmatmul.mubr.bf16.gmra.mrb[0].mxu0 %v9244
      %v9701 = vpop.f32.mrb[0].mxu0
      %v9702 = vadd.f32 0.0, %v9701
      %v9703 = vpop.f32.mrb[0].mxu0
      %v9704 = vpop.f32.mrb[0].mxu0
      %v9705 = vadd.f32 0.0, %v9704
      %v9706 = vpop.f32.mrb[0].mxu0
      %9707 = vmatprep.mubr.bf16.mxu0 %v9375
      %9708 = vmatmul.mubr.bf16.gmra.mrb[0].mxu0 %v9247
      %v9709 = vpop.f32.mrb[0].mxu0
      %v9710 = vadd.f32 0.0, %v9709
      %v9711 = vpop.f32.mrb[0].mxu0
      %v9712 = vpop.f32.mrb[0].mxu0
      %v9713 = vadd.f32 0.0, %v9712
      %v9714 = vpop.f32.mrb[0].mxu0
      %9715 = vmatprep.mubr.bf16.mxu0 %v9378
      %9716 = vmatmul.mubr.bf16.gmra.mrb[0].mxu0 %v9250
      %v9717 = vpop.f32.mrb[0].mxu0
      %v9718 = vadd.f32 0.0, %v9717
      %v9719 = vpop.f32.mrb[0].mxu0
      %v9720 = vpop.f32.mrb[0].mxu0
      %v9721 = vadd.f32 0.0, %v9720
      %v9722 = vpop.f32.mrb[0].mxu0
      %9723 = vmatprep.mubr.bf16.mxu0 %v9381
      %9724 = vmatmul.mubr.bf16.gmra.mrb[0].mxu0 %v9253
      %v9725 = vpop.f32.mrb[0].mxu0
      %v9726 = vadd.f32 0.0, %v9725
      %v9727 = vpop.f32.mrb[0].mxu0
      %v9728 = vpop.f32.mrb[0].mxu0
      %v9729 = vadd.f32 0.0, %v9728
      %v9730 = vpop.f32.mrb[0].mxu0
      %9731 = vmatprep.mubr.bf16.mxu0 %v9384
      %9732 = vmatmul.mubr.bf16.gmra.mrb[0].mxu0 %v9256
      %v9733 = vpop.f32.mrb[0].mxu0
      %v9734 = vadd.f32 0.0, %v9733
      %v9735 = vpop.f32.mrb[0].mxu0
      %v9736 = vpop.f32.mrb[0].mxu0
      %v9737 = vadd.f32 0.0, %v9736
      %v9738 = vpop.f32.mrb[0].mxu0
      %9739 = vdwg.mxu0
      %9740 = vmatprep.subr.bf16.mxu0 0
      %9741 = vmatpush1.bf16.msra.mxu0 %v9511
      %9742 = vmatprep.subr.bf16.mxu0 0
      %9743 = vmatpush1.bf16.msra.mxu0 %v9512
      %9744 = vmatprep.subr.bf16.mxu0 0
      %9745 = vmatpush1.bf16.msra.mxu0 0
      %9746 = vmatprep.subr.bf16.mxu0 0
      %9747 = vmatpush1.bf16.msra.mxu0 0
      %9748 = vmatprep.subr.bf16.mxu0 0
      %9749 = vmatpush1.bf16.msra.mxu0 0
      %9750 = vmatprep.subr.bf16.mxu0 0
      %9751 = vmatpush1.bf16.msra.mxu0 0
      %9752 = vmatprep.subr.bf16.mxu0 0
      %9753 = vmatpush1.bf16.msra.mxu0 0
      %9754 = vmatprep.subr.bf16.mxu0 0
      %9755 = vmatpush1.bf16.msra.mxu0 0
      %9756 = vmatprep.subr.bf16.mxu0 0
      %9757 = vmatpush1.bf16.msra.mxu0 0
      %9758 = vmatprep.subr.bf16.mxu0 0
      %9759 = vmatpush1.bf16.msra.mxu0 0
      %9760 = vmatprep.subr.bf16.mxu0 0
      %9761 = vmatpush1.bf16.msra.mxu0 0
      %9762 = vmatprep.subr.bf16.mxu0 0
      %9763 = vmatpush1.bf16.msra.mxu0 0
      %9764 = vmatprep.subr.bf16.mxu0 0
      %9765 = vmatpush1.bf16.msra.mxu0 0
      %9766 = vmatprep.subr.bf16.mxu0 0
      %9767 = vmatpush1.bf16.msra.mxu0 0
      %9768 = vmatprep.subr.bf16.mxu0 0
      %9769 = vmatpush1.bf16.msra.mxu0 0
      %9770 = vmatprep.subr.bf16.mxu0 0
      %9771 = vmatpush1.bf16.msra.mxu0 0
      %9772 = vmatprep.mubr.bf16.mxu0 0
      %9773 = vmatmul.mubr.bf16.gmra.mrb[0].mxu0 %v9532
      %v9774 = vpop.f32.mrb[0].mxu0
      %v9775 = vadd.f32 %v9614, %v9774
      %v9776 = vpop.f32.mrb[0].mxu0
      %v9777 = vpop.f32.mrb[0].mxu0
      %v9778 = vadd.f32 %v9617, %v9777
      %v9779 = vpop.f32.mrb[0].mxu0
      %9780 = vmatprep.mubr.bf16.mxu0 0
      %9781 = vmatmul.mubr.bf16.gmra.mrb[0].mxu0 %v9535
      %v9782 = vpop.f32.mrb[0].mxu0
      %v9783 = vadd.f32 %v9622, %v9782
      %v9784 = vpop.f32.mrb[0].mxu0
      %v9785 = vpop.f32.mrb[0].mxu0
      %v9786 = vadd.f32 %v9625, %v9785
      %v9787 = vpop.f32.mrb[0].mxu0
      %9788 = vmatprep.mubr.bf16.mxu0 0
      %9789 = vmatmul.mubr.bf16.gmra.mrb[0].mxu0 %v9538
      %v9790 = vpop.f32.mrb[0].mxu0
      %v9791 = vadd.f32 %v9630, %v9790
      %v9792 = vpop.f32.mrb[0].mxu0
      %v9793 = vpop.f32.mrb[0].mxu0
      %v9794 = vadd.f32 %v9633, %v9793
      %v9795 = vpop.f32.mrb[0].mxu0
      %9796 = vmatprep.mubr.bf16.mxu0 0
      %9797 = vmatmul.mubr.bf16.gmra.mrb[0].mxu0 %v9541
      %v9798 = vpop.f32.mrb[0].mxu0
      %v9799 = vadd.f32 %v9638, %v9798
      %v9800 = vpop.f32.mrb[0].mxu0
      %v9801 = vpop.f32.mrb[0].mxu0
      %v9802 = vadd.f32 %v9641, %v9801
      %v9803 = vpop.f32.mrb[0].mxu0
      %9804 = vmatprep.mubr.bf16.mxu0 0
      %9805 = vmatmul.mubr.bf16.gmra.mrb[0].mxu0 %v9544
      %v9806 = vpop.f32.mrb[0].mxu0
      %v9807 = vadd.f32 %v9646, %v9806
      %v9808 = vpop.f32.mrb[0].mxu0
      %v9809 = vpop.f32.mrb[0].mxu0
      %v9810 = vadd.f32 %v9649, %v9809
      %v9811 = vpop.f32.mrb[0].mxu0
      %9812 = vmatprep.mubr.bf16.mxu0 0
      %9813 = vmatmul.mubr.bf16.gmra.mrb[0].mxu0 %v9547
      %v9814 = vpop.f32.mrb[0].mxu0
      %v9815 = vadd.f32 %v9654, %v9814
      %v9816 = vpop.f32.mrb[0].mxu0
      %v9817 = vpop.f32.mrb[0].mxu0
      %v9818 = vadd.f32 %v9657, %v9817
      %v9819 = vpop.f32.mrb[0].mxu0
      %9820 = vmatprep.mubr.bf16.mxu0 0
      %9821 = vmatmul.mubr.bf16.gmra.mrb[0].mxu0 %v9550
      %v9822 = vpop.f32.mrb[0].mxu0
      %v9823 = vadd.f32 %v9662, %v9822
      %v9824 = vpop.f32.mrb[0].mxu0
      %v9825 = vpop.f32.mrb[0].mxu0
      %v9826 = vadd.f32 %v9665, %v9825
      %v9827 = vpop.f32.mrb[0].mxu0
      %9828 = vmatprep.mubr.bf16.mxu0 0
      %9829 = vmatmul.mubr.bf16.gmra.mrb[0].mxu0 %v9553
      %v9830 = vpop.f32.mrb[0].mxu0
      %v9831 = vadd.f32 %v9670, %v9830
      %v9832 = vpop.f32.mrb[0].mxu0
      %v9833 = vpop.f32.mrb[0].mxu0
      %v9834 = vadd.f32 %v9673, %v9833
      %v9835 = vpop.f32.mrb[0].mxu0
      %9836 = vmatprep.mubr.bf16.mxu0 0
      %9837 = vmatmul.mubr.bf16.gmra.mrb[0].mxu0 %v9556
      %v9838 = vpop.f32.mrb[0].mxu0
      %v9839 = vadd.f32 %v9678, %v9838
      %v9840 = vpop.f32.mrb[0].mxu0
      %v9841 = vpop.f32.mrb[0].mxu0
      %v9842 = vadd.f32 %v9681, %v9841
      %v9843 = vpop.f32.mrb[0].mxu0
      %9844 = vmatprep.mubr.bf16.mxu0 0
      %9845 = vmatmul.mubr.bf16.gmra.mrb[0].mxu0 %v9559
      %v9846 = vpop.f32.mrb[0].mxu0
      %v9847 = vadd.f32 %v9686, %v9846
      %v9848 = vpop.f32.mrb[0].mxu0
      %v9849 = vpop.f32.mrb[0].mxu0
      %v9850 = vadd.f32 %v9689, %v9849
      %v9851 = vpop.f32.mrb[0].mxu0
      %9852 = vmatprep.mubr.bf16.mxu0 0
      %9853 = vmatmul.mubr.bf16.gmra.mrb[0].mxu0 %v9562
      %v9854 = vpop.f32.mrb[0].mxu0
      %v9855 = vadd.f32 %v9694, %v9854
      %v9856 = vpop.f32.mrb[0].mxu0
      %v9857 = vpop.f32.mrb[0].mxu0
      %v9858 = vadd.f32 %v9697, %v9857
      %v9859 = vpop.f32.mrb[0].mxu0
      %9860 = vmatprep.mubr.bf16.mxu0 0
      %9861 = vmatmul.mubr.bf16.gmra.mrb[0].mxu0 %v9565
      %v9862 = vpop.f32.mrb[0].mxu0
      %v9863 = vadd.f32 %v9702, %v9862
      %v9864 = vpop.f32.mrb[0].mxu0
      %v9865 = vpop.f32.mrb[0].mxu0
      %v9866 = vadd.f32 %v9705, %v9865
      %v9867 = vpop.f32.mrb[0].mxu0
      %9868 = vmatprep.mubr.bf16.mxu0 0
      %9869 = vmatmul.mubr.bf16.gmra.mrb[0].mxu0 %v9568
      %v9870 = vpop.f32.mrb[0].mxu0
      %v9871 = vadd.f32 %v9710, %v9870
      %v9872 = vpop.f32.mrb[0].mxu0
      %v9873 = vpop.f32.mrb[0].mxu0
      %v9874 = vadd.f32 %v9713, %v9873
      %v9875 = vpop.f32.mrb[0].mxu0
      %9876 = vmatprep.mubr.bf16.mxu0 0
      %9877 = vmatmul.mubr.bf16.gmra.mrb[0].mxu0 %v9571
      %v9878 = vpop.f32.mrb[0].mxu0
      %v9879 = vadd.f32 %v9718, %v9878
      %v9880 = vpop.f32.mrb[0].mxu0
      %v9881 = vpop.f32.mrb[0].mxu0
      %v9882 = vadd.f32 %v9721, %v9881
      %v9883 = vpop.f32.mrb[0].mxu0
      %9884 = vmatprep.mubr.bf16.mxu0 0
      %9885 = vmatmul.mubr.bf16.gmra.mrb[0].mxu0 %v9574
      %v9886 = vpop.f32.mrb[0].mxu0
      %v9887 = vadd.f32 %v9726, %v9886
      %v9888 = vpop.f32.mrb[0].mxu0
      %v9889 = vpop.f32.mrb[0].mxu0
      %v9890 = vadd.f32 %v9729, %v9889
      %v9891 = vpop.f32.mrb[0].mxu0
      %9892 = vmatprep.mubr.bf16.mxu0 0
      %9893 = vmatmul.mubr.bf16.gmra.mrb[0].mxu0 %v9577
      %v9894 = vpop.f32.mrb[0].mxu0
      %v9895 = vadd.f32 %v9734, %v9894
      %v9896 = vpop.f32.mrb[0].mxu0
      %v9897 = vpop.f32.mrb[0].mxu0
      %v9898 = vadd.f32 %v9737, %v9897
      %v9899 = vpop.f32.mrb[0].mxu0
      %9900 = vdwg.mxu0
      %v9901 = vadd.f32 %v8281, %v9775
      %v9902 = vadd.f32 %v8284, %v9778
      %v9903 = vadd.f32 %v8289, %v9783
      %v9904 = vadd.f32 %v8292, %v9786
      %v9905 = vadd.f32 %v8297, %v9791
      %v9906 = vadd.f32 %v8300, %v9794
      %v9907 = vadd.f32 %v8305, %v9799
      %v9908 = vadd.f32 %v8308, %v9802
      %v9909 = vadd.f32 %v8313, %v9807
      %v9910 = vadd.f32 %v8316, %v9810
      %v9911 = vadd.f32 %v8321, %v9815
      %v9912 = vadd.f32 %v8324, %v9818
      %v9913 = vadd.f32 %v8329, %v9823
      %v9914 = vadd.f32 %v8332, %v9826
      %v9915 = vadd.f32 %v8337, %v9831
      %v9916 = vadd.f32 %v8340, %v9834
      %v9917 = vadd.f32 %v8345, %v9839
      %v9918 = vadd.f32 %v8348, %v9842
      %v9919 = vadd.f32 %v8353, %v9847
      %v9920 = vadd.f32 %v8356, %v9850
      %v9921 = vadd.f32 %v8361, %v9855
      %v9922 = vadd.f32 %v8364, %v9858
      %v9923 = vadd.f32 %v8369, %v9863
      %v9924 = vadd.f32 %v8372, %v9866
      %v9925 = vadd.f32 %v8377, %v9871
      %v9926 = vadd.f32 %v8380, %v9874
      %v9927 = vadd.f32 %v8385, %v9879
      %v9928 = vadd.f32 %v8388, %v9882
      %v9929 = vadd.f32 %v8393, %v9887
      %v9930 = vadd.f32 %v8396, %v9890
      %v9931 = vadd.f32 %v8401, %v9895
      %v9932 = vadd.f32 %v8404, %v9898
      %v9933 = vld [vmem:[%s5] sm:$0x1]
      %v9935 = vlaneseq
      %v9936 = vshrl.u32 %v9935, 7
      %v9937 = vsub.s32 0, %v9936
      %v9938 = vrot.slane %v9933, %v9937
      %v9940 = vmul.f32 %v9901, %v9938
      %v9941 = vmul.f32 %v9902, %v9938
      %v9942 = vmul.f32 %v9903, %v9938
      %v9943 = vmul.f32 %v9904, %v9938
      %v9944 = vmul.f32 %v9905, %v9938
      %v9945 = vmul.f32 %v9906, %v9938
      %v9946 = vmul.f32 %v9907, %v9938
      %v9947 = vmul.f32 %v9908, %v9938
      %v9948 = vmul.f32 %v9909, %v9938
      %v9949 = vmul.f32 %v9910, %v9938
      %v9950 = vmul.f32 %v9911, %v9938
      %v9951 = vmul.f32 %v9912, %v9938
      %v9952 = vmul.f32 %v9913, %v9938
      %v9953 = vmul.f32 %v9914, %v9938
      %v9954 = vmul.f32 %v9915, %v9938
      %v9955 = vmul.f32 %v9916, %v9938
      %v9956 = vmul.f32 %v9917, %v9938
      %v9957 = vmul.f32 %v9918, %v9938
      %v9958 = vmul.f32 %v9919, %v9938
      %v9959 = vmul.f32 %v9920, %v9938
      %v9960 = vmul.f32 %v9921, %v9938
      %v9961 = vmul.f32 %v9922, %v9938
      %v9962 = vmul.f32 %v9923, %v9938
      %v9963 = vmul.f32 %v9924, %v9938
      %v9964 = vmul.f32 %v9925, %v9938
      %v9965 = vmul.f32 %v9926, %v9938
      %v9966 = vmul.f32 %v9927, %v9938
      %v9967 = vmul.f32 %v9928, %v9938
      %v9968 = vmul.f32 %v9929, %v9938
      %v9969 = vmul.f32 %v9930, %v9938
      %v9970 = vmul.f32 %v9931, %v9938
      %v9971 = vmul.f32 %v9932, %v9938
      %v9972 = vld [vmem:[%s6] sm:$0x1]
      %v9974 = vlaneseq
      %v9975 = vshrl.u32 %v9974, 7
      %v9976 = vsub.s32 0, %v9975
      %v9977 = vrot.slane %v9972, %v9976
      %v9979 = vadd.f32 %v9940, %v9977
      %v9980 = vadd.f32 %v9941, %v9977
      %v9981 = vadd.f32 %v9942, %v9977
      %v9982 = vadd.f32 %v9943, %v9977
      %v9983 = vadd.f32 %v9944, %v9977
      %v9984 = vadd.f32 %v9945, %v9977
      %v9985 = vadd.f32 %v9946, %v9977
      %v9986 = vadd.f32 %v9947, %v9977
      %v9987 = vadd.f32 %v9948, %v9977
      %v9988 = vadd.f32 %v9949, %v9977
      %v9989 = vadd.f32 %v9950, %v9977
      %v9990 = vadd.f32 %v9951, %v9977
      %v9991 = vadd.f32 %v9952, %v9977
      %v9992 = vadd.f32 %v9953, %v9977
      %v9993 = vadd.f32 %v9954, %v9977
      %v9994 = vadd.f32 %v9955, %v9977
      %v9995 = vadd.f32 %v9956, %v9977
      %v9996 = vadd.f32 %v9957, %v9977
      %v9997 = vadd.f32 %v9958, %v9977
      %v9998 = vadd.f32 %v9959, %v9977
      %v9999 = vadd.f32 %v9960, %v9977
      %v10000 = vadd.f32 %v9961, %v9977
      %v10001 = vadd.f32 %v9962, %v9977
      %v10002 = vadd.f32 %v9963, %v9977
      %v10003 = vadd.f32 %v9964, %v9977
      %v10004 = vadd.f32 %v9965, %v9977
      %v10005 = vadd.f32 %v9966, %v9977
      %v10006 = vadd.f32 %v9967, %v9977
      %v10007 = vadd.f32 %v9968, %v9977
      %v10008 = vadd.f32 %v9969, %v9977
      %v10009 = vadd.f32 %v9970, %v9977
      %v10010 = vadd.f32 %v9971, %v9977
      %v10011 = vld [vmem:[%s1928 + $0x1] sm:$0xff]
      %v10012 = vld [vmem:[%s1928 + $0x11] sm:$0xff]
      %v10013 = vld [vmem:[%s1928 + $0x21] sm:$0xff]
      %v10014 = vld [vmem:[%s1928 + $0x31] sm:$0xff]
      %v10015 = vld [vmem:[%s1928 + $0x41] sm:$0xff]
      %v10016 = vld [vmem:[%s1928 + $0x51] sm:$0xff]
      %v10017 = vld [vmem:[%s1928 + $0x61] sm:$0xff]
      %v10018 = vld [vmem:[%s1928 + $0x71] sm:$0xff]
      %v10019 = vld [vmem:[%s1928 + $0xa1] sm:$0xff]
      %v10020 = vld [vmem:[%s1928 + $0xb1] sm:$0xff]
      %v10021 = vld [vmem:[%s1928 + $0xc1] sm:$0xff]
      %v10022 = vld [vmem:[%s1928 + $0xd1] sm:$0xff]
      %v10023 = vld [vmem:[%s1928 + $0xe1] sm:$0xff]
      %v10024 = vld [vmem:[%s1928 + $0xf1] sm:$0xff]
      %v10025 = vld [vmem:[%s1928 + $0x101] sm:$0xff]
      %v10026 = vld [vmem:[%s1928 + $0x111] sm:$0xff]
      %v10027 = vld [vmem:[%s1928 + $0x141] sm:$0xff]
      %v10028 = vld [vmem:[%s1928 + $0x151] sm:$0xff]
      %v10029 = vld [vmem:[%s1928 + $0x161] sm:$0xff]
      %v10030 = vld [vmem:[%s1928 + $0x171] sm:$0xff]
      %v10031 = vld [vmem:[%s1928 + $0x181] sm:$0xff]
      %v10032 = vld [vmem:[%s1928 + $0x191] sm:$0xff]
      %v10033 = vld [vmem:[%s1928 + $0x1a1] sm:$0xff]
      %v10034 = vld [vmem:[%s1928 + $0x1b1] sm:$0xff]
      %v10035 = vld [vmem:[%s1928 + $0x1e1] sm:$0xff]
      %v10036 = vld [vmem:[%s1928 + $0x1f1] sm:$0xff]
      %v10037 = vld [vmem:[%s1928 + $0x201] sm:$0xff]
      %v10038 = vld [vmem:[%s1928 + $0x211] sm:$0xff]
      %v10039 = vld [vmem:[%s1928 + $0x221] sm:$0xff]
      %v10040 = vld [vmem:[%s1928 + $0x231] sm:$0xff]
      %v10041 = vld [vmem:[%s1928 + $0x241] sm:$0xff]
      %v10042 = vld [vmem:[%s1928 + $0x251] sm:$0xff]
      %v10043 = vadd.f32 %v9979, %v10011
      %v10044 = vadd.f32 %v9980, %v10012
      %v10045 = vadd.f32 %v9981, %v10013
      %v10046 = vadd.f32 %v9982, %v10014
      %v10047 = vadd.f32 %v9983, %v10015
      %v10048 = vadd.f32 %v9984, %v10016
      %v10049 = vadd.f32 %v9985, %v10017
      %v10050 = vadd.f32 %v9986, %v10018
      %v10051 = vadd.f32 %v9987, %v10019
      %v10052 = vadd.f32 %v9988, %v10020
      %v10053 = vadd.f32 %v9989, %v10021
      %v10054 = vadd.f32 %v9990, %v10022
      %v10055 = vadd.f32 %v9991, %v10023
      %v10056 = vadd.f32 %v9992, %v10024
      %v10057 = vadd.f32 %v9993, %v10025
      %v10058 = vadd.f32 %v9994, %v10026
      %v10059 = vadd.f32 %v9995, %v10027
      %v10060 = vadd.f32 %v9996, %v10028
      %v10061 = vadd.f32 %v9997, %v10029
      %v10062 = vadd.f32 %v9998, %v10030
      %v10063 = vadd.f32 %v9999, %v10031
      %v10064 = vadd.f32 %v10000, %v10032
      %v10065 = vadd.f32 %v10001, %v10033
      %v10066 = vadd.f32 %v10002, %v10034
      %v10067 = vadd.f32 %v10003, %v10035
      %v10068 = vadd.f32 %v10004, %v10036
      %v10069 = vadd.f32 %v10005, %v10037
      %v10070 = vadd.f32 %v10006, %v10038
      %v10071 = vadd.f32 %v10007, %v10039
      %v10072 = vadd.f32 %v10008, %v10040
      %v10073 = vadd.f32 %v10009, %v10041
      %v10074 = vadd.f32 %v10010, %v10042
      %v10075 = vmax.f32 %v10043, 0.0
      %v10076 = vmax.f32 %v10044, 0.0
      %v10077 = vmax.f32 %v10045, 0.0
      %v10078 = vmax.f32 %v10046, 0.0
      %v10079 = vmax.f32 %v10047, 0.0
      %v10080 = vmax.f32 %v10048, 0.0
      %v10081 = vmax.f32 %v10049, 0.0
      %v10082 = vmax.f32 %v10050, 0.0
      %v10083 = vmax.f32 %v10051, 0.0
      %v10084 = vmax.f32 %v10052, 0.0
      %v10085 = vmax.f32 %v10053, 0.0
      %v10086 = vmax.f32 %v10054, 0.0
      %v10087 = vmax.f32 %v10055, 0.0
      %v10088 = vmax.f32 %v10056, 0.0
      %v10089 = vmax.f32 %v10057, 0.0
      %v10090 = vmax.f32 %v10058, 0.0
      %v10091 = vmax.f32 %v10059, 0.0
      %v10092 = vmax.f32 %v10060, 0.0
      %v10093 = vmax.f32 %v10061, 0.0
      %v10094 = vmax.f32 %v10062, 0.0
      %v10095 = vmax.f32 %v10063, 0.0
      %v10096 = vmax.f32 %v10064, 0.0
      %v10097 = vmax.f32 %v10065, 0.0
      %v10098 = vmax.f32 %v10066, 0.0
      %v10099 = vmax.f32 %v10067, 0.0
      %v10100 = vmax.f32 %v10068, 0.0
      %v10101 = vmax.f32 %v10069, 0.0
      %v10102 = vmax.f32 %v10070, 0.0
      %v10103 = vmax.f32 %v10071, 0.0
      %v10104 = vmax.f32 %v10072, 0.0
      %v10105 = vmax.f32 %v10073, 0.0
      %v10106 = vmax.f32 %v10074, 0.0
      %v10139 = vrot.slane %v10076, 7
      %vm10140 = vcmask 1041409
      %v10141 = vsel %vm10140, %v10139, %v10075
      %v10142 = vrot.slane %v10077, 6
      %vm10143 = vcmask 1042434
      %v10144 = vsel %vm10143, %v10142, %v10141
      %v10145 = vrot.slane %v10078, 5
      %vm10146 = vcmask 1043459
      %v10147 = vsel %vm10146, %v10145, %v10144
      %v10148 = vrot.slane %v10079, 4
      %vm10149 = vcmask 1044484
      %v10150 = vsel %vm10149, %v10148, %v10147
      %v10151 = vrot.slane %v10080, 3
      %vm10152 = vcmask 1045509
      %v10153 = vsel %vm10152, %v10151, %v10150
      %v10154 = vrot.slane %v10081, 2
      %vm10155 = vcmask 1046534
      %v10156 = vsel %vm10155, %v10154, %v10153
      %v10157 = vrot.slane %v10082, 1
      %vm10158 = vcmask 1047559
      %v10159 = vsel %vm10158, %v10157, %v10156
      %v10160 = vrot.slane %v10084, 7
      %v10161 = vsel %vm10140, %v10160, %v10083
      %v10162 = vrot.slane %v10085, 6
      %v10163 = vsel %vm10143, %v10162, %v10161
      %v10164 = vrot.slane %v10086, 5
      %v10165 = vsel %vm10146, %v10164, %v10163
      %v10166 = vrot.slane %v10087, 4
      %v10167 = vsel %vm10149, %v10166, %v10165
      %v10168 = vrot.slane %v10088, 3
      %v10169 = vsel %vm10152, %v10168, %v10167
      %v10170 = vrot.slane %v10089, 2
      %v10171 = vsel %vm10155, %v10170, %v10169
      %v10172 = vrot.slane %v10090, 1
      %v10173 = vsel %vm10158, %v10172, %v10171
      %v10174 = vrot.slane %v10092, 7
      %v10175 = vsel %vm10140, %v10174, %v10091
      %v10176 = vrot.slane %v10093, 6
      %v10177 = vsel %vm10143, %v10176, %v10175
      %v10178 = vrot.slane %v10094, 5
      %v10179 = vsel %vm10146, %v10178, %v10177
      %v10180 = vrot.slane %v10095, 4
      %v10181 = vsel %vm10149, %v10180, %v10179
      %v10182 = vrot.slane %v10096, 3
      %v10183 = vsel %vm10152, %v10182, %v10181
      %v10184 = vrot.slane %v10097, 2
      %v10185 = vsel %vm10155, %v10184, %v10183
      %v10186 = vrot.slane %v10098, 1
      %v10187 = vsel %vm10158, %v10186, %v10185
      %v10188 = vrot.slane %v10100, 7
      %v10189 = vsel %vm10140, %v10188, %v10099
      %v10190 = vrot.slane %v10101, 6
      %v10191 = vsel %vm10143, %v10190, %v10189
      %v10192 = vrot.slane %v10102, 5
      %v10193 = vsel %vm10146, %v10192, %v10191
      %v10194 = vrot.slane %v10103, 4
      %v10195 = vsel %vm10149, %v10194, %v10193
      %v10196 = vrot.slane %v10104, 3
      %v10197 = vsel %vm10152, %v10196, %v10195
      %v10198 = vrot.slane %v10105, 2
      %v10199 = vsel %vm10155, %v10198, %v10197
      %v10200 = vrot.slane %v10106, 1
      %v10201 = vsel %vm10158, %v10200, %v10199
      %v10206 = vrot.slane %v10075, 1
      %v10207 = vsel %vm10140, %v10076, %v10206
      %v10208 = vrot.slane %v10077, 7
      %v10209 = vsel %vm10143, %v10208, %v10207
      %v10210 = vrot.slane %v10078, 6
      %v10211 = vsel %vm10146, %v10210, %v10209
      %v10212 = vrot.slane %v10079, 5
      %v10213 = vsel %vm10149, %v10212, %v10211
      %v10214 = vrot.slane %v10080, 4
      %v10215 = vsel %vm10152, %v10214, %v10213
      %v10216 = vrot.slane %v10081, 3
      %v10217 = vsel %vm10155, %v10216, %v10215
      %v10218 = vrot.slane %v10082, 2
      %v10219 = vsel %vm10158, %v10218, %v10217
      %v10220 = vrot.slane %v10083, 1
      %v10221 = vsel %vm10140, %v10084, %v10220
      %v10222 = vrot.slane %v10085, 7
      %v10223 = vsel %vm10143, %v10222, %v10221
      %v10224 = vrot.slane %v10086, 6
      %v10225 = vsel %vm10146, %v10224, %v10223
      %v10226 = vrot.slane %v10087, 5
      %v10227 = vsel %vm10149, %v10226, %v10225
      %v10228 = vrot.slane %v10088, 4
      %v10229 = vsel %vm10152, %v10228, %v10227
      %v10230 = vrot.slane %v10089, 3
      %v10231 = vsel %vm10155, %v10230, %v10229
      %v10232 = vrot.slane %v10090, 2
      %v10233 = vsel %vm10158, %v10232, %v10231
      %v10234 = vrot.slane %v10091, 1
      %v10235 = vsel %vm10140, %v10092, %v10234
      %v10236 = vrot.slane %v10093, 7
      %v10237 = vsel %vm10143, %v10236, %v10235
      %v10238 = vrot.slane %v10094, 6
      %v10239 = vsel %vm10146, %v10238, %v10237
      %v10240 = vrot.slane %v10095, 5
      %v10241 = vsel %vm10149, %v10240, %v10239
      %v10242 = vrot.slane %v10096, 4
      %v10243 = vsel %vm10152, %v10242, %v10241
      %v10244 = vrot.slane %v10097, 3
      %v10245 = vsel %vm10155, %v10244, %v10243
      %v10246 = vrot.slane %v10098, 2
      %v10247 = vsel %vm10158, %v10246, %v10245
      %v10248 = vrot.slane %v10099, 1
      %v10249 = vsel %vm10140, %v10100, %v10248
      %v10250 = vrot.slane %v10101, 7
      %v10251 = vsel %vm10143, %v10250, %v10249
      %v10252 = vrot.slane %v10102, 6
      %v10253 = vsel %vm10146, %v10252, %v10251
      %v10254 = vrot.slane %v10103, 5
      %v10255 = vsel %vm10149, %v10254, %v10253
      %v10256 = vrot.slane %v10104, 4
      %v10257 = vsel %vm10152, %v10256, %v10255
      %v10258 = vrot.slane %v10105, 3
      %v10259 = vsel %vm10155, %v10258, %v10257
      %v10260 = vrot.slane %v10106, 2
      %v10261 = vsel %vm10158, %v10260, %v10259
      %10262 = vrot.lane.b32.xlu0 %v10219, 32
      %v10263 = vpop.permute.xlu0 %10262
      %10264 = vrot.lane.b32.xlu0 %v10233, 32
      %v10265 = vpop.permute.xlu0 %10264
      %10266 = vrot.lane.b32.xlu0 %v10247, 32
      %v10267 = vpop.permute.xlu0 %10266
      %10268 = vrot.lane.b32.xlu0 %v10261, 32
      %v10269 = vpop.permute.xlu0 %10268
      %v10274 = vrot.slane %v10075, 2
      %v10275 = vrot.slane %v10076, 1
      %v10276 = vsel %vm10140, %v10275, %v10274
      %v10277 = vsel %vm10143, %v10077, %v10276
      %v10278 = vrot.slane %v10078, 7
      %v10279 = vsel %vm10146, %v10278, %v10277
      %v10280 = vrot.slane %v10079, 6
      %v10281 = vsel %vm10149, %v10280, %v10279
      %v10282 = vrot.slane %v10080, 5
      %v10283 = vsel %vm10152, %v10282, %v10281
      %v10284 = vrot.slane %v10081, 4
      %v10285 = vsel %vm10155, %v10284, %v10283
      %v10286 = vrot.slane %v10082, 3
      %v10287 = vsel %vm10158, %v10286, %v10285
      %v10288 = vrot.slane %v10083, 2
      %v10289 = vrot.slane %v10084, 1
      %v10290 = vsel %vm10140, %v10289, %v10288
      %v10291 = vsel %vm10143, %v10085, %v10290
      %v10292 = vrot.slane %v10086, 7
      %v10293 = vsel %vm10146, %v10292, %v10291
      %v10294 = vrot.slane %v10087, 6
      %v10295 = vsel %vm10149, %v10294, %v10293
      %v10296 = vrot.slane %v10088, 5
      %v10297 = vsel %vm10152, %v10296, %v10295
      %v10298 = vrot.slane %v10089, 4
      %v10299 = vsel %vm10155, %v10298, %v10297
      %v10300 = vrot.slane %v10090, 3
      %v10301 = vsel %vm10158, %v10300, %v10299
      %v10302 = vrot.slane %v10091, 2
      %v10303 = vrot.slane %v10092, 1
      %v10304 = vsel %vm10140, %v10303, %v10302
      %v10305 = vsel %vm10143, %v10093, %v10304
      %v10306 = vrot.slane %v10094, 7
      %v10307 = vsel %vm10146, %v10306, %v10305
      %v10308 = vrot.slane %v10095, 6
      %v10309 = vsel %vm10149, %v10308, %v10307
      %v10310 = vrot.slane %v10096, 5
      %v10311 = vsel %vm10152, %v10310, %v10309
      %v10312 = vrot.slane %v10097, 4
      %v10313 = vsel %vm10155, %v10312, %v10311
      %v10314 = vrot.slane %v10098, 3
      %v10315 = vsel %vm10158, %v10314, %v10313
      %v10316 = vrot.slane %v10099, 2
      %v10317 = vrot.slane %v10100, 1
      %v10318 = vsel %vm10140, %v10317, %v10316
      %v10319 = vsel %vm10143, %v10101, %v10318
      %v10320 = vrot.slane %v10102, 7
      %v10321 = vsel %vm10146, %v10320, %v10319
      %v10322 = vrot.slane %v10103, 6
      %v10323 = vsel %vm10149, %v10322, %v10321
      %v10324 = vrot.slane %v10104, 5
      %v10325 = vsel %vm10152, %v10324, %v10323
      %v10326 = vrot.slane %v10105, 4
      %v10327 = vsel %vm10155, %v10326, %v10325
      %v10328 = vrot.slane %v10106, 3
      %v10329 = vsel %vm10158, %v10328, %v10327
      %10330 = vrot.lane.b32.xlu0 %v10287, 64
      %v10331 = vpop.permute.xlu0 %10330
      %10332 = vrot.lane.b32.xlu0 %v10301, 64
      %v10333 = vpop.permute.xlu0 %10332
      %10334 = vrot.lane.b32.xlu0 %v10315, 64
      %v10335 = vpop.permute.xlu0 %10334
      %10336 = vrot.lane.b32.xlu0 %v10329, 64
      %v10337 = vpop.permute.xlu0 %10336
      %v10342 = vrot.slane %v10075, 3
      %v10343 = vrot.slane %v10076, 2
      %v10344 = vsel %vm10140, %v10343, %v10342
      %v10345 = vrot.slane %v10077, 1
      %v10346 = vsel %vm10143, %v10345, %v10344
      %v10347 = vsel %vm10146, %v10078, %v10346
      %v10348 = vrot.slane %v10079, 7
      %v10349 = vsel %vm10149, %v10348, %v10347
      %v10350 = vrot.slane %v10080, 6
      %v10351 = vsel %vm10152, %v10350, %v10349
      %v10352 = vrot.slane %v10081, 5
      %v10353 = vsel %vm10155, %v10352, %v10351
      %v10354 = vrot.slane %v10082, 4
      %v10355 = vsel %vm10158, %v10354, %v10353
      %v10356 = vrot.slane %v10083, 3
      %v10357 = vrot.slane %v10084, 2
      %v10358 = vsel %vm10140, %v10357, %v10356
      %v10359 = vrot.slane %v10085, 1
      %v10360 = vsel %vm10143, %v10359, %v10358
      %v10361 = vsel %vm10146, %v10086, %v10360
      %v10362 = vrot.slane %v10087, 7
      %v10363 = vsel %vm10149, %v10362, %v10361
      %v10364 = vrot.slane %v10088, 6
      %v10365 = vsel %vm10152, %v10364, %v10363
      %v10366 = vrot.slane %v10089, 5
      %v10367 = vsel %vm10155, %v10366, %v10365
      %v10368 = vrot.slane %v10090, 4
      %v10369 = vsel %vm10158, %v10368, %v10367
      %v10370 = vrot.slane %v10091, 3
      %v10371 = vrot.slane %v10092, 2
      %v10372 = vsel %vm10140, %v10371, %v10370
      %v10373 = vrot.slane %v10093, 1
      %v10374 = vsel %vm10143, %v10373, %v10372
      %v10375 = vsel %vm10146, %v10094, %v10374
      %v10376 = vrot.slane %v10095, 7
      %v10377 = vsel %vm10149, %v10376, %v10375
      %v10378 = vrot.slane %v10096, 6
      %v10379 = vsel %vm10152, %v10378, %v10377
      %v10380 = vrot.slane %v10097, 5
      %v10381 = vsel %vm10155, %v10380, %v10379
      %v10382 = vrot.slane %v10098, 4
      %v10383 = vsel %vm10158, %v10382, %v10381
      %v10384 = vrot.slane %v10099, 3
      %v10385 = vrot.slane %v10100, 2
      %v10386 = vsel %vm10140, %v10385, %v10384
      %v10387 = vrot.slane %v10101, 1
      %v10388 = vsel %vm10143, %v10387, %v10386
      %v10389 = vsel %vm10146, %v10102, %v10388
      %v10390 = vrot.slane %v10103, 7
      %v10391 = vsel %vm10149, %v10390, %v10389
      %v10392 = vrot.slane %v10104, 6
      %v10393 = vsel %vm10152, %v10392, %v10391
      %v10394 = vrot.slane %v10105, 5
      %v10395 = vsel %vm10155, %v10394, %v10393
      %v10396 = vrot.slane %v10106, 4
      %v10397 = vsel %vm10158, %v10396, %v10395
      %10398 = vrot.lane.b32.xlu0 %v10355, 96
      %v10399 = vpop.permute.xlu0 %10398
      %10400 = vrot.lane.b32.xlu0 %v10369, 96
      %v10401 = vpop.permute.xlu0 %10400
      %10402 = vrot.lane.b32.xlu0 %v10383, 96
      %v10403 = vpop.permute.xlu0 %10402
      %10404 = vrot.lane.b32.xlu0 %v10397, 96
      %v10405 = vpop.permute.xlu0 %10404
      %v10410 = vrot.slane %v10075, 4
      %v10411 = vrot.slane %v10076, 3
      %v10412 = vsel %vm10140, %v10411, %v10410
      %v10413 = vrot.slane %v10077, 2
      %v10414 = vsel %vm10143, %v10413, %v10412
      %v10415 = vrot.slane %v10078, 1
      %v10416 = vsel %vm10146, %v10415, %v10414
      %v10417 = vsel %vm10149, %v10079, %v10416
      %v10418 = vrot.slane %v10080, 7
      %v10419 = vsel %vm10152, %v10418, %v10417
      %v10420 = vrot.slane %v10081, 6
      %v10421 = vsel %vm10155, %v10420, %v10419
      %v10422 = vrot.slane %v10082, 5
      %v10423 = vsel %vm10158, %v10422, %v10421
      %v10424 = vrot.slane %v10083, 4
      %v10425 = vrot.slane %v10084, 3
      %v10426 = vsel %vm10140, %v10425, %v10424
      %v10427 = vrot.slane %v10085, 2
      %v10428 = vsel %vm10143, %v10427, %v10426
      %v10429 = vrot.slane %v10086, 1
      %v10430 = vsel %vm10146, %v10429, %v10428
      %v10431 = vsel %vm10149, %v10087, %v10430
      %v10432 = vrot.slane %v10088, 7
      %v10433 = vsel %vm10152, %v10432, %v10431
      %v10434 = vrot.slane %v10089, 6
      %v10435 = vsel %vm10155, %v10434, %v10433
      %v10436 = vrot.slane %v10090, 5
      %v10437 = vsel %vm10158, %v10436, %v10435
      %v10438 = vrot.slane %v10091, 4
      %v10439 = vrot.slane %v10092, 3
      %v10440 = vsel %vm10140, %v10439, %v10438
      %v10441 = vrot.slane %v10093, 2
      %v10442 = vsel %vm10143, %v10441, %v10440
      %v10443 = vrot.slane %v10094, 1
      %v10444 = vsel %vm10146, %v10443, %v10442
      %v10445 = vsel %vm10149, %v10095, %v10444
      %v10446 = vrot.slane %v10096, 7
      %v10447 = vsel %vm10152, %v10446, %v10445
      %v10448 = vrot.slane %v10097, 6
      %v10449 = vsel %vm10155, %v10448, %v10447
      %v10450 = vrot.slane %v10098, 5
      %v10451 = vsel %vm10158, %v10450, %v10449
      %v10452 = vrot.slane %v10099, 4
      %v10453 = vrot.slane %v10100, 3
      %v10454 = vsel %vm10140, %v10453, %v10452
      %v10455 = vrot.slane %v10101, 2
      %v10456 = vsel %vm10143, %v10455, %v10454
      %v10457 = vrot.slane %v10102, 1
      %v10458 = vsel %vm10146, %v10457, %v10456
      %v10459 = vsel %vm10149, %v10103, %v10458
      %v10460 = vrot.slane %v10104, 7
      %v10461 = vsel %vm10152, %v10460, %v10459
      %v10462 = vrot.slane %v10105, 6
      %v10463 = vsel %vm10155, %v10462, %v10461
      %v10464 = vrot.slane %v10106, 5
      %v10465 = vsel %vm10158, %v10464, %v10463
      %v10470 = vrot.slane %v10075, 5
      %v10471 = vrot.slane %v10076, 4
      %v10472 = vsel %vm10140, %v10471, %v10470
      %v10473 = vrot.slane %v10077, 3
      %v10474 = vsel %vm10143, %v10473, %v10472
      %v10475 = vrot.slane %v10078, 2
      %v10476 = vsel %vm10146, %v10475, %v10474
      %v10477 = vrot.slane %v10079, 1
      %v10478 = vsel %vm10149, %v10477, %v10476
      %v10479 = vsel %vm10152, %v10080, %v10478
      %v10480 = vrot.slane %v10081, 7
      %v10481 = vsel %vm10155, %v10480, %v10479
      %v10482 = vrot.slane %v10082, 6
      %v10483 = vsel %vm10158, %v10482, %v10481
      %v10484 = vrot.slane %v10083, 5
      %v10485 = vrot.slane %v10084, 4
      %v10486 = vsel %vm10140, %v10485, %v10484
      %v10487 = vrot.slane %v10085, 3
      %v10488 = vsel %vm10143, %v10487, %v10486
      %v10489 = vrot.slane %v10086, 2
      %v10490 = vsel %vm10146, %v10489, %v10488
      %v10491 = vrot.slane %v10087, 1
      %v10492 = vsel %vm10149, %v10491, %v10490
      %v10493 = vsel %vm10152, %v10088, %v10492
      %v10494 = vrot.slane %v10089, 7
      %v10495 = vsel %vm10155, %v10494, %v10493
      %v10496 = vrot.slane %v10090, 6
      %v10497 = vsel %vm10158, %v10496, %v10495
      %v10498 = vrot.slane %v10091, 5
      %v10499 = vrot.slane %v10092, 4
      %v10500 = vsel %vm10140, %v10499, %v10498
      %v10501 = vrot.slane %v10093, 3
      %v10502 = vsel %vm10143, %v10501, %v10500
      %v10503 = vrot.slane %v10094, 2
      %v10504 = vsel %vm10146, %v10503, %v10502
      %v10505 = vrot.slane %v10095, 1
      %v10506 = vsel %vm10149, %v10505, %v10504
      %v10507 = vsel %vm10152, %v10096, %v10506
      %v10508 = vrot.slane %v10097, 7
      %v10509 = vsel %vm10155, %v10508, %v10507
      %v10510 = vrot.slane %v10098, 6
      %v10511 = vsel %vm10158, %v10510, %v10509
      %v10512 = vrot.slane %v10099, 5
      %v10513 = vrot.slane %v10100, 4
      %v10514 = vsel %vm10140, %v10513, %v10512
      %v10515 = vrot.slane %v10101, 3
      %v10516 = vsel %vm10143, %v10515, %v10514
      %v10517 = vrot.slane %v10102, 2
      %v10518 = vsel %vm10146, %v10517, %v10516
      %v10519 = vrot.slane %v10103, 1
      %v10520 = vsel %vm10149, %v10519, %v10518
      %v10521 = vsel %vm10152, %v10104, %v10520
      %v10522 = vrot.slane %v10105, 7
      %v10523 = vsel %vm10155, %v10522, %v10521
      %v10524 = vrot.slane %v10106, 6
      %v10525 = vsel %vm10158, %v10524, %v10523
      %10526 = vrot.lane.b32.xlu0 %v10483, 32
      %v10527 = vpop.permute.xlu0 %10526
      %10528 = vrot.lane.b32.xlu0 %v10497, 32
      %v10529 = vpop.permute.xlu0 %10528
      %10530 = vrot.lane.b32.xlu0 %v10511, 32
      %v10531 = vpop.permute.xlu0 %10530
      %10532 = vrot.lane.b32.xlu0 %v10525, 32
      %v10533 = vpop.permute.xlu0 %10532
      %v10538 = vrot.slane %v10075, 6
      %v10539 = vrot.slane %v10076, 5
      %v10540 = vsel %vm10140, %v10539, %v10538
      %v10541 = vrot.slane %v10077, 4
      %v10542 = vsel %vm10143, %v10541, %v10540
      %v10543 = vrot.slane %v10078, 3
      %v10544 = vsel %vm10146, %v10543, %v10542
      %v10545 = vrot.slane %v10079, 2
      %v10546 = vsel %vm10149, %v10545, %v10544
      %v10547 = vrot.slane %v10080, 1
      %v10548 = vsel %vm10152, %v10547, %v10546
      %v10549 = vsel %vm10155, %v10081, %v10548
      %v10550 = vrot.slane %v10082, 7
      %v10551 = vsel %vm10158, %v10550, %v10549
      %v10552 = vrot.slane %v10083, 6
      %v10553 = vrot.slane %v10084, 5
      %v10554 = vsel %vm10140, %v10553, %v10552
      %v10555 = vrot.slane %v10085, 4
      %v10556 = vsel %vm10143, %v10555, %v10554
      %v10557 = vrot.slane %v10086, 3
      %v10558 = vsel %vm10146, %v10557, %v10556
      %v10559 = vrot.slane %v10087, 2
      %v10560 = vsel %vm10149, %v10559, %v10558
      %v10561 = vrot.slane %v10088, 1
      %v10562 = vsel %vm10152, %v10561, %v10560
      %v10563 = vsel %vm10155, %v10089, %v10562
      %v10564 = vrot.slane %v10090, 7
      %v10565 = vsel %vm10158, %v10564, %v10563
      %v10566 = vrot.slane %v10091, 6
      %v10567 = vrot.slane %v10092, 5
      %v10568 = vsel %vm10140, %v10567, %v10566
      %v10569 = vrot.slane %v10093, 4
      %v10570 = vsel %vm10143, %v10569, %v10568
      %v10571 = vrot.slane %v10094, 3
      %v10572 = vsel %vm10146, %v10571, %v10570
      %v10573 = vrot.slane %v10095, 2
      %v10574 = vsel %vm10149, %v10573, %v10572
      %v10575 = vrot.slane %v10096, 1
      %v10576 = vsel %vm10152, %v10575, %v10574
      %v10577 = vsel %vm10155, %v10097, %v10576
      %v10578 = vrot.slane %v10098, 7
      %v10579 = vsel %vm10158, %v10578, %v10577
      %v10580 = vrot.slane %v10099, 6
      %v10581 = vrot.slane %v10100, 5
      %v10582 = vsel %vm10140, %v10581, %v10580
      %v10583 = vrot.slane %v10101, 4
      %v10584 = vsel %vm10143, %v10583, %v10582
      %v10585 = vrot.slane %v10102, 3
      %v10586 = vsel %vm10146, %v10585, %v10584
      %v10587 = vrot.slane %v10103, 2
      %v10588 = vsel %vm10149, %v10587, %v10586
      %v10589 = vrot.slane %v10104, 1
      %v10590 = vsel %vm10152, %v10589, %v10588
      %v10591 = vsel %vm10155, %v10105, %v10590
      %v10592 = vrot.slane %v10106, 7
      %v10593 = vsel %vm10158, %v10592, %v10591
      %10594 = vrot.lane.b32.xlu0 %v10551, 64
      %v10595 = vpop.permute.xlu0 %10594
      %10596 = vrot.lane.b32.xlu0 %v10565, 64
      %v10597 = vpop.permute.xlu0 %10596
      %10598 = vrot.lane.b32.xlu0 %v10579, 64
      %v10599 = vpop.permute.xlu0 %10598
      %10600 = vrot.lane.b32.xlu0 %v10593, 64
      %v10601 = vpop.permute.xlu0 %10600
      %v10606 = vrot.slane %v10075, 7
      %v10607 = vrot.slane %v10076, 6
      %v10608 = vsel %vm10140, %v10607, %v10606
      %v10609 = vrot.slane %v10077, 5
      %v10610 = vsel %vm10143, %v10609, %v10608
      %v10611 = vrot.slane %v10078, 4
      %v10612 = vsel %vm10146, %v10611, %v10610
      %v10613 = vrot.slane %v10079, 3
      %v10614 = vsel %vm10149, %v10613, %v10612
      %v10615 = vrot.slane %v10080, 2
      %v10616 = vsel %vm10152, %v10615, %v10614
      %v10617 = vrot.slane %v10081, 1
      %v10618 = vsel %vm10155, %v10617, %v10616
      %v10619 = vsel %vm10158, %v10082, %v10618
      %v10620 = vrot.slane %v10083, 7
      %v10621 = vrot.slane %v10084, 6
      %v10622 = vsel %vm10140, %v10621, %v10620
      %v10623 = vrot.slane %v10085, 5
      %v10624 = vsel %vm10143, %v10623, %v10622
      %v10625 = vrot.slane %v10086, 4
      %v10626 = vsel %vm10146, %v10625, %v10624
      %v10627 = vrot.slane %v10087, 3
      %v10628 = vsel %vm10149, %v10627, %v10626
      %v10629 = vrot.slane %v10088, 2
      %v10630 = vsel %vm10152, %v10629, %v10628
      %v10631 = vrot.slane %v10089, 1
      %v10632 = vsel %vm10155, %v10631, %v10630
      %v10633 = vsel %vm10158, %v10090, %v10632
      %v10634 = vrot.slane %v10091, 7
      %v10635 = vrot.slane %v10092, 6
      %v10636 = vsel %vm10140, %v10635, %v10634
      %v10637 = vrot.slane %v10093, 5
      %v10638 = vsel %vm10143, %v10637, %v10636
      %v10639 = vrot.slane %v10094, 4
      %v10640 = vsel %vm10146, %v10639, %v10638
      %v10641 = vrot.slane %v10095, 3
      %v10642 = vsel %vm10149, %v10641, %v10640
      %v10643 = vrot.slane %v10096, 2
      %v10644 = vsel %vm10152, %v10643, %v10642
      %v10645 = vrot.slane %v10097, 1
      %v10646 = vsel %vm10155, %v10645, %v10644
      %v10647 = vsel %vm10158, %v10098, %v10646
      %v10648 = vrot.slane %v10099, 7
      %v10649 = vrot.slane %v10100, 6
      %v10650 = vsel %vm10140, %v10649, %v10648
      %v10651 = vrot.slane %v10101, 5
      %v10652 = vsel %vm10143, %v10651, %v10650
      %v10653 = vrot.slane %v10102, 4
      %v10654 = vsel %vm10146, %v10653, %v10652
      %v10655 = vrot.slane %v10103, 3
      %v10656 = vsel %vm10149, %v10655, %v10654
      %v10657 = vrot.slane %v10104, 2
      %v10658 = vsel %vm10152, %v10657, %v10656
      %v10659 = vrot.slane %v10105, 1
      %v10660 = vsel %vm10155, %v10659, %v10658
      %v10661 = vsel %vm10158, %v10106, %v10660
      %10662 = vrot.lane.b32.xlu0 %v10619, 96
      %v10663 = vpop.permute.xlu0 %10662
      %10664 = vrot.lane.b32.xlu0 %v10633, 96
      %v10665 = vpop.permute.xlu0 %10664
      %10666 = vrot.lane.b32.xlu0 %v10647, 96
      %v10667 = vpop.permute.xlu0 %10666
      %10668 = vrot.lane.b32.xlu0 %v10661, 96
      %v10669 = vpop.permute.xlu0 %10668
      %v10674 = vsel %vm520, %v10159, %v10263
      %v10675 = vsel %vm520, %v10173, %v10265
      %v10676 = vsel %vm520, %v10187, %v10267
      %v10677 = vsel %vm520, %v10201, %v10269
      %v10678 = vsel %vm1537, %v10674, %v10331
      %v10679 = vsel %vm1537, %v10675, %v10333
      %v10680 = vsel %vm1537, %v10676, %v10335
      %v10681 = vsel %vm1537, %v10677, %v10337
      %v10682 = vsel %vm1570, %v10678, %v10399
      %v10683 = vsel %vm1570, %v10679, %v10401
      %v10684 = vsel %vm1570, %v10680, %v10403
      %v10685 = vsel %vm1570, %v10681, %v10405
      %v10686 = vsel %vm520, %v10423, %v10527
      %v10687 = vsel %vm520, %v10437, %v10529
      %v10688 = vsel %vm520, %v10451, %v10531
      %v10689 = vsel %vm520, %v10465, %v10533
      %v10690 = vsel %vm1537, %v10686, %v10595
      %v10691 = vsel %vm1537, %v10687, %v10597
      %v10692 = vsel %vm1537, %v10688, %v10599
      %v10693 = vsel %vm1537, %v10689, %v10601
      %v10694 = vsel %vm1570, %v10690, %v10663
      %v10695 = vsel %vm1570, %v10691, %v10665
      %v10696 = vsel %vm1570, %v10692, %v10667
      %v10697 = vsel %vm1570, %v10693, %v10669
      %10698 = vst [vmem:[%s278] sm:$0xff] %v10682
      %10699 = vst [vmem:[%s278 + $0x8] sm:$0xff] %v10694
      %10700 = vst [vmem:[%s278 + $0x10] sm:$0xff] %v10683
      %10701 = vst [vmem:[%s278 + $0x18] sm:$0xff] %v10695
      %10702 = vst [vmem:[%s278 + $0x20] sm:$0xff] %v10684
      %10703 = vst [vmem:[%s278 + $0x28] sm:$0xff] %v10696
      %10704 = vst [vmem:[%s278 + $0x30] sm:$0xff] %v10685
      %10705 = vst [vmem:[%s278 + $0x38] sm:$0xff] %v10697
      %p10706 = scmp.lt.s32.totalorder %s18, 1
      %s10707 = scalar_select %p10706, %s18, 1
      %s10708 = smul.addr %s10707, 8
      %s10709 = smul.addr %s10708, 8
      %s10710 = scalar_lea.vmem %s7, %s10709
      // Predicated region
      $region49: #{basic_block_forward.1} parent=47 // pred_check
        %p10711 = pneg %p188
      $region50: #{basic_block_forward.1} parent=47 // pred_check_branch
        %10713 = sbr.rel (%p10711) target = $region52
      $region51: #{basic_block_forward.1} parent=47 // pred_region
        _
      $region52: #{basic_block_forward.1} parent=47 // pred_fallthru
        _
    $region48: #{basic_block_forward.1} parent=5 // pred_fallthru
      _
    %p10714 = scmp.le.s32.totalorder 2, %s13
    // Predicated region
    $region53: #{basic_block_forward.1} parent=5 // pred_check
      %p10715 = pneg %p10714
    $region54: #{basic_block_forward.1} parent=5 // pred_check_branch
      %10717 = sbr.rel (%p10715) target = $region56
    $region55: #{basic_block_forward.1} parent=5 // pred_region
      %s10718 = ssub.s32 %s13, 2
      // Predicated region
      $region57: #{basic_block_forward.1} parent=55 // pred_check
        %p10719 = pneg %p194
      $region58: #{basic_block_forward.1} parent=55 // pred_check_branch
        %10721 = sbr.rel (%p10719) target = $region60
      $region59: #{basic_block_forward.1} parent=55 // pred_region
        %p10722 = scmp.lt.s32.totalorder %s19, 1
        %s10723 = scalar_select %p10722, %s19, 1
        %s10724 = smul.addr %s10723, 8
        %s10725 = smul.addr %s10724, 8
        %s10726 = scalar_lea.vmem %s7, %s10725
      $region60: #{basic_block_forward.1} parent=55 // pred_fallthru
        _
    $region56: #{basic_block_forward.1} parent=5 // pred_fallthru
      _
  $region6: #{basic_block_forward.1} parent=0 // loop_footer
    %s17 = sadd.s32 1, %s13
  $region7: #{basic_block_forward.1} parent=0 // loop_footer_branch
    %12 = sbr.rel target = $region3
  $region8: #{basic_block_forward.1} parent=0 // loop_exit
    _

</llo_original>
